<compile_context>
chip_gen: v7x
topology: tpu7x:2x2x1
jax: 0.10.0
libtpu: 0.0.40
codegen_flags: <defaults>
</compile_context>

<pallas_src>
import functools
import math

import jax
import jax.numpy as jnp
import numpy as np
from jax.experimental import pallas as pl
from jax.experimental.pallas import tpu as pltpu

VOCAB_SIZE = 72
LN_EPS = 1e-5


# ----------------------------- fused Pallas kernel -----------------------------

def _reconstructor_kernel(
    x_ref, emb_ref,
    lew_ref, leb_ref,
    ca_wqkv_ref, ca_bqkv_ref, ca_wo_ref, ca_bo_ref, ca_lng_ref, ca_lnb_ref,
    l_wqkv_ref, l_bqkv_ref, l_wo_ref, l_bo_ref,
    l_ln1g_ref, l_ln1b_ref,
    l_ffw1_ref, l_ffb1_ref, l_ffw2_ref, l_ffb2_ref,
    l_ln2g_ref, l_ln2b_ref,
    encg_ref, encb_ref, wout_ref, bout_ref,
    y_ref,
    *, batch, seq, nhead, nlayers, use_mask):
  d_model = x_ref.shape[1]
  dh = d_model // nhead
  scale = 1.0 / math.sqrt(dh)
  f32 = jnp.float32
  bf16 = jnp.bfloat16

  def mm(a, w):
    # All MXU matmuls: bf16 operands, f32 accumulation.
    return jnp.dot(a.astype(bf16), w.astype(bf16), preferred_element_type=f32)

  def mm_nt(a, b):
    # a @ b.T without materializing the transpose (contract the dh axes).
    return jax.lax.dot_general(
        a.astype(bf16), b.astype(bf16),
        (((1,), (1,)), ((), ())),
        preferred_element_type=f32)

  def layer_norm(h, g, b):
    mean = jnp.mean(h, axis=-1, keepdims=True)
    var = jnp.mean(jnp.square(h - mean), axis=-1, keepdims=True)
    return (h - mean) * jax.lax.rsqrt(var + LN_EPS) * g + b

  def softmax_rows(s):
    s = s - jnp.max(s, axis=-1, keepdims=True)
    p = jnp.exp(s)
    return p / jnp.sum(p, axis=-1, keepdims=True)   # exact (f32)

  def mha(q, k, v, w_o, mask):
    """q: (Lq, D), k/v: (Lk, D) f32.  Returns attn @ W_o (no out bias), f32.

    Head outputs are accumulated via W_o row-slices (sublane-aligned) instead
    of a lane concatenate; scores avoid any explicit transpose."""
    out = jnp.zeros((q.shape[0], d_model), f32)
    for h in range(nhead):
      sl = slice(h * dh, (h + 1) * dh)
      s = mm_nt(q[:, sl] * scale, k[:, sl])              # (Lq, Lk)
      if mask is not None:
        s = s + mask
      p = softmax_rows(s)
      oh = mm(p, v[:, sl])                               # (Lq, dh)
      out = out + mm(oh, w_o[sl, :])                     # accumulate, no concat
    return out

  # Residual stream kept in f32; input arrives as bf16 (halved DMA).
  x = x_ref[...].astype(f32)                             # (B*S, D)

  # ---- cross-attention.  K/V come from the shared (B, D) style|content
  # embedding and are identical for every query row (torch unsqueeze/repeat
  # with seq-first layout), so they are computed exactly once here.
  ca_wqkv = ca_wqkv_ref[...]
  ca_bqkv = ca_bqkv_ref[...]
  emb_lin = mm(emb_ref[...], lew_ref[...]) + leb_ref[...]          # (B, D)
  q_c = mm(x, ca_wqkv[0]) + ca_bqkv[0]                             # (B*S, D)
  k_c = mm(emb_lin, ca_wqkv[1]) + ca_bqkv[1]                       # (B, D)
  v_c = mm(emb_lin, ca_wqkv[2]) + ca_bqkv[2]                       # (B, D)
  attn = mha(q_c, k_c, v_c, ca_wo_ref[...], mask=None) + ca_bo_ref[...]
  x = layer_norm(attn + x, ca_lng_ref[...], ca_lnb_ref[...])

  # ---- causal mask built in-kernel (no HBM DMA; skipped entirely if unused).
  if use_mask:
    row = jax.lax.broadcasted_iota(jnp.int32, (seq, seq), 0)
    col = jax.lax.broadcasted_iota(jnp.int32, (seq, seq), 1)
    mask = jnp.where(col > row, -1e9, 0.0).astype(f32)
  else:
    mask = None

  # ---- encoder stack (post-norm, ReLU FFN).  Projections/FFN run on the
  # whole (B*S, D) batch-folded activation; only the (S, S) softmax/mask step
  # is done per batch element (sublane-aligned row slices, S % 8 == 0).
  for l in range(nlayers):
    wqkv = l_wqkv_ref[l]                                 # (3, D, D) bf16
    bqkv = l_bqkv_ref[l]                                 # (3, 1, D) f32
    w_o = l_wo_ref[l]
    q = mm(x, wqkv[0]) + bqkv[0]
    k = mm(x, wqkv[1]) + bqkv[1]
    v = mm(x, wqkv[2]) + bqkv[2]
    blocks = []
    for b in range(batch):
      rs = slice(b * seq, (b + 1) * seq)
      blocks.append(mha(q[rs], k[rs], v[rs], w_o, mask))
    attn = jnp.concatenate(blocks, axis=0) + l_bo_ref[l]
    x = layer_norm(attn + x, l_ln1g_ref[l], l_ln1b_ref[l])

    hid = jnp.maximum(mm(x, l_ffw1_ref[l]) + l_ffb1_ref[l], 0.0)   # (B*S, d_ff)
    ff = mm(hid, l_ffw2_ref[l]) + l_ffb2_ref[l]
    x = layer_norm(ff + x, l_ln2g_ref[l], l_ln2b_ref[l])

  # ---- final encoder LayerNorm + lane-dense (128-padded) output projection.
  x = layer_norm(x, encg_ref[...], encb_ref[...])
  y_ref[...] = mm(x, wout_ref[...]) + bout_ref[...]


# ----------------------------- params / packing -----------------------------

def sinusoidal_pe(max_len, d_model):
  pos = np.arange(max_len, dtype=np.float32)[:, None]
  div = np.exp(np.arange(0, d_model, 2, dtype=np.float32)
               * (-math.log(10000.0) / d_model))
  pe = np.zeros((max_len, d_model), np.float32)
  pe[:, 0::2] = np.sin(pos * div)
  pe[:, 1::2] = np.cos(pos * div)
  return jnp.asarray(pe)


def init_params(key, vocab, d_model, nhead, d_ff, nlayers, max_seq):
  it = iter(jax.random.split(key, 64))

  def w(shape):
    return jax.random.normal(next(it), shape, jnp.float32) * 0.02

  def zeros(n):
    return jnp.zeros((n,), jnp.float32)

  def ones(n):
    return jnp.ones((n,), jnp.float32)

  def mha():
    return dict(w_q=w((d_model, d_model)), b_q=zeros(d_model),
                w_k=w((d_model, d_model)), b_k=zeros(d_model),
                w_v=w((d_model, d_model)), b_v=zeros(d_model),
                w_o=w((d_model, d_model)), b_o=zeros(d_model))

  layers = []
  for _ in range(nlayers):
    layers.append(dict(
        attn=mha(),
        ln1_g=ones(d_model), ln1_b=zeros(d_model),
        ff_w1=w((d_model, d_ff)), ff_b1=zeros(d_ff),
        ff_w2=w((d_ff, d_model)), ff_b2=zeros(d_model),
        ln2_g=ones(d_model), ln2_b=zeros(d_model),
    ))

  return dict(
      embedding=w((vocab, d_model)),
      pe=sinusoidal_pe(max_seq, d_model),
      lin_emb_w=w((256, d_model)), lin_emb_b=zeros(d_model),
      cross_attn=mha(),
      ca_ln_g=ones(d_model), ca_ln_b=zeros(d_model),
      layers=layers,
      enc_ln_g=ones(d_model), enc_ln_b=zeros(d_model),
      wout_w=w((d_model, vocab)), wout_b=zeros(vocab),
  )


def pack_params(params):
  """Pack / bf16-cast weights ONCE (call OUTSIDE the jitted forward)."""
  vocab, d_model = params["embedding"].shape
  vpad = ((vocab + 127) // 128) * 128

  def bf(a):
    return a.astype(jnp.bfloat16)

  def row(a):
    return a[None, :].astype(jnp.float32)

  ca = params["cross_attn"]
  L = params["layers"]
  return dict(
      embedding=params["embedding"], pe=params["pe"],
      lew=bf(params["lin_emb_w"]), leb=row(params["lin_emb_b"]),
      ca_wqkv=bf(jnp.stack([ca["w_q"], ca["w_k"], ca["w_v"]])),          # (3,D,D)
      ca_bqkv=jnp.stack([row(ca["b_q"]), row(ca["b_k"]), row(ca["b_v"])]),
      ca_wo=bf(ca["w_o"]), ca_bo=row(ca["b_o"]),
      ca_lng=row(params["ca_ln_g"]), ca_lnb=row(params["ca_ln_b"]),
      l_wqkv=bf(jnp.stack([jnp.stack([l["attn"]["w_q"], l["attn"]["w_k"],
                                      l["attn"]["w_v"]]) for l in L])),  # (nl,3,D,D)
      l_bqkv=jnp.stack([jnp.stack([row(l["attn"]["b_q"]), row(l["attn"]["b_k"]),
                                   row(l["attn"]["b_v"])]) for l in L]),
      l_wo=bf(jnp.stack([l["attn"]["w_o"] for l in L])),
      l_bo=jnp.stack([row(l["attn"]["b_o"]) for l in L]),
      l_ln1g=jnp.stack([row(l["ln1_g"]) for l in L]),
      l_ln1b=jnp.stack([row(l["ln1_b"]) for l in L]),
      l_ffw1=bf(jnp.stack([l["ff_w1"] for l in L])),
      l_ffb1=jnp.stack([row(l["ff_b1"]) for l in L]),
      l_ffw2=bf(jnp.stack([l["ff_w2"] for l in L])),
      l_ffb2=jnp.stack([row(l["ff_b2"]) for l in L]),
      l_ln2g=jnp.stack([row(l["ln2_g"]) for l in L]),
      l_ln2b=jnp.stack([row(l["ln2_b"]) for l in L]),
      encg=row(params["enc_ln_g"]), encb=row(params["enc_ln_b"]),
      wout=bf(jnp.pad(params["wout_w"], ((0, 0), (0, vpad - vocab)))),
      bout=jnp.pad(params["wout_b"], (0, vpad - vocab))[None, :].astype(jnp.float32),
  )


# ----------------------------- model forward -----------------------------

def reconstructor_forward(packed, x_tokens, style_emb, content_emb,
                          *, nhead, use_mask=True):
  B, S = x_tokens.shape
  vocab, D = packed["embedding"].shape
  vpad = packed["wout"].shape[1]
  nlayers = packed["l_wqkv"].shape[0]
  N = B * S

  # TODO(synk): token-embedding gather + positional encoding stay in XLA glue
  # (dropout = eval-mode identity).  Input to the kernel is shipped as bf16.
  x = packed["embedding"][x_tokens] + packed["pe"][:S][None, :, :]   # (B, S, D) f32
  x = x.reshape(N, D).astype(jnp.bfloat16)                           # batch folded
  emb_cat = jnp.concatenate([style_emb, content_emb],
                            axis=1).astype(jnp.bfloat16)             # (B, 256)

  kernel = functools.partial(_reconstructor_kernel, batch=B, seq=S,
                             nhead=nhead, nlayers=nlayers, use_mask=use_mask)

  # Single grid step (whole-array VMEM blocks, single-buffered) -> whole
  # forward fused; only the bf16 input and the lane-dense f32 logits touch HBM.
  y_pad = pl.pallas_call(
      kernel,
      out_shape=jax.ShapeDtypeStruct((N, vpad), jnp.float32),
      compiler_params=pltpu.CompilerParams(
          vmem_limit_bytes=32 * 1024 * 1024),
  )(x, emb_cat,
    packed["lew"], packed["leb"],
    packed["ca_wqkv"], packed["ca_bqkv"], packed["ca_wo"], packed["ca_bo"],
    packed["ca_lng"], packed["ca_lnb"],
    packed["l_wqkv"], packed["l_bqkv"], packed["l_wo"], packed["l_bo"],
    packed["l_ln1g"], packed["l_ln1b"],
    packed["l_ffw1"], packed["l_ffb1"], packed["l_ffw2"], packed["l_ffb2"],
    packed["l_ln2g"], packed["l_ln2b"],
    packed["encg"], packed["encb"], packed["wout"], packed["bout"])

  return y_pad[:, :vocab].reshape(B, S, vocab)


# ----------------------------- main -----------------------------

if __name__ == "__main__":
  B, S = 2, 8
  d_model, nhead, d_ff, nlayers, max_seq = 64, 4, 128, 2, 32

  key = jax.random.PRNGKey(0)
  kp, kx, ks, kc = jax.random.split(key, 4)

  params = init_params(kp, VOCAB_SIZE, d_model, nhead, d_ff, nlayers, max_seq)
  packed = pack_params(params)          # packed / bf16-cast ONCE, outside jit
  x_tokens = jax.random.randint(kx, (B, S), 0, VOCAB_SIZE)
  style_embedding = jax.random.normal(ks, (B, 128), jnp.float32)
  content_embedding = jax.random.normal(kc, (B, 128), jnp.float32)

  fwd = jax.jit(functools.partial(reconstructor_forward, nhead=nhead))
  y = fwd(packed, x_tokens, style_embedding, content_embedding)
  jax.block_until_ready(y)

  assert y.shape == (B, S, VOCAB_SIZE)
  assert bool(jnp.all(jnp.isfinite(y)))
  print("KERNEL_OK")
</pallas_src>

<mosaic_0001>
module attributes {stable_mosaic.version = 11 : i64} {
  func.func @_reconstructor_kernel(%arg0: memref<16x64xbf16, #tpu.memory_space<vmem>>, %arg1: memref<2x256xbf16, #tpu.memory_space<vmem>>, %arg2: memref<256x64xbf16, #tpu.memory_space<vmem>>, %arg3: memref<1x64xf32, #tpu.memory_space<vmem>>, %arg4: memref<3x64x64xbf16, #tpu.memory_space<vmem>>, %arg5: memref<3x1x64xf32, #tpu.memory_space<vmem>>, %arg6: memref<64x64xbf16, #tpu.memory_space<vmem>>, %arg7: memref<1x64xf32, #tpu.memory_space<vmem>>, %arg8: memref<1x64xf32, #tpu.memory_space<vmem>>, %arg9: memref<1x64xf32, #tpu.memory_space<vmem>>, %arg10: memref<2x3x64x64xbf16, #tpu.memory_space<vmem>>, %arg11: memref<2x3x1x64xf32, #tpu.memory_space<vmem>>, %arg12: memref<2x64x64xbf16, #tpu.memory_space<vmem>>, %arg13: memref<2x1x64xf32, #tpu.memory_space<vmem>>, %arg14: memref<2x1x64xf32, #tpu.memory_space<vmem>>, %arg15: memref<2x1x64xf32, #tpu.memory_space<vmem>>, %arg16: memref<2x64x128xbf16, #tpu.memory_space<vmem>>, %arg17: memref<2x1x128xf32, #tpu.memory_space<vmem>>, %arg18: memref<2x128x64xbf16, #tpu.memory_space<vmem>>, %arg19: memref<2x1x64xf32, #tpu.memory_space<vmem>>, %arg20: memref<2x1x64xf32, #tpu.memory_space<vmem>>, %arg21: memref<2x1x64xf32, #tpu.memory_space<vmem>>, %arg22: memref<1x64xf32, #tpu.memory_space<vmem>>, %arg23: memref<1x64xf32, #tpu.memory_space<vmem>>, %arg24: memref<64x128xbf16, #tpu.memory_space<vmem>>, %arg25: memref<1x128xf32, #tpu.memory_space<vmem>>, %arg26: memref<16x128xf32, #tpu.memory_space<vmem>>) attributes {dimension_semantics = [], scalar_prefetch = 0 : i64, scratch_operands = 0 : i64, tpu.core_type = #tpu.core_type<tc>} {
    %c0 = arith.constant 0 : index
    %c0_0 = arith.constant 0 : index
    %0 = vector.load %arg0[%c0, %c0_0] : memref<16x64xbf16, #tpu.memory_space<vmem>>, vector<16x64xbf16>
    %1 = arith.extf %0 : vector<16x64xbf16> to vector<16x64xf32>
    %c0_1 = arith.constant 0 : index
    %c0_2 = arith.constant 0 : index
    %c0_3 = arith.constant 0 : index
    %2 = vector.load %arg4[%c0_1, %c0_2, %c0_3] : memref<3x64x64xbf16, #tpu.memory_space<vmem>>, vector<3x64x64xbf16>
    %c0_4 = arith.constant 0 : index
    %c0_5 = arith.constant 0 : index
    %c0_6 = arith.constant 0 : index
    %3 = vector.load %arg5[%c0_4, %c0_5, %c0_6] : memref<3x1x64xf32, #tpu.memory_space<vmem>>, vector<3x1x64xf32>
    %c0_7 = arith.constant 0 : index
    %c0_8 = arith.constant 0 : index
    %4 = vector.load %arg1[%c0_7, %c0_8] : memref<2x256xbf16, #tpu.memory_space<vmem>>, vector<2x256xbf16>
    %c0_9 = arith.constant 0 : index
    %c0_10 = arith.constant 0 : index
    %5 = vector.load %arg2[%c0_9, %c0_10] : memref<256x64xbf16, #tpu.memory_space<vmem>>, vector<256x64xbf16>
    %cst = arith.constant dense<0.000000e+00> : vector<2x64xf32>
    %6 = tpu.matmul %4, %5, %cst {dimension_numbers = #tpu.dot_dimension_numbers<[1], [0], [0], [1], [0, 0, 1, 1], [], []>} : vector<2x256xbf16>, vector<256x64xbf16>, vector<2x64xf32> -> vector<2x64xf32>
    %c0_11 = arith.constant 0 : index
    %c0_12 = arith.constant 0 : index
    %7 = vector.load %arg3[%c0_11, %c0_12] : memref<1x64xf32, #tpu.memory_space<vmem>>, vector<1x64xf32>
    %8 = vector.broadcast %7 : vector<1x64xf32> to vector<2x64xf32>
    %9 = arith.addf %6, %8 : vector<2x64xf32>
    %10 = vector.extract_strided_slice %2 {offsets = [0, 0, 0], sizes = [1, 64, 64], strides = [1, 1, 1]} : vector<3x64x64xbf16> to vector<1x64x64xbf16>
    %11 = vector.shape_cast %10 : vector<1x64x64xbf16> to vector<64x64xbf16>
    %12 = arith.truncf %1 : vector<16x64xf32> to vector<16x64xbf16>
    %cst_13 = arith.constant dense<0.000000e+00> : vector<16x64xf32>
    %13 = tpu.matmul %12, %11, %cst_13 {dimension_numbers = #tpu.dot_dimension_numbers<[1], [0], [0], [1], [0, 0, 1, 1], [], []>} : vector<16x64xbf16>, vector<64x64xbf16>, vector<16x64xf32> -> vector<16x64xf32>
    %14 = vector.extract_strided_slice %3 {offsets = [0, 0, 0], sizes = [1, 1, 64], strides = [1, 1, 1]} : vector<3x1x64xf32> to vector<1x1x64xf32>
    %15 = vector.shape_cast %14 : vector<1x1x64xf32> to vector<1x64xf32>
    %16 = vector.broadcast %15 : vector<1x64xf32> to vector<16x64xf32>
    %17 = arith.addf %13, %16 : vector<16x64xf32>
    %18 = vector.extract_strided_slice %2 {offsets = [1, 0, 0], sizes = [1, 64, 64], strides = [1, 1, 1]} : vector<3x64x64xbf16> to vector<1x64x64xbf16>
    %19 = vector.shape_cast %18 : vector<1x64x64xbf16> to vector<64x64xbf16>
    %20 = arith.truncf %9 : vector<2x64xf32> to vector<2x64xbf16>
    %cst_14 = arith.constant dense<0.000000e+00> : vector<2x64xf32>
    %21 = tpu.matmul %20, %19, %cst_14 {dimension_numbers = #tpu.dot_dimension_numbers<[1], [0], [0], [1], [0, 0, 1, 1], [], []>} : vector<2x64xbf16>, vector<64x64xbf16>, vector<2x64xf32> -> vector<2x64xf32>
    %22 = vector.extract_strided_slice %3 {offsets = [1, 0, 0], sizes = [1, 1, 64], strides = [1, 1, 1]} : vector<3x1x64xf32> to vector<1x1x64xf32>
    %23 = vector.shape_cast %22 : vector<1x1x64xf32> to vector<1x64xf32>
    %24 = vector.broadcast %23 : vector<1x64xf32> to vector<2x64xf32>
    %25 = arith.addf %21, %24 : vector<2x64xf32>
    %26 = vector.extract_strided_slice %2 {offsets = [2, 0, 0], sizes = [1, 64, 64], strides = [1, 1, 1]} : vector<3x64x64xbf16> to vector<1x64x64xbf16>
    %27 = vector.shape_cast %26 : vector<1x64x64xbf16> to vector<64x64xbf16>
    %28 = arith.truncf %9 : vector<2x64xf32> to vector<2x64xbf16>
    %cst_15 = arith.constant dense<0.000000e+00> : vector<2x64xf32>
    %29 = tpu.matmul %28, %27, %cst_15 {dimension_numbers = #tpu.dot_dimension_numbers<[1], [0], [0], [1], [0, 0, 1, 1], [], []>} : vector<2x64xbf16>, vector<64x64xbf16>, vector<2x64xf32> -> vector<2x64xf32>
    %30 = vector.extract_strided_slice %3 {offsets = [2, 0, 0], sizes = [1, 1, 64], strides = [1, 1, 1]} : vector<3x1x64xf32> to vector<1x1x64xf32>
    %31 = vector.shape_cast %30 : vector<1x1x64xf32> to vector<1x64xf32>
    %32 = vector.broadcast %31 : vector<1x64xf32> to vector<2x64xf32>
    %33 = arith.addf %29, %32 : vector<2x64xf32>
    %c0_16 = arith.constant 0 : index
    %c0_17 = arith.constant 0 : index
    %34 = vector.load %arg6[%c0_16, %c0_17] : memref<64x64xbf16, #tpu.memory_space<vmem>>, vector<64x64xbf16>
    %cst_18 = arith.constant 0.000000e+00 : f32
    %35 = vector.broadcast %cst_18 : f32 to vector<16x64xf32>
    %36 = vector.extract_strided_slice %17 {offsets = [0, 0], sizes = [16, 16], strides = [1, 1]} : vector<16x64xf32> to vector<16x16xf32>
    %cst_19 = arith.constant 2.500000e-01 : f32
    %37 = vector.broadcast %cst_19 : f32 to vector<16x16xf32>
    %38 = arith.mulf %36, %37 : vector<16x16xf32>
    %39 = vector.extract_strided_slice %25 {offsets = [0, 0], sizes = [2, 16], strides = [1, 1]} : vector<2x64xf32> to vector<2x16xf32>
    %40 = arith.truncf %38 : vector<16x16xf32> to vector<16x16xbf16>
    %41 = arith.truncf %39 : vector<2x16xf32> to vector<2x16xbf16>
    %cst_20 = arith.constant dense<0.000000e+00> : vector<16x2xf32>
    %42 = tpu.matmul %40, %41, %cst_20 {dimension_numbers = #tpu.dot_dimension_numbers<[1], [1], [0], [0], [0, 0, 1, 0], [], []>} : vector<16x16xbf16>, vector<2x16xbf16>, vector<16x2xf32> -> vector<16x2xf32>
    %cst_21 = arith.constant dense<0xFF800000> : vector<16xf32>
    %43 = vector.multi_reduction <maximumf>, %42, %cst_21 [1] : vector<16x2xf32> to vector<16xf32>
    %44 = vector.shape_cast %43 : vector<16xf32> to vector<16x1xf32>
    %45 = vector.broadcast %44 : vector<16x1xf32> to vector<16x2xf32>
    %46 = arith.subf %42, %45 : vector<16x2xf32>
    %47 = math.exp %46 : vector<16x2xf32>
    %cst_22 = arith.constant dense<0.000000e+00> : vector<16xf32>
    %48 = vector.multi_reduction <add>, %47, %cst_22 [1] : vector<16x2xf32> to vector<16xf32>
    %49 = vector.shape_cast %48 : vector<16xf32> to vector<16x1xf32>
    %50 = vector.broadcast %49 : vector<16x1xf32> to vector<16x2xf32>
    %51 = arith.divf %47, %50 : vector<16x2xf32>
    %52 = vector.extract_strided_slice %33 {offsets = [0, 0], sizes = [2, 16], strides = [1, 1]} : vector<2x64xf32> to vector<2x16xf32>
    %53 = arith.truncf %51 : vector<16x2xf32> to vector<16x2xbf16>
    %54 = arith.truncf %52 : vector<2x16xf32> to vector<2x16xbf16>
    %cst_23 = arith.constant dense<0.000000e+00> : vector<16x16xf32>
    %55 = tpu.matmul %53, %54, %cst_23 {dimension_numbers = #tpu.dot_dimension_numbers<[1], [0], [0], [1], [0, 0, 1, 1], [], []>} : vector<16x2xbf16>, vector<2x16xbf16>, vector<16x16xf32> -> vector<16x16xf32>
    %56 = vector.extract_strided_slice %34 {offsets = [0, 0], sizes = [16, 64], strides = [1, 1]} : vector<64x64xbf16> to vector<16x64xbf16>
    %57 = arith.truncf %55 : vector<16x16xf32> to vector<16x16xbf16>
    %cst_24 = arith.constant dense<0.000000e+00> : vector<16x64xf32>
    %58 = tpu.matmul %57, %56, %cst_24 {dimension_numbers = #tpu.dot_dimension_numbers<[1], [0], [0], [1], [0, 0, 1, 1], [], []>} : vector<16x16xbf16>, vector<16x64xbf16>, vector<16x64xf32> -> vector<16x64xf32>
    %59 = arith.addf %35, %58 : vector<16x64xf32>
    %60 = vector.extract_strided_slice %17 {offsets = [0, 16], sizes = [16, 16], strides = [1, 1]} : vector<16x64xf32> to vector<16x16xf32>
    %cst_25 = arith.constant 2.500000e-01 : f32
    %61 = vector.broadcast %cst_25 : f32 to vector<16x16xf32>
    %62 = arith.mulf %60, %61 : vector<16x16xf32>
    %63 = vector.extract_strided_slice %25 {offsets = [0, 16], sizes = [2, 16], strides = [1, 1]} : vector<2x64xf32> to vector<2x16xf32>
    %64 = arith.truncf %62 : vector<16x16xf32> to vector<16x16xbf16>
    %65 = arith.truncf %63 : vector<2x16xf32> to vector<2x16xbf16>
    %cst_26 = arith.constant dense<0.000000e+00> : vector<16x2xf32>
    %66 = tpu.matmul %64, %65, %cst_26 {dimension_numbers = #tpu.dot_dimension_numbers<[1], [1], [0], [0], [0, 0, 1, 0], [], []>} : vector<16x16xbf16>, vector<2x16xbf16>, vector<16x2xf32> -> vector<16x2xf32>
    %cst_27 = arith.constant dense<0xFF800000> : vector<16xf32>
    %67 = vector.multi_reduction <maximumf>, %66, %cst_27 [1] : vector<16x2xf32> to vector<16xf32>
    %68 = vector.shape_cast %67 : vector<16xf32> to vector<16x1xf32>
    %69 = vector.broadcast %68 : vector<16x1xf32> to vector<16x2xf32>
    %70 = arith.subf %66, %69 : vector<16x2xf32>
    %71 = math.exp %70 : vector<16x2xf32>
    %cst_28 = arith.constant dense<0.000000e+00> : vector<16xf32>
    %72 = vector.multi_reduction <add>, %71, %cst_28 [1] : vector<16x2xf32> to vector<16xf32>
    %73 = vector.shape_cast %72 : vector<16xf32> to vector<16x1xf32>
    %74 = vector.broadcast %73 : vector<16x1xf32> to vector<16x2xf32>
    %75 = arith.divf %71, %74 : vector<16x2xf32>
    %76 = vector.extract_strided_slice %33 {offsets = [0, 16], sizes = [2, 16], strides = [1, 1]} : vector<2x64xf32> to vector<2x16xf32>
    %77 = arith.truncf %75 : vector<16x2xf32> to vector<16x2xbf16>
    %78 = arith.truncf %76 : vector<2x16xf32> to vector<2x16xbf16>
    %cst_29 = arith.constant dense<0.000000e+00> : vector<16x16xf32>
    %79 = tpu.matmul %77, %78, %cst_29 {dimension_numbers = #tpu.dot_dimension_numbers<[1], [0], [0], [1], [0, 0, 1, 1], [], []>} : vector<16x2xbf16>, vector<2x16xbf16>, vector<16x16xf32> -> vector<16x16xf32>
    %80 = vector.extract_strided_slice %34 {offsets = [16, 0], sizes = [16, 64], strides = [1, 1]} : vector<64x64xbf16> to vector<16x64xbf16>
    %81 = arith.truncf %79 : vector<16x16xf32> to vector<16x16xbf16>
    %cst_30 = arith.constant dense<0.000000e+00> : vector<16x64xf32>
    %82 = tpu.matmul %81, %80, %cst_30 {dimension_numbers = #tpu.dot_dimension_numbers<[1], [0], [0], [1], [0, 0, 1, 1], [], []>} : vector<16x16xbf16>, vector<16x64xbf16>, vector<16x64xf32> -> vector<16x64xf32>
    %83 = arith.addf %59, %82 : vector<16x64xf32>
    %84 = vector.extract_strided_slice %17 {offsets = [0, 32], sizes = [16, 16], strides = [1, 1]} : vector<16x64xf32> to vector<16x16xf32>
    %cst_31 = arith.constant 2.500000e-01 : f32
    %85 = vector.broadcast %cst_31 : f32 to vector<16x16xf32>
    %86 = arith.mulf %84, %85 : vector<16x16xf32>
    %87 = vector.extract_strided_slice %25 {offsets = [0, 32], sizes = [2, 16], strides = [1, 1]} : vector<2x64xf32> to vector<2x16xf32>
    %88 = arith.truncf %86 : vector<16x16xf32> to vector<16x16xbf16>
    %89 = arith.truncf %87 : vector<2x16xf32> to vector<2x16xbf16>
    %cst_32 = arith.constant dense<0.000000e+00> : vector<16x2xf32>
    %90 = tpu.matmul %88, %89, %cst_32 {dimension_numbers = #tpu.dot_dimension_numbers<[1], [1], [0], [0], [0, 0, 1, 0], [], []>} : vector<16x16xbf16>, vector<2x16xbf16>, vector<16x2xf32> -> vector<16x2xf32>
    %cst_33 = arith.constant dense<0xFF800000> : vector<16xf32>
    %91 = vector.multi_reduction <maximumf>, %90, %cst_33 [1] : vector<16x2xf32> to vector<16xf32>
    %92 = vector.shape_cast %91 : vector<16xf32> to vector<16x1xf32>
    %93 = vector.broadcast %92 : vector<16x1xf32> to vector<16x2xf32>
    %94 = arith.subf %90, %93 : vector<16x2xf32>
    %95 = math.exp %94 : vector<16x2xf32>
    %cst_34 = arith.constant dense<0.000000e+00> : vector<16xf32>
    %96 = vector.multi_reduction <add>, %95, %cst_34 [1] : vector<16x2xf32> to vector<16xf32>
    %97 = vector.shape_cast %96 : vector<16xf32> to vector<16x1xf32>
    %98 = vector.broadcast %97 : vector<16x1xf32> to vector<16x2xf32>
    %99 = arith.divf %95, %98 : vector<16x2xf32>
    %100 = vector.extract_strided_slice %33 {offsets = [0, 32], sizes = [2, 16], strides = [1, 1]} : vector<2x64xf32> to vector<2x16xf32>
    %101 = arith.truncf %99 : vector<16x2xf32> to vector<16x2xbf16>
    %102 = arith.truncf %100 : vector<2x16xf32> to vector<2x16xbf16>
    %cst_35 = arith.constant dense<0.000000e+00> : vector<16x16xf32>
    %103 = tpu.matmul %101, %102, %cst_35 {dimension_numbers = #tpu.dot_dimension_numbers<[1], [0], [0], [1], [0, 0, 1, 1], [], []>} : vector<16x2xbf16>, vector<2x16xbf16>, vector<16x16xf32> -> vector<16x16xf32>
    %104 = vector.extract_strided_slice %34 {offsets = [32, 0], sizes = [16, 64], strides = [1, 1]} : vector<64x64xbf16> to vector<16x64xbf16>
    %105 = arith.truncf %103 : vector<16x16xf32> to vector<16x16xbf16>
    %cst_36 = arith.constant dense<0.000000e+00> : vector<16x64xf32>
    %106 = tpu.matmul %105, %104, %cst_36 {dimension_numbers = #tpu.dot_dimension_numbers<[1], [0], [0], [1], [0, 0, 1, 1], [], []>} : vector<16x16xbf16>, vector<16x64xbf16>, vector<16x64xf32> -> vector<16x64xf32>
    %107 = arith.addf %83, %106 : vector<16x64xf32>
    %108 = vector.extract_strided_slice %17 {offsets = [0, 48], sizes = [16, 16], strides = [1, 1]} : vector<16x64xf32> to vector<16x16xf32>
    %cst_37 = arith.constant 2.500000e-01 : f32
    %109 = vector.broadcast %cst_37 : f32 to vector<16x16xf32>
    %110 = arith.mulf %108, %109 : vector<16x16xf32>
    %111 = vector.extract_strided_slice %25 {offsets = [0, 48], sizes = [2, 16], strides = [1, 1]} : vector<2x64xf32> to vector<2x16xf32>
    %112 = arith.truncf %110 : vector<16x16xf32> to vector<16x16xbf16>
    %113 = arith.truncf %111 : vector<2x16xf32> to vector<2x16xbf16>
    %cst_38 = arith.constant dense<0.000000e+00> : vector<16x2xf32>
    %114 = tpu.matmul %112, %113, %cst_38 {dimension_numbers = #tpu.dot_dimension_numbers<[1], [1], [0], [0], [0, 0, 1, 0], [], []>} : vector<16x16xbf16>, vector<2x16xbf16>, vector<16x2xf32> -> vector<16x2xf32>
    %cst_39 = arith.constant dense<0xFF800000> : vector<16xf32>
    %115 = vector.multi_reduction <maximumf>, %114, %cst_39 [1] : vector<16x2xf32> to vector<16xf32>
    %116 = vector.shape_cast %115 : vector<16xf32> to vector<16x1xf32>
    %117 = vector.broadcast %116 : vector<16x1xf32> to vector<16x2xf32>
    %118 = arith.subf %114, %117 : vector<16x2xf32>
    %119 = math.exp %118 : vector<16x2xf32>
    %cst_40 = arith.constant dense<0.000000e+00> : vector<16xf32>
    %120 = vector.multi_reduction <add>, %119, %cst_40 [1] : vector<16x2xf32> to vector<16xf32>
    %121 = vector.shape_cast %120 : vector<16xf32> to vector<16x1xf32>
    %122 = vector.broadcast %121 : vector<16x1xf32> to vector<16x2xf32>
    %123 = arith.divf %119, %122 : vector<16x2xf32>
    %124 = vector.extract_strided_slice %33 {offsets = [0, 48], sizes = [2, 16], strides = [1, 1]} : vector<2x64xf32> to vector<2x16xf32>
    %125 = arith.truncf %123 : vector<16x2xf32> to vector<16x2xbf16>
    %126 = arith.truncf %124 : vector<2x16xf32> to vector<2x16xbf16>
    %cst_41 = arith.constant dense<0.000000e+00> : vector<16x16xf32>
    %127 = tpu.matmul %125, %126, %cst_41 {dimension_numbers = #tpu.dot_dimension_numbers<[1], [0], [0], [1], [0, 0, 1, 1], [], []>} : vector<16x2xbf16>, vector<2x16xbf16>, vector<16x16xf32> -> vector<16x16xf32>
    %128 = vector.extract_strided_slice %34 {offsets = [48, 0], sizes = [16, 64], strides = [1, 1]} : vector<64x64xbf16> to vector<16x64xbf16>
    %129 = arith.truncf %127 : vector<16x16xf32> to vector<16x16xbf16>
    %cst_42 = arith.constant dense<0.000000e+00> : vector<16x64xf32>
    %130 = tpu.matmul %129, %128, %cst_42 {dimension_numbers = #tpu.dot_dimension_numbers<[1], [0], [0], [1], [0, 0, 1, 1], [], []>} : vector<16x16xbf16>, vector<16x64xbf16>, vector<16x64xf32> -> vector<16x64xf32>
    %131 = arith.addf %107, %130 : vector<16x64xf32>
    %c0_43 = arith.constant 0 : index
    %c0_44 = arith.constant 0 : index
    %132 = vector.load %arg7[%c0_43, %c0_44] : memref<1x64xf32, #tpu.memory_space<vmem>>, vector<1x64xf32>
    %133 = vector.broadcast %132 : vector<1x64xf32> to vector<16x64xf32>
    %134 = arith.addf %131, %133 : vector<16x64xf32>
    %135 = arith.addf %134, %1 : vector<16x64xf32>
    %c0_45 = arith.constant 0 : index
    %c0_46 = arith.constant 0 : index
    %136 = vector.load %arg8[%c0_45, %c0_46] : memref<1x64xf32, #tpu.memory_space<vmem>>, vector<1x64xf32>
    %c0_47 = arith.constant 0 : index
    %c0_48 = arith.constant 0 : index
    %137 = vector.load %arg9[%c0_47, %c0_48] : memref<1x64xf32, #tpu.memory_space<vmem>>, vector<1x64xf32>
    %cst_49 = arith.constant dense<0.000000e+00> : vector<16xf32>
    %138 = vector.multi_reduction <add>, %135, %cst_49 [1] : vector<16x64xf32> to vector<16xf32>
    %139 = vector.shape_cast %138 : vector<16xf32> to vector<16x1xf32>
    %cst_50 = arith.constant 6.400000e+01 : f32
    %140 = vector.broadcast %cst_50 : f32 to vector<16x1xf32>
    %141 = arith.divf %139, %140 : vector<16x1xf32>
    %142 = vector.broadcast %141 : vector<16x1xf32> to vector<16x64xf32>
    %143 = arith.subf %135, %142 : vector<16x64xf32>
    %144 = arith.mulf %143, %143 : vector<16x64xf32>
    %cst_51 = arith.constant dense<0.000000e+00> : vector<16xf32>
    %145 = vector.multi_reduction <add>, %144, %cst_51 [1] : vector<16x64xf32> to vector<16xf32>
    %146 = vector.shape_cast %145 : vector<16xf32> to vector<16x1xf32>
    %cst_52 = arith.constant 6.400000e+01 : f32
    %147 = vector.broadcast %cst_52 : f32 to vector<16x1xf32>
    %148 = arith.divf %146, %147 : vector<16x1xf32>
    %149 = vector.broadcast %141 : vector<16x1xf32> to vector<16x64xf32>
    %150 = arith.subf %135, %149 : vector<16x64xf32>
    %cst_53 = arith.constant 9.99999974E-6 : f32
    %151 = vector.broadcast %cst_53 : f32 to vector<16x1xf32>
    %152 = arith.addf %148, %151 : vector<16x1xf32>
    %153 = math.rsqrt %152 : vector<16x1xf32>
    %154 = vector.broadcast %153 : vector<16x1xf32> to vector<16x64xf32>
    %155 = arith.mulf %150, %154 : vector<16x64xf32>
    %156 = vector.broadcast %136 : vector<1x64xf32> to vector<16x64xf32>
    %157 = arith.mulf %155, %156 : vector<16x64xf32>
    %158 = vector.broadcast %137 : vector<1x64xf32> to vector<16x64xf32>
    %159 = arith.addf %157, %158 : vector<16x64xf32>
    %160 = tpu.iota {dimensions = array<i32: 0>} : vector<8x8xi32>
    %161 = tpu.iota {dimensions = array<i32: 1>} : vector<8x8xi32>
    %162 = arith.cmpi sgt, %161, %160 : vector<8x8xi32>
    %cst_54 = arith.constant -1.000000e+09 : f32
    %cst_55 = arith.constant 0.000000e+00 : f32
    %163 = vector.broadcast %cst_54 : f32 to vector<8x8xf32>
    %164 = vector.broadcast %cst_55 : f32 to vector<8x8xf32>
    %165 = arith.select %162, %163, %164 : vector<8x8xi1>, vector<8x8xf32>
    %c0_56 = arith.constant 0 : index
    %c0_57 = arith.constant 0 : index
    %c0_58 = arith.constant 0 : index
    %c0_59 = arith.constant 0 : index
    %166 = vector.load %arg10[%c0_56, %c0_57, %c0_58, %c0_59] : memref<2x3x64x64xbf16, #tpu.memory_space<vmem>>, vector<1x3x64x64xbf16>
    %167 = vector.shape_cast %166 : vector<1x3x64x64xbf16> to vector<3x64x64xbf16>
    %c0_60 = arith.constant 0 : index
    %c0_61 = arith.constant 0 : index
    %c0_62 = arith.constant 0 : index
    %c0_63 = arith.constant 0 : index
    %168 = vector.load %arg11[%c0_60, %c0_61, %c0_62, %c0_63] : memref<2x3x1x64xf32, #tpu.memory_space<vmem>>, vector<1x3x1x64xf32>
    %169 = vector.shape_cast %168 : vector<1x3x1x64xf32> to vector<3x1x64xf32>
    %c0_64 = arith.constant 0 : index
    %c0_65 = arith.constant 0 : index
    %c0_66 = arith.constant 0 : index
    %170 = vector.load %arg12[%c0_64, %c0_65, %c0_66] : memref<2x64x64xbf16, #tpu.memory_space<vmem>>, vector<1x64x64xbf16>
    %171 = vector.shape_cast %170 : vector<1x64x64xbf16> to vector<64x64xbf16>
    %172 = vector.extract_strided_slice %167 {offsets = [0, 0, 0], sizes = [1, 64, 64], strides = [1, 1, 1]} : vector<3x64x64xbf16> to vector<1x64x64xbf16>
    %173 = vector.shape_cast %172 : vector<1x64x64xbf16> to vector<64x64xbf16>
    %174 = arith.truncf %159 : vector<16x64xf32> to vector<16x64xbf16>
    %cst_67 = arith.constant dense<0.000000e+00> : vector<16x64xf32>
    %175 = tpu.matmul %174, %173, %cst_67 {dimension_numbers = #tpu.dot_dimension_numbers<[1], [0], [0], [1], [0, 0, 1, 1], [], []>} : vector<16x64xbf16>, vector<64x64xbf16>, vector<16x64xf32> -> vector<16x64xf32>
    %176 = vector.extract_strided_slice %169 {offsets = [0, 0, 0], sizes = [1, 1, 64], strides = [1, 1, 1]} : vector<3x1x64xf32> to vector<1x1x64xf32>
    %177 = vector.shape_cast %176 : vector<1x1x64xf32> to vector<1x64xf32>
    %178 = vector.broadcast %177 : vector<1x64xf32> to vector<16x64xf32>
    %179 = arith.addf %175, %178 : vector<16x64xf32>
    %180 = vector.extract_strided_slice %167 {offsets = [1, 0, 0], sizes = [1, 64, 64], strides = [1, 1, 1]} : vector<3x64x64xbf16> to vector<1x64x64xbf16>
    %181 = vector.shape_cast %180 : vector<1x64x64xbf16> to vector<64x64xbf16>
    %182 = arith.truncf %159 : vector<16x64xf32> to vector<16x64xbf16>
    %cst_68 = arith.constant dense<0.000000e+00> : vector<16x64xf32>
    %183 = tpu.matmul %182, %181, %cst_68 {dimension_numbers = #tpu.dot_dimension_numbers<[1], [0], [0], [1], [0, 0, 1, 1], [], []>} : vector<16x64xbf16>, vector<64x64xbf16>, vector<16x64xf32> -> vector<16x64xf32>
    %184 = vector.extract_strided_slice %169 {offsets = [1, 0, 0], sizes = [1, 1, 64], strides = [1, 1, 1]} : vector<3x1x64xf32> to vector<1x1x64xf32>
    %185 = vector.shape_cast %184 : vector<1x1x64xf32> to vector<1x64xf32>
    %186 = vector.broadcast %185 : vector<1x64xf32> to vector<16x64xf32>
    %187 = arith.addf %183, %186 : vector<16x64xf32>
    %188 = vector.extract_strided_slice %167 {offsets = [2, 0, 0], sizes = [1, 64, 64], strides = [1, 1, 1]} : vector<3x64x64xbf16> to vector<1x64x64xbf16>
    %189 = vector.shape_cast %188 : vector<1x64x64xbf16> to vector<64x64xbf16>
    %190 = arith.truncf %159 : vector<16x64xf32> to vector<16x64xbf16>
    %cst_69 = arith.constant dense<0.000000e+00> : vector<16x64xf32>
    %191 = tpu.matmul %190, %189, %cst_69 {dimension_numbers = #tpu.dot_dimension_numbers<[1], [0], [0], [1], [0, 0, 1, 1], [], []>} : vector<16x64xbf16>, vector<64x64xbf16>, vector<16x64xf32> -> vector<16x64xf32>
    %192 = vector.extract_strided_slice %169 {offsets = [2, 0, 0], sizes = [1, 1, 64], strides = [1, 1, 1]} : vector<3x1x64xf32> to vector<1x1x64xf32>
    %193 = vector.shape_cast %192 : vector<1x1x64xf32> to vector<1x64xf32>
    %194 = vector.broadcast %193 : vector<1x64xf32> to vector<16x64xf32>
    %195 = arith.addf %191, %194 : vector<16x64xf32>
    %196 = vector.extract_strided_slice %179 {offsets = [0, 0], sizes = [8, 64], strides = [1, 1]} : vector<16x64xf32> to vector<8x64xf32>
    %197 = vector.extract_strided_slice %187 {offsets = [0, 0], sizes = [8, 64], strides = [1, 1]} : vector<16x64xf32> to vector<8x64xf32>
    %198 = vector.extract_strided_slice %195 {offsets = [0, 0], sizes = [8, 64], strides = [1, 1]} : vector<16x64xf32> to vector<8x64xf32>
    %cst_70 = arith.constant 0.000000e+00 : f32
    %199 = vector.broadcast %cst_70 : f32 to vector<8x64xf32>
    %200 = vector.extract_strided_slice %196 {offsets = [0, 0], sizes = [8, 16], strides = [1, 1]} : vector<8x64xf32> to vector<8x16xf32>
    %cst_71 = arith.constant 2.500000e-01 : f32
    %201 = vector.broadcast %cst_71 : f32 to vector<8x16xf32>
    %202 = arith.mulf %200, %201 : vector<8x16xf32>
    %203 = vector.extract_strided_slice %197 {offsets = [0, 0], sizes = [8, 16], strides = [1, 1]} : vector<8x64xf32> to vector<8x16xf32>
    %204 = arith.truncf %202 : vector<8x16xf32> to vector<8x16xbf16>
    %205 = arith.truncf %203 : vector<8x16xf32> to vector<8x16xbf16>
    %cst_72 = arith.constant dense<0.000000e+00> : vector<8x8xf32>
    %206 = tpu.matmul %204, %205, %cst_72 {dimension_numbers = #tpu.dot_dimension_numbers<[1], [1], [0], [0], [0, 0, 1, 0], [], []>} : vector<8x16xbf16>, vector<8x16xbf16>, vector<8x8xf32> -> vector<8x8xf32>
    %207 = arith.addf %206, %165 : vector<8x8xf32>
    %cst_73 = arith.constant dense<0xFF800000> : vector<8xf32>
    %208 = vector.multi_reduction <maximumf>, %207, %cst_73 [1] : vector<8x8xf32> to vector<8xf32>
    %209 = vector.shape_cast %208 : vector<8xf32> to vector<8x1xf32>
    %210 = vector.broadcast %209 : vector<8x1xf32> to vector<8x8xf32>
    %211 = arith.subf %207, %210 : vector<8x8xf32>
    %212 = math.exp %211 : vector<8x8xf32>
    %cst_74 = arith.constant dense<0.000000e+00> : vector<8xf32>
    %213 = vector.multi_reduction <add>, %212, %cst_74 [1] : vector<8x8xf32> to vector<8xf32>
    %214 = vector.shape_cast %213 : vector<8xf32> to vector<8x1xf32>
    %215 = vector.broadcast %214 : vector<8x1xf32> to vector<8x8xf32>
    %216 = arith.divf %212, %215 : vector<8x8xf32>
    %217 = vector.extract_strided_slice %198 {offsets = [0, 0], sizes = [8, 16], strides = [1, 1]} : vector<8x64xf32> to vector<8x16xf32>
    %218 = arith.truncf %216 : vector<8x8xf32> to vector<8x8xbf16>
    %219 = arith.truncf %217 : vector<8x16xf32> to vector<8x16xbf16>
    %cst_75 = arith.constant dense<0.000000e+00> : vector<8x16xf32>
    %220 = tpu.matmul %218, %219, %cst_75 {dimension_numbers = #tpu.dot_dimension_numbers<[1], [0], [0], [1], [0, 0, 1, 1], [], []>} : vector<8x8xbf16>, vector<8x16xbf16>, vector<8x16xf32> -> vector<8x16xf32>
    %221 = vector.extract_strided_slice %171 {offsets = [0, 0], sizes = [16, 64], strides = [1, 1]} : vector<64x64xbf16> to vector<16x64xbf16>
    %222 = arith.truncf %220 : vector<8x16xf32> to vector<8x16xbf16>
    %cst_76 = arith.constant dense<0.000000e+00> : vector<8x64xf32>
    %223 = tpu.matmul %222, %221, %cst_76 {dimension_numbers = #tpu.dot_dimension_numbers<[1], [0], [0], [1], [0, 0, 1, 1], [], []>} : vector<8x16xbf16>, vector<16x64xbf16>, vector<8x64xf32> -> vector<8x64xf32>
    %224 = arith.addf %199, %223 : vector<8x64xf32>
    %225 = vector.extract_strided_slice %196 {offsets = [0, 16], sizes = [8, 16], strides = [1, 1]} : vector<8x64xf32> to vector<8x16xf32>
    %cst_77 = arith.constant 2.500000e-01 : f32
    %226 = vector.broadcast %cst_77 : f32 to vector<8x16xf32>
    %227 = arith.mulf %225, %226 : vector<8x16xf32>
    %228 = vector.extract_strided_slice %197 {offsets = [0, 16], sizes = [8, 16], strides = [1, 1]} : vector<8x64xf32> to vector<8x16xf32>
    %229 = arith.truncf %227 : vector<8x16xf32> to vector<8x16xbf16>
    %230 = arith.truncf %228 : vector<8x16xf32> to vector<8x16xbf16>
    %cst_78 = arith.constant dense<0.000000e+00> : vector<8x8xf32>
    %231 = tpu.matmul %229, %230, %cst_78 {dimension_numbers = #tpu.dot_dimension_numbers<[1], [1], [0], [0], [0, 0, 1, 0], [], []>} : vector<8x16xbf16>, vector<8x16xbf16>, vector<8x8xf32> -> vector<8x8xf32>
    %232 = arith.addf %231, %165 : vector<8x8xf32>
    %cst_79 = arith.constant dense<0xFF800000> : vector<8xf32>
    %233 = vector.multi_reduction <maximumf>, %232, %cst_79 [1] : vector<8x8xf32> to vector<8xf32>
    %234 = vector.shape_cast %233 : vector<8xf32> to vector<8x1xf32>
    %235 = vector.broadcast %234 : vector<8x1xf32> to vector<8x8xf32>
    %236 = arith.subf %232, %235 : vector<8x8xf32>
    %237 = math.exp %236 : vector<8x8xf32>
    %cst_80 = arith.constant dense<0.000000e+00> : vector<8xf32>
    %238 = vector.multi_reduction <add>, %237, %cst_80 [1] : vector<8x8xf32> to vector<8xf32>
    %239 = vector.shape_cast %238 : vector<8xf32> to vector<8x1xf32>
    %240 = vector.broadcast %239 : vector<8x1xf32> to vector<8x8xf32>
    %241 = arith.divf %237, %240 : vector<8x8xf32>
    %242 = vector.extract_strided_slice %198 {offsets = [0, 16], sizes = [8, 16], strides = [1, 1]} : vector<8x64xf32> to vector<8x16xf32>
    %243 = arith.truncf %241 : vector<8x8xf32> to vector<8x8xbf16>
    %244 = arith.truncf %242 : vector<8x16xf32> to vector<8x16xbf16>
    %cst_81 = arith.constant dense<0.000000e+00> : vector<8x16xf32>
    %245 = tpu.matmul %243, %244, %cst_81 {dimension_numbers = #tpu.dot_dimension_numbers<[1], [0], [0], [1], [0, 0, 1, 1], [], []>} : vector<8x8xbf16>, vector<8x16xbf16>, vector<8x16xf32> -> vector<8x16xf32>
    %246 = vector.extract_strided_slice %171 {offsets = [16, 0], sizes = [16, 64], strides = [1, 1]} : vector<64x64xbf16> to vector<16x64xbf16>
    %247 = arith.truncf %245 : vector<8x16xf32> to vector<8x16xbf16>
    %cst_82 = arith.constant dense<0.000000e+00> : vector<8x64xf32>
    %248 = tpu.matmul %247, %246, %cst_82 {dimension_numbers = #tpu.dot_dimension_numbers<[1], [0], [0], [1], [0, 0, 1, 1], [], []>} : vector<8x16xbf16>, vector<16x64xbf16>, vector<8x64xf32> -> vector<8x64xf32>
    %249 = arith.addf %224, %248 : vector<8x64xf32>
    %250 = vector.extract_strided_slice %196 {offsets = [0, 32], sizes = [8, 16], strides = [1, 1]} : vector<8x64xf32> to vector<8x16xf32>
    %cst_83 = arith.constant 2.500000e-01 : f32
    %251 = vector.broadcast %cst_83 : f32 to vector<8x16xf32>
    %252 = arith.mulf %250, %251 : vector<8x16xf32>
    %253 = vector.extract_strided_slice %197 {offsets = [0, 32], sizes = [8, 16], strides = [1, 1]} : vector<8x64xf32> to vector<8x16xf32>
    %254 = arith.truncf %252 : vector<8x16xf32> to vector<8x16xbf16>
    %255 = arith.truncf %253 : vector<8x16xf32> to vector<8x16xbf16>
    %cst_84 = arith.constant dense<0.000000e+00> : vector<8x8xf32>
    %256 = tpu.matmul %254, %255, %cst_84 {dimension_numbers = #tpu.dot_dimension_numbers<[1], [1], [0], [0], [0, 0, 1, 0], [], []>} : vector<8x16xbf16>, vector<8x16xbf16>, vector<8x8xf32> -> vector<8x8xf32>
    %257 = arith.addf %256, %165 : vector<8x8xf32>
    %cst_85 = arith.constant dense<0xFF800000> : vector<8xf32>
    %258 = vector.multi_reduction <maximumf>, %257, %cst_85 [1] : vector<8x8xf32> to vector<8xf32>
    %259 = vector.shape_cast %258 : vector<8xf32> to vector<8x1xf32>
    %260 = vector.broadcast %259 : vector<8x1xf32> to vector<8x8xf32>
    %261 = arith.subf %257, %260 : vector<8x8xf32>
    %262 = math.exp %261 : vector<8x8xf32>
    %cst_86 = arith.constant dense<0.000000e+00> : vector<8xf32>
    %263 = vector.multi_reduction <add>, %262, %cst_86 [1] : vector<8x8xf32> to vector<8xf32>
    %264 = vector.shape_cast %263 : vector<8xf32> to vector<8x1xf32>
    %265 = vector.broadcast %264 : vector<8x1xf32> to vector<8x8xf32>
    %266 = arith.divf %262, %265 : vector<8x8xf32>
    %267 = vector.extract_strided_slice %198 {offsets = [0, 32], sizes = [8, 16], strides = [1, 1]} : vector<8x64xf32> to vector<8x16xf32>
    %268 = arith.truncf %266 : vector<8x8xf32> to vector<8x8xbf16>
    %269 = arith.truncf %267 : vector<8x16xf32> to vector<8x16xbf16>
    %cst_87 = arith.constant dense<0.000000e+00> : vector<8x16xf32>
    %270 = tpu.matmul %268, %269, %cst_87 {dimension_numbers = #tpu.dot_dimension_numbers<[1], [0], [0], [1], [0, 0, 1, 1], [], []>} : vector<8x8xbf16>, vector<8x16xbf16>, vector<8x16xf32> -> vector<8x16xf32>
    %271 = vector.extract_strided_slice %171 {offsets = [32, 0], sizes = [16, 64], strides = [1, 1]} : vector<64x64xbf16> to vector<16x64xbf16>
    %272 = arith.truncf %270 : vector<8x16xf32> to vector<8x16xbf16>
    %cst_88 = arith.constant dense<0.000000e+00> : vector<8x64xf32>
    %273 = tpu.matmul %272, %271, %cst_88 {dimension_numbers = #tpu.dot_dimension_numbers<[1], [0], [0], [1], [0, 0, 1, 1], [], []>} : vector<8x16xbf16>, vector<16x64xbf16>, vector<8x64xf32> -> vector<8x64xf32>
    %274 = arith.addf %249, %273 : vector<8x64xf32>
    %275 = vector.extract_strided_slice %196 {offsets = [0, 48], sizes = [8, 16], strides = [1, 1]} : vector<8x64xf32> to vector<8x16xf32>
    %cst_89 = arith.constant 2.500000e-01 : f32
    %276 = vector.broadcast %cst_89 : f32 to vector<8x16xf32>
    %277 = arith.mulf %275, %276 : vector<8x16xf32>
    %278 = vector.extract_strided_slice %197 {offsets = [0, 48], sizes = [8, 16], strides = [1, 1]} : vector<8x64xf32> to vector<8x16xf32>
    %279 = arith.truncf %277 : vector<8x16xf32> to vector<8x16xbf16>
    %280 = arith.truncf %278 : vector<8x16xf32> to vector<8x16xbf16>
    %cst_90 = arith.constant dense<0.000000e+00> : vector<8x8xf32>
    %281 = tpu.matmul %279, %280, %cst_90 {dimension_numbers = #tpu.dot_dimension_numbers<[1], [1], [0], [0], [0, 0, 1, 0], [], []>} : vector<8x16xbf16>, vector<8x16xbf16>, vector<8x8xf32> -> vector<8x8xf32>
    %282 = arith.addf %281, %165 : vector<8x8xf32>
    %cst_91 = arith.constant dense<0xFF800000> : vector<8xf32>
    %283 = vector.multi_reduction <maximumf>, %282, %cst_91 [1] : vector<8x8xf32> to vector<8xf32>
    %284 = vector.shape_cast %283 : vector<8xf32> to vector<8x1xf32>
    %285 = vector.broadcast %284 : vector<8x1xf32> to vector<8x8xf32>
    %286 = arith.subf %282, %285 : vector<8x8xf32>
    %287 = math.exp %286 : vector<8x8xf32>
    %cst_92 = arith.constant dense<0.000000e+00> : vector<8xf32>
    %288 = vector.multi_reduction <add>, %287, %cst_92 [1] : vector<8x8xf32> to vector<8xf32>
    %289 = vector.shape_cast %288 : vector<8xf32> to vector<8x1xf32>
    %290 = vector.broadcast %289 : vector<8x1xf32> to vector<8x8xf32>
    %291 = arith.divf %287, %290 : vector<8x8xf32>
    %292 = vector.extract_strided_slice %198 {offsets = [0, 48], sizes = [8, 16], strides = [1, 1]} : vector<8x64xf32> to vector<8x16xf32>
    %293 = arith.truncf %291 : vector<8x8xf32> to vector<8x8xbf16>
    %294 = arith.truncf %292 : vector<8x16xf32> to vector<8x16xbf16>
    %cst_93 = arith.constant dense<0.000000e+00> : vector<8x16xf32>
    %295 = tpu.matmul %293, %294, %cst_93 {dimension_numbers = #tpu.dot_dimension_numbers<[1], [0], [0], [1], [0, 0, 1, 1], [], []>} : vector<8x8xbf16>, vector<8x16xbf16>, vector<8x16xf32> -> vector<8x16xf32>
    %296 = vector.extract_strided_slice %171 {offsets = [48, 0], sizes = [16, 64], strides = [1, 1]} : vector<64x64xbf16> to vector<16x64xbf16>
    %297 = arith.truncf %295 : vector<8x16xf32> to vector<8x16xbf16>
    %cst_94 = arith.constant dense<0.000000e+00> : vector<8x64xf32>
    %298 = tpu.matmul %297, %296, %cst_94 {dimension_numbers = #tpu.dot_dimension_numbers<[1], [0], [0], [1], [0, 0, 1, 1], [], []>} : vector<8x16xbf16>, vector<16x64xbf16>, vector<8x64xf32> -> vector<8x64xf32>
    %299 = arith.addf %274, %298 : vector<8x64xf32>
    %300 = vector.extract_strided_slice %179 {offsets = [8, 0], sizes = [8, 64], strides = [1, 1]} : vector<16x64xf32> to vector<8x64xf32>
    %301 = vector.extract_strided_slice %187 {offsets = [8, 0], sizes = [8, 64], strides = [1, 1]} : vector<16x64xf32> to vector<8x64xf32>
    %302 = vector.extract_strided_slice %195 {offsets = [8, 0], sizes = [8, 64], strides = [1, 1]} : vector<16x64xf32> to vector<8x64xf32>
    %cst_95 = arith.constant 0.000000e+00 : f32
    %303 = vector.broadcast %cst_95 : f32 to vector<8x64xf32>
    %304 = vector.extract_strided_slice %300 {offsets = [0, 0], sizes = [8, 16], strides = [1, 1]} : vector<8x64xf32> to vector<8x16xf32>
    %cst_96 = arith.constant 2.500000e-01 : f32
    %305 = vector.broadcast %cst_96 : f32 to vector<8x16xf32>
    %306 = arith.mulf %304, %305 : vector<8x16xf32>
    %307 = vector.extract_strided_slice %301 {offsets = [0, 0], sizes = [8, 16], strides = [1, 1]} : vector<8x64xf32> to vector<8x16xf32>
    %308 = arith.truncf %306 : vector<8x16xf32> to vector<8x16xbf16>
    %309 = arith.truncf %307 : vector<8x16xf32> to vector<8x16xbf16>
    %cst_97 = arith.constant dense<0.000000e+00> : vector<8x8xf32>
    %310 = tpu.matmul %308, %309, %cst_97 {dimension_numbers = #tpu.dot_dimension_numbers<[1], [1], [0], [0], [0, 0, 1, 0], [], []>} : vector<8x16xbf16>, vector<8x16xbf16>, vector<8x8xf32> -> vector<8x8xf32>
    %311 = arith.addf %310, %165 : vector<8x8xf32>
    %cst_98 = arith.constant dense<0xFF800000> : vector<8xf32>
    %312 = vector.multi_reduction <maximumf>, %311, %cst_98 [1] : vector<8x8xf32> to vector<8xf32>
    %313 = vector.shape_cast %312 : vector<8xf32> to vector<8x1xf32>
    %314 = vector.broadcast %313 : vector<8x1xf32> to vector<8x8xf32>
    %315 = arith.subf %311, %314 : vector<8x8xf32>
    %316 = math.exp %315 : vector<8x8xf32>
    %cst_99 = arith.constant dense<0.000000e+00> : vector<8xf32>
    %317 = vector.multi_reduction <add>, %316, %cst_99 [1] : vector<8x8xf32> to vector<8xf32>
    %318 = vector.shape_cast %317 : vector<8xf32> to vector<8x1xf32>
    %319 = vector.broadcast %318 : vector<8x1xf32> to vector<8x8xf32>
    %320 = arith.divf %316, %319 : vector<8x8xf32>
    %321 = vector.extract_strided_slice %302 {offsets = [0, 0], sizes = [8, 16], strides = [1, 1]} : vector<8x64xf32> to vector<8x16xf32>
    %322 = arith.truncf %320 : vector<8x8xf32> to vector<8x8xbf16>
    %323 = arith.truncf %321 : vector<8x16xf32> to vector<8x16xbf16>
    %cst_100 = arith.constant dense<0.000000e+00> : vector<8x16xf32>
    %324 = tpu.matmul %322, %323, %cst_100 {dimension_numbers = #tpu.dot_dimension_numbers<[1], [0], [0], [1], [0, 0, 1, 1], [], []>} : vector<8x8xbf16>, vector<8x16xbf16>, vector<8x16xf32> -> vector<8x16xf32>
    %325 = vector.extract_strided_slice %171 {offsets = [0, 0], sizes = [16, 64], strides = [1, 1]} : vector<64x64xbf16> to vector<16x64xbf16>
    %326 = arith.truncf %324 : vector<8x16xf32> to vector<8x16xbf16>
    %cst_101 = arith.constant dense<0.000000e+00> : vector<8x64xf32>
    %327 = tpu.matmul %326, %325, %cst_101 {dimension_numbers = #tpu.dot_dimension_numbers<[1], [0], [0], [1], [0, 0, 1, 1], [], []>} : vector<8x16xbf16>, vector<16x64xbf16>, vector<8x64xf32> -> vector<8x64xf32>
    %328 = arith.addf %303, %327 : vector<8x64xf32>
    %329 = vector.extract_strided_slice %300 {offsets = [0, 16], sizes = [8, 16], strides = [1, 1]} : vector<8x64xf32> to vector<8x16xf32>
    %cst_102 = arith.constant 2.500000e-01 : f32
    %330 = vector.broadcast %cst_102 : f32 to vector<8x16xf32>
    %331 = arith.mulf %329, %330 : vector<8x16xf32>
    %332 = vector.extract_strided_slice %301 {offsets = [0, 16], sizes = [8, 16], strides = [1, 1]} : vector<8x64xf32> to vector<8x16xf32>
    %333 = arith.truncf %331 : vector<8x16xf32> to vector<8x16xbf16>
    %334 = arith.truncf %332 : vector<8x16xf32> to vector<8x16xbf16>
    %cst_103 = arith.constant dense<0.000000e+00> : vector<8x8xf32>
    %335 = tpu.matmul %333, %334, %cst_103 {dimension_numbers = #tpu.dot_dimension_numbers<[1], [1], [0], [0], [0, 0, 1, 0], [], []>} : vector<8x16xbf16>, vector<8x16xbf16>, vector<8x8xf32> -> vector<8x8xf32>
    %336 = arith.addf %335, %165 : vector<8x8xf32>
    %cst_104 = arith.constant dense<0xFF800000> : vector<8xf32>
    %337 = vector.multi_reduction <maximumf>, %336, %cst_104 [1] : vector<8x8xf32> to vector<8xf32>
    %338 = vector.shape_cast %337 : vector<8xf32> to vector<8x1xf32>
    %339 = vector.broadcast %338 : vector<8x1xf32> to vector<8x8xf32>
    %340 = arith.subf %336, %339 : vector<8x8xf32>
    %341 = math.exp %340 : vector<8x8xf32>
    %cst_105 = arith.constant dense<0.000000e+00> : vector<8xf32>
    %342 = vector.multi_reduction <add>, %341, %cst_105 [1] : vector<8x8xf32> to vector<8xf32>
    %343 = vector.shape_cast %342 : vector<8xf32> to vector<8x1xf32>
    %344 = vector.broadcast %343 : vector<8x1xf32> to vector<8x8xf32>
    %345 = arith.divf %341, %344 : vector<8x8xf32>
    %346 = vector.extract_strided_slice %302 {offsets = [0, 16], sizes = [8, 16], strides = [1, 1]} : vector<8x64xf32> to vector<8x16xf32>
    %347 = arith.truncf %345 : vector<8x8xf32> to vector<8x8xbf16>
    %348 = arith.truncf %346 : vector<8x16xf32> to vector<8x16xbf16>
    %cst_106 = arith.constant dense<0.000000e+00> : vector<8x16xf32>
    %349 = tpu.matmul %347, %348, %cst_106 {dimension_numbers = #tpu.dot_dimension_numbers<[1], [0], [0], [1], [0, 0, 1, 1], [], []>} : vector<8x8xbf16>, vector<8x16xbf16>, vector<8x16xf32> -> vector<8x16xf32>
    %350 = vector.extract_strided_slice %171 {offsets = [16, 0], sizes = [16, 64], strides = [1, 1]} : vector<64x64xbf16> to vector<16x64xbf16>
    %351 = arith.truncf %349 : vector<8x16xf32> to vector<8x16xbf16>
    %cst_107 = arith.constant dense<0.000000e+00> : vector<8x64xf32>
    %352 = tpu.matmul %351, %350, %cst_107 {dimension_numbers = #tpu.dot_dimension_numbers<[1], [0], [0], [1], [0, 0, 1, 1], [], []>} : vector<8x16xbf16>, vector<16x64xbf16>, vector<8x64xf32> -> vector<8x64xf32>
    %353 = arith.addf %328, %352 : vector<8x64xf32>
    %354 = vector.extract_strided_slice %300 {offsets = [0, 32], sizes = [8, 16], strides = [1, 1]} : vector<8x64xf32> to vector<8x16xf32>
    %cst_108 = arith.constant 2.500000e-01 : f32
    %355 = vector.broadcast %cst_108 : f32 to vector<8x16xf32>
    %356 = arith.mulf %354, %355 : vector<8x16xf32>
    %357 = vector.extract_strided_slice %301 {offsets = [0, 32], sizes = [8, 16], strides = [1, 1]} : vector<8x64xf32> to vector<8x16xf32>
    %358 = arith.truncf %356 : vector<8x16xf32> to vector<8x16xbf16>
    %359 = arith.truncf %357 : vector<8x16xf32> to vector<8x16xbf16>
    %cst_109 = arith.constant dense<0.000000e+00> : vector<8x8xf32>
    %360 = tpu.matmul %358, %359, %cst_109 {dimension_numbers = #tpu.dot_dimension_numbers<[1], [1], [0], [0], [0, 0, 1, 0], [], []>} : vector<8x16xbf16>, vector<8x16xbf16>, vector<8x8xf32> -> vector<8x8xf32>
    %361 = arith.addf %360, %165 : vector<8x8xf32>
    %cst_110 = arith.constant dense<0xFF800000> : vector<8xf32>
    %362 = vector.multi_reduction <maximumf>, %361, %cst_110 [1] : vector<8x8xf32> to vector<8xf32>
    %363 = vector.shape_cast %362 : vector<8xf32> to vector<8x1xf32>
    %364 = vector.broadcast %363 : vector<8x1xf32> to vector<8x8xf32>
    %365 = arith.subf %361, %364 : vector<8x8xf32>
    %366 = math.exp %365 : vector<8x8xf32>
    %cst_111 = arith.constant dense<0.000000e+00> : vector<8xf32>
    %367 = vector.multi_reduction <add>, %366, %cst_111 [1] : vector<8x8xf32> to vector<8xf32>
    %368 = vector.shape_cast %367 : vector<8xf32> to vector<8x1xf32>
    %369 = vector.broadcast %368 : vector<8x1xf32> to vector<8x8xf32>
    %370 = arith.divf %366, %369 : vector<8x8xf32>
    %371 = vector.extract_strided_slice %302 {offsets = [0, 32], sizes = [8, 16], strides = [1, 1]} : vector<8x64xf32> to vector<8x16xf32>
    %372 = arith.truncf %370 : vector<8x8xf32> to vector<8x8xbf16>
    %373 = arith.truncf %371 : vector<8x16xf32> to vector<8x16xbf16>
    %cst_112 = arith.constant dense<0.000000e+00> : vector<8x16xf32>
    %374 = tpu.matmul %372, %373, %cst_112 {dimension_numbers = #tpu.dot_dimension_numbers<[1], [0], [0], [1], [0, 0, 1, 1], [], []>} : vector<8x8xbf16>, vector<8x16xbf16>, vector<8x16xf32> -> vector<8x16xf32>
    %375 = vector.extract_strided_slice %171 {offsets = [32, 0], sizes = [16, 64], strides = [1, 1]} : vector<64x64xbf16> to vector<16x64xbf16>
    %376 = arith.truncf %374 : vector<8x16xf32> to vector<8x16xbf16>
    %cst_113 = arith.constant dense<0.000000e+00> : vector<8x64xf32>
    %377 = tpu.matmul %376, %375, %cst_113 {dimension_numbers = #tpu.dot_dimension_numbers<[1], [0], [0], [1], [0, 0, 1, 1], [], []>} : vector<8x16xbf16>, vector<16x64xbf16>, vector<8x64xf32> -> vector<8x64xf32>
    %378 = arith.addf %353, %377 : vector<8x64xf32>
    %379 = vector.extract_strided_slice %300 {offsets = [0, 48], sizes = [8, 16], strides = [1, 1]} : vector<8x64xf32> to vector<8x16xf32>
    %cst_114 = arith.constant 2.500000e-01 : f32
    %380 = vector.broadcast %cst_114 : f32 to vector<8x16xf32>
    %381 = arith.mulf %379, %380 : vector<8x16xf32>
    %382 = vector.extract_strided_slice %301 {offsets = [0, 48], sizes = [8, 16], strides = [1, 1]} : vector<8x64xf32> to vector<8x16xf32>
    %383 = arith.truncf %381 : vector<8x16xf32> to vector<8x16xbf16>
    %384 = arith.truncf %382 : vector<8x16xf32> to vector<8x16xbf16>
    %cst_115 = arith.constant dense<0.000000e+00> : vector<8x8xf32>
    %385 = tpu.matmul %383, %384, %cst_115 {dimension_numbers = #tpu.dot_dimension_numbers<[1], [1], [0], [0], [0, 0, 1, 0], [], []>} : vector<8x16xbf16>, vector<8x16xbf16>, vector<8x8xf32> -> vector<8x8xf32>
    %386 = arith.addf %385, %165 : vector<8x8xf32>
    %cst_116 = arith.constant dense<0xFF800000> : vector<8xf32>
    %387 = vector.multi_reduction <maximumf>, %386, %cst_116 [1] : vector<8x8xf32> to vector<8xf32>
    %388 = vector.shape_cast %387 : vector<8xf32> to vector<8x1xf32>
    %389 = vector.broadcast %388 : vector<8x1xf32> to vector<8x8xf32>
    %390 = arith.subf %386, %389 : vector<8x8xf32>
    %391 = math.exp %390 : vector<8x8xf32>
    %cst_117 = arith.constant dense<0.000000e+00> : vector<8xf32>
    %392 = vector.multi_reduction <add>, %391, %cst_117 [1] : vector<8x8xf32> to vector<8xf32>
    %393 = vector.shape_cast %392 : vector<8xf32> to vector<8x1xf32>
    %394 = vector.broadcast %393 : vector<8x1xf32> to vector<8x8xf32>
    %395 = arith.divf %391, %394 : vector<8x8xf32>
    %396 = vector.extract_strided_slice %302 {offsets = [0, 48], sizes = [8, 16], strides = [1, 1]} : vector<8x64xf32> to vector<8x16xf32>
    %397 = arith.truncf %395 : vector<8x8xf32> to vector<8x8xbf16>
    %398 = arith.truncf %396 : vector<8x16xf32> to vector<8x16xbf16>
    %cst_118 = arith.constant dense<0.000000e+00> : vector<8x16xf32>
    %399 = tpu.matmul %397, %398, %cst_118 {dimension_numbers = #tpu.dot_dimension_numbers<[1], [0], [0], [1], [0, 0, 1, 1], [], []>} : vector<8x8xbf16>, vector<8x16xbf16>, vector<8x16xf32> -> vector<8x16xf32>
    %400 = vector.extract_strided_slice %171 {offsets = [48, 0], sizes = [16, 64], strides = [1, 1]} : vector<64x64xbf16> to vector<16x64xbf16>
    %401 = arith.truncf %399 : vector<8x16xf32> to vector<8x16xbf16>
    %cst_119 = arith.constant dense<0.000000e+00> : vector<8x64xf32>
    %402 = tpu.matmul %401, %400, %cst_119 {dimension_numbers = #tpu.dot_dimension_numbers<[1], [0], [0], [1], [0, 0, 1, 1], [], []>} : vector<8x16xbf16>, vector<16x64xbf16>, vector<8x64xf32> -> vector<8x64xf32>
    %403 = arith.addf %378, %402 : vector<8x64xf32>
    %404 = tpu.concatenate %299, %403 in 0 : vector<8x64xf32>, vector<8x64xf32> -> vector<16x64xf32>
    %c0_120 = arith.constant 0 : index
    %c0_121 = arith.constant 0 : index
    %c0_122 = arith.constant 0 : index
    %405 = vector.load %arg13[%c0_120, %c0_121, %c0_122] : memref<2x1x64xf32, #tpu.memory_space<vmem>>, vector<1x1x64xf32>
    %406 = vector.shape_cast %405 : vector<1x1x64xf32> to vector<1x64xf32>
    %407 = vector.broadcast %406 : vector<1x64xf32> to vector<16x64xf32>
    %408 = arith.addf %404, %407 : vector<16x64xf32>
    %409 = arith.addf %408, %159 : vector<16x64xf32>
    %c0_123 = arith.constant 0 : index
    %c0_124 = arith.constant 0 : index
    %c0_125 = arith.constant 0 : index
    %410 = vector.load %arg14[%c0_123, %c0_124, %c0_125] : memref<2x1x64xf32, #tpu.memory_space<vmem>>, vector<1x1x64xf32>
    %411 = vector.shape_cast %410 : vector<1x1x64xf32> to vector<1x64xf32>
    %c0_126 = arith.constant 0 : index
    %c0_127 = arith.constant 0 : index
    %c0_128 = arith.constant 0 : index
    %412 = vector.load %arg15[%c0_126, %c0_127, %c0_128] : memref<2x1x64xf32, #tpu.memory_space<vmem>>, vector<1x1x64xf32>
    %413 = vector.shape_cast %412 : vector<1x1x64xf32> to vector<1x64xf32>
    %cst_129 = arith.constant dense<0.000000e+00> : vector<16xf32>
    %414 = vector.multi_reduction <add>, %409, %cst_129 [1] : vector<16x64xf32> to vector<16xf32>
    %415 = vector.shape_cast %414 : vector<16xf32> to vector<16x1xf32>
    %cst_130 = arith.constant 6.400000e+01 : f32
    %416 = vector.broadcast %cst_130 : f32 to vector<16x1xf32>
    %417 = arith.divf %415, %416 : vector<16x1xf32>
    %418 = vector.broadcast %417 : vector<16x1xf32> to vector<16x64xf32>
    %419 = arith.subf %409, %418 : vector<16x64xf32>
    %420 = arith.mulf %419, %419 : vector<16x64xf32>
    %cst_131 = arith.constant dense<0.000000e+00> : vector<16xf32>
    %421 = vector.multi_reduction <add>, %420, %cst_131 [1] : vector<16x64xf32> to vector<16xf32>
    %422 = vector.shape_cast %421 : vector<16xf32> to vector<16x1xf32>
    %cst_132 = arith.constant 6.400000e+01 : f32
    %423 = vector.broadcast %cst_132 : f32 to vector<16x1xf32>
    %424 = arith.divf %422, %423 : vector<16x1xf32>
    %425 = vector.broadcast %417 : vector<16x1xf32> to vector<16x64xf32>
    %426 = arith.subf %409, %425 : vector<16x64xf32>
    %cst_133 = arith.constant 9.99999974E-6 : f32
    %427 = vector.broadcast %cst_133 : f32 to vector<16x1xf32>
    %428 = arith.addf %424, %427 : vector<16x1xf32>
    %429 = math.rsqrt %428 : vector<16x1xf32>
    %430 = vector.broadcast %429 : vector<16x1xf32> to vector<16x64xf32>
    %431 = arith.mulf %426, %430 : vector<16x64xf32>
    %432 = vector.broadcast %411 : vector<1x64xf32> to vector<16x64xf32>
    %433 = arith.mulf %431, %432 : vector<16x64xf32>
    %434 = vector.broadcast %413 : vector<1x64xf32> to vector<16x64xf32>
    %435 = arith.addf %433, %434 : vector<16x64xf32>
    %c0_134 = arith.constant 0 : index
    %c0_135 = arith.constant 0 : index
    %c0_136 = arith.constant 0 : index
    %436 = vector.load %arg16[%c0_134, %c0_135, %c0_136] : memref<2x64x128xbf16, #tpu.memory_space<vmem>>, vector<1x64x128xbf16>
    %437 = vector.shape_cast %436 : vector<1x64x128xbf16> to vector<64x128xbf16>
    %438 = arith.truncf %435 : vector<16x64xf32> to vector<16x64xbf16>
    %cst_137 = arith.constant dense<0.000000e+00> : vector<16x128xf32>
    %439 = tpu.matmul %438, %437, %cst_137 {dimension_numbers = #tpu.dot_dimension_numbers<[1], [0], [0], [1], [0, 0, 1, 1], [], []>} : vector<16x64xbf16>, vector<64x128xbf16>, vector<16x128xf32> -> vector<16x128xf32>
    %c0_138 = arith.constant 0 : index
    %c0_139 = arith.constant 0 : index
    %c0_140 = arith.constant 0 : index
    %440 = vector.load %arg17[%c0_138, %c0_139, %c0_140] : memref<2x1x128xf32, #tpu.memory_space<vmem>>, vector<1x1x128xf32>
    %441 = vector.shape_cast %440 : vector<1x1x128xf32> to vector<1x128xf32>
    %442 = vector.broadcast %441 : vector<1x128xf32> to vector<16x128xf32>
    %443 = arith.addf %439, %442 : vector<16x128xf32>
    %cst_141 = arith.constant 0.000000e+00 : f32
    %444 = vector.broadcast %cst_141 : f32 to vector<16x128xf32>
    %445 = arith.maximumf %443, %444 : vector<16x128xf32>
    %c0_142 = arith.constant 0 : index
    %c0_143 = arith.constant 0 : index
    %c0_144 = arith.constant 0 : index
    %446 = vector.load %arg18[%c0_142, %c0_143, %c0_144] : memref<2x128x64xbf16, #tpu.memory_space<vmem>>, vector<1x128x64xbf16>
    %447 = vector.shape_cast %446 : vector<1x128x64xbf16> to vector<128x64xbf16>
    %448 = arith.truncf %445 : vector<16x128xf32> to vector<16x128xbf16>
    %cst_145 = arith.constant dense<0.000000e+00> : vector<16x64xf32>
    %449 = tpu.matmul %448, %447, %cst_145 {dimension_numbers = #tpu.dot_dimension_numbers<[1], [0], [0], [1], [0, 0, 1, 1], [], []>} : vector<16x128xbf16>, vector<128x64xbf16>, vector<16x64xf32> -> vector<16x64xf32>
    %c0_146 = arith.constant 0 : index
    %c0_147 = arith.constant 0 : index
    %c0_148 = arith.constant 0 : index
    %450 = vector.load %arg19[%c0_146, %c0_147, %c0_148] : memref<2x1x64xf32, #tpu.memory_space<vmem>>, vector<1x1x64xf32>
    %451 = vector.shape_cast %450 : vector<1x1x64xf32> to vector<1x64xf32>
    %452 = vector.broadcast %451 : vector<1x64xf32> to vector<16x64xf32>
    %453 = arith.addf %449, %452 : vector<16x64xf32>
    %454 = arith.addf %453, %435 : vector<16x64xf32>
    %c0_149 = arith.constant 0 : index
    %c0_150 = arith.constant 0 : index
    %c0_151 = arith.constant 0 : index
    %455 = vector.load %arg20[%c0_149, %c0_150, %c0_151] : memref<2x1x64xf32, #tpu.memory_space<vmem>>, vector<1x1x64xf32>
    %456 = vector.shape_cast %455 : vector<1x1x64xf32> to vector<1x64xf32>
    %c0_152 = arith.constant 0 : index
    %c0_153 = arith.constant 0 : index
    %c0_154 = arith.constant 0 : index
    %457 = vector.load %arg21[%c0_152, %c0_153, %c0_154] : memref<2x1x64xf32, #tpu.memory_space<vmem>>, vector<1x1x64xf32>
    %458 = vector.shape_cast %457 : vector<1x1x64xf32> to vector<1x64xf32>
    %cst_155 = arith.constant dense<0.000000e+00> : vector<16xf32>
    %459 = vector.multi_reduction <add>, %454, %cst_155 [1] : vector<16x64xf32> to vector<16xf32>
    %460 = vector.shape_cast %459 : vector<16xf32> to vector<16x1xf32>
    %cst_156 = arith.constant 6.400000e+01 : f32
    %461 = vector.broadcast %cst_156 : f32 to vector<16x1xf32>
    %462 = arith.divf %460, %461 : vector<16x1xf32>
    %463 = vector.broadcast %462 : vector<16x1xf32> to vector<16x64xf32>
    %464 = arith.subf %454, %463 : vector<16x64xf32>
    %465 = arith.mulf %464, %464 : vector<16x64xf32>
    %cst_157 = arith.constant dense<0.000000e+00> : vector<16xf32>
    %466 = vector.multi_reduction <add>, %465, %cst_157 [1] : vector<16x64xf32> to vector<16xf32>
    %467 = vector.shape_cast %466 : vector<16xf32> to vector<16x1xf32>
    %cst_158 = arith.constant 6.400000e+01 : f32
    %468 = vector.broadcast %cst_158 : f32 to vector<16x1xf32>
    %469 = arith.divf %467, %468 : vector<16x1xf32>
    %470 = vector.broadcast %462 : vector<16x1xf32> to vector<16x64xf32>
    %471 = arith.subf %454, %470 : vector<16x64xf32>
    %cst_159 = arith.constant 9.99999974E-6 : f32
    %472 = vector.broadcast %cst_159 : f32 to vector<16x1xf32>
    %473 = arith.addf %469, %472 : vector<16x1xf32>
    %474 = math.rsqrt %473 : vector<16x1xf32>
    %475 = vector.broadcast %474 : vector<16x1xf32> to vector<16x64xf32>
    %476 = arith.mulf %471, %475 : vector<16x64xf32>
    %477 = vector.broadcast %456 : vector<1x64xf32> to vector<16x64xf32>
    %478 = arith.mulf %476, %477 : vector<16x64xf32>
    %479 = vector.broadcast %458 : vector<1x64xf32> to vector<16x64xf32>
    %480 = arith.addf %478, %479 : vector<16x64xf32>
    %c1 = arith.constant 1 : index
    %c0_160 = arith.constant 0 : index
    %c0_161 = arith.constant 0 : index
    %c0_162 = arith.constant 0 : index
    %481 = vector.load %arg10[%c1, %c0_160, %c0_161, %c0_162] : memref<2x3x64x64xbf16, #tpu.memory_space<vmem>>, vector<1x3x64x64xbf16>
    %482 = vector.shape_cast %481 : vector<1x3x64x64xbf16> to vector<3x64x64xbf16>
    %c1_163 = arith.constant 1 : index
    %c0_164 = arith.constant 0 : index
    %c0_165 = arith.constant 0 : index
    %c0_166 = arith.constant 0 : index
    %483 = vector.load %arg11[%c1_163, %c0_164, %c0_165, %c0_166] : memref<2x3x1x64xf32, #tpu.memory_space<vmem>>, vector<1x3x1x64xf32>
    %484 = vector.shape_cast %483 : vector<1x3x1x64xf32> to vector<3x1x64xf32>
    %c1_167 = arith.constant 1 : index
    %c0_168 = arith.constant 0 : index
    %c0_169 = arith.constant 0 : index
    %485 = vector.load %arg12[%c1_167, %c0_168, %c0_169] : memref<2x64x64xbf16, #tpu.memory_space<vmem>>, vector<1x64x64xbf16>
    %486 = vector.shape_cast %485 : vector<1x64x64xbf16> to vector<64x64xbf16>
    %487 = vector.extract_strided_slice %482 {offsets = [0, 0, 0], sizes = [1, 64, 64], strides = [1, 1, 1]} : vector<3x64x64xbf16> to vector<1x64x64xbf16>
    %488 = vector.shape_cast %487 : vector<1x64x64xbf16> to vector<64x64xbf16>
    %489 = arith.truncf %480 : vector<16x64xf32> to vector<16x64xbf16>
    %cst_170 = arith.constant dense<0.000000e+00> : vector<16x64xf32>
    %490 = tpu.matmul %489, %488, %cst_170 {dimension_numbers = #tpu.dot_dimension_numbers<[1], [0], [0], [1], [0, 0, 1, 1], [], []>} : vector<16x64xbf16>, vector<64x64xbf16>, vector<16x64xf32> -> vector<16x64xf32>
    %491 = vector.extract_strided_slice %484 {offsets = [0, 0, 0], sizes = [1, 1, 64], strides = [1, 1, 1]} : vector<3x1x64xf32> to vector<1x1x64xf32>
    %492 = vector.shape_cast %491 : vector<1x1x64xf32> to vector<1x64xf32>
    %493 = vector.broadcast %492 : vector<1x64xf32> to vector<16x64xf32>
    %494 = arith.addf %490, %493 : vector<16x64xf32>
    %495 = vector.extract_strided_slice %482 {offsets = [1, 0, 0], sizes = [1, 64, 64], strides = [1, 1, 1]} : vector<3x64x64xbf16> to vector<1x64x64xbf16>
    %496 = vector.shape_cast %495 : vector<1x64x64xbf16> to vector<64x64xbf16>
    %497 = arith.truncf %480 : vector<16x64xf32> to vector<16x64xbf16>
    %cst_171 = arith.constant dense<0.000000e+00> : vector<16x64xf32>
    %498 = tpu.matmul %497, %496, %cst_171 {dimension_numbers = #tpu.dot_dimension_numbers<[1], [0], [0], [1], [0, 0, 1, 1], [], []>} : vector<16x64xbf16>, vector<64x64xbf16>, vector<16x64xf32> -> vector<16x64xf32>
    %499 = vector.extract_strided_slice %484 {offsets = [1, 0, 0], sizes = [1, 1, 64], strides = [1, 1, 1]} : vector<3x1x64xf32> to vector<1x1x64xf32>
    %500 = vector.shape_cast %499 : vector<1x1x64xf32> to vector<1x64xf32>
    %501 = vector.broadcast %500 : vector<1x64xf32> to vector<16x64xf32>
    %502 = arith.addf %498, %501 : vector<16x64xf32>
    %503 = vector.extract_strided_slice %482 {offsets = [2, 0, 0], sizes = [1, 64, 64], strides = [1, 1, 1]} : vector<3x64x64xbf16> to vector<1x64x64xbf16>
    %504 = vector.shape_cast %503 : vector<1x64x64xbf16> to vector<64x64xbf16>
    %505 = arith.truncf %480 : vector<16x64xf32> to vector<16x64xbf16>
    %cst_172 = arith.constant dense<0.000000e+00> : vector<16x64xf32>
    %506 = tpu.matmul %505, %504, %cst_172 {dimension_numbers = #tpu.dot_dimension_numbers<[1], [0], [0], [1], [0, 0, 1, 1], [], []>} : vector<16x64xbf16>, vector<64x64xbf16>, vector<16x64xf32> -> vector<16x64xf32>
    %507 = vector.extract_strided_slice %484 {offsets = [2, 0, 0], sizes = [1, 1, 64], strides = [1, 1, 1]} : vector<3x1x64xf32> to vector<1x1x64xf32>
    %508 = vector.shape_cast %507 : vector<1x1x64xf32> to vector<1x64xf32>
    %509 = vector.broadcast %508 : vector<1x64xf32> to vector<16x64xf32>
    %510 = arith.addf %506, %509 : vector<16x64xf32>
    %511 = vector.extract_strided_slice %494 {offsets = [0, 0], sizes = [8, 64], strides = [1, 1]} : vector<16x64xf32> to vector<8x64xf32>
    %512 = vector.extract_strided_slice %502 {offsets = [0, 0], sizes = [8, 64], strides = [1, 1]} : vector<16x64xf32> to vector<8x64xf32>
    %513 = vector.extract_strided_slice %510 {offsets = [0, 0], sizes = [8, 64], strides = [1, 1]} : vector<16x64xf32> to vector<8x64xf32>
    %cst_173 = arith.constant 0.000000e+00 : f32
    %514 = vector.broadcast %cst_173 : f32 to vector<8x64xf32>
    %515 = vector.extract_strided_slice %511 {offsets = [0, 0], sizes = [8, 16], strides = [1, 1]} : vector<8x64xf32> to vector<8x16xf32>
    %cst_174 = arith.constant 2.500000e-01 : f32
    %516 = vector.broadcast %cst_174 : f32 to vector<8x16xf32>
    %517 = arith.mulf %515, %516 : vector<8x16xf32>
    %518 = vector.extract_strided_slice %512 {offsets = [0, 0], sizes = [8, 16], strides = [1, 1]} : vector<8x64xf32> to vector<8x16xf32>
    %519 = arith.truncf %517 : vector<8x16xf32> to vector<8x16xbf16>
    %520 = arith.truncf %518 : vector<8x16xf32> to vector<8x16xbf16>
    %cst_175 = arith.constant dense<0.000000e+00> : vector<8x8xf32>
    %521 = tpu.matmul %519, %520, %cst_175 {dimension_numbers = #tpu.dot_dimension_numbers<[1], [1], [0], [0], [0, 0, 1, 0], [], []>} : vector<8x16xbf16>, vector<8x16xbf16>, vector<8x8xf32> -> vector<8x8xf32>
    %522 = arith.addf %521, %165 : vector<8x8xf32>
    %cst_176 = arith.constant dense<0xFF800000> : vector<8xf32>
    %523 = vector.multi_reduction <maximumf>, %522, %cst_176 [1] : vector<8x8xf32> to vector<8xf32>
    %524 = vector.shape_cast %523 : vector<8xf32> to vector<8x1xf32>
    %525 = vector.broadcast %524 : vector<8x1xf32> to vector<8x8xf32>
    %526 = arith.subf %522, %525 : vector<8x8xf32>
    %527 = math.exp %526 : vector<8x8xf32>
    %cst_177 = arith.constant dense<0.000000e+00> : vector<8xf32>
    %528 = vector.multi_reduction <add>, %527, %cst_177 [1] : vector<8x8xf32> to vector<8xf32>
    %529 = vector.shape_cast %528 : vector<8xf32> to vector<8x1xf32>
    %530 = vector.broadcast %529 : vector<8x1xf32> to vector<8x8xf32>
    %531 = arith.divf %527, %530 : vector<8x8xf32>
    %532 = vector.extract_strided_slice %513 {offsets = [0, 0], sizes = [8, 16], strides = [1, 1]} : vector<8x64xf32> to vector<8x16xf32>
    %533 = arith.truncf %531 : vector<8x8xf32> to vector<8x8xbf16>
    %534 = arith.truncf %532 : vector<8x16xf32> to vector<8x16xbf16>
    %cst_178 = arith.constant dense<0.000000e+00> : vector<8x16xf32>
    %535 = tpu.matmul %533, %534, %cst_178 {dimension_numbers = #tpu.dot_dimension_numbers<[1], [0], [0], [1], [0, 0, 1, 1], [], []>} : vector<8x8xbf16>, vector<8x16xbf16>, vector<8x16xf32> -> vector<8x16xf32>
    %536 = vector.extract_strided_slice %486 {offsets = [0, 0], sizes = [16, 64], strides = [1, 1]} : vector<64x64xbf16> to vector<16x64xbf16>
    %537 = arith.truncf %535 : vector<8x16xf32> to vector<8x16xbf16>
    %cst_179 = arith.constant dense<0.000000e+00> : vector<8x64xf32>
    %538 = tpu.matmul %537, %536, %cst_179 {dimension_numbers = #tpu.dot_dimension_numbers<[1], [0], [0], [1], [0, 0, 1, 1], [], []>} : vector<8x16xbf16>, vector<16x64xbf16>, vector<8x64xf32> -> vector<8x64xf32>
    %539 = arith.addf %514, %538 : vector<8x64xf32>
    %540 = vector.extract_strided_slice %511 {offsets = [0, 16], sizes = [8, 16], strides = [1, 1]} : vector<8x64xf32> to vector<8x16xf32>
    %cst_180 = arith.constant 2.500000e-01 : f32
    %541 = vector.broadcast %cst_180 : f32 to vector<8x16xf32>
    %542 = arith.mulf %540, %541 : vector<8x16xf32>
    %543 = vector.extract_strided_slice %512 {offsets = [0, 16], sizes = [8, 16], strides = [1, 1]} : vector<8x64xf32> to vector<8x16xf32>
    %544 = arith.truncf %542 : vector<8x16xf32> to vector<8x16xbf16>
    %545 = arith.truncf %543 : vector<8x16xf32> to vector<8x16xbf16>
    %cst_181 = arith.constant dense<0.000000e+00> : vector<8x8xf32>
    %546 = tpu.matmul %544, %545, %cst_181 {dimension_numbers = #tpu.dot_dimension_numbers<[1], [1], [0], [0], [0, 0, 1, 0], [], []>} : vector<8x16xbf16>, vector<8x16xbf16>, vector<8x8xf32> -> vector<8x8xf32>
    %547 = arith.addf %546, %165 : vector<8x8xf32>
    %cst_182 = arith.constant dense<0xFF800000> : vector<8xf32>
    %548 = vector.multi_reduction <maximumf>, %547, %cst_182 [1] : vector<8x8xf32> to vector<8xf32>
    %549 = vector.shape_cast %548 : vector<8xf32> to vector<8x1xf32>
    %550 = vector.broadcast %549 : vector<8x1xf32> to vector<8x8xf32>
    %551 = arith.subf %547, %550 : vector<8x8xf32>
    %552 = math.exp %551 : vector<8x8xf32>
    %cst_183 = arith.constant dense<0.000000e+00> : vector<8xf32>
    %553 = vector.multi_reduction <add>, %552, %cst_183 [1] : vector<8x8xf32> to vector<8xf32>
    %554 = vector.shape_cast %553 : vector<8xf32> to vector<8x1xf32>
    %555 = vector.broadcast %554 : vector<8x1xf32> to vector<8x8xf32>
    %556 = arith.divf %552, %555 : vector<8x8xf32>
    %557 = vector.extract_strided_slice %513 {offsets = [0, 16], sizes = [8, 16], strides = [1, 1]} : vector<8x64xf32> to vector<8x16xf32>
    %558 = arith.truncf %556 : vector<8x8xf32> to vector<8x8xbf16>
    %559 = arith.truncf %557 : vector<8x16xf32> to vector<8x16xbf16>
    %cst_184 = arith.constant dense<0.000000e+00> : vector<8x16xf32>
    %560 = tpu.matmul %558, %559, %cst_184 {dimension_numbers = #tpu.dot_dimension_numbers<[1], [0], [0], [1], [0, 0, 1, 1], [], []>} : vector<8x8xbf16>, vector<8x16xbf16>, vector<8x16xf32> -> vector<8x16xf32>
    %561 = vector.extract_strided_slice %486 {offsets = [16, 0], sizes = [16, 64], strides = [1, 1]} : vector<64x64xbf16> to vector<16x64xbf16>
    %562 = arith.truncf %560 : vector<8x16xf32> to vector<8x16xbf16>
    %cst_185 = arith.constant dense<0.000000e+00> : vector<8x64xf32>
    %563 = tpu.matmul %562, %561, %cst_185 {dimension_numbers = #tpu.dot_dimension_numbers<[1], [0], [0], [1], [0, 0, 1, 1], [], []>} : vector<8x16xbf16>, vector<16x64xbf16>, vector<8x64xf32> -> vector<8x64xf32>
    %564 = arith.addf %539, %563 : vector<8x64xf32>
    %565 = vector.extract_strided_slice %511 {offsets = [0, 32], sizes = [8, 16], strides = [1, 1]} : vector<8x64xf32> to vector<8x16xf32>
    %cst_186 = arith.constant 2.500000e-01 : f32
    %566 = vector.broadcast %cst_186 : f32 to vector<8x16xf32>
    %567 = arith.mulf %565, %566 : vector<8x16xf32>
    %568 = vector.extract_strided_slice %512 {offsets = [0, 32], sizes = [8, 16], strides = [1, 1]} : vector<8x64xf32> to vector<8x16xf32>
    %569 = arith.truncf %567 : vector<8x16xf32> to vector<8x16xbf16>
    %570 = arith.truncf %568 : vector<8x16xf32> to vector<8x16xbf16>
    %cst_187 = arith.constant dense<0.000000e+00> : vector<8x8xf32>
    %571 = tpu.matmul %569, %570, %cst_187 {dimension_numbers = #tpu.dot_dimension_numbers<[1], [1], [0], [0], [0, 0, 1, 0], [], []>} : vector<8x16xbf16>, vector<8x16xbf16>, vector<8x8xf32> -> vector<8x8xf32>
    %572 = arith.addf %571, %165 : vector<8x8xf32>
    %cst_188 = arith.constant dense<0xFF800000> : vector<8xf32>
    %573 = vector.multi_reduction <maximumf>, %572, %cst_188 [1] : vector<8x8xf32> to vector<8xf32>
    %574 = vector.shape_cast %573 : vector<8xf32> to vector<8x1xf32>
    %575 = vector.broadcast %574 : vector<8x1xf32> to vector<8x8xf32>
    %576 = arith.subf %572, %575 : vector<8x8xf32>
    %577 = math.exp %576 : vector<8x8xf32>
    %cst_189 = arith.constant dense<0.000000e+00> : vector<8xf32>
    %578 = vector.multi_reduction <add>, %577, %cst_189 [1] : vector<8x8xf32> to vector<8xf32>
    %579 = vector.shape_cast %578 : vector<8xf32> to vector<8x1xf32>
    %580 = vector.broadcast %579 : vector<8x1xf32> to vector<8x8xf32>
    %581 = arith.divf %577, %580 : vector<8x8xf32>
    %582 = vector.extract_strided_slice %513 {offsets = [0, 32], sizes = [8, 16], strides = [1, 1]} : vector<8x64xf32> to vector<8x16xf32>
    %583 = arith.truncf %581 : vector<8x8xf32> to vector<8x8xbf16>
    %584 = arith.truncf %582 : vector<8x16xf32> to vector<8x16xbf16>
    %cst_190 = arith.constant dense<0.000000e+00> : vector<8x16xf32>
    %585 = tpu.matmul %583, %584, %cst_190 {dimension_numbers = #tpu.dot_dimension_numbers<[1], [0], [0], [1], [0, 0, 1, 1], [], []>} : vector<8x8xbf16>, vector<8x16xbf16>, vector<8x16xf32> -> vector<8x16xf32>
    %586 = vector.extract_strided_slice %486 {offsets = [32, 0], sizes = [16, 64], strides = [1, 1]} : vector<64x64xbf16> to vector<16x64xbf16>
    %587 = arith.truncf %585 : vector<8x16xf32> to vector<8x16xbf16>
    %cst_191 = arith.constant dense<0.000000e+00> : vector<8x64xf32>
    %588 = tpu.matmul %587, %586, %cst_191 {dimension_numbers = #tpu.dot_dimension_numbers<[1], [0], [0], [1], [0, 0, 1, 1], [], []>} : vector<8x16xbf16>, vector<16x64xbf16>, vector<8x64xf32> -> vector<8x64xf32>
    %589 = arith.addf %564, %588 : vector<8x64xf32>
    %590 = vector.extract_strided_slice %511 {offsets = [0, 48], sizes = [8, 16], strides = [1, 1]} : vector<8x64xf32> to vector<8x16xf32>
    %cst_192 = arith.constant 2.500000e-01 : f32
    %591 = vector.broadcast %cst_192 : f32 to vector<8x16xf32>
    %592 = arith.mulf %590, %591 : vector<8x16xf32>
    %593 = vector.extract_strided_slice %512 {offsets = [0, 48], sizes = [8, 16], strides = [1, 1]} : vector<8x64xf32> to vector<8x16xf32>
    %594 = arith.truncf %592 : vector<8x16xf32> to vector<8x16xbf16>
    %595 = arith.truncf %593 : vector<8x16xf32> to vector<8x16xbf16>
    %cst_193 = arith.constant dense<0.000000e+00> : vector<8x8xf32>
    %596 = tpu.matmul %594, %595, %cst_193 {dimension_numbers = #tpu.dot_dimension_numbers<[1], [1], [0], [0], [0, 0, 1, 0], [], []>} : vector<8x16xbf16>, vector<8x16xbf16>, vector<8x8xf32> -> vector<8x8xf32>
    %597 = arith.addf %596, %165 : vector<8x8xf32>
    %cst_194 = arith.constant dense<0xFF800000> : vector<8xf32>
    %598 = vector.multi_reduction <maximumf>, %597, %cst_194 [1] : vector<8x8xf32> to vector<8xf32>
    %599 = vector.shape_cast %598 : vector<8xf32> to vector<8x1xf32>
    %600 = vector.broadcast %599 : vector<8x1xf32> to vector<8x8xf32>
    %601 = arith.subf %597, %600 : vector<8x8xf32>
    %602 = math.exp %601 : vector<8x8xf32>
    %cst_195 = arith.constant dense<0.000000e+00> : vector<8xf32>
    %603 = vector.multi_reduction <add>, %602, %cst_195 [1] : vector<8x8xf32> to vector<8xf32>
    %604 = vector.shape_cast %603 : vector<8xf32> to vector<8x1xf32>
    %605 = vector.broadcast %604 : vector<8x1xf32> to vector<8x8xf32>
    %606 = arith.divf %602, %605 : vector<8x8xf32>
    %607 = vector.extract_strided_slice %513 {offsets = [0, 48], sizes = [8, 16], strides = [1, 1]} : vector<8x64xf32> to vector<8x16xf32>
    %608 = arith.truncf %606 : vector<8x8xf32> to vector<8x8xbf16>
    %609 = arith.truncf %607 : vector<8x16xf32> to vector<8x16xbf16>
    %cst_196 = arith.constant dense<0.000000e+00> : vector<8x16xf32>
    %610 = tpu.matmul %608, %609, %cst_196 {dimension_numbers = #tpu.dot_dimension_numbers<[1], [0], [0], [1], [0, 0, 1, 1], [], []>} : vector<8x8xbf16>, vector<8x16xbf16>, vector<8x16xf32> -> vector<8x16xf32>
    %611 = vector.extract_strided_slice %486 {offsets = [48, 0], sizes = [16, 64], strides = [1, 1]} : vector<64x64xbf16> to vector<16x64xbf16>
    %612 = arith.truncf %610 : vector<8x16xf32> to vector<8x16xbf16>
    %cst_197 = arith.constant dense<0.000000e+00> : vector<8x64xf32>
    %613 = tpu.matmul %612, %611, %cst_197 {dimension_numbers = #tpu.dot_dimension_numbers<[1], [0], [0], [1], [0, 0, 1, 1], [], []>} : vector<8x16xbf16>, vector<16x64xbf16>, vector<8x64xf32> -> vector<8x64xf32>
    %614 = arith.addf %589, %613 : vector<8x64xf32>
    %615 = vector.extract_strided_slice %494 {offsets = [8, 0], sizes = [8, 64], strides = [1, 1]} : vector<16x64xf32> to vector<8x64xf32>
    %616 = vector.extract_strided_slice %502 {offsets = [8, 0], sizes = [8, 64], strides = [1, 1]} : vector<16x64xf32> to vector<8x64xf32>
    %617 = vector.extract_strided_slice %510 {offsets = [8, 0], sizes = [8, 64], strides = [1, 1]} : vector<16x64xf32> to vector<8x64xf32>
    %cst_198 = arith.constant 0.000000e+00 : f32
    %618 = vector.broadcast %cst_198 : f32 to vector<8x64xf32>
    %619 = vector.extract_strided_slice %615 {offsets = [0, 0], sizes = [8, 16], strides = [1, 1]} : vector<8x64xf32> to vector<8x16xf32>
    %cst_199 = arith.constant 2.500000e-01 : f32
    %620 = vector.broadcast %cst_199 : f32 to vector<8x16xf32>
    %621 = arith.mulf %619, %620 : vector<8x16xf32>
    %622 = vector.extract_strided_slice %616 {offsets = [0, 0], sizes = [8, 16], strides = [1, 1]} : vector<8x64xf32> to vector<8x16xf32>
    %623 = arith.truncf %621 : vector<8x16xf32> to vector<8x16xbf16>
    %624 = arith.truncf %622 : vector<8x16xf32> to vector<8x16xbf16>
    %cst_200 = arith.constant dense<0.000000e+00> : vector<8x8xf32>
    %625 = tpu.matmul %623, %624, %cst_200 {dimension_numbers = #tpu.dot_dimension_numbers<[1], [1], [0], [0], [0, 0, 1, 0], [], []>} : vector<8x16xbf16>, vector<8x16xbf16>, vector<8x8xf32> -> vector<8x8xf32>
    %626 = arith.addf %625, %165 : vector<8x8xf32>
    %cst_201 = arith.constant dense<0xFF800000> : vector<8xf32>
    %627 = vector.multi_reduction <maximumf>, %626, %cst_201 [1] : vector<8x8xf32> to vector<8xf32>
    %628 = vector.shape_cast %627 : vector<8xf32> to vector<8x1xf32>
    %629 = vector.broadcast %628 : vector<8x1xf32> to vector<8x8xf32>
    %630 = arith.subf %626, %629 : vector<8x8xf32>
    %631 = math.exp %630 : vector<8x8xf32>
    %cst_202 = arith.constant dense<0.000000e+00> : vector<8xf32>
    %632 = vector.multi_reduction <add>, %631, %cst_202 [1] : vector<8x8xf32> to vector<8xf32>
    %633 = vector.shape_cast %632 : vector<8xf32> to vector<8x1xf32>
    %634 = vector.broadcast %633 : vector<8x1xf32> to vector<8x8xf32>
    %635 = arith.divf %631, %634 : vector<8x8xf32>
    %636 = vector.extract_strided_slice %617 {offsets = [0, 0], sizes = [8, 16], strides = [1, 1]} : vector<8x64xf32> to vector<8x16xf32>
    %637 = arith.truncf %635 : vector<8x8xf32> to vector<8x8xbf16>
    %638 = arith.truncf %636 : vector<8x16xf32> to vector<8x16xbf16>
    %cst_203 = arith.constant dense<0.000000e+00> : vector<8x16xf32>
    %639 = tpu.matmul %637, %638, %cst_203 {dimension_numbers = #tpu.dot_dimension_numbers<[1], [0], [0], [1], [0, 0, 1, 1], [], []>} : vector<8x8xbf16>, vector<8x16xbf16>, vector<8x16xf32> -> vector<8x16xf32>
    %640 = vector.extract_strided_slice %486 {offsets = [0, 0], sizes = [16, 64], strides = [1, 1]} : vector<64x64xbf16> to vector<16x64xbf16>
    %641 = arith.truncf %639 : vector<8x16xf32> to vector<8x16xbf16>
    %cst_204 = arith.constant dense<0.000000e+00> : vector<8x64xf32>
    %642 = tpu.matmul %641, %640, %cst_204 {dimension_numbers = #tpu.dot_dimension_numbers<[1], [0], [0], [1], [0, 0, 1, 1], [], []>} : vector<8x16xbf16>, vector<16x64xbf16>, vector<8x64xf32> -> vector<8x64xf32>
    %643 = arith.addf %618, %642 : vector<8x64xf32>
    %644 = vector.extract_strided_slice %615 {offsets = [0, 16], sizes = [8, 16], strides = [1, 1]} : vector<8x64xf32> to vector<8x16xf32>
    %cst_205 = arith.constant 2.500000e-01 : f32
    %645 = vector.broadcast %cst_205 : f32 to vector<8x16xf32>
    %646 = arith.mulf %644, %645 : vector<8x16xf32>
    %647 = vector.extract_strided_slice %616 {offsets = [0, 16], sizes = [8, 16], strides = [1, 1]} : vector<8x64xf32> to vector<8x16xf32>
    %648 = arith.truncf %646 : vector<8x16xf32> to vector<8x16xbf16>
    %649 = arith.truncf %647 : vector<8x16xf32> to vector<8x16xbf16>
    %cst_206 = arith.constant dense<0.000000e+00> : vector<8x8xf32>
    %650 = tpu.matmul %648, %649, %cst_206 {dimension_numbers = #tpu.dot_dimension_numbers<[1], [1], [0], [0], [0, 0, 1, 0], [], []>} : vector<8x16xbf16>, vector<8x16xbf16>, vector<8x8xf32> -> vector<8x8xf32>
    %651 = arith.addf %650, %165 : vector<8x8xf32>
    %cst_207 = arith.constant dense<0xFF800000> : vector<8xf32>
    %652 = vector.multi_reduction <maximumf>, %651, %cst_207 [1] : vector<8x8xf32> to vector<8xf32>
    %653 = vector.shape_cast %652 : vector<8xf32> to vector<8x1xf32>
    %654 = vector.broadcast %653 : vector<8x1xf32> to vector<8x8xf32>
    %655 = arith.subf %651, %654 : vector<8x8xf32>
    %656 = math.exp %655 : vector<8x8xf32>
    %cst_208 = arith.constant dense<0.000000e+00> : vector<8xf32>
    %657 = vector.multi_reduction <add>, %656, %cst_208 [1] : vector<8x8xf32> to vector<8xf32>
    %658 = vector.shape_cast %657 : vector<8xf32> to vector<8x1xf32>
    %659 = vector.broadcast %658 : vector<8x1xf32> to vector<8x8xf32>
    %660 = arith.divf %656, %659 : vector<8x8xf32>
    %661 = vector.extract_strided_slice %617 {offsets = [0, 16], sizes = [8, 16], strides = [1, 1]} : vector<8x64xf32> to vector<8x16xf32>
    %662 = arith.truncf %660 : vector<8x8xf32> to vector<8x8xbf16>
    %663 = arith.truncf %661 : vector<8x16xf32> to vector<8x16xbf16>
    %cst_209 = arith.constant dense<0.000000e+00> : vector<8x16xf32>
    %664 = tpu.matmul %662, %663, %cst_209 {dimension_numbers = #tpu.dot_dimension_numbers<[1], [0], [0], [1], [0, 0, 1, 1], [], []>} : vector<8x8xbf16>, vector<8x16xbf16>, vector<8x16xf32> -> vector<8x16xf32>
    %665 = vector.extract_strided_slice %486 {offsets = [16, 0], sizes = [16, 64], strides = [1, 1]} : vector<64x64xbf16> to vector<16x64xbf16>
    %666 = arith.truncf %664 : vector<8x16xf32> to vector<8x16xbf16>
    %cst_210 = arith.constant dense<0.000000e+00> : vector<8x64xf32>
    %667 = tpu.matmul %666, %665, %cst_210 {dimension_numbers = #tpu.dot_dimension_numbers<[1], [0], [0], [1], [0, 0, 1, 1], [], []>} : vector<8x16xbf16>, vector<16x64xbf16>, vector<8x64xf32> -> vector<8x64xf32>
    %668 = arith.addf %643, %667 : vector<8x64xf32>
    %669 = vector.extract_strided_slice %615 {offsets = [0, 32], sizes = [8, 16], strides = [1, 1]} : vector<8x64xf32> to vector<8x16xf32>
    %cst_211 = arith.constant 2.500000e-01 : f32
    %670 = vector.broadcast %cst_211 : f32 to vector<8x16xf32>
    %671 = arith.mulf %669, %670 : vector<8x16xf32>
    %672 = vector.extract_strided_slice %616 {offsets = [0, 32], sizes = [8, 16], strides = [1, 1]} : vector<8x64xf32> to vector<8x16xf32>
    %673 = arith.truncf %671 : vector<8x16xf32> to vector<8x16xbf16>
    %674 = arith.truncf %672 : vector<8x16xf32> to vector<8x16xbf16>
    %cst_212 = arith.constant dense<0.000000e+00> : vector<8x8xf32>
    %675 = tpu.matmul %673, %674, %cst_212 {dimension_numbers = #tpu.dot_dimension_numbers<[1], [1], [0], [0], [0, 0, 1, 0], [], []>} : vector<8x16xbf16>, vector<8x16xbf16>, vector<8x8xf32> -> vector<8x8xf32>
    %676 = arith.addf %675, %165 : vector<8x8xf32>
    %cst_213 = arith.constant dense<0xFF800000> : vector<8xf32>
    %677 = vector.multi_reduction <maximumf>, %676, %cst_213 [1] : vector<8x8xf32> to vector<8xf32>
    %678 = vector.shape_cast %677 : vector<8xf32> to vector<8x1xf32>
    %679 = vector.broadcast %678 : vector<8x1xf32> to vector<8x8xf32>
    %680 = arith.subf %676, %679 : vector<8x8xf32>
    %681 = math.exp %680 : vector<8x8xf32>
    %cst_214 = arith.constant dense<0.000000e+00> : vector<8xf32>
    %682 = vector.multi_reduction <add>, %681, %cst_214 [1] : vector<8x8xf32> to vector<8xf32>
    %683 = vector.shape_cast %682 : vector<8xf32> to vector<8x1xf32>
    %684 = vector.broadcast %683 : vector<8x1xf32> to vector<8x8xf32>
    %685 = arith.divf %681, %684 : vector<8x8xf32>
    %686 = vector.extract_strided_slice %617 {offsets = [0, 32], sizes = [8, 16], strides = [1, 1]} : vector<8x64xf32> to vector<8x16xf32>
    %687 = arith.truncf %685 : vector<8x8xf32> to vector<8x8xbf16>
    %688 = arith.truncf %686 : vector<8x16xf32> to vector<8x16xbf16>
    %cst_215 = arith.constant dense<0.000000e+00> : vector<8x16xf32>
    %689 = tpu.matmul %687, %688, %cst_215 {dimension_numbers = #tpu.dot_dimension_numbers<[1], [0], [0], [1], [0, 0, 1, 1], [], []>} : vector<8x8xbf16>, vector<8x16xbf16>, vector<8x16xf32> -> vector<8x16xf32>
    %690 = vector.extract_strided_slice %486 {offsets = [32, 0], sizes = [16, 64], strides = [1, 1]} : vector<64x64xbf16> to vector<16x64xbf16>
    %691 = arith.truncf %689 : vector<8x16xf32> to vector<8x16xbf16>
    %cst_216 = arith.constant dense<0.000000e+00> : vector<8x64xf32>
    %692 = tpu.matmul %691, %690, %cst_216 {dimension_numbers = #tpu.dot_dimension_numbers<[1], [0], [0], [1], [0, 0, 1, 1], [], []>} : vector<8x16xbf16>, vector<16x64xbf16>, vector<8x64xf32> -> vector<8x64xf32>
    %693 = arith.addf %668, %692 : vector<8x64xf32>
    %694 = vector.extract_strided_slice %615 {offsets = [0, 48], sizes = [8, 16], strides = [1, 1]} : vector<8x64xf32> to vector<8x16xf32>
    %cst_217 = arith.constant 2.500000e-01 : f32
    %695 = vector.broadcast %cst_217 : f32 to vector<8x16xf32>
    %696 = arith.mulf %694, %695 : vector<8x16xf32>
    %697 = vector.extract_strided_slice %616 {offsets = [0, 48], sizes = [8, 16], strides = [1, 1]} : vector<8x64xf32> to vector<8x16xf32>
    %698 = arith.truncf %696 : vector<8x16xf32> to vector<8x16xbf16>
    %699 = arith.truncf %697 : vector<8x16xf32> to vector<8x16xbf16>
    %cst_218 = arith.constant dense<0.000000e+00> : vector<8x8xf32>
    %700 = tpu.matmul %698, %699, %cst_218 {dimension_numbers = #tpu.dot_dimension_numbers<[1], [1], [0], [0], [0, 0, 1, 0], [], []>} : vector<8x16xbf16>, vector<8x16xbf16>, vector<8x8xf32> -> vector<8x8xf32>
    %701 = arith.addf %700, %165 : vector<8x8xf32>
    %cst_219 = arith.constant dense<0xFF800000> : vector<8xf32>
    %702 = vector.multi_reduction <maximumf>, %701, %cst_219 [1] : vector<8x8xf32> to vector<8xf32>
    %703 = vector.shape_cast %702 : vector<8xf32> to vector<8x1xf32>
    %704 = vector.broadcast %703 : vector<8x1xf32> to vector<8x8xf32>
    %705 = arith.subf %701, %704 : vector<8x8xf32>
    %706 = math.exp %705 : vector<8x8xf32>
    %cst_220 = arith.constant dense<0.000000e+00> : vector<8xf32>
    %707 = vector.multi_reduction <add>, %706, %cst_220 [1] : vector<8x8xf32> to vector<8xf32>
    %708 = vector.shape_cast %707 : vector<8xf32> to vector<8x1xf32>
    %709 = vector.broadcast %708 : vector<8x1xf32> to vector<8x8xf32>
    %710 = arith.divf %706, %709 : vector<8x8xf32>
    %711 = vector.extract_strided_slice %617 {offsets = [0, 48], sizes = [8, 16], strides = [1, 1]} : vector<8x64xf32> to vector<8x16xf32>
    %712 = arith.truncf %710 : vector<8x8xf32> to vector<8x8xbf16>
    %713 = arith.truncf %711 : vector<8x16xf32> to vector<8x16xbf16>
    %cst_221 = arith.constant dense<0.000000e+00> : vector<8x16xf32>
    %714 = tpu.matmul %712, %713, %cst_221 {dimension_numbers = #tpu.dot_dimension_numbers<[1], [0], [0], [1], [0, 0, 1, 1], [], []>} : vector<8x8xbf16>, vector<8x16xbf16>, vector<8x16xf32> -> vector<8x16xf32>
    %715 = vector.extract_strided_slice %486 {offsets = [48, 0], sizes = [16, 64], strides = [1, 1]} : vector<64x64xbf16> to vector<16x64xbf16>
    %716 = arith.truncf %714 : vector<8x16xf32> to vector<8x16xbf16>
    %cst_222 = arith.constant dense<0.000000e+00> : vector<8x64xf32>
    %717 = tpu.matmul %716, %715, %cst_222 {dimension_numbers = #tpu.dot_dimension_numbers<[1], [0], [0], [1], [0, 0, 1, 1], [], []>} : vector<8x16xbf16>, vector<16x64xbf16>, vector<8x64xf32> -> vector<8x64xf32>
    %718 = arith.addf %693, %717 : vector<8x64xf32>
    %719 = tpu.concatenate %614, %718 in 0 : vector<8x64xf32>, vector<8x64xf32> -> vector<16x64xf32>
    %c1_223 = arith.constant 1 : index
    %c0_224 = arith.constant 0 : index
    %c0_225 = arith.constant 0 : index
    %720 = vector.load %arg13[%c1_223, %c0_224, %c0_225] : memref<2x1x64xf32, #tpu.memory_space<vmem>>, vector<1x1x64xf32>
    %721 = vector.shape_cast %720 : vector<1x1x64xf32> to vector<1x64xf32>
    %722 = vector.broadcast %721 : vector<1x64xf32> to vector<16x64xf32>
    %723 = arith.addf %719, %722 : vector<16x64xf32>
    %724 = arith.addf %723, %480 : vector<16x64xf32>
    %c1_226 = arith.constant 1 : index
    %c0_227 = arith.constant 0 : index
    %c0_228 = arith.constant 0 : index
    %725 = vector.load %arg14[%c1_226, %c0_227, %c0_228] : memref<2x1x64xf32, #tpu.memory_space<vmem>>, vector<1x1x64xf32>
    %726 = vector.shape_cast %725 : vector<1x1x64xf32> to vector<1x64xf32>
    %c1_229 = arith.constant 1 : index
    %c0_230 = arith.constant 0 : index
    %c0_231 = arith.constant 0 : index
    %727 = vector.load %arg15[%c1_229, %c0_230, %c0_231] : memref<2x1x64xf32, #tpu.memory_space<vmem>>, vector<1x1x64xf32>
    %728 = vector.shape_cast %727 : vector<1x1x64xf32> to vector<1x64xf32>
    %cst_232 = arith.constant dense<0.000000e+00> : vector<16xf32>
    %729 = vector.multi_reduction <add>, %724, %cst_232 [1] : vector<16x64xf32> to vector<16xf32>
    %730 = vector.shape_cast %729 : vector<16xf32> to vector<16x1xf32>
    %cst_233 = arith.constant 6.400000e+01 : f32
    %731 = vector.broadcast %cst_233 : f32 to vector<16x1xf32>
    %732 = arith.divf %730, %731 : vector<16x1xf32>
    %733 = vector.broadcast %732 : vector<16x1xf32> to vector<16x64xf32>
    %734 = arith.subf %724, %733 : vector<16x64xf32>
    %735 = arith.mulf %734, %734 : vector<16x64xf32>
    %cst_234 = arith.constant dense<0.000000e+00> : vector<16xf32>
    %736 = vector.multi_reduction <add>, %735, %cst_234 [1] : vector<16x64xf32> to vector<16xf32>
    %737 = vector.shape_cast %736 : vector<16xf32> to vector<16x1xf32>
    %cst_235 = arith.constant 6.400000e+01 : f32
    %738 = vector.broadcast %cst_235 : f32 to vector<16x1xf32>
    %739 = arith.divf %737, %738 : vector<16x1xf32>
    %740 = vector.broadcast %732 : vector<16x1xf32> to vector<16x64xf32>
    %741 = arith.subf %724, %740 : vector<16x64xf32>
    %cst_236 = arith.constant 9.99999974E-6 : f32
    %742 = vector.broadcast %cst_236 : f32 to vector<16x1xf32>
    %743 = arith.addf %739, %742 : vector<16x1xf32>
    %744 = math.rsqrt %743 : vector<16x1xf32>
    %745 = vector.broadcast %744 : vector<16x1xf32> to vector<16x64xf32>
    %746 = arith.mulf %741, %745 : vector<16x64xf32>
    %747 = vector.broadcast %726 : vector<1x64xf32> to vector<16x64xf32>
    %748 = arith.mulf %746, %747 : vector<16x64xf32>
    %749 = vector.broadcast %728 : vector<1x64xf32> to vector<16x64xf32>
    %750 = arith.addf %748, %749 : vector<16x64xf32>
    %c1_237 = arith.constant 1 : index
    %c0_238 = arith.constant 0 : index
    %c0_239 = arith.constant 0 : index
    %751 = vector.load %arg16[%c1_237, %c0_238, %c0_239] : memref<2x64x128xbf16, #tpu.memory_space<vmem>>, vector<1x64x128xbf16>
    %752 = vector.shape_cast %751 : vector<1x64x128xbf16> to vector<64x128xbf16>
    %753 = arith.truncf %750 : vector<16x64xf32> to vector<16x64xbf16>
    %cst_240 = arith.constant dense<0.000000e+00> : vector<16x128xf32>
    %754 = tpu.matmul %753, %752, %cst_240 {dimension_numbers = #tpu.dot_dimension_numbers<[1], [0], [0], [1], [0, 0, 1, 1], [], []>} : vector<16x64xbf16>, vector<64x128xbf16>, vector<16x128xf32> -> vector<16x128xf32>
    %c1_241 = arith.constant 1 : index
    %c0_242 = arith.constant 0 : index
    %c0_243 = arith.constant 0 : index
    %755 = vector.load %arg17[%c1_241, %c0_242, %c0_243] : memref<2x1x128xf32, #tpu.memory_space<vmem>>, vector<1x1x128xf32>
    %756 = vector.shape_cast %755 : vector<1x1x128xf32> to vector<1x128xf32>
    %757 = vector.broadcast %756 : vector<1x128xf32> to vector<16x128xf32>
    %758 = arith.addf %754, %757 : vector<16x128xf32>
    %cst_244 = arith.constant 0.000000e+00 : f32
    %759 = vector.broadcast %cst_244 : f32 to vector<16x128xf32>
    %760 = arith.maximumf %758, %759 : vector<16x128xf32>
    %c1_245 = arith.constant 1 : index
    %c0_246 = arith.constant 0 : index
    %c0_247 = arith.constant 0 : index
    %761 = vector.load %arg18[%c1_245, %c0_246, %c0_247] : memref<2x128x64xbf16, #tpu.memory_space<vmem>>, vector<1x128x64xbf16>
    %762 = vector.shape_cast %761 : vector<1x128x64xbf16> to vector<128x64xbf16>
    %763 = arith.truncf %760 : vector<16x128xf32> to vector<16x128xbf16>
    %cst_248 = arith.constant dense<0.000000e+00> : vector<16x64xf32>
    %764 = tpu.matmul %763, %762, %cst_248 {dimension_numbers = #tpu.dot_dimension_numbers<[1], [0], [0], [1], [0, 0, 1, 1], [], []>} : vector<16x128xbf16>, vector<128x64xbf16>, vector<16x64xf32> -> vector<16x64xf32>
    %c1_249 = arith.constant 1 : index
    %c0_250 = arith.constant 0 : index
    %c0_251 = arith.constant 0 : index
    %765 = vector.load %arg19[%c1_249, %c0_250, %c0_251] : memref<2x1x64xf32, #tpu.memory_space<vmem>>, vector<1x1x64xf32>
    %766 = vector.shape_cast %765 : vector<1x1x64xf32> to vector<1x64xf32>
    %767 = vector.broadcast %766 : vector<1x64xf32> to vector<16x64xf32>
    %768 = arith.addf %764, %767 : vector<16x64xf32>
    %769 = arith.addf %768, %750 : vector<16x64xf32>
    %c1_252 = arith.constant 1 : index
    %c0_253 = arith.constant 0 : index
    %c0_254 = arith.constant 0 : index
    %770 = vector.load %arg20[%c1_252, %c0_253, %c0_254] : memref<2x1x64xf32, #tpu.memory_space<vmem>>, vector<1x1x64xf32>
    %771 = vector.shape_cast %770 : vector<1x1x64xf32> to vector<1x64xf32>
    %c1_255 = arith.constant 1 : index
    %c0_256 = arith.constant 0 : index
    %c0_257 = arith.constant 0 : index
    %772 = vector.load %arg21[%c1_255, %c0_256, %c0_257] : memref<2x1x64xf32, #tpu.memory_space<vmem>>, vector<1x1x64xf32>
    %773 = vector.shape_cast %772 : vector<1x1x64xf32> to vector<1x64xf32>
    %cst_258 = arith.constant dense<0.000000e+00> : vector<16xf32>
    %774 = vector.multi_reduction <add>, %769, %cst_258 [1] : vector<16x64xf32> to vector<16xf32>
    %775 = vector.shape_cast %774 : vector<16xf32> to vector<16x1xf32>
    %cst_259 = arith.constant 6.400000e+01 : f32
    %776 = vector.broadcast %cst_259 : f32 to vector<16x1xf32>
    %777 = arith.divf %775, %776 : vector<16x1xf32>
    %778 = vector.broadcast %777 : vector<16x1xf32> to vector<16x64xf32>
    %779 = arith.subf %769, %778 : vector<16x64xf32>
    %780 = arith.mulf %779, %779 : vector<16x64xf32>
    %cst_260 = arith.constant dense<0.000000e+00> : vector<16xf32>
    %781 = vector.multi_reduction <add>, %780, %cst_260 [1] : vector<16x64xf32> to vector<16xf32>
    %782 = vector.shape_cast %781 : vector<16xf32> to vector<16x1xf32>
    %cst_261 = arith.constant 6.400000e+01 : f32
    %783 = vector.broadcast %cst_261 : f32 to vector<16x1xf32>
    %784 = arith.divf %782, %783 : vector<16x1xf32>
    %785 = vector.broadcast %777 : vector<16x1xf32> to vector<16x64xf32>
    %786 = arith.subf %769, %785 : vector<16x64xf32>
    %cst_262 = arith.constant 9.99999974E-6 : f32
    %787 = vector.broadcast %cst_262 : f32 to vector<16x1xf32>
    %788 = arith.addf %784, %787 : vector<16x1xf32>
    %789 = math.rsqrt %788 : vector<16x1xf32>
    %790 = vector.broadcast %789 : vector<16x1xf32> to vector<16x64xf32>
    %791 = arith.mulf %786, %790 : vector<16x64xf32>
    %792 = vector.broadcast %771 : vector<1x64xf32> to vector<16x64xf32>
    %793 = arith.mulf %791, %792 : vector<16x64xf32>
    %794 = vector.broadcast %773 : vector<1x64xf32> to vector<16x64xf32>
    %795 = arith.addf %793, %794 : vector<16x64xf32>
    %c0_263 = arith.constant 0 : index
    %c0_264 = arith.constant 0 : index
    %796 = vector.load %arg22[%c0_263, %c0_264] : memref<1x64xf32, #tpu.memory_space<vmem>>, vector<1x64xf32>
    %c0_265 = arith.constant 0 : index
    %c0_266 = arith.constant 0 : index
    %797 = vector.load %arg23[%c0_265, %c0_266] : memref<1x64xf32, #tpu.memory_space<vmem>>, vector<1x64xf32>
    %cst_267 = arith.constant dense<0.000000e+00> : vector<16xf32>
    %798 = vector.multi_reduction <add>, %795, %cst_267 [1] : vector<16x64xf32> to vector<16xf32>
    %799 = vector.shape_cast %798 : vector<16xf32> to vector<16x1xf32>
    %cst_268 = arith.constant 6.400000e+01 : f32
    %800 = vector.broadcast %cst_268 : f32 to vector<16x1xf32>
    %801 = arith.divf %799, %800 : vector<16x1xf32>
    %802 = vector.broadcast %801 : vector<16x1xf32> to vector<16x64xf32>
    %803 = arith.subf %795, %802 : vector<16x64xf32>
    %804 = arith.mulf %803, %803 : vector<16x64xf32>
    %cst_269 = arith.constant dense<0.000000e+00> : vector<16xf32>
    %805 = vector.multi_reduction <add>, %804, %cst_269 [1] : vector<16x64xf32> to vector<16xf32>
    %806 = vector.shape_cast %805 : vector<16xf32> to vector<16x1xf32>
    %cst_270 = arith.constant 6.400000e+01 : f32
    %807 = vector.broadcast %cst_270 : f32 to vector<16x1xf32>
    %808 = arith.divf %806, %807 : vector<16x1xf32>
    %809 = vector.broadcast %801 : vector<16x1xf32> to vector<16x64xf32>
    %810 = arith.subf %795, %809 : vector<16x64xf32>
    %cst_271 = arith.constant 9.99999974E-6 : f32
    %811 = vector.broadcast %cst_271 : f32 to vector<16x1xf32>
    %812 = arith.addf %808, %811 : vector<16x1xf32>
    %813 = math.rsqrt %812 : vector<16x1xf32>
    %814 = vector.broadcast %813 : vector<16x1xf32> to vector<16x64xf32>
    %815 = arith.mulf %810, %814 : vector<16x64xf32>
    %816 = vector.broadcast %796 : vector<1x64xf32> to vector<16x64xf32>
    %817 = arith.mulf %815, %816 : vector<16x64xf32>
    %818 = vector.broadcast %797 : vector<1x64xf32> to vector<16x64xf32>
    %819 = arith.addf %817, %818 : vector<16x64xf32>
    %c0_272 = arith.constant 0 : index
    %c0_273 = arith.constant 0 : index
    %820 = vector.load %arg24[%c0_272, %c0_273] : memref<64x128xbf16, #tpu.memory_space<vmem>>, vector<64x128xbf16>
    %821 = arith.truncf %819 : vector<16x64xf32> to vector<16x64xbf16>
    %cst_274 = arith.constant dense<0.000000e+00> : vector<16x128xf32>
    %822 = tpu.matmul %821, %820, %cst_274 {dimension_numbers = #tpu.dot_dimension_numbers<[1], [0], [0], [1], [0, 0, 1, 1], [], []>} : vector<16x64xbf16>, vector<64x128xbf16>, vector<16x128xf32> -> vector<16x128xf32>
    %c0_275 = arith.constant 0 : index
    %c0_276 = arith.constant 0 : index
    %823 = vector.load %arg25[%c0_275, %c0_276] : memref<1x128xf32, #tpu.memory_space<vmem>>, vector<1x128xf32>
    %824 = vector.broadcast %823 : vector<1x128xf32> to vector<16x128xf32>
    %825 = arith.addf %822, %824 : vector<16x128xf32>
    %c0_277 = arith.constant 0 : index
    %c0_278 = arith.constant 0 : index
    %826 = vector.load %arg26[%c0_277, %c0_278] : memref<16x128xf32, #tpu.memory_space<vmem>>, vector<16x128xf32>
    tpu.vector_store %arg26[%c0_277, %c0_278], %825 {strides = array<i32>} : memref<16x128xf32, #tpu.memory_space<vmem>>, vector<16x128xf32>,
    return
  }
}

</mosaic_0001>

<llo_original>
// kernel: reconstructor_forward.1
$region0: #{reconstructor_forward.1}
  #allocation0 [shape = 'u32[]', space=smem, size = 0x4, offset = 0x4, fixed_abs, tag = 'smem constant byte address 0x4 - core index']
  #allocation1 [shape = 'u32[144,128]{1,0:T(1,128)}', space=vmem, size = 0x12000, scoped, tag = 'internal scratch']
  %s0 = inlined_call_operand.vmem [shape: bf16[16,64], index: 0, kind: input, shape index: {}]
  %s1 = inlined_call_operand.vmem [shape: bf16[2,256], index: 1, kind: input, shape index: {}]
  %s2 = inlined_call_operand.vmem [shape: bf16[256,64], index: 2, kind: input, shape index: {}]
  %s3 = inlined_call_operand.vmem [shape: f32[1,64], index: 3, kind: input, shape index: {}]
  %s4 = inlined_call_operand.vmem [shape: bf16[3,64,64], index: 4, kind: input, shape index: {}]
  %s5 = inlined_call_operand.vmem [shape: f32[3,1,64], index: 5, kind: input, shape index: {}]
  %s6 = inlined_call_operand.vmem [shape: bf16[64,64], index: 6, kind: input, shape index: {}]
  %s7 = inlined_call_operand.vmem [shape: f32[1,64], index: 7, kind: input, shape index: {}]
  %s8 = inlined_call_operand.vmem [shape: f32[1,64], index: 8, kind: input, shape index: {}]
  %s9 = inlined_call_operand.vmem [shape: f32[1,64], index: 9, kind: input, shape index: {}]
  %s10 = inlined_call_operand.vmem [shape: bf16[2,3,64,64], index: 10, kind: input, shape index: {}]
  %s11 = inlined_call_operand.vmem [shape: f32[2,3,1,64], index: 11, kind: input, shape index: {}]
  %s12 = inlined_call_operand.vmem [shape: bf16[2,64,64], index: 12, kind: input, shape index: {}]
  %s13 = inlined_call_operand.vmem [shape: f32[2,1,64], index: 13, kind: input, shape index: {}]
  %s14 = inlined_call_operand.vmem [shape: f32[2,1,64], index: 14, kind: input, shape index: {}]
  %s15 = inlined_call_operand.vmem [shape: f32[2,1,64], index: 15, kind: input, shape index: {}]
  %s16 = inlined_call_operand.vmem [shape: bf16[2,64,128], index: 16, kind: input, shape index: {}]
  %s17 = inlined_call_operand.vmem [shape: f32[2,1,128], index: 17, kind: input, shape index: {}]
  %s18 = inlined_call_operand.vmem [shape: bf16[2,128,64], index: 18, kind: input, shape index: {}]
  %s19 = inlined_call_operand.vmem [shape: f32[2,1,64], index: 19, kind: input, shape index: {}]
  %s20 = inlined_call_operand.vmem [shape: f32[2,1,64], index: 20, kind: input, shape index: {}]
  %s21 = inlined_call_operand.vmem [shape: f32[2,1,64], index: 21, kind: input, shape index: {}]
  %s22 = inlined_call_operand.vmem [shape: f32[1,64], index: 22, kind: input, shape index: {}]
  %s23 = inlined_call_operand.vmem [shape: f32[1,64], index: 23, kind: input, shape index: {}]
  %s24 = inlined_call_operand.vmem [shape: bf16[64,128], index: 24, kind: input, shape index: {}]
  %s25 = inlined_call_operand.vmem [shape: f32[1,128], index: 25, kind: input, shape index: {}]
  %s26 = inlined_call_operand.vmem [shape: f32[16,128], index: 26, kind: output, shape index: {}]
  %s27 = sld [smem:[#allocation0]]
  $region114: #{reconstructor_forward.1} parent=0
    _
  %s29 = ssub.s32 1, %s27
  %s30 = scalar_select 0, %s29, %s27
  // Predicated region
  $region2: #{reconstructor_forward.1} parent=0 // pred_check
    _
  $region3: #{reconstructor_forward.1} parent=0 // pred_check_branch
    %32 = sbr.rel (0) target = $region5
  $region4: #{reconstructor_forward.1} parent=0 // pred_region
    _
  $region5: #{reconstructor_forward.1} parent=0 // pred_fallthru
    _
  // Predicated region
  $region6: #{reconstructor_forward.1} parent=0 // pred_check
    _
  $region7: #{reconstructor_forward.1} parent=0 // pred_check_branch
    %34 = sbr.rel (0) target = $region9
  $region8: #{reconstructor_forward.1} parent=0 // pred_region
    _
  $region9: #{reconstructor_forward.1} parent=0 // pred_fallthru
    _
  // Predicated region
  $region10: #{reconstructor_forward.1} parent=0 // pred_check
    _
  $region11: #{reconstructor_forward.1} parent=0 // pred_check_branch
    %36 = sbr.rel (0) target = $region13
  $region12: #{reconstructor_forward.1} parent=0 // pred_region
    _
  $region13: #{reconstructor_forward.1} parent=0 // pred_fallthru
    _
  // Predicated region
  $region14: #{reconstructor_forward.1} parent=0 // pred_check
    _
  $region15: #{reconstructor_forward.1} parent=0 // pred_check_branch
    %38 = sbr.rel (0) target = $region17
  $region16: #{reconstructor_forward.1} parent=0 // pred_region
    _
  $region17: #{reconstructor_forward.1} parent=0 // pred_fallthru
    _
  // Predicated region
  $region18: #{reconstructor_forward.1} parent=0 // pred_check
    _
  $region19: #{reconstructor_forward.1} parent=0 // pred_check_branch
    %40 = sbr.rel (0) target = $region21
  $region20: #{reconstructor_forward.1} parent=0 // pred_region
    _
  $region21: #{reconstructor_forward.1} parent=0 // pred_fallthru
    _
  // Predicated region
  $region22: #{reconstructor_forward.1} parent=0 // pred_check
    _
  $region23: #{reconstructor_forward.1} parent=0 // pred_check_branch
    %42 = sbr.rel (0) target = $region25
  $region24: #{reconstructor_forward.1} parent=0 // pred_region
    _
  $region25: #{reconstructor_forward.1} parent=0 // pred_fallthru
    _
  // Predicated region
  $region26: #{reconstructor_forward.1} parent=0 // pred_check
    _
  $region27: #{reconstructor_forward.1} parent=0 // pred_check_branch
    %44 = sbr.rel (0) target = $region29
  $region28: #{reconstructor_forward.1} parent=0 // pred_region
    _
  $region29: #{reconstructor_forward.1} parent=0 // pred_fallthru
    _
  // Predicated region
  $region30: #{reconstructor_forward.1} parent=0 // pred_check
    _
  $region31: #{reconstructor_forward.1} parent=0 // pred_check_branch
    %46 = sbr.rel (0) target = $region33
  $region32: #{reconstructor_forward.1} parent=0 // pred_region
    _
  $region33: #{reconstructor_forward.1} parent=0 // pred_fallthru
    _
  // Predicated region
  $region34: #{reconstructor_forward.1} parent=0 // pred_check
    _
  $region35: #{reconstructor_forward.1} parent=0 // pred_check_branch
    %48 = sbr.rel (0) target = $region37
  $region36: #{reconstructor_forward.1} parent=0 // pred_region
    _
  $region37: #{reconstructor_forward.1} parent=0 // pred_fallthru
    _
  // Predicated region
  $region38: #{reconstructor_forward.1} parent=0 // pred_check
    _
  $region39: #{reconstructor_forward.1} parent=0 // pred_check_branch
    %50 = sbr.rel (0) target = $region41
  $region40: #{reconstructor_forward.1} parent=0 // pred_region
    _
  $region41: #{reconstructor_forward.1} parent=0 // pred_fallthru
    _
  // Predicated region
  $region42: #{reconstructor_forward.1} parent=0 // pred_check
    _
  $region43: #{reconstructor_forward.1} parent=0 // pred_check_branch
    %52 = sbr.rel (0) target = $region45
  $region44: #{reconstructor_forward.1} parent=0 // pred_region
    _
  $region45: #{reconstructor_forward.1} parent=0 // pred_fallthru
    _
  // Predicated region
  $region46: #{reconstructor_forward.1} parent=0 // pred_check
    _
  $region47: #{reconstructor_forward.1} parent=0 // pred_check_branch
    %54 = sbr.rel (0) target = $region49
  $region48: #{reconstructor_forward.1} parent=0 // pred_region
    _
  $region49: #{reconstructor_forward.1} parent=0 // pred_fallthru
    _
  // Predicated region
  $region50: #{reconstructor_forward.1} parent=0 // pred_check
    _
  $region51: #{reconstructor_forward.1} parent=0 // pred_check_branch
    %56 = sbr.rel (0) target = $region53
  $region52: #{reconstructor_forward.1} parent=0 // pred_region
    _
  $region53: #{reconstructor_forward.1} parent=0 // pred_fallthru
    _
  // Predicated region
  $region54: #{reconstructor_forward.1} parent=0 // pred_check
    _
  $region55: #{reconstructor_forward.1} parent=0 // pred_check_branch
    %58 = sbr.rel (0) target = $region57
  $region56: #{reconstructor_forward.1} parent=0 // pred_region
    _
  $region57: #{reconstructor_forward.1} parent=0 // pred_fallthru
    _
  // Predicated region
  $region58: #{reconstructor_forward.1} parent=0 // pred_check
    _
  $region59: #{reconstructor_forward.1} parent=0 // pred_check_branch
    %60 = sbr.rel (0) target = $region61
  $region60: #{reconstructor_forward.1} parent=0 // pred_region
    _
  $region61: #{reconstructor_forward.1} parent=0 // pred_fallthru
    _
  // Predicated region
  $region62: #{reconstructor_forward.1} parent=0 // pred_check
    _
  $region63: #{reconstructor_forward.1} parent=0 // pred_check_branch
    %62 = sbr.rel (0) target = $region65
  $region64: #{reconstructor_forward.1} parent=0 // pred_region
    _
  $region65: #{reconstructor_forward.1} parent=0 // pred_fallthru
    _
  // Predicated region
  $region66: #{reconstructor_forward.1} parent=0 // pred_check
    _
  $region67: #{reconstructor_forward.1} parent=0 // pred_check_branch
    %64 = sbr.rel (0) target = $region69
  $region68: #{reconstructor_forward.1} parent=0 // pred_region
    _
  $region69: #{reconstructor_forward.1} parent=0 // pred_fallthru
    _
  // Predicated region
  $region70: #{reconstructor_forward.1} parent=0 // pred_check
    _
  $region71: #{reconstructor_forward.1} parent=0 // pred_check_branch
    %66 = sbr.rel (0) target = $region73
  $region72: #{reconstructor_forward.1} parent=0 // pred_region
    _
  $region73: #{reconstructor_forward.1} parent=0 // pred_fallthru
    _
  // Predicated region
  $region74: #{reconstructor_forward.1} parent=0 // pred_check
    _
  $region75: #{reconstructor_forward.1} parent=0 // pred_check_branch
    %68 = sbr.rel (0) target = $region77
  $region76: #{reconstructor_forward.1} parent=0 // pred_region
    _
  $region77: #{reconstructor_forward.1} parent=0 // pred_fallthru
    _
  // Predicated region
  $region78: #{reconstructor_forward.1} parent=0 // pred_check
    _
  $region79: #{reconstructor_forward.1} parent=0 // pred_check_branch
    %70 = sbr.rel (0) target = $region81
  $region80: #{reconstructor_forward.1} parent=0 // pred_region
    _
  $region81: #{reconstructor_forward.1} parent=0 // pred_fallthru
    _
  // Predicated region
  $region82: #{reconstructor_forward.1} parent=0 // pred_check
    _
  $region83: #{reconstructor_forward.1} parent=0 // pred_check_branch
    %72 = sbr.rel (0) target = $region85
  $region84: #{reconstructor_forward.1} parent=0 // pred_region
    _
  $region85: #{reconstructor_forward.1} parent=0 // pred_fallthru
    _
  // Predicated region
  $region86: #{reconstructor_forward.1} parent=0 // pred_check
    _
  $region87: #{reconstructor_forward.1} parent=0 // pred_check_branch
    %74 = sbr.rel (0) target = $region89
  $region88: #{reconstructor_forward.1} parent=0 // pred_region
    _
  $region89: #{reconstructor_forward.1} parent=0 // pred_fallthru
    _
  // Predicated region
  $region90: #{reconstructor_forward.1} parent=0 // pred_check
    _
  $region91: #{reconstructor_forward.1} parent=0 // pred_check_branch
    %76 = sbr.rel (0) target = $region93
  $region92: #{reconstructor_forward.1} parent=0 // pred_region
    _
  $region93: #{reconstructor_forward.1} parent=0 // pred_fallthru
    _
  // Predicated region
  $region94: #{reconstructor_forward.1} parent=0 // pred_check
    _
  $region95: #{reconstructor_forward.1} parent=0 // pred_check_branch
    %78 = sbr.rel (0) target = $region97
  $region96: #{reconstructor_forward.1} parent=0 // pred_region
    _
  $region97: #{reconstructor_forward.1} parent=0 // pred_fallthru
    _
  // Predicated region
  $region98: #{reconstructor_forward.1} parent=0 // pred_check
    _
  $region99: #{reconstructor_forward.1} parent=0 // pred_check_branch
    %80 = sbr.rel (0) target = $region101
  $region100: #{reconstructor_forward.1} parent=0 // pred_region
    _
  $region101: #{reconstructor_forward.1} parent=0 // pred_fallthru
    _
  // Predicated region
  $region102: #{reconstructor_forward.1} parent=0 // pred_check
    _
  $region103: #{reconstructor_forward.1} parent=0 // pred_check_branch
    %82 = sbr.rel (0) target = $region105
  $region104: #{reconstructor_forward.1} parent=0 // pred_region
    _
  $region105: #{reconstructor_forward.1} parent=0 // pred_fallthru
    _
  %v84 = vld [vmem:[%s0] sm:$0xf]
  %v85 = vld [vmem:[%s0 + $0x4] sm:$0xf]
  %v86 = vunpack.c.l.bf16 %v84
  %v87 = vunpack.c.l.bf16 %v85
  %v88 = vld [vmem:[%s4] sm:$0xf]
  %v89 = vld [vmem:[%s4 + $0x4] sm:$0xf]
  %v90 = vld [vmem:[%s4 + $0x8] sm:$0xf]
  %v91 = vld [vmem:[%s4 + $0xc] sm:$0xf]
  %v92 = vld [vmem:[%s4 + $0x10] sm:$0xf]
  %v93 = vld [vmem:[%s4 + $0x14] sm:$0xf]
  %v94 = vld [vmem:[%s4 + $0x18] sm:$0xf]
  %v95 = vld [vmem:[%s4 + $0x1c] sm:$0xf]
  %v96 = vld [vmem:[%s4 + $0x20] sm:$0xf]
  %v97 = vld [vmem:[%s4 + $0x24] sm:$0xf]
  %v98 = vld [vmem:[%s4 + $0x28] sm:$0xf]
  %v99 = vld [vmem:[%s4 + $0x2c] sm:$0xf]
  %v100 = vld [vmem:[%s4 + $0x30] sm:$0xf]
  %v101 = vld [vmem:[%s4 + $0x34] sm:$0xf]
  %v102 = vld [vmem:[%s4 + $0x38] sm:$0xf]
  %v103 = vld [vmem:[%s4 + $0x3c] sm:$0xf]
  %v104 = vld [vmem:[%s4 + $0x40] sm:$0xf]
  %v105 = vld [vmem:[%s4 + $0x44] sm:$0xf]
  %v106 = vld [vmem:[%s4 + $0x48] sm:$0xf]
  %v107 = vld [vmem:[%s4 + $0x4c] sm:$0xf]
  %v108 = vld [vmem:[%s4 + $0x50] sm:$0xf]
  %v109 = vld [vmem:[%s4 + $0x54] sm:$0xf]
  %v110 = vld [vmem:[%s4 + $0x58] sm:$0xf]
  %v111 = vld [vmem:[%s4 + $0x5c] sm:$0xf]
  %v112 = vld [vmem:[%s5] sm:$0x1]
  %v113 = vld [vmem:[%s5 + $0x1] sm:$0x1]
  %v114 = vld [vmem:[%s5 + $0x2] sm:$0x1]
  %v115 = vld [vmem:[%s1] sm:$0x3]
  %v116 = vld [vmem:[%s2] sm:$0xf]
  %v117 = vld [vmem:[%s2 + $0x4] sm:$0xf]
  %v118 = vld [vmem:[%s2 + $0x8] sm:$0xf]
  %v119 = vld [vmem:[%s2 + $0xc] sm:$0xf]
  %v120 = vld [vmem:[%s2 + $0x10] sm:$0xf]
  %v121 = vld [vmem:[%s2 + $0x14] sm:$0xf]
  %v122 = vld [vmem:[%s2 + $0x18] sm:$0xf]
  %v123 = vld [vmem:[%s2 + $0x1c] sm:$0xf]
  %v124 = vld [vmem:[%s2 + $0x20] sm:$0xf]
  %v125 = vld [vmem:[%s2 + $0x24] sm:$0xf]
  %v126 = vld [vmem:[%s2 + $0x28] sm:$0xf]
  %v127 = vld [vmem:[%s2 + $0x2c] sm:$0xf]
  %v128 = vld [vmem:[%s2 + $0x30] sm:$0xf]
  %v129 = vld [vmem:[%s2 + $0x34] sm:$0xf]
  %v130 = vld [vmem:[%s2 + $0x38] sm:$0xf]
  %v131 = vld [vmem:[%s2 + $0x3c] sm:$0xf]
  %v132 = vld [vmem:[%s2 + $0x40] sm:$0xf]
  %v133 = vld [vmem:[%s2 + $0x44] sm:$0xf]
  %v134 = vld [vmem:[%s2 + $0x48] sm:$0xf]
  %v135 = vld [vmem:[%s2 + $0x4c] sm:$0xf]
  %v136 = vld [vmem:[%s2 + $0x50] sm:$0xf]
  %v137 = vld [vmem:[%s2 + $0x54] sm:$0xf]
  %v138 = vld [vmem:[%s2 + $0x58] sm:$0xf]
  %v139 = vld [vmem:[%s2 + $0x5c] sm:$0xf]
  %v140 = vld [vmem:[%s2 + $0x60] sm:$0xf]
  %v141 = vld [vmem:[%s2 + $0x64] sm:$0xf]
  %v142 = vld [vmem:[%s2 + $0x68] sm:$0xf]
  %v143 = vld [vmem:[%s2 + $0x6c] sm:$0xf]
  %v144 = vld [vmem:[%s2 + $0x70] sm:$0xf]
  %v145 = vld [vmem:[%s2 + $0x74] sm:$0xf]
  %v146 = vld [vmem:[%s2 + $0x78] sm:$0xf]
  %v147 = vld [vmem:[%s2 + $0x7c] sm:$0xf]
  %v148 = vld [vmem:[%s3] sm:$0x1]
  %v150 = vlaneseq
  %v151 = vshrl.u32 %v150, 7
  %v152 = vsub.s32 0, %v151
  %v153 = vrot.slane %v148, %v152
  %v157 = vunpack.c.l.s4 1966171168
  %v158 = vunpack.c.0.s8 %v157
  %v159 = vlaneseq
  %v160 = vshrl.u32 %v159, 7
  %v161 = vsub.s32 %v158, %v160
  %v162 = vrot.slane %v115, %v161
  %v163 = vcombine.high %v162, %v162
  %v165 = vunpack.c.l.s4 1966171168
  %v166 = vunpack.c.0.s8 %v165
  %v167 = vlaneseq
  %v168 = vshrl.u32 %v167, 7
  %v169 = vsub.s32 %v166, %v168
  %v170 = vrot.slane %v162, %v169
  %v172 = vunpack.c.l.s4 1966171168
  %v173 = vunpack.c.0.s8 %v172
  %v174 = vlaneseq
  %v175 = vshrl.u32 %v174, 7
  %v176 = vsub.s32 %v173, %v175
  %v177 = vrot.slane %v163, %v176
  %v212 = vunpack.c.l.b16 %v116
  %v213 = vunpack.c.l.b16 %v117
  %v214 = vunpack.c.l.b16 %v118
  %v215 = vunpack.c.l.b16 %v119
  %v216 = vunpack.c.l.b16 %v120
  %v217 = vunpack.c.l.b16 %v121
  %v218 = vunpack.c.l.b16 %v122
  %v219 = vunpack.c.l.b16 %v123
  %v220 = vunpack.c.l.b16 %v124
  %v221 = vunpack.c.l.b16 %v125
  %v222 = vunpack.c.l.b16 %v126
  %v223 = vunpack.c.l.b16 %v127
  %v224 = vunpack.c.l.b16 %v128
  %v225 = vunpack.c.l.b16 %v129
  %v226 = vunpack.c.l.b16 %v130
  %v227 = vunpack.c.l.b16 %v131
  %v228 = vunpack.c.l.b16 %v132
  %v229 = vunpack.c.l.b16 %v133
  %v230 = vunpack.c.l.b16 %v134
  %v231 = vunpack.c.l.b16 %v135
  %v232 = vunpack.c.l.b16 %v136
  %v233 = vunpack.c.l.b16 %v137
  %v234 = vunpack.c.l.b16 %v138
  %v235 = vunpack.c.l.b16 %v139
  %v236 = vunpack.c.l.b16 %v140
  %v237 = vunpack.c.l.b16 %v141
  %v238 = vunpack.c.l.b16 %v142
  %v239 = vunpack.c.l.b16 %v143
  %v240 = vunpack.c.l.b16 %v144
  %v241 = vunpack.c.l.b16 %v145
  %v242 = vunpack.c.l.b16 %v146
  %v243 = vunpack.c.l.b16 %v147
  %v244 = vpack.c.b16 %v213, %v212
  %v245 = vpack.c.b16 %v215, %v214
  %v246 = vpack.c.b16 %v217, %v216
  %v247 = vpack.c.b16 %v219, %v218
  %v248 = vpack.c.b16 %v221, %v220
  %v249 = vpack.c.b16 %v223, %v222
  %v250 = vpack.c.b16 %v225, %v224
  %v251 = vpack.c.b16 %v227, %v226
  %v252 = vpack.c.b16 %v229, %v228
  %v253 = vpack.c.b16 %v231, %v230
  %v254 = vpack.c.b16 %v233, %v232
  %v255 = vpack.c.b16 %v235, %v234
  %v256 = vpack.c.b16 %v237, %v236
  %v257 = vpack.c.b16 %v239, %v238
  %v258 = vpack.c.b16 %v241, %v240
  %v259 = vpack.c.b16 %v243, %v242
  %276 = vmatprep.subr.bf16.mxu0 0
  %277 = vmatpush1.bf16.msra.mxu0 %v244
  %278 = vmatprep.subr.bf16.mxu0 0
  %279 = vmatpush1.bf16.msra.mxu0 %v245
  %280 = vmatprep.subr.bf16.mxu0 0
  %281 = vmatpush1.bf16.msra.mxu0 %v246
  %282 = vmatprep.subr.bf16.mxu0 0
  %283 = vmatpush1.bf16.msra.mxu0 %v247
  %284 = vmatprep.subr.bf16.mxu0 0
  %285 = vmatpush1.bf16.msra.mxu0 %v248
  %286 = vmatprep.subr.bf16.mxu0 0
  %287 = vmatpush1.bf16.msra.mxu0 %v249
  %288 = vmatprep.subr.bf16.mxu0 0
  %289 = vmatpush1.bf16.msra.mxu0 %v250
  %290 = vmatprep.subr.bf16.mxu0 0
  %291 = vmatpush1.bf16.msra.mxu0 %v251
  %292 = vmatprep.subr.bf16.mxu0 0
  %293 = vmatpush1.bf16.msra.mxu0 %v252
  %294 = vmatprep.subr.bf16.mxu0 0
  %295 = vmatpush1.bf16.msra.mxu0 %v253
  %296 = vmatprep.subr.bf16.mxu0 0
  %297 = vmatpush1.bf16.msra.mxu0 %v254
  %298 = vmatprep.subr.bf16.mxu0 0
  %299 = vmatpush1.bf16.msra.mxu0 %v255
  %300 = vmatprep.subr.bf16.mxu0 0
  %301 = vmatpush1.bf16.msra.mxu0 %v256
  %302 = vmatprep.subr.bf16.mxu0 0
  %303 = vmatpush1.bf16.msra.mxu0 %v257
  %304 = vmatprep.subr.bf16.mxu0 0
  %305 = vmatpush1.bf16.msra.mxu0 %v258
  %306 = vmatprep.subr.bf16.mxu0 0
  %307 = vmatpush1.bf16.msra.mxu0 %v259
  %308 = vmatprep.mubr.bf16.mxu0 %v177
  %309 = vmatmul.mubr.bf16.gmra.mrb[0].mxu0 %v170
  %v310 = vpop.f32.mrb[0].mxu0
  %v311 = vadd.f32 %v153, %v310
  %v312 = vpop.f32.mrb[0].mxu0
  %v313 = vpop.f32.mrb[0].mxu0
  %v314 = vpop.f32.mrb[0].mxu0
  %315 = vdwg.mxu0
  %v317 = vlaneseq
  %v318 = vshrl.u32 %v317, 7
  %v319 = vsub.s32 0, %v318
  %v320 = vrot.slane %v112, %v319
  %v324 = vunpack.c.l.b16 %v84
  %v325 = vunpack.c.l.b16 %v85
  %v326 = vpack.c.b16 %v325, %v324
  %v335 = vunpack.c.l.b16 %v88
  %v336 = vunpack.c.l.b16 %v89
  %v337 = vunpack.c.l.b16 %v90
  %v338 = vunpack.c.l.b16 %v91
  %v339 = vunpack.c.l.b16 %v92
  %v340 = vunpack.c.l.b16 %v93
  %v341 = vunpack.c.l.b16 %v94
  %v342 = vunpack.c.l.b16 %v95
  %v343 = vpack.c.b16 %v336, %v335
  %v344 = vpack.c.b16 %v338, %v337
  %v345 = vpack.c.b16 %v340, %v339
  %v346 = vpack.c.b16 %v342, %v341
  %vm351 = vcmask 523264
  %v353 = vsel %vm351, %v326, 0
  %355 = vmatprep.subr.bf16.mxu0 0
  %356 = vmatpush1.bf16.msra.mxu0 %v343
  %357 = vmatprep.subr.bf16.mxu0 0
  %358 = vmatpush1.bf16.msra.mxu0 %v344
  %359 = vmatprep.subr.bf16.mxu0 0
  %360 = vmatpush1.bf16.msra.mxu0 %v345
  %361 = vmatprep.subr.bf16.mxu0 0
  %362 = vmatpush1.bf16.msra.mxu0 %v346
  %363 = vmatprep.subr.bf16.mxu0 0
  %364 = vmatpush1.bf16.msra.mxu0 0
  %365 = vmatprep.subr.bf16.mxu0 0
  %366 = vmatpush1.bf16.msra.mxu0 0
  %367 = vmatprep.subr.bf16.mxu0 0
  %368 = vmatpush1.bf16.msra.mxu0 0
  %369 = vmatprep.subr.bf16.mxu0 0
  %370 = vmatpush1.bf16.msra.mxu0 0
  %371 = vmatprep.subr.bf16.mxu0 0
  %372 = vmatpush1.bf16.msra.mxu0 0
  %373 = vmatprep.subr.bf16.mxu0 0
  %374 = vmatpush1.bf16.msra.mxu0 0
  %375 = vmatprep.subr.bf16.mxu0 0
  %376 = vmatpush1.bf16.msra.mxu0 0
  %377 = vmatprep.subr.bf16.mxu0 0
  %378 = vmatpush1.bf16.msra.mxu0 0
  %379 = vmatprep.subr.bf16.mxu0 0
  %380 = vmatpush1.bf16.msra.mxu0 0
  %381 = vmatprep.subr.bf16.mxu0 0
  %382 = vmatpush1.bf16.msra.mxu0 0
  %383 = vmatprep.subr.bf16.mxu0 0
  %384 = vmatpush1.bf16.msra.mxu0 0
  %385 = vmatprep.subr.bf16.mxu0 0
  %386 = vmatpush1.bf16.msra.mxu0 0
  %387 = vmatprep.mubr.bf16.mxu0 0
  %388 = vmatmul.mubr.bf16.gmra.mrb[0].mxu0 %v353
  %v389 = vpop.f32.mrb[0].mxu0
  %v390 = vadd.f32 %v320, %v389
  %v391 = vpop.f32.mrb[0].mxu0
  %v392 = vpop.f32.mrb[0].mxu0
  %v393 = vadd.f32 %v320, %v392
  %v394 = vpop.f32.mrb[0].mxu0
  %395 = vdwg.mxu0
  %v396 = vpack.c.bf16 %v311, %v311
  %v398 = vlaneseq
  %v399 = vshrl.u32 %v398, 7
  %v400 = vsub.s32 0, %v399
  %v401 = vrot.slane %v113, %v400
  %v411 = vunpack.c.l.b16 %v96
  %v412 = vunpack.c.l.b16 %v97
  %v413 = vunpack.c.l.b16 %v98
  %v414 = vunpack.c.l.b16 %v99
  %v415 = vunpack.c.l.b16 %v100
  %v416 = vunpack.c.l.b16 %v101
  %v417 = vunpack.c.l.b16 %v102
  %v418 = vunpack.c.l.b16 %v103
  %v419 = vpack.c.b16 %v412, %v411
  %v420 = vpack.c.b16 %v414, %v413
  %v421 = vpack.c.b16 %v416, %v415
  %v422 = vpack.c.b16 %v418, %v417
  %v428 = vsel %vm351, %v396, 0
  %430 = vmatprep.subr.bf16.mxu0 0
  %431 = vmatpush1.bf16.msra.mxu0 %v419
  %432 = vmatprep.subr.bf16.mxu0 0
  %433 = vmatpush1.bf16.msra.mxu0 %v420
  %434 = vmatprep.subr.bf16.mxu0 0
  %435 = vmatpush1.bf16.msra.mxu0 %v421
  %436 = vmatprep.subr.bf16.mxu0 0
  %437 = vmatpush1.bf16.msra.mxu0 %v422
  %438 = vmatprep.subr.bf16.mxu0 0
  %439 = vmatpush1.bf16.msra.mxu0 0
  %440 = vmatprep.subr.bf16.mxu0 0
  %441 = vmatpush1.bf16.msra.mxu0 0
  %442 = vmatprep.subr.bf16.mxu0 0
  %443 = vmatpush1.bf16.msra.mxu0 0
  %444 = vmatprep.subr.bf16.mxu0 0
  %445 = vmatpush1.bf16.msra.mxu0 0
  %446 = vmatprep.subr.bf16.mxu0 0
  %447 = vmatpush1.bf16.msra.mxu0 0
  %448 = vmatprep.subr.bf16.mxu0 0
  %449 = vmatpush1.bf16.msra.mxu0 0
  %450 = vmatprep.subr.bf16.mxu0 0
  %451 = vmatpush1.bf16.msra.mxu0 0
  %452 = vmatprep.subr.bf16.mxu0 0
  %453 = vmatpush1.bf16.msra.mxu0 0
  %454 = vmatprep.subr.bf16.mxu0 0
  %455 = vmatpush1.bf16.msra.mxu0 0
  %456 = vmatprep.subr.bf16.mxu0 0
  %457 = vmatpush1.bf16.msra.mxu0 0
  %458 = vmatprep.subr.bf16.mxu0 0
  %459 = vmatpush1.bf16.msra.mxu0 0
  %460 = vmatprep.subr.bf16.mxu0 0
  %461 = vmatpush1.bf16.msra.mxu0 0
  %462 = vmatprep.mubr.bf16.mxu0 0
  %463 = vmatmul.mubr.bf16.gmra.mrb[0].mxu0 %v428
  %v464 = vpop.f32.mrb[0].mxu0
  %v465 = vadd.f32 %v401, %v464
  %v466 = vpop.f32.mrb[0].mxu0
  %v467 = vpop.f32.mrb[0].mxu0
  %v468 = vpop.f32.mrb[0].mxu0
  %469 = vdwg.mxu0
  %v471 = vlaneseq
  %v472 = vshrl.u32 %v471, 7
  %v473 = vsub.s32 0, %v472
  %v474 = vrot.slane %v114, %v473
  %v484 = vunpack.c.l.b16 %v104
  %v485 = vunpack.c.l.b16 %v105
  %v486 = vunpack.c.l.b16 %v106
  %v487 = vunpack.c.l.b16 %v107
  %v488 = vunpack.c.l.b16 %v108
  %v489 = vunpack.c.l.b16 %v109
  %v490 = vunpack.c.l.b16 %v110
  %v491 = vunpack.c.l.b16 %v111
  %v492 = vpack.c.b16 %v485, %v484
  %v493 = vpack.c.b16 %v487, %v486
  %v494 = vpack.c.b16 %v489, %v488
  %v495 = vpack.c.b16 %v491, %v490
  %500 = vmatprep.subr.bf16.mxu0 0
  %501 = vmatpush1.bf16.msra.mxu0 %v492
  %502 = vmatprep.subr.bf16.mxu0 0
  %503 = vmatpush1.bf16.msra.mxu0 %v493
  %504 = vmatprep.subr.bf16.mxu0 0
  %505 = vmatpush1.bf16.msra.mxu0 %v494
  %506 = vmatprep.subr.bf16.mxu0 0
  %507 = vmatpush1.bf16.msra.mxu0 %v495
  %508 = vmatprep.subr.bf16.mxu0 0
  %509 = vmatpush1.bf16.msra.mxu0 0
  %510 = vmatprep.subr.bf16.mxu0 0
  %511 = vmatpush1.bf16.msra.mxu0 0
  %512 = vmatprep.subr.bf16.mxu0 0
  %513 = vmatpush1.bf16.msra.mxu0 0
  %514 = vmatprep.subr.bf16.mxu0 0
  %515 = vmatpush1.bf16.msra.mxu0 0
  %516 = vmatprep.subr.bf16.mxu0 0
  %517 = vmatpush1.bf16.msra.mxu0 0
  %518 = vmatprep.subr.bf16.mxu0 0
  %519 = vmatpush1.bf16.msra.mxu0 0
  %520 = vmatprep.subr.bf16.mxu0 0
  %521 = vmatpush1.bf16.msra.mxu0 0
  %522 = vmatprep.subr.bf16.mxu0 0
  %523 = vmatpush1.bf16.msra.mxu0 0
  %524 = vmatprep.subr.bf16.mxu0 0
  %525 = vmatpush1.bf16.msra.mxu0 0
  %526 = vmatprep.subr.bf16.mxu0 0
  %527 = vmatpush1.bf16.msra.mxu0 0
  %528 = vmatprep.subr.bf16.mxu0 0
  %529 = vmatpush1.bf16.msra.mxu0 0
  %530 = vmatprep.subr.bf16.mxu0 0
  %531 = vmatpush1.bf16.msra.mxu0 0
  %532 = vmatprep.mubr.bf16.mxu0 0
  %533 = vmatmul.mubr.bf16.gmra.mrb[0].mxu0 %v428
  %v534 = vpop.f32.mrb[0].mxu0
  %v535 = vadd.f32 %v474, %v534
  %v536 = vpop.f32.mrb[0].mxu0
  %v537 = vpop.f32.mrb[0].mxu0
  %v538 = vpop.f32.mrb[0].mxu0
  %539 = vdwg.mxu0
  %v540 = vld [vmem:[%s6] sm:$0xf]
  %v541 = vld [vmem:[%s6 + $0x4] sm:$0xf]
  %v542 = vld [vmem:[%s6 + $0x8] sm:$0xf]
  %v543 = vld [vmem:[%s6 + $0xc] sm:$0xf]
  %v544 = vld [vmem:[%s6 + $0x10] sm:$0xf]
  %v545 = vld [vmem:[%s6 + $0x14] sm:$0xf]
  %v546 = vld [vmem:[%s6 + $0x18] sm:$0xf]
  %v547 = vld [vmem:[%s6 + $0x1c] sm:$0xf]
  %v548 = vmul.f32 %v390, 0.25
  %v549 = vmul.f32 %v393, 0.25
  %v550 = vpack.c.bf16 %v549, %v548
  %v551 = vpack.c.bf16 %v465, %v465
  %vm552 = vcmask 130048
  %v554 = vsel %vm552, %v550, 0
  %v557 = vsel %vm552, %v551, 0
  %559 = vmatprep.subr.bf16.mxu0 0
  %560 = vmatpush1.bf16.xpose.msra.mxu0 %v557
  %561 = vmatprep.subr.bf16.mxu0 0
  %562 = vmatpush1.bf16.xpose.msra.mxu0 0
  %563 = vmatprep.subr.bf16.mxu0 0
  %564 = vmatpush1.bf16.xpose.msra.mxu0 0
  %565 = vmatprep.subr.bf16.mxu0 0
  %566 = vmatpush1.bf16.xpose.msra.mxu0 0
  %567 = vmatprep.subr.bf16.mxu0 0
  %568 = vmatpush1.bf16.xpose.msra.mxu0 0
  %569 = vmatprep.subr.bf16.mxu0 0
  %570 = vmatpush1.bf16.xpose.msra.mxu0 0
  %571 = vmatprep.subr.bf16.mxu0 0
  %572 = vmatpush1.bf16.xpose.msra.mxu0 0
  %573 = vmatprep.subr.bf16.mxu0 0
  %574 = vmatpush1.bf16.xpose.msra.mxu0 0
  %575 = vmatprep.subr.bf16.mxu0 0
  %576 = vmatpush1.bf16.xpose.msra.mxu0 0
  %577 = vmatprep.subr.bf16.mxu0 0
  %578 = vmatpush1.bf16.xpose.msra.mxu0 0
  %579 = vmatprep.subr.bf16.mxu0 0
  %580 = vmatpush1.bf16.xpose.msra.mxu0 0
  %581 = vmatprep.subr.bf16.mxu0 0
  %582 = vmatpush1.bf16.xpose.msra.mxu0 0
  %583 = vmatprep.subr.bf16.mxu0 0
  %584 = vmatpush1.bf16.xpose.msra.mxu0 0
  %585 = vmatprep.subr.bf16.mxu0 0
  %586 = vmatpush1.bf16.xpose.msra.mxu0 0
  %587 = vmatprep.subr.bf16.mxu0 0
  %588 = vmatpush1.bf16.xpose.msra.mxu0 0
  %589 = vmatprep.subr.bf16.mxu0 0
  %590 = vmatpush1.bf16.xpose.msra.mxu0 0
  %591 = vmatprep.mubr.bf16.mxu0 0
  %592 = vmatmul.mubr.bf16.gmra.mrb[0].mxu0 %v554
  %v593 = vpop.f32.mrb[0].mxu0
  %v594 = vadd.f32 0.0, %v593
  %v595 = vpop.f32.mrb[0].mxu0
  %v596 = vpop.f32.mrb[0].mxu0
  %v597 = vadd.f32 0.0, %v596
  %v598 = vpop.f32.mrb[0].mxu0
  %599 = vdwg.mxu0
  %vm600 = vcmask 15360
  %v601 = vsel %vm600, %v594, -inf
  %602 = vmax.xlane.f32.xlu0 %v601
  %v603 = vpop.xlane.xlu0 %602
  %v604 = vsel %vm600, %v597, -inf
  %605 = vmax.xlane.f32.xlu0 %v604
  %v606 = vpop.xlane.xlu0 %605
  %v607 = vsub.f32 %v594, %v603
  %v608 = vsub.f32 %v597, %v606
  %v609 = vmul.f32 %v607, 1.442695
  %v610 = vpow.pop %v609
  %v611 = vmul.f32 %v608, 1.442695
  %v612 = vpow.pop %v611
  %v613 = vsel %vm600, %v610, 0.0
  %614 = vadd.xlane.f32.xlu0 %v613
  %v615 = vpop.xlane.xlu0 %614
  %v616 = vsel %vm600, %v612, 0.0
  %617 = vadd.xlane.f32.xlu0 %v616
  %v618 = vpop.xlane.xlu0 %617
  %v619 = vrcp.pop %v615
  %v620 = vmul.f32 %v610, %v619
  %v621 = vrcp.pop %v618
  %v622 = vmul.f32 %v612, %v621
  %v623 = vpack.c.bf16 %v622, %v620
  %v624 = vpack.c.bf16 %v535, %v535
  %v626 = vsel %vm600, %v623, 0
  %vm628 = vcmask 1040384
  %v630 = vsel %vm628, %v624, 0
  %632 = vmatprep.subr.bf16.mxu0 0
  %633 = vmatpush1.bf16.msra.mxu0 %v630
  %634 = vmatprep.subr.bf16.mxu0 0
  %635 = vmatpush1.bf16.msra.mxu0 0
  %636 = vmatprep.subr.bf16.mxu0 0
  %637 = vmatpush1.bf16.msra.mxu0 0
  %638 = vmatprep.subr.bf16.mxu0 0
  %639 = vmatpush1.bf16.msra.mxu0 0
  %640 = vmatprep.subr.bf16.mxu0 0
  %641 = vmatpush1.bf16.msra.mxu0 0
  %642 = vmatprep.subr.bf16.mxu0 0
  %643 = vmatpush1.bf16.msra.mxu0 0
  %644 = vmatprep.subr.bf16.mxu0 0
  %645 = vmatpush1.bf16.msra.mxu0 0
  %646 = vmatprep.subr.bf16.mxu0 0
  %647 = vmatpush1.bf16.msra.mxu0 0
  %648 = vmatprep.subr.bf16.mxu0 0
  %649 = vmatpush1.bf16.msra.mxu0 0
  %650 = vmatprep.subr.bf16.mxu0 0
  %651 = vmatpush1.bf16.msra.mxu0 0
  %652 = vmatprep.subr.bf16.mxu0 0
  %653 = vmatpush1.bf16.msra.mxu0 0
  %654 = vmatprep.subr.bf16.mxu0 0
  %655 = vmatpush1.bf16.msra.mxu0 0
  %656 = vmatprep.subr.bf16.mxu0 0
  %657 = vmatpush1.bf16.msra.mxu0 0
  %658 = vmatprep.subr.bf16.mxu0 0
  %659 = vmatpush1.bf16.msra.mxu0 0
  %660 = vmatprep.subr.bf16.mxu0 0
  %661 = vmatpush1.bf16.msra.mxu0 0
  %662 = vmatprep.subr.bf16.mxu0 0
  %663 = vmatpush1.bf16.msra.mxu0 0
  %664 = vmatprep.mubr.bf16.mxu0 0
  %665 = vmatmul.mubr.bf16.gmra.mrb[0].mxu0 %v626
  %v666 = vpop.f32.mrb[0].mxu0
  %v667 = vadd.f32 0.0, %v666
  %v668 = vpop.f32.mrb[0].mxu0
  %v669 = vpop.f32.mrb[0].mxu0
  %v670 = vadd.f32 0.0, %v669
  %v671 = vpop.f32.mrb[0].mxu0
  %672 = vdwg.mxu0
  %v673 = vpack.c.bf16 %v670, %v667
  %675 = vrot.lane.b32.xlu0 %v550, 112
  %v676 = vpop.permute.xlu0 %675
  %678 = vrot.lane.b32.xlu0 %v551, 112
  %v679 = vpop.permute.xlu0 %678
  %v681 = vsel %vm552, %v676, 0
  %v684 = vsel %vm552, %v679, 0
  %686 = vmatprep.subr.bf16.mxu0 0
  %687 = vmatpush1.bf16.xpose.msra.mxu0 %v684
  %688 = vmatprep.subr.bf16.mxu0 0
  %689 = vmatpush1.bf16.xpose.msra.mxu0 0
  %690 = vmatprep.subr.bf16.mxu0 0
  %691 = vmatpush1.bf16.xpose.msra.mxu0 0
  %692 = vmatprep.subr.bf16.mxu0 0
  %693 = vmatpush1.bf16.xpose.msra.mxu0 0
  %694 = vmatprep.subr.bf16.mxu0 0
  %695 = vmatpush1.bf16.xpose.msra.mxu0 0
  %696 = vmatprep.subr.bf16.mxu0 0
  %697 = vmatpush1.bf16.xpose.msra.mxu0 0
  %698 = vmatprep.subr.bf16.mxu0 0
  %699 = vmatpush1.bf16.xpose.msra.mxu0 0
  %700 = vmatprep.subr.bf16.mxu0 0
  %701 = vmatpush1.bf16.xpose.msra.mxu0 0
  %702 = vmatprep.subr.bf16.mxu0 0
  %703 = vmatpush1.bf16.xpose.msra.mxu0 0
  %704 = vmatprep.subr.bf16.mxu0 0
  %705 = vmatpush1.bf16.xpose.msra.mxu0 0
  %706 = vmatprep.subr.bf16.mxu0 0
  %707 = vmatpush1.bf16.xpose.msra.mxu0 0
  %708 = vmatprep.subr.bf16.mxu0 0
  %709 = vmatpush1.bf16.xpose.msra.mxu0 0
  %710 = vmatprep.subr.bf16.mxu0 0
  %711 = vmatpush1.bf16.xpose.msra.mxu0 0
  %712 = vmatprep.subr.bf16.mxu0 0
  %713 = vmatpush1.bf16.xpose.msra.mxu0 0
  %714 = vmatprep.subr.bf16.mxu0 0
  %715 = vmatpush1.bf16.xpose.msra.mxu0 0
  %716 = vmatprep.subr.bf16.mxu0 0
  %717 = vmatpush1.bf16.xpose.msra.mxu0 0
  %718 = vmatprep.mubr.bf16.mxu0 0
  %719 = vmatmul.mubr.bf16.gmra.mrb[0].mxu0 %v681
  %v720 = vpop.f32.mrb[0].mxu0
  %v721 = vadd.f32 0.0, %v720
  %v722 = vpop.f32.mrb[0].mxu0
  %v723 = vpop.f32.mrb[0].mxu0
  %v724 = vadd.f32 0.0, %v723
  %v725 = vpop.f32.mrb[0].mxu0
  %726 = vdwg.mxu0
  %v727 = vsel %vm600, %v721, -inf
  %728 = vmax.xlane.f32.xlu0 %v727
  %v729 = vpop.xlane.xlu0 %728
  %v730 = vsel %vm600, %v724, -inf
  %731 = vmax.xlane.f32.xlu0 %v730
  %v732 = vpop.xlane.xlu0 %731
  %v733 = vsub.f32 %v721, %v729
  %v734 = vsub.f32 %v724, %v732
  %v735 = vmul.f32 %v733, 1.442695
  %v736 = vpow.pop %v735
  %v737 = vmul.f32 %v734, 1.442695
  %v738 = vpow.pop %v737
  %v739 = vsel %vm600, %v736, 0.0
  %740 = vadd.xlane.f32.xlu0 %v739
  %v741 = vpop.xlane.xlu0 %740
  %v742 = vsel %vm600, %v738, 0.0
  %743 = vadd.xlane.f32.xlu0 %v742
  %v744 = vpop.xlane.xlu0 %743
  %v745 = vrcp.pop %v741
  %v746 = vmul.f32 %v736, %v745
  %v747 = vrcp.pop %v744
  %v748 = vmul.f32 %v738, %v747
  %v749 = vpack.c.bf16 %v748, %v746
  %751 = vrot.lane.b32.xlu0 %v624, 112
  %v752 = vpop.permute.xlu0 %751
  %v754 = vsel %vm600, %v749, 0
  %v757 = vsel %vm628, %v752, 0
  %759 = vmatprep.subr.bf16.mxu0 0
  %760 = vmatpush1.bf16.msra.mxu0 %v757
  %761 = vmatprep.subr.bf16.mxu0 0
  %762 = vmatpush1.bf16.msra.mxu0 0
  %763 = vmatprep.subr.bf16.mxu0 0
  %764 = vmatpush1.bf16.msra.mxu0 0
  %765 = vmatprep.subr.bf16.mxu0 0
  %766 = vmatpush1.bf16.msra.mxu0 0
  %767 = vmatprep.subr.bf16.mxu0 0
  %768 = vmatpush1.bf16.msra.mxu0 0
  %769 = vmatprep.subr.bf16.mxu0 0
  %770 = vmatpush1.bf16.msra.mxu0 0
  %771 = vmatprep.subr.bf16.mxu0 0
  %772 = vmatpush1.bf16.msra.mxu0 0
  %773 = vmatprep.subr.bf16.mxu0 0
  %774 = vmatpush1.bf16.msra.mxu0 0
  %775 = vmatprep.subr.bf16.mxu0 0
  %776 = vmatpush1.bf16.msra.mxu0 0
  %777 = vmatprep.subr.bf16.mxu0 0
  %778 = vmatpush1.bf16.msra.mxu0 0
  %779 = vmatprep.subr.bf16.mxu0 0
  %780 = vmatpush1.bf16.msra.mxu0 0
  %781 = vmatprep.subr.bf16.mxu0 0
  %782 = vmatpush1.bf16.msra.mxu0 0
  %783 = vmatprep.subr.bf16.mxu0 0
  %784 = vmatpush1.bf16.msra.mxu0 0
  %785 = vmatprep.subr.bf16.mxu0 0
  %786 = vmatpush1.bf16.msra.mxu0 0
  %787 = vmatprep.subr.bf16.mxu0 0
  %788 = vmatpush1.bf16.msra.mxu0 0
  %789 = vmatprep.subr.bf16.mxu0 0
  %790 = vmatpush1.bf16.msra.mxu0 0
  %791 = vmatprep.mubr.bf16.mxu0 0
  %792 = vmatmul.mubr.bf16.gmra.mrb[0].mxu0 %v754
  %v793 = vpop.f32.mrb[0].mxu0
  %v794 = vadd.f32 0.0, %v793
  %v795 = vpop.f32.mrb[0].mxu0
  %v796 = vpop.f32.mrb[0].mxu0
  %v797 = vadd.f32 0.0, %v796
  %v798 = vpop.f32.mrb[0].mxu0
  %799 = vdwg.mxu0
  %v800 = vpack.c.bf16 %v797, %v794
  %v803 = vunpack.c.l.b16 %v542
  %v804 = vunpack.c.l.b16 %v543
  %v805 = vpack.c.b16 %v804, %v803
  %v808 = vsel %vm552, %v800, 0
  %810 = vmatprep.subr.bf16.mxu0 0
  %811 = vmatpush1.bf16.msra.mxu0 %v805
  %812 = vmatprep.subr.bf16.mxu0 0
  %813 = vmatpush1.bf16.msra.mxu0 0
  %814 = vmatprep.subr.bf16.mxu0 0
  %815 = vmatpush1.bf16.msra.mxu0 0
  %816 = vmatprep.subr.bf16.mxu0 0
  %817 = vmatpush1.bf16.msra.mxu0 0
  %818 = vmatprep.subr.bf16.mxu0 0
  %819 = vmatpush1.bf16.msra.mxu0 0
  %820 = vmatprep.subr.bf16.mxu0 0
  %821 = vmatpush1.bf16.msra.mxu0 0
  %822 = vmatprep.subr.bf16.mxu0 0
  %823 = vmatpush1.bf16.msra.mxu0 0
  %824 = vmatprep.subr.bf16.mxu0 0
  %825 = vmatpush1.bf16.msra.mxu0 0
  %826 = vmatprep.subr.bf16.mxu0 0
  %827 = vmatpush1.bf16.msra.mxu0 0
  %828 = vmatprep.subr.bf16.mxu0 0
  %829 = vmatpush1.bf16.msra.mxu0 0
  %830 = vmatprep.subr.bf16.mxu0 0
  %831 = vmatpush1.bf16.msra.mxu0 0
  %832 = vmatprep.subr.bf16.mxu0 0
  %833 = vmatpush1.bf16.msra.mxu0 0
  %834 = vmatprep.subr.bf16.mxu0 0
  %835 = vmatpush1.bf16.msra.mxu0 0
  %836 = vmatprep.subr.bf16.mxu0 0
  %837 = vmatpush1.bf16.msra.mxu0 0
  %838 = vmatprep.subr.bf16.mxu0 0
  %839 = vmatpush1.bf16.msra.mxu0 0
  %840 = vmatprep.subr.bf16.mxu0 0
  %841 = vmatpush1.bf16.msra.mxu0 0
  %842 = vmatprep.mubr.bf16.mxu0 0
  %843 = vmatmul.mubr.bf16.gmra.mrb[0].mxu0 %v808
  %v844 = vpop.f32.mrb[0].mxu0
  %v845 = vadd.f32 0.0, %v844
  %v846 = vpop.f32.mrb[0].mxu0
  %v847 = vpop.f32.mrb[0].mxu0
  %v848 = vadd.f32 0.0, %v847
  %v849 = vpop.f32.mrb[0].mxu0
  %850 = vdwg.mxu0
  %v853 = vunpack.c.l.b16 %v540
  %v854 = vunpack.c.l.b16 %v541
  %v855 = vpack.c.b16 %v854, %v853
  %v858 = vsel %vm552, %v673, 0
  %860 = vmatprep.subr.bf16.mxu0 0
  %861 = vmatpush1.bf16.msra.mxu0 %v855
  %862 = vmatprep.subr.bf16.mxu0 0
  %863 = vmatpush1.bf16.msra.mxu0 0
  %864 = vmatprep.subr.bf16.mxu0 0
  %865 = vmatpush1.bf16.msra.mxu0 0
  %866 = vmatprep.subr.bf16.mxu0 0
  %867 = vmatpush1.bf16.msra.mxu0 0
  %868 = vmatprep.subr.bf16.mxu0 0
  %869 = vmatpush1.bf16.msra.mxu0 0
  %870 = vmatprep.subr.bf16.mxu0 0
  %871 = vmatpush1.bf16.msra.mxu0 0
  %872 = vmatprep.subr.bf16.mxu0 0
  %873 = vmatpush1.bf16.msra.mxu0 0
  %874 = vmatprep.subr.bf16.mxu0 0
  %875 = vmatpush1.bf16.msra.mxu0 0
  %876 = vmatprep.subr.bf16.mxu0 0
  %877 = vmatpush1.bf16.msra.mxu0 0
  %878 = vmatprep.subr.bf16.mxu0 0
  %879 = vmatpush1.bf16.msra.mxu0 0
  %880 = vmatprep.subr.bf16.mxu0 0
  %881 = vmatpush1.bf16.msra.mxu0 0
  %882 = vmatprep.subr.bf16.mxu0 0
  %883 = vmatpush1.bf16.msra.mxu0 0
  %884 = vmatprep.subr.bf16.mxu0 0
  %885 = vmatpush1.bf16.msra.mxu0 0
  %886 = vmatprep.subr.bf16.mxu0 0
  %887 = vmatpush1.bf16.msra.mxu0 0
  %888 = vmatprep.subr.bf16.mxu0 0
  %889 = vmatpush1.bf16.msra.mxu0 0
  %890 = vmatprep.subr.bf16.mxu0 0
  %891 = vmatpush1.bf16.msra.mxu0 0
  %892 = vmatprep.mubr.bf16.mxu0 0
  %893 = vmatmul.mubr.bf16.gmra.mrb[0].mxu0 %v858
  %v894 = vpop.f32.mrb[0].mxu0
  %v895 = vadd.f32 %v845, %v894
  %v896 = vpop.f32.mrb[0].mxu0
  %v897 = vpop.f32.mrb[0].mxu0
  %v898 = vadd.f32 %v848, %v897
  %v899 = vpop.f32.mrb[0].mxu0
  %900 = vdwg.mxu0
  %901 = vrot.lane.b32.xlu0 %v550, 96
  %v902 = vpop.permute.xlu0 %901
  %903 = vrot.lane.b32.xlu0 %v551, 96
  %v904 = vpop.permute.xlu0 %903
  %v906 = vsel %vm552, %v902, 0
  %v909 = vsel %vm552, %v904, 0
  %911 = vmatprep.subr.bf16.mxu0 0
  %912 = vmatpush1.bf16.xpose.msra.mxu0 %v909
  %913 = vmatprep.subr.bf16.mxu0 0
  %914 = vmatpush1.bf16.xpose.msra.mxu0 0
  %915 = vmatprep.subr.bf16.mxu0 0
  %916 = vmatpush1.bf16.xpose.msra.mxu0 0
  %917 = vmatprep.subr.bf16.mxu0 0
  %918 = vmatpush1.bf16.xpose.msra.mxu0 0
  %919 = vmatprep.subr.bf16.mxu0 0
  %920 = vmatpush1.bf16.xpose.msra.mxu0 0
  %921 = vmatprep.subr.bf16.mxu0 0
  %922 = vmatpush1.bf16.xpose.msra.mxu0 0
  %923 = vmatprep.subr.bf16.mxu0 0
  %924 = vmatpush1.bf16.xpose.msra.mxu0 0
  %925 = vmatprep.subr.bf16.mxu0 0
  %926 = vmatpush1.bf16.xpose.msra.mxu0 0
  %927 = vmatprep.subr.bf16.mxu0 0
  %928 = vmatpush1.bf16.xpose.msra.mxu0 0
  %929 = vmatprep.subr.bf16.mxu0 0
  %930 = vmatpush1.bf16.xpose.msra.mxu0 0
  %931 = vmatprep.subr.bf16.mxu0 0
  %932 = vmatpush1.bf16.xpose.msra.mxu0 0
  %933 = vmatprep.subr.bf16.mxu0 0
  %934 = vmatpush1.bf16.xpose.msra.mxu0 0
  %935 = vmatprep.subr.bf16.mxu0 0
  %936 = vmatpush1.bf16.xpose.msra.mxu0 0
  %937 = vmatprep.subr.bf16.mxu0 0
  %938 = vmatpush1.bf16.xpose.msra.mxu0 0
  %939 = vmatprep.subr.bf16.mxu0 0
  %940 = vmatpush1.bf16.xpose.msra.mxu0 0
  %941 = vmatprep.subr.bf16.mxu0 0
  %942 = vmatpush1.bf16.xpose.msra.mxu0 0
  %943 = vmatprep.mubr.bf16.mxu0 0
  %944 = vmatmul.mubr.bf16.gmra.mrb[0].mxu0 %v906
  %v945 = vpop.f32.mrb[0].mxu0
  %v946 = vadd.f32 0.0, %v945
  %v947 = vpop.f32.mrb[0].mxu0
  %v948 = vpop.f32.mrb[0].mxu0
  %v949 = vadd.f32 0.0, %v948
  %v950 = vpop.f32.mrb[0].mxu0
  %951 = vdwg.mxu0
  %v952 = vsel %vm600, %v946, -inf
  %953 = vmax.xlane.f32.xlu0 %v952
  %v954 = vpop.xlane.xlu0 %953
  %v955 = vsel %vm600, %v949, -inf
  %956 = vmax.xlane.f32.xlu0 %v955
  %v957 = vpop.xlane.xlu0 %956
  %v958 = vsub.f32 %v946, %v954
  %v959 = vsub.f32 %v949, %v957
  %v960 = vmul.f32 %v958, 1.442695
  %v961 = vpow.pop %v960
  %v962 = vmul.f32 %v959, 1.442695
  %v963 = vpow.pop %v962
  %v964 = vsel %vm600, %v961, 0.0
  %965 = vadd.xlane.f32.xlu0 %v964
  %v966 = vpop.xlane.xlu0 %965
  %v967 = vsel %vm600, %v963, 0.0
  %968 = vadd.xlane.f32.xlu0 %v967
  %v969 = vpop.xlane.xlu0 %968
  %v970 = vrcp.pop %v966
  %v971 = vmul.f32 %v961, %v970
  %v972 = vrcp.pop %v969
  %v973 = vmul.f32 %v963, %v972
  %v974 = vpack.c.bf16 %v973, %v971
  %975 = vrot.lane.b32.xlu0 %v624, 96
  %v976 = vpop.permute.xlu0 %975
  %v978 = vsel %vm600, %v974, 0
  %v981 = vsel %vm628, %v976, 0
  %983 = vmatprep.subr.bf16.mxu0 0
  %984 = vmatpush1.bf16.msra.mxu0 %v981
  %985 = vmatprep.subr.bf16.mxu0 0
  %986 = vmatpush1.bf16.msra.mxu0 0
  %987 = vmatprep.subr.bf16.mxu0 0
  %988 = vmatpush1.bf16.msra.mxu0 0
  %989 = vmatprep.subr.bf16.mxu0 0
  %990 = vmatpush1.bf16.msra.mxu0 0
  %991 = vmatprep.subr.bf16.mxu0 0
  %992 = vmatpush1.bf16.msra.mxu0 0
  %993 = vmatprep.subr.bf16.mxu0 0
  %994 = vmatpush1.bf16.msra.mxu0 0
  %995 = vmatprep.subr.bf16.mxu0 0
  %996 = vmatpush1.bf16.msra.mxu0 0
  %997 = vmatprep.subr.bf16.mxu0 0
  %998 = vmatpush1.bf16.msra.mxu0 0
  %999 = vmatprep.subr.bf16.mxu0 0
  %1000 = vmatpush1.bf16.msra.mxu0 0
  %1001 = vmatprep.subr.bf16.mxu0 0
  %1002 = vmatpush1.bf16.msra.mxu0 0
  %1003 = vmatprep.subr.bf16.mxu0 0
  %1004 = vmatpush1.bf16.msra.mxu0 0
  %1005 = vmatprep.subr.bf16.mxu0 0
  %1006 = vmatpush1.bf16.msra.mxu0 0
  %1007 = vmatprep.subr.bf16.mxu0 0
  %1008 = vmatpush1.bf16.msra.mxu0 0
  %1009 = vmatprep.subr.bf16.mxu0 0
  %1010 = vmatpush1.bf16.msra.mxu0 0
  %1011 = vmatprep.subr.bf16.mxu0 0
  %1012 = vmatpush1.bf16.msra.mxu0 0
  %1013 = vmatprep.subr.bf16.mxu0 0
  %1014 = vmatpush1.bf16.msra.mxu0 0
  %1015 = vmatprep.mubr.bf16.mxu0 0
  %1016 = vmatmul.mubr.bf16.gmra.mrb[0].mxu0 %v978
  %v1017 = vpop.f32.mrb[0].mxu0
  %v1018 = vadd.f32 0.0, %v1017
  %v1019 = vpop.f32.mrb[0].mxu0
  %v1020 = vpop.f32.mrb[0].mxu0
  %v1021 = vadd.f32 0.0, %v1020
  %v1022 = vpop.f32.mrb[0].mxu0
  %1023 = vdwg.mxu0
  %v1024 = vpack.c.bf16 %v1021, %v1018
  %v1027 = vunpack.c.l.b16 %v544
  %v1028 = vunpack.c.l.b16 %v545
  %v1029 = vpack.c.b16 %v1028, %v1027
  %v1032 = vsel %vm552, %v1024, 0
  %1034 = vmatprep.subr.bf16.mxu0 0
  %1035 = vmatpush1.bf16.msra.mxu0 %v1029
  %1036 = vmatprep.subr.bf16.mxu0 0
  %1037 = vmatpush1.bf16.msra.mxu0 0
  %1038 = vmatprep.subr.bf16.mxu0 0
  %1039 = vmatpush1.bf16.msra.mxu0 0
  %1040 = vmatprep.subr.bf16.mxu0 0
  %1041 = vmatpush1.bf16.msra.mxu0 0
  %1042 = vmatprep.subr.bf16.mxu0 0
  %1043 = vmatpush1.bf16.msra.mxu0 0
  %1044 = vmatprep.subr.bf16.mxu0 0
  %1045 = vmatpush1.bf16.msra.mxu0 0
  %1046 = vmatprep.subr.bf16.mxu0 0
  %1047 = vmatpush1.bf16.msra.mxu0 0
  %1048 = vmatprep.subr.bf16.mxu0 0
  %1049 = vmatpush1.bf16.msra.mxu0 0
  %1050 = vmatprep.subr.bf16.mxu0 0
  %1051 = vmatpush1.bf16.msra.mxu0 0
  %1052 = vmatprep.subr.bf16.mxu0 0
  %1053 = vmatpush1.bf16.msra.mxu0 0
  %1054 = vmatprep.subr.bf16.mxu0 0
  %1055 = vmatpush1.bf16.msra.mxu0 0
  %1056 = vmatprep.subr.bf16.mxu0 0
  %1057 = vmatpush1.bf16.msra.mxu0 0
  %1058 = vmatprep.subr.bf16.mxu0 0
  %1059 = vmatpush1.bf16.msra.mxu0 0
  %1060 = vmatprep.subr.bf16.mxu0 0
  %1061 = vmatpush1.bf16.msra.mxu0 0
  %1062 = vmatprep.subr.bf16.mxu0 0
  %1063 = vmatpush1.bf16.msra.mxu0 0
  %1064 = vmatprep.subr.bf16.mxu0 0
  %1065 = vmatpush1.bf16.msra.mxu0 0
  %1066 = vmatprep.mubr.bf16.mxu0 0
  %1067 = vmatmul.mubr.bf16.gmra.mrb[0].mxu0 %v1032
  %v1068 = vpop.f32.mrb[0].mxu0
  %v1069 = vadd.f32 0.0, %v1068
  %v1070 = vpop.f32.mrb[0].mxu0
  %v1071 = vpop.f32.mrb[0].mxu0
  %v1072 = vadd.f32 0.0, %v1071
  %v1073 = vpop.f32.mrb[0].mxu0
  %1074 = vdwg.mxu0
  %v1075 = vadd.f32 %v895, %v1069
  %v1076 = vadd.f32 %v898, %v1072
  %1077 = vrot.lane.b32.xlu0 %v550, 80
  %v1078 = vpop.permute.xlu0 %1077
  %1079 = vrot.lane.b32.xlu0 %v551, 80
  %v1080 = vpop.permute.xlu0 %1079
  %v1082 = vsel %vm552, %v1078, 0
  %v1085 = vsel %vm552, %v1080, 0
  %1087 = vmatprep.subr.bf16.mxu0 0
  %1088 = vmatpush1.bf16.xpose.msra.mxu0 %v1085
  %1089 = vmatprep.subr.bf16.mxu0 0
  %1090 = vmatpush1.bf16.xpose.msra.mxu0 0
  %1091 = vmatprep.subr.bf16.mxu0 0
  %1092 = vmatpush1.bf16.xpose.msra.mxu0 0
  %1093 = vmatprep.subr.bf16.mxu0 0
  %1094 = vmatpush1.bf16.xpose.msra.mxu0 0
  %1095 = vmatprep.subr.bf16.mxu0 0
  %1096 = vmatpush1.bf16.xpose.msra.mxu0 0
  %1097 = vmatprep.subr.bf16.mxu0 0
  %1098 = vmatpush1.bf16.xpose.msra.mxu0 0
  %1099 = vmatprep.subr.bf16.mxu0 0
  %1100 = vmatpush1.bf16.xpose.msra.mxu0 0
  %1101 = vmatprep.subr.bf16.mxu0 0
  %1102 = vmatpush1.bf16.xpose.msra.mxu0 0
  %1103 = vmatprep.subr.bf16.mxu0 0
  %1104 = vmatpush1.bf16.xpose.msra.mxu0 0
  %1105 = vmatprep.subr.bf16.mxu0 0
  %1106 = vmatpush1.bf16.xpose.msra.mxu0 0
  %1107 = vmatprep.subr.bf16.mxu0 0
  %1108 = vmatpush1.bf16.xpose.msra.mxu0 0
  %1109 = vmatprep.subr.bf16.mxu0 0
  %1110 = vmatpush1.bf16.xpose.msra.mxu0 0
  %1111 = vmatprep.subr.bf16.mxu0 0
  %1112 = vmatpush1.bf16.xpose.msra.mxu0 0
  %1113 = vmatprep.subr.bf16.mxu0 0
  %1114 = vmatpush1.bf16.xpose.msra.mxu0 0
  %1115 = vmatprep.subr.bf16.mxu0 0
  %1116 = vmatpush1.bf16.xpose.msra.mxu0 0
  %1117 = vmatprep.subr.bf16.mxu0 0
  %1118 = vmatpush1.bf16.xpose.msra.mxu0 0
  %1119 = vmatprep.mubr.bf16.mxu0 0
  %1120 = vmatmul.mubr.bf16.gmra.mrb[0].mxu0 %v1082
  %v1121 = vpop.f32.mrb[0].mxu0
  %v1122 = vadd.f32 0.0, %v1121
  %v1123 = vpop.f32.mrb[0].mxu0
  %v1124 = vpop.f32.mrb[0].mxu0
  %v1125 = vadd.f32 0.0, %v1124
  %v1126 = vpop.f32.mrb[0].mxu0
  %1127 = vdwg.mxu0
  %v1128 = vsel %vm600, %v1122, -inf
  %1129 = vmax.xlane.f32.xlu0 %v1128
  %v1130 = vpop.xlane.xlu0 %1129
  %v1131 = vsel %vm600, %v1125, -inf
  %1132 = vmax.xlane.f32.xlu0 %v1131
  %v1133 = vpop.xlane.xlu0 %1132
  %v1134 = vsub.f32 %v1122, %v1130
  %v1135 = vsub.f32 %v1125, %v1133
  %v1136 = vmul.f32 %v1134, 1.442695
  %v1137 = vpow.pop %v1136
  %v1138 = vmul.f32 %v1135, 1.442695
  %v1139 = vpow.pop %v1138
  %v1140 = vsel %vm600, %v1137, 0.0
  %1141 = vadd.xlane.f32.xlu0 %v1140
  %v1142 = vpop.xlane.xlu0 %1141
  %v1143 = vsel %vm600, %v1139, 0.0
  %1144 = vadd.xlane.f32.xlu0 %v1143
  %v1145 = vpop.xlane.xlu0 %1144
  %v1146 = vrcp.pop %v1142
  %v1147 = vmul.f32 %v1137, %v1146
  %v1148 = vrcp.pop %v1145
  %v1149 = vmul.f32 %v1139, %v1148
  %v1150 = vpack.c.bf16 %v1149, %v1147
  %1151 = vrot.lane.b32.xlu0 %v624, 80
  %v1152 = vpop.permute.xlu0 %1151
  %v1154 = vsel %vm600, %v1150, 0
  %v1157 = vsel %vm628, %v1152, 0
  %1159 = vmatprep.subr.bf16.mxu0 0
  %1160 = vmatpush1.bf16.msra.mxu0 %v1157
  %1161 = vmatprep.subr.bf16.mxu0 0
  %1162 = vmatpush1.bf16.msra.mxu0 0
  %1163 = vmatprep.subr.bf16.mxu0 0
  %1164 = vmatpush1.bf16.msra.mxu0 0
  %1165 = vmatprep.subr.bf16.mxu0 0
  %1166 = vmatpush1.bf16.msra.mxu0 0
  %1167 = vmatprep.subr.bf16.mxu0 0
  %1168 = vmatpush1.bf16.msra.mxu0 0
  %1169 = vmatprep.subr.bf16.mxu0 0
  %1170 = vmatpush1.bf16.msra.mxu0 0
  %1171 = vmatprep.subr.bf16.mxu0 0
  %1172 = vmatpush1.bf16.msra.mxu0 0
  %1173 = vmatprep.subr.bf16.mxu0 0
  %1174 = vmatpush1.bf16.msra.mxu0 0
  %1175 = vmatprep.subr.bf16.mxu0 0
  %1176 = vmatpush1.bf16.msra.mxu0 0
  %1177 = vmatprep.subr.bf16.mxu0 0
  %1178 = vmatpush1.bf16.msra.mxu0 0
  %1179 = vmatprep.subr.bf16.mxu0 0
  %1180 = vmatpush1.bf16.msra.mxu0 0
  %1181 = vmatprep.subr.bf16.mxu0 0
  %1182 = vmatpush1.bf16.msra.mxu0 0
  %1183 = vmatprep.subr.bf16.mxu0 0
  %1184 = vmatpush1.bf16.msra.mxu0 0
  %1185 = vmatprep.subr.bf16.mxu0 0
  %1186 = vmatpush1.bf16.msra.mxu0 0
  %1187 = vmatprep.subr.bf16.mxu0 0
  %1188 = vmatpush1.bf16.msra.mxu0 0
  %1189 = vmatprep.subr.bf16.mxu0 0
  %1190 = vmatpush1.bf16.msra.mxu0 0
  %1191 = vmatprep.mubr.bf16.mxu0 0
  %1192 = vmatmul.mubr.bf16.gmra.mrb[0].mxu0 %v1154
  %v1193 = vpop.f32.mrb[0].mxu0
  %v1194 = vadd.f32 0.0, %v1193
  %v1195 = vpop.f32.mrb[0].mxu0
  %v1196 = vpop.f32.mrb[0].mxu0
  %v1197 = vadd.f32 0.0, %v1196
  %v1198 = vpop.f32.mrb[0].mxu0
  %1199 = vdwg.mxu0
  %v1200 = vpack.c.bf16 %v1197, %v1194
  %v1203 = vunpack.c.l.b16 %v546
  %v1204 = vunpack.c.l.b16 %v547
  %v1205 = vpack.c.b16 %v1204, %v1203
  %v1208 = vsel %vm552, %v1200, 0
  %1210 = vmatprep.subr.bf16.mxu0 0
  %1211 = vmatpush1.bf16.msra.mxu0 %v1205
  %1212 = vmatprep.subr.bf16.mxu0 0
  %1213 = vmatpush1.bf16.msra.mxu0 0
  %1214 = vmatprep.subr.bf16.mxu0 0
  %1215 = vmatpush1.bf16.msra.mxu0 0
  %1216 = vmatprep.subr.bf16.mxu0 0
  %1217 = vmatpush1.bf16.msra.mxu0 0
  %1218 = vmatprep.subr.bf16.mxu0 0
  %1219 = vmatpush1.bf16.msra.mxu0 0
  %1220 = vmatprep.subr.bf16.mxu0 0
  %1221 = vmatpush1.bf16.msra.mxu0 0
  %1222 = vmatprep.subr.bf16.mxu0 0
  %1223 = vmatpush1.bf16.msra.mxu0 0
  %1224 = vmatprep.subr.bf16.mxu0 0
  %1225 = vmatpush1.bf16.msra.mxu0 0
  %1226 = vmatprep.subr.bf16.mxu0 0
  %1227 = vmatpush1.bf16.msra.mxu0 0
  %1228 = vmatprep.subr.bf16.mxu0 0
  %1229 = vmatpush1.bf16.msra.mxu0 0
  %1230 = vmatprep.subr.bf16.mxu0 0
  %1231 = vmatpush1.bf16.msra.mxu0 0
  %1232 = vmatprep.subr.bf16.mxu0 0
  %1233 = vmatpush1.bf16.msra.mxu0 0
  %1234 = vmatprep.subr.bf16.mxu0 0
  %1235 = vmatpush1.bf16.msra.mxu0 0
  %1236 = vmatprep.subr.bf16.mxu0 0
  %1237 = vmatpush1.bf16.msra.mxu0 0
  %1238 = vmatprep.subr.bf16.mxu0 0
  %1239 = vmatpush1.bf16.msra.mxu0 0
  %1240 = vmatprep.subr.bf16.mxu0 0
  %1241 = vmatpush1.bf16.msra.mxu0 0
  %1242 = vmatprep.mubr.bf16.mxu0 0
  %1243 = vmatmul.mubr.bf16.gmra.mrb[0].mxu0 %v1208
  %v1244 = vpop.f32.mrb[0].mxu0
  %v1245 = vadd.f32 0.0, %v1244
  %v1246 = vpop.f32.mrb[0].mxu0
  %v1247 = vpop.f32.mrb[0].mxu0
  %v1248 = vadd.f32 0.0, %v1247
  %v1249 = vpop.f32.mrb[0].mxu0
  %1250 = vdwg.mxu0
  %v1251 = vadd.f32 %v1075, %v1245
  %v1252 = vadd.f32 %v1076, %v1248
  %v1253 = vld [vmem:[%s7] sm:$0x1]
  %v1255 = vlaneseq
  %v1256 = vshrl.u32 %v1255, 7
  %v1257 = vsub.s32 0, %v1256
  %v1258 = vrot.slane %v1253, %v1257
  %v1260 = vadd.f32 %v1251, %v1258
  %v1261 = vadd.f32 %v1252, %v1258
  %v1262 = vadd.f32 %v1260, %v86
  %v1263 = vadd.f32 %v1261, %v87
  %v1264 = vld [vmem:[%s8] sm:$0x1]
  %v1265 = vld [vmem:[%s9] sm:$0x1]
  %v1266 = vsel %vm351, %v1262, 0.0
  %1267 = vadd.xlane.f32.xlu0 %v1266
  %v1268 = vpop.xlane.xlu0 %1267
  %v1269 = vsel %vm351, %v1263, 0.0
  %1270 = vadd.xlane.f32.xlu0 %v1269
  %v1271 = vpop.xlane.xlu0 %1270
  %v1272 = vrcp.pop 64.0
  %v1273 = vmul.f32 %v1268, %v1272
  %v1274 = vmul.f32 %v1271, %v1272
  %v1275 = vsub.f32 %v1262, %v1273
  %v1276 = vsub.f32 %v1263, %v1274
  %v1277 = vmul.f32 %v1275, %v1275
  %v1278 = vmul.f32 %v1276, %v1276
  %v1279 = vsel %vm351, %v1277, 0.0
  %1280 = vadd.xlane.f32.xlu0 %v1279
  %v1281 = vpop.xlane.xlu0 %1280
  %v1282 = vsel %vm351, %v1278, 0.0
  %1283 = vadd.xlane.f32.xlu0 %v1282
  %v1284 = vpop.xlane.xlu0 %1283
  %v1285 = vmul.f32 %v1281, %v1272
  %v1286 = vmul.f32 %v1284, %v1272
  %v1287 = vadd.f32 %v1285, 1e-05
  %v1288 = vadd.f32 %v1286, 1e-05
  %v1289 = vrsqrt.pop %v1287
  %v1290 = vrsqrt.pop %v1288
  %v1291 = vmul.f32 %v1275, %v1289
  %v1292 = vmul.f32 %v1276, %v1290
  %v1294 = vlaneseq
  %v1295 = vshrl.u32 %v1294, 7
  %v1296 = vsub.s32 0, %v1295
  %v1297 = vrot.slane %v1264, %v1296
  %v1299 = vmul.f32 %v1291, %v1297
  %v1300 = vmul.f32 %v1292, %v1297
  %v1302 = vlaneseq
  %v1303 = vshrl.u32 %v1302, 7
  %v1304 = vsub.s32 0, %v1303
  %v1305 = vrot.slane %v1265, %v1304
  %v1307 = vadd.f32 %v1299, %v1305
  %v1308 = vadd.f32 %v1300, %v1305
  %v1309 = vlaneseq
  %v1310 = vshrl.u32 %v1309, 7
  %v1311 = vlaneseq
  %v1312 = vand.u32 %v1311, 127
  %vm1313 = vcmp.gt.s32.totalorder %v1312, %v1310
  %v1314 = vsel %vm1313, -1e+09, 0.0
  %v1315 = vld [vmem:[%s10] sm:$0xf]
  %v1316 = vld [vmem:[%s10 + $0x4] sm:$0xf]
  %v1317 = vld [vmem:[%s10 + $0x8] sm:$0xf]
  %v1318 = vld [vmem:[%s10 + $0xc] sm:$0xf]
  %v1319 = vld [vmem:[%s10 + $0x10] sm:$0xf]
  %v1320 = vld [vmem:[%s10 + $0x14] sm:$0xf]
  %v1321 = vld [vmem:[%s10 + $0x18] sm:$0xf]
  %v1322 = vld [vmem:[%s10 + $0x1c] sm:$0xf]
  %v1323 = vld [vmem:[%s10 + $0x20] sm:$0xf]
  %v1324 = vld [vmem:[%s10 + $0x24] sm:$0xf]
  %v1325 = vld [vmem:[%s10 + $0x28] sm:$0xf]
  %v1326 = vld [vmem:[%s10 + $0x2c] sm:$0xf]
  %v1327 = vld [vmem:[%s10 + $0x30] sm:$0xf]
  %v1328 = vld [vmem:[%s10 + $0x34] sm:$0xf]
  %v1329 = vld [vmem:[%s10 + $0x38] sm:$0xf]
  %v1330 = vld [vmem:[%s10 + $0x3c] sm:$0xf]
  %v1331 = vld [vmem:[%s10 + $0x40] sm:$0xf]
  %v1332 = vld [vmem:[%s10 + $0x44] sm:$0xf]
  %v1333 = vld [vmem:[%s10 + $0x48] sm:$0xf]
  %v1334 = vld [vmem:[%s10 + $0x4c] sm:$0xf]
  %v1335 = vld [vmem:[%s10 + $0x50] sm:$0xf]
  %v1336 = vld [vmem:[%s10 + $0x54] sm:$0xf]
  %v1337 = vld [vmem:[%s10 + $0x58] sm:$0xf]
  %v1338 = vld [vmem:[%s10 + $0x5c] sm:$0xf]
  %v1339 = vld [vmem:[%s11] sm:$0x1]
  %v1340 = vld [vmem:[%s11 + $0x1] sm:$0x1]
  %v1341 = vld [vmem:[%s11 + $0x2] sm:$0x1]
  %v1342 = vld [vmem:[%s12] sm:$0xf]
  %v1343 = vld [vmem:[%s12 + $0x4] sm:$0xf]
  %v1344 = vld [vmem:[%s12 + $0x8] sm:$0xf]
  %v1345 = vld [vmem:[%s12 + $0xc] sm:$0xf]
  %v1346 = vld [vmem:[%s12 + $0x10] sm:$0xf]
  %v1347 = vld [vmem:[%s12 + $0x14] sm:$0xf]
  %v1348 = vld [vmem:[%s12 + $0x18] sm:$0xf]
  %v1349 = vld [vmem:[%s12 + $0x1c] sm:$0xf]
  %v1350 = vpack.c.bf16 %v1308, %v1307
  %v1352 = vlaneseq
  %v1353 = vshrl.u32 %v1352, 7
  %v1354 = vsub.s32 0, %v1353
  %v1355 = vrot.slane %v1339, %v1354
  %v1365 = vunpack.c.l.b16 %v1315
  %v1366 = vunpack.c.l.b16 %v1316
  %v1367 = vunpack.c.l.b16 %v1317
  %v1368 = vunpack.c.l.b16 %v1318
  %v1369 = vunpack.c.l.b16 %v1319
  %v1370 = vunpack.c.l.b16 %v1320
  %v1371 = vunpack.c.l.b16 %v1321
  %v1372 = vunpack.c.l.b16 %v1322
  %v1373 = vpack.c.b16 %v1366, %v1365
  %v1374 = vpack.c.b16 %v1368, %v1367
  %v1375 = vpack.c.b16 %v1370, %v1369
  %v1376 = vpack.c.b16 %v1372, %v1371
  %v1382 = vsel %vm351, %v1350, 0
  %1384 = vmatprep.subr.bf16.mxu0 0
  %1385 = vmatpush1.bf16.msra.mxu0 %v1373
  %1386 = vmatprep.subr.bf16.mxu0 0
  %1387 = vmatpush1.bf16.msra.mxu0 %v1374
  %1388 = vmatprep.subr.bf16.mxu0 0
  %1389 = vmatpush1.bf16.msra.mxu0 %v1375
  %1390 = vmatprep.subr.bf16.mxu0 0
  %1391 = vmatpush1.bf16.msra.mxu0 %v1376
  %1392 = vmatprep.subr.bf16.mxu0 0
  %1393 = vmatpush1.bf16.msra.mxu0 0
  %1394 = vmatprep.subr.bf16.mxu0 0
  %1395 = vmatpush1.bf16.msra.mxu0 0
  %1396 = vmatprep.subr.bf16.mxu0 0
  %1397 = vmatpush1.bf16.msra.mxu0 0
  %1398 = vmatprep.subr.bf16.mxu0 0
  %1399 = vmatpush1.bf16.msra.mxu0 0
  %1400 = vmatprep.subr.bf16.mxu0 0
  %1401 = vmatpush1.bf16.msra.mxu0 0
  %1402 = vmatprep.subr.bf16.mxu0 0
  %1403 = vmatpush1.bf16.msra.mxu0 0
  %1404 = vmatprep.subr.bf16.mxu0 0
  %1405 = vmatpush1.bf16.msra.mxu0 0
  %1406 = vmatprep.subr.bf16.mxu0 0
  %1407 = vmatpush1.bf16.msra.mxu0 0
  %1408 = vmatprep.subr.bf16.mxu0 0
  %1409 = vmatpush1.bf16.msra.mxu0 0
  %1410 = vmatprep.subr.bf16.mxu0 0
  %1411 = vmatpush1.bf16.msra.mxu0 0
  %1412 = vmatprep.subr.bf16.mxu0 0
  %1413 = vmatpush1.bf16.msra.mxu0 0
  %1414 = vmatprep.subr.bf16.mxu0 0
  %1415 = vmatpush1.bf16.msra.mxu0 0
  %1416 = vmatprep.mubr.bf16.mxu0 0
  %1417 = vmatmul.mubr.bf16.gmra.mrb[0].mxu0 %v1382
  %v1418 = vpop.f32.mrb[0].mxu0
  %v1419 = vadd.f32 %v1355, %v1418
  %v1420 = vpop.f32.mrb[0].mxu0
  %v1421 = vpop.f32.mrb[0].mxu0
  %v1422 = vadd.f32 %v1355, %v1421
  %v1423 = vpop.f32.mrb[0].mxu0
  %1424 = vdwg.mxu0
  %v1426 = vlaneseq
  %v1427 = vshrl.u32 %v1426, 7
  %v1428 = vsub.s32 0, %v1427
  %v1429 = vrot.slane %v1340, %v1428
  %v1439 = vunpack.c.l.b16 %v1323
  %v1440 = vunpack.c.l.b16 %v1324
  %v1441 = vunpack.c.l.b16 %v1325
  %v1442 = vunpack.c.l.b16 %v1326
  %v1443 = vunpack.c.l.b16 %v1327
  %v1444 = vunpack.c.l.b16 %v1328
  %v1445 = vunpack.c.l.b16 %v1329
  %v1446 = vunpack.c.l.b16 %v1330
  %v1447 = vpack.c.b16 %v1440, %v1439
  %v1448 = vpack.c.b16 %v1442, %v1441
  %v1449 = vpack.c.b16 %v1444, %v1443
  %v1450 = vpack.c.b16 %v1446, %v1445
  %1455 = vmatprep.subr.bf16.mxu0 0
  %1456 = vmatpush1.bf16.msra.mxu0 %v1447
  %1457 = vmatprep.subr.bf16.mxu0 0
  %1458 = vmatpush1.bf16.msra.mxu0 %v1448
  %1459 = vmatprep.subr.bf16.mxu0 0
  %1460 = vmatpush1.bf16.msra.mxu0 %v1449
  %1461 = vmatprep.subr.bf16.mxu0 0
  %1462 = vmatpush1.bf16.msra.mxu0 %v1450
  %1463 = vmatprep.subr.bf16.mxu0 0
  %1464 = vmatpush1.bf16.msra.mxu0 0
  %1465 = vmatprep.subr.bf16.mxu0 0
  %1466 = vmatpush1.bf16.msra.mxu0 0
  %1467 = vmatprep.subr.bf16.mxu0 0
  %1468 = vmatpush1.bf16.msra.mxu0 0
  %1469 = vmatprep.subr.bf16.mxu0 0
  %1470 = vmatpush1.bf16.msra.mxu0 0
  %1471 = vmatprep.subr.bf16.mxu0 0
  %1472 = vmatpush1.bf16.msra.mxu0 0
  %1473 = vmatprep.subr.bf16.mxu0 0
  %1474 = vmatpush1.bf16.msra.mxu0 0
  %1475 = vmatprep.subr.bf16.mxu0 0
  %1476 = vmatpush1.bf16.msra.mxu0 0
  %1477 = vmatprep.subr.bf16.mxu0 0
  %1478 = vmatpush1.bf16.msra.mxu0 0
  %1479 = vmatprep.subr.bf16.mxu0 0
  %1480 = vmatpush1.bf16.msra.mxu0 0
  %1481 = vmatprep.subr.bf16.mxu0 0
  %1482 = vmatpush1.bf16.msra.mxu0 0
  %1483 = vmatprep.subr.bf16.mxu0 0
  %1484 = vmatpush1.bf16.msra.mxu0 0
  %1485 = vmatprep.subr.bf16.mxu0 0
  %1486 = vmatpush1.bf16.msra.mxu0 0
  %1487 = vmatprep.mubr.bf16.mxu0 0
  %1488 = vmatmul.mubr.bf16.gmra.mrb[0].mxu0 %v1382
  %v1489 = vpop.f32.mrb[0].mxu0
  %v1490 = vadd.f32 %v1429, %v1489
  %v1491 = vpop.f32.mrb[0].mxu0
  %v1492 = vpop.f32.mrb[0].mxu0
  %v1493 = vadd.f32 %v1429, %v1492
  %v1494 = vpop.f32.mrb[0].mxu0
  %1495 = vdwg.mxu0
  %v1497 = vlaneseq
  %v1498 = vshrl.u32 %v1497, 7
  %v1499 = vsub.s32 0, %v1498
  %v1500 = vrot.slane %v1341, %v1499
  %v1510 = vunpack.c.l.b16 %v1331
  %v1511 = vunpack.c.l.b16 %v1332
  %v1512 = vunpack.c.l.b16 %v1333
  %v1513 = vunpack.c.l.b16 %v1334
  %v1514 = vunpack.c.l.b16 %v1335
  %v1515 = vunpack.c.l.b16 %v1336
  %v1516 = vunpack.c.l.b16 %v1337
  %v1517 = vunpack.c.l.b16 %v1338
  %v1518 = vpack.c.b16 %v1511, %v1510
  %v1519 = vpack.c.b16 %v1513, %v1512
  %v1520 = vpack.c.b16 %v1515, %v1514
  %v1521 = vpack.c.b16 %v1517, %v1516
  %1526 = vmatprep.subr.bf16.mxu0 0
  %1527 = vmatpush1.bf16.msra.mxu0 %v1518
  %1528 = vmatprep.subr.bf16.mxu0 0
  %1529 = vmatpush1.bf16.msra.mxu0 %v1519
  %1530 = vmatprep.subr.bf16.mxu0 0
  %1531 = vmatpush1.bf16.msra.mxu0 %v1520
  %1532 = vmatprep.subr.bf16.mxu0 0
  %1533 = vmatpush1.bf16.msra.mxu0 %v1521
  %1534 = vmatprep.subr.bf16.mxu0 0
  %1535 = vmatpush1.bf16.msra.mxu0 0
  %1536 = vmatprep.subr.bf16.mxu0 0
  %1537 = vmatpush1.bf16.msra.mxu0 0
  %1538 = vmatprep.subr.bf16.mxu0 0
  %1539 = vmatpush1.bf16.msra.mxu0 0
  %1540 = vmatprep.subr.bf16.mxu0 0
  %1541 = vmatpush1.bf16.msra.mxu0 0
  %1542 = vmatprep.subr.bf16.mxu0 0
  %1543 = vmatpush1.bf16.msra.mxu0 0
  %1544 = vmatprep.subr.bf16.mxu0 0
  %1545 = vmatpush1.bf16.msra.mxu0 0
  %1546 = vmatprep.subr.bf16.mxu0 0
  %1547 = vmatpush1.bf16.msra.mxu0 0
  %1548 = vmatprep.subr.bf16.mxu0 0
  %1549 = vmatpush1.bf16.msra.mxu0 0
  %1550 = vmatprep.subr.bf16.mxu0 0
  %1551 = vmatpush1.bf16.msra.mxu0 0
  %1552 = vmatprep.subr.bf16.mxu0 0
  %1553 = vmatpush1.bf16.msra.mxu0 0
  %1554 = vmatprep.subr.bf16.mxu0 0
  %1555 = vmatpush1.bf16.msra.mxu0 0
  %1556 = vmatprep.subr.bf16.mxu0 0
  %1557 = vmatpush1.bf16.msra.mxu0 0
  %1558 = vmatprep.mubr.bf16.mxu0 0
  %1559 = vmatmul.mubr.bf16.gmra.mrb[0].mxu0 %v1382
  %v1560 = vpop.f32.mrb[0].mxu0
  %v1561 = vadd.f32 %v1500, %v1560
  %v1562 = vpop.f32.mrb[0].mxu0
  %v1563 = vpop.f32.mrb[0].mxu0
  %v1564 = vadd.f32 %v1500, %v1563
  %v1565 = vpop.f32.mrb[0].mxu0
  %1566 = vdwg.mxu0
  %v1567 = vmul.f32 %v1419, 0.25
  %v1568 = vpack.c.bf16 %v1567, %v1567
  %v1569 = vpack.c.bf16 %v1490, %v1490
  %v1571 = vsel %vm552, %v1568, 0
  %v1574 = vsel %vm552, %v1569, 0
  %1576 = vmatprep.subr.bf16.mxu0 0
  %1577 = vmatpush1.bf16.xpose.msra.mxu0 %v1574
  %1578 = vmatprep.subr.bf16.mxu0 0
  %1579 = vmatpush1.bf16.xpose.msra.mxu0 0
  %1580 = vmatprep.subr.bf16.mxu0 0
  %1581 = vmatpush1.bf16.xpose.msra.mxu0 0
  %1582 = vmatprep.subr.bf16.mxu0 0
  %1583 = vmatpush1.bf16.xpose.msra.mxu0 0
  %1584 = vmatprep.subr.bf16.mxu0 0
  %1585 = vmatpush1.bf16.xpose.msra.mxu0 0
  %1586 = vmatprep.subr.bf16.mxu0 0
  %1587 = vmatpush1.bf16.xpose.msra.mxu0 0
  %1588 = vmatprep.subr.bf16.mxu0 0
  %1589 = vmatpush1.bf16.xpose.msra.mxu0 0
  %1590 = vmatprep.subr.bf16.mxu0 0
  %1591 = vmatpush1.bf16.xpose.msra.mxu0 0
  %1592 = vmatprep.subr.bf16.mxu0 0
  %1593 = vmatpush1.bf16.xpose.msra.mxu0 0
  %1594 = vmatprep.subr.bf16.mxu0 0
  %1595 = vmatpush1.bf16.xpose.msra.mxu0 0
  %1596 = vmatprep.subr.bf16.mxu0 0
  %1597 = vmatpush1.bf16.xpose.msra.mxu0 0
  %1598 = vmatprep.subr.bf16.mxu0 0
  %1599 = vmatpush1.bf16.xpose.msra.mxu0 0
  %1600 = vmatprep.subr.bf16.mxu0 0
  %1601 = vmatpush1.bf16.xpose.msra.mxu0 0
  %1602 = vmatprep.subr.bf16.mxu0 0
  %1603 = vmatpush1.bf16.xpose.msra.mxu0 0
  %1604 = vmatprep.subr.bf16.mxu0 0
  %1605 = vmatpush1.bf16.xpose.msra.mxu0 0
  %1606 = vmatprep.subr.bf16.mxu0 0
  %1607 = vmatpush1.bf16.xpose.msra.mxu0 0
  %1608 = vmatprep.mubr.bf16.mxu0 0
  %1609 = vmatmul.mubr.bf16.gmra.mrb[0].mxu0 %v1571
  %v1610 = vpop.f32.mrb[0].mxu0
  %v1611 = vadd.f32 %v1314, %v1610
  %v1612 = vpop.f32.mrb[0].mxu0
  %v1613 = vpop.f32.mrb[0].mxu0
  %v1614 = vpop.f32.mrb[0].mxu0
  %1615 = vdwg.mxu0
  %vm1616 = vcmask 64512
  %v1617 = vsel %vm1616, %v1611, -inf
  %1618 = vmax.xlane.f32.xlu0 %v1617
  %v1619 = vpop.xlane.xlu0 %1618
  %v1620 = vsub.f32 %v1611, %v1619
  %v1621 = vmul.f32 %v1620, 1.442695
  %v1622 = vpow.pop %v1621
  %v1623 = vsel %vm1616, %v1622, 0.0
  %1624 = vadd.xlane.f32.xlu0 %v1623
  %v1625 = vpop.xlane.xlu0 %1624
  %v1626 = vrcp.pop %v1625
  %v1627 = vmul.f32 %v1622, %v1626
  %v1628 = vpack.c.bf16 %v1627, %v1627
  %v1629 = vpack.c.bf16 %v1561, %v1561
  %v1631 = vsel %vm1616, %v1628, 0
  %vm1633 = vcmask 1043456
  %v1635 = vsel %vm1633, %v1629, 0
  %1637 = vmatprep.subr.bf16.mxu0 0
  %1638 = vmatpush1.bf16.msra.mxu0 %v1635
  %1639 = vmatprep.subr.bf16.mxu0 0
  %1640 = vmatpush1.bf16.msra.mxu0 0
  %1641 = vmatprep.subr.bf16.mxu0 0
  %1642 = vmatpush1.bf16.msra.mxu0 0
  %1643 = vmatprep.subr.bf16.mxu0 0
  %1644 = vmatpush1.bf16.msra.mxu0 0
  %1645 = vmatprep.subr.bf16.mxu0 0
  %1646 = vmatpush1.bf16.msra.mxu0 0
  %1647 = vmatprep.subr.bf16.mxu0 0
  %1648 = vmatpush1.bf16.msra.mxu0 0
  %1649 = vmatprep.subr.bf16.mxu0 0
  %1650 = vmatpush1.bf16.msra.mxu0 0
  %1651 = vmatprep.subr.bf16.mxu0 0
  %1652 = vmatpush1.bf16.msra.mxu0 0
  %1653 = vmatprep.subr.bf16.mxu0 0
  %1654 = vmatpush1.bf16.msra.mxu0 0
  %1655 = vmatprep.subr.bf16.mxu0 0
  %1656 = vmatpush1.bf16.msra.mxu0 0
  %1657 = vmatprep.subr.bf16.mxu0 0
  %1658 = vmatpush1.bf16.msra.mxu0 0
  %1659 = vmatprep.subr.bf16.mxu0 0
  %1660 = vmatpush1.bf16.msra.mxu0 0
  %1661 = vmatprep.subr.bf16.mxu0 0
  %1662 = vmatpush1.bf16.msra.mxu0 0
  %1663 = vmatprep.subr.bf16.mxu0 0
  %1664 = vmatpush1.bf16.msra.mxu0 0
  %1665 = vmatprep.subr.bf16.mxu0 0
  %1666 = vmatpush1.bf16.msra.mxu0 0
  %1667 = vmatprep.subr.bf16.mxu0 0
  %1668 = vmatpush1.bf16.msra.mxu0 0
  %1669 = vmatprep.mubr.bf16.mxu0 0
  %1670 = vmatmul.mubr.bf16.gmra.mrb[0].mxu0 %v1631
  %v1671 = vpop.f32.mrb[0].mxu0
  %v1672 = vadd.f32 0.0, %v1671
  %v1673 = vpop.f32.mrb[0].mxu0
  %v1674 = vpop.f32.mrb[0].mxu0
  %v1675 = vpop.f32.mrb[0].mxu0
  %1676 = vdwg.mxu0
  %v1677 = vpack.c.bf16 %v1672, %v1672
  %1679 = vrot.lane.b32.xlu0 %v1568, 112
  %v1680 = vpop.permute.xlu0 %1679
  %1682 = vrot.lane.b32.xlu0 %v1569, 112
  %v1683 = vpop.permute.xlu0 %1682
  %v1685 = vsel %vm552, %v1680, 0
  %v1688 = vsel %vm552, %v1683, 0
  %1690 = vmatprep.subr.bf16.mxu0 0
  %1691 = vmatpush1.bf16.xpose.msra.mxu0 %v1688
  %1692 = vmatprep.subr.bf16.mxu0 0
  %1693 = vmatpush1.bf16.xpose.msra.mxu0 0
  %1694 = vmatprep.subr.bf16.mxu0 0
  %1695 = vmatpush1.bf16.xpose.msra.mxu0 0
  %1696 = vmatprep.subr.bf16.mxu0 0
  %1697 = vmatpush1.bf16.xpose.msra.mxu0 0
  %1698 = vmatprep.subr.bf16.mxu0 0
  %1699 = vmatpush1.bf16.xpose.msra.mxu0 0
  %1700 = vmatprep.subr.bf16.mxu0 0
  %1701 = vmatpush1.bf16.xpose.msra.mxu0 0
  %1702 = vmatprep.subr.bf16.mxu0 0
  %1703 = vmatpush1.bf16.xpose.msra.mxu0 0
  %1704 = vmatprep.subr.bf16.mxu0 0
  %1705 = vmatpush1.bf16.xpose.msra.mxu0 0
  %1706 = vmatprep.subr.bf16.mxu0 0
  %1707 = vmatpush1.bf16.xpose.msra.mxu0 0
  %1708 = vmatprep.subr.bf16.mxu0 0
  %1709 = vmatpush1.bf16.xpose.msra.mxu0 0
  %1710 = vmatprep.subr.bf16.mxu0 0
  %1711 = vmatpush1.bf16.xpose.msra.mxu0 0
  %1712 = vmatprep.subr.bf16.mxu0 0
  %1713 = vmatpush1.bf16.xpose.msra.mxu0 0
  %1714 = vmatprep.subr.bf16.mxu0 0
  %1715 = vmatpush1.bf16.xpose.msra.mxu0 0
  %1716 = vmatprep.subr.bf16.mxu0 0
  %1717 = vmatpush1.bf16.xpose.msra.mxu0 0
  %1718 = vmatprep.subr.bf16.mxu0 0
  %1719 = vmatpush1.bf16.xpose.msra.mxu0 0
  %1720 = vmatprep.subr.bf16.mxu0 0
  %1721 = vmatpush1.bf16.xpose.msra.mxu0 0
  %1722 = vmatprep.mubr.bf16.mxu0 0
  %1723 = vmatmul.mubr.bf16.gmra.mrb[0].mxu0 %v1685
  %v1724 = vpop.f32.mrb[0].mxu0
  %v1725 = vadd.f32 %v1314, %v1724
  %v1726 = vpop.f32.mrb[0].mxu0
  %v1727 = vpop.f32.mrb[0].mxu0
  %v1728 = vpop.f32.mrb[0].mxu0
  %1729 = vdwg.mxu0
  %v1730 = vsel %vm1616, %v1725, -inf
  %1731 = vmax.xlane.f32.xlu0 %v1730
  %v1732 = vpop.xlane.xlu0 %1731
  %v1733 = vsub.f32 %v1725, %v1732
  %v1734 = vmul.f32 %v1733, 1.442695
  %v1735 = vpow.pop %v1734
  %v1736 = vsel %vm1616, %v1735, 0.0
  %1737 = vadd.xlane.f32.xlu0 %v1736
  %v1738 = vpop.xlane.xlu0 %1737
  %v1739 = vrcp.pop %v1738
  %v1740 = vmul.f32 %v1735, %v1739
  %v1741 = vpack.c.bf16 %v1740, %v1740
  %1743 = vrot.lane.b32.xlu0 %v1629, 112
  %v1744 = vpop.permute.xlu0 %1743
  %v1746 = vsel %vm1616, %v1741, 0
  %v1749 = vsel %vm1633, %v1744, 0
  %1751 = vmatprep.subr.bf16.mxu0 0
  %1752 = vmatpush1.bf16.msra.mxu0 %v1749
  %1753 = vmatprep.subr.bf16.mxu0 0
  %1754 = vmatpush1.bf16.msra.mxu0 0
  %1755 = vmatprep.subr.bf16.mxu0 0
  %1756 = vmatpush1.bf16.msra.mxu0 0
  %1757 = vmatprep.subr.bf16.mxu0 0
  %1758 = vmatpush1.bf16.msra.mxu0 0
  %1759 = vmatprep.subr.bf16.mxu0 0
  %1760 = vmatpush1.bf16.msra.mxu0 0
  %1761 = vmatprep.subr.bf16.mxu0 0
  %1762 = vmatpush1.bf16.msra.mxu0 0
  %1763 = vmatprep.subr.bf16.mxu0 0
  %1764 = vmatpush1.bf16.msra.mxu0 0
  %1765 = vmatprep.subr.bf16.mxu0 0
  %1766 = vmatpush1.bf16.msra.mxu0 0
  %1767 = vmatprep.subr.bf16.mxu0 0
  %1768 = vmatpush1.bf16.msra.mxu0 0
  %1769 = vmatprep.subr.bf16.mxu0 0
  %1770 = vmatpush1.bf16.msra.mxu0 0
  %1771 = vmatprep.subr.bf16.mxu0 0
  %1772 = vmatpush1.bf16.msra.mxu0 0
  %1773 = vmatprep.subr.bf16.mxu0 0
  %1774 = vmatpush1.bf16.msra.mxu0 0
  %1775 = vmatprep.subr.bf16.mxu0 0
  %1776 = vmatpush1.bf16.msra.mxu0 0
  %1777 = vmatprep.subr.bf16.mxu0 0
  %1778 = vmatpush1.bf16.msra.mxu0 0
  %1779 = vmatprep.subr.bf16.mxu0 0
  %1780 = vmatpush1.bf16.msra.mxu0 0
  %1781 = vmatprep.subr.bf16.mxu0 0
  %1782 = vmatpush1.bf16.msra.mxu0 0
  %1783 = vmatprep.mubr.bf16.mxu0 0
  %1784 = vmatmul.mubr.bf16.gmra.mrb[0].mxu0 %v1746
  %v1785 = vpop.f32.mrb[0].mxu0
  %v1786 = vadd.f32 0.0, %v1785
  %v1787 = vpop.f32.mrb[0].mxu0
  %v1788 = vpop.f32.mrb[0].mxu0
  %v1789 = vpop.f32.mrb[0].mxu0
  %1790 = vdwg.mxu0
  %v1791 = vpack.c.bf16 %v1786, %v1786
  %v1794 = vunpack.c.l.b16 %v1344
  %v1795 = vunpack.c.l.b16 %v1345
  %v1796 = vpack.c.b16 %v1795, %v1794
  %v1799 = vsel %vm552, %v1791, 0
  %1801 = vmatprep.subr.bf16.mxu0 0
  %1802 = vmatpush1.bf16.msra.mxu0 %v1796
  %1803 = vmatprep.subr.bf16.mxu0 0
  %1804 = vmatpush1.bf16.msra.mxu0 0
  %1805 = vmatprep.subr.bf16.mxu0 0
  %1806 = vmatpush1.bf16.msra.mxu0 0
  %1807 = vmatprep.subr.bf16.mxu0 0
  %1808 = vmatpush1.bf16.msra.mxu0 0
  %1809 = vmatprep.subr.bf16.mxu0 0
  %1810 = vmatpush1.bf16.msra.mxu0 0
  %1811 = vmatprep.subr.bf16.mxu0 0
  %1812 = vmatpush1.bf16.msra.mxu0 0
  %1813 = vmatprep.subr.bf16.mxu0 0
  %1814 = vmatpush1.bf16.msra.mxu0 0
  %1815 = vmatprep.subr.bf16.mxu0 0
  %1816 = vmatpush1.bf16.msra.mxu0 0
  %1817 = vmatprep.subr.bf16.mxu0 0
  %1818 = vmatpush1.bf16.msra.mxu0 0
  %1819 = vmatprep.subr.bf16.mxu0 0
  %1820 = vmatpush1.bf16.msra.mxu0 0
  %1821 = vmatprep.subr.bf16.mxu0 0
  %1822 = vmatpush1.bf16.msra.mxu0 0
  %1823 = vmatprep.subr.bf16.mxu0 0
  %1824 = vmatpush1.bf16.msra.mxu0 0
  %1825 = vmatprep.subr.bf16.mxu0 0
  %1826 = vmatpush1.bf16.msra.mxu0 0
  %1827 = vmatprep.subr.bf16.mxu0 0
  %1828 = vmatpush1.bf16.msra.mxu0 0
  %1829 = vmatprep.subr.bf16.mxu0 0
  %1830 = vmatpush1.bf16.msra.mxu0 0
  %1831 = vmatprep.subr.bf16.mxu0 0
  %1832 = vmatpush1.bf16.msra.mxu0 0
  %1833 = vmatprep.mubr.bf16.mxu0 0
  %1834 = vmatmul.mubr.bf16.gmra.mrb[0].mxu0 %v1799
  %v1835 = vpop.f32.mrb[0].mxu0
  %v1836 = vadd.f32 0.0, %v1835
  %v1837 = vpop.f32.mrb[0].mxu0
  %v1838 = vpop.f32.mrb[0].mxu0
  %v1839 = vpop.f32.mrb[0].mxu0
  %1840 = vdwg.mxu0
  %v1843 = vunpack.c.l.b16 %v1342
  %v1844 = vunpack.c.l.b16 %v1343
  %v1845 = vpack.c.b16 %v1844, %v1843
  %v1848 = vsel %vm552, %v1677, 0
  %1850 = vmatprep.subr.bf16.mxu0 0
  %1851 = vmatpush1.bf16.msra.mxu0 %v1845
  %1852 = vmatprep.subr.bf16.mxu0 0
  %1853 = vmatpush1.bf16.msra.mxu0 0
  %1854 = vmatprep.subr.bf16.mxu0 0
  %1855 = vmatpush1.bf16.msra.mxu0 0
  %1856 = vmatprep.subr.bf16.mxu0 0
  %1857 = vmatpush1.bf16.msra.mxu0 0
  %1858 = vmatprep.subr.bf16.mxu0 0
  %1859 = vmatpush1.bf16.msra.mxu0 0
  %1860 = vmatprep.subr.bf16.mxu0 0
  %1861 = vmatpush1.bf16.msra.mxu0 0
  %1862 = vmatprep.subr.bf16.mxu0 0
  %1863 = vmatpush1.bf16.msra.mxu0 0
  %1864 = vmatprep.subr.bf16.mxu0 0
  %1865 = vmatpush1.bf16.msra.mxu0 0
  %1866 = vmatprep.subr.bf16.mxu0 0
  %1867 = vmatpush1.bf16.msra.mxu0 0
  %1868 = vmatprep.subr.bf16.mxu0 0
  %1869 = vmatpush1.bf16.msra.mxu0 0
  %1870 = vmatprep.subr.bf16.mxu0 0
  %1871 = vmatpush1.bf16.msra.mxu0 0
  %1872 = vmatprep.subr.bf16.mxu0 0
  %1873 = vmatpush1.bf16.msra.mxu0 0
  %1874 = vmatprep.subr.bf16.mxu0 0
  %1875 = vmatpush1.bf16.msra.mxu0 0
  %1876 = vmatprep.subr.bf16.mxu0 0
  %1877 = vmatpush1.bf16.msra.mxu0 0
  %1878 = vmatprep.subr.bf16.mxu0 0
  %1879 = vmatpush1.bf16.msra.mxu0 0
  %1880 = vmatprep.subr.bf16.mxu0 0
  %1881 = vmatpush1.bf16.msra.mxu0 0
  %1882 = vmatprep.mubr.bf16.mxu0 0
  %1883 = vmatmul.mubr.bf16.gmra.mrb[0].mxu0 %v1848
  %v1884 = vpop.f32.mrb[0].mxu0
  %v1885 = vadd.f32 %v1836, %v1884
  %v1886 = vpop.f32.mrb[0].mxu0
  %v1887 = vpop.f32.mrb[0].mxu0
  %v1888 = vpop.f32.mrb[0].mxu0
  %1889 = vdwg.mxu0
  %1890 = vrot.lane.b32.xlu0 %v1568, 96
  %v1891 = vpop.permute.xlu0 %1890
  %1892 = vrot.lane.b32.xlu0 %v1569, 96
  %v1893 = vpop.permute.xlu0 %1892
  %v1895 = vsel %vm552, %v1891, 0
  %v1898 = vsel %vm552, %v1893, 0
  %1900 = vmatprep.subr.bf16.mxu0 0
  %1901 = vmatpush1.bf16.xpose.msra.mxu0 %v1898
  %1902 = vmatprep.subr.bf16.mxu0 0
  %1903 = vmatpush1.bf16.xpose.msra.mxu0 0
  %1904 = vmatprep.subr.bf16.mxu0 0
  %1905 = vmatpush1.bf16.xpose.msra.mxu0 0
  %1906 = vmatprep.subr.bf16.mxu0 0
  %1907 = vmatpush1.bf16.xpose.msra.mxu0 0
  %1908 = vmatprep.subr.bf16.mxu0 0
  %1909 = vmatpush1.bf16.xpose.msra.mxu0 0
  %1910 = vmatprep.subr.bf16.mxu0 0
  %1911 = vmatpush1.bf16.xpose.msra.mxu0 0
  %1912 = vmatprep.subr.bf16.mxu0 0
  %1913 = vmatpush1.bf16.xpose.msra.mxu0 0
  %1914 = vmatprep.subr.bf16.mxu0 0
  %1915 = vmatpush1.bf16.xpose.msra.mxu0 0
  %1916 = vmatprep.subr.bf16.mxu0 0
  %1917 = vmatpush1.bf16.xpose.msra.mxu0 0
  %1918 = vmatprep.subr.bf16.mxu0 0
  %1919 = vmatpush1.bf16.xpose.msra.mxu0 0
  %1920 = vmatprep.subr.bf16.mxu0 0
  %1921 = vmatpush1.bf16.xpose.msra.mxu0 0
  %1922 = vmatprep.subr.bf16.mxu0 0
  %1923 = vmatpush1.bf16.xpose.msra.mxu0 0
  %1924 = vmatprep.subr.bf16.mxu0 0
  %1925 = vmatpush1.bf16.xpose.msra.mxu0 0
  %1926 = vmatprep.subr.bf16.mxu0 0
  %1927 = vmatpush1.bf16.xpose.msra.mxu0 0
  %1928 = vmatprep.subr.bf16.mxu0 0
  %1929 = vmatpush1.bf16.xpose.msra.mxu0 0
  %1930 = vmatprep.subr.bf16.mxu0 0
  %1931 = vmatpush1.bf16.xpose.msra.mxu0 0
  %1932 = vmatprep.mubr.bf16.mxu0 0
  %1933 = vmatmul.mubr.bf16.gmra.mrb[0].mxu0 %v1895
  %v1934 = vpop.f32.mrb[0].mxu0
  %v1935 = vadd.f32 %v1314, %v1934
  %v1936 = vpop.f32.mrb[0].mxu0
  %v1937 = vpop.f32.mrb[0].mxu0
  %v1938 = vpop.f32.mrb[0].mxu0
  %1939 = vdwg.mxu0
  %v1940 = vsel %vm1616, %v1935, -inf
  %1941 = vmax.xlane.f32.xlu0 %v1940
  %v1942 = vpop.xlane.xlu0 %1941
  %v1943 = vsub.f32 %v1935, %v1942
  %v1944 = vmul.f32 %v1943, 1.442695
  %v1945 = vpow.pop %v1944
  %v1946 = vsel %vm1616, %v1945, 0.0
  %1947 = vadd.xlane.f32.xlu0 %v1946
  %v1948 = vpop.xlane.xlu0 %1947
  %v1949 = vrcp.pop %v1948
  %v1950 = vmul.f32 %v1945, %v1949
  %v1951 = vpack.c.bf16 %v1950, %v1950
  %1952 = vrot.lane.b32.xlu0 %v1629, 96
  %v1953 = vpop.permute.xlu0 %1952
  %v1955 = vsel %vm1616, %v1951, 0
  %v1958 = vsel %vm1633, %v1953, 0
  %1960 = vmatprep.subr.bf16.mxu0 0
  %1961 = vmatpush1.bf16.msra.mxu0 %v1958
  %1962 = vmatprep.subr.bf16.mxu0 0
  %1963 = vmatpush1.bf16.msra.mxu0 0
  %1964 = vmatprep.subr.bf16.mxu0 0
  %1965 = vmatpush1.bf16.msra.mxu0 0
  %1966 = vmatprep.subr.bf16.mxu0 0
  %1967 = vmatpush1.bf16.msra.mxu0 0
  %1968 = vmatprep.subr.bf16.mxu0 0
  %1969 = vmatpush1.bf16.msra.mxu0 0
  %1970 = vmatprep.subr.bf16.mxu0 0
  %1971 = vmatpush1.bf16.msra.mxu0 0
  %1972 = vmatprep.subr.bf16.mxu0 0
  %1973 = vmatpush1.bf16.msra.mxu0 0
  %1974 = vmatprep.subr.bf16.mxu0 0
  %1975 = vmatpush1.bf16.msra.mxu0 0
  %1976 = vmatprep.subr.bf16.mxu0 0
  %1977 = vmatpush1.bf16.msra.mxu0 0
  %1978 = vmatprep.subr.bf16.mxu0 0
  %1979 = vmatpush1.bf16.msra.mxu0 0
  %1980 = vmatprep.subr.bf16.mxu0 0
  %1981 = vmatpush1.bf16.msra.mxu0 0
  %1982 = vmatprep.subr.bf16.mxu0 0
  %1983 = vmatpush1.bf16.msra.mxu0 0
  %1984 = vmatprep.subr.bf16.mxu0 0
  %1985 = vmatpush1.bf16.msra.mxu0 0
  %1986 = vmatprep.subr.bf16.mxu0 0
  %1987 = vmatpush1.bf16.msra.mxu0 0
  %1988 = vmatprep.subr.bf16.mxu0 0
  %1989 = vmatpush1.bf16.msra.mxu0 0
  %1990 = vmatprep.subr.bf16.mxu0 0
  %1991 = vmatpush1.bf16.msra.mxu0 0
  %1992 = vmatprep.mubr.bf16.mxu0 0
  %1993 = vmatmul.mubr.bf16.gmra.mrb[0].mxu0 %v1955
  %v1994 = vpop.f32.mrb[0].mxu0
  %v1995 = vadd.f32 0.0, %v1994
  %v1996 = vpop.f32.mrb[0].mxu0
  %v1997 = vpop.f32.mrb[0].mxu0
  %v1998 = vpop.f32.mrb[0].mxu0
  %1999 = vdwg.mxu0
  %v2000 = vpack.c.bf16 %v1995, %v1995
  %v2003 = vunpack.c.l.b16 %v1346
  %v2004 = vunpack.c.l.b16 %v1347
  %v2005 = vpack.c.b16 %v2004, %v2003
  %v2008 = vsel %vm552, %v2000, 0
  %2010 = vmatprep.subr.bf16.mxu0 0
  %2011 = vmatpush1.bf16.msra.mxu0 %v2005
  %2012 = vmatprep.subr.bf16.mxu0 0
  %2013 = vmatpush1.bf16.msra.mxu0 0
  %2014 = vmatprep.subr.bf16.mxu0 0
  %2015 = vmatpush1.bf16.msra.mxu0 0
  %2016 = vmatprep.subr.bf16.mxu0 0
  %2017 = vmatpush1.bf16.msra.mxu0 0
  %2018 = vmatprep.subr.bf16.mxu0 0
  %2019 = vmatpush1.bf16.msra.mxu0 0
  %2020 = vmatprep.subr.bf16.mxu0 0
  %2021 = vmatpush1.bf16.msra.mxu0 0
  %2022 = vmatprep.subr.bf16.mxu0 0
  %2023 = vmatpush1.bf16.msra.mxu0 0
  %2024 = vmatprep.subr.bf16.mxu0 0
  %2025 = vmatpush1.bf16.msra.mxu0 0
  %2026 = vmatprep.subr.bf16.mxu0 0
  %2027 = vmatpush1.bf16.msra.mxu0 0
  %2028 = vmatprep.subr.bf16.mxu0 0
  %2029 = vmatpush1.bf16.msra.mxu0 0
  %2030 = vmatprep.subr.bf16.mxu0 0
  %2031 = vmatpush1.bf16.msra.mxu0 0
  %2032 = vmatprep.subr.bf16.mxu0 0
  %2033 = vmatpush1.bf16.msra.mxu0 0
  %2034 = vmatprep.subr.bf16.mxu0 0
  %2035 = vmatpush1.bf16.msra.mxu0 0
  %2036 = vmatprep.subr.bf16.mxu0 0
  %2037 = vmatpush1.bf16.msra.mxu0 0
  %2038 = vmatprep.subr.bf16.mxu0 0
  %2039 = vmatpush1.bf16.msra.mxu0 0
  %2040 = vmatprep.subr.bf16.mxu0 0
  %2041 = vmatpush1.bf16.msra.mxu0 0
  %2042 = vmatprep.mubr.bf16.mxu0 0
  %2043 = vmatmul.mubr.bf16.gmra.mrb[0].mxu0 %v2008
  %v2044 = vpop.f32.mrb[0].mxu0
  %v2045 = vadd.f32 0.0, %v2044
  %v2046 = vpop.f32.mrb[0].mxu0
  %v2047 = vpop.f32.mrb[0].mxu0
  %v2048 = vpop.f32.mrb[0].mxu0
  %2049 = vdwg.mxu0
  %v2050 = vadd.f32 %v1885, %v2045
  %2051 = vrot.lane.b32.xlu0 %v1568, 80
  %v2052 = vpop.permute.xlu0 %2051
  %2053 = vrot.lane.b32.xlu0 %v1569, 80
  %v2054 = vpop.permute.xlu0 %2053
  %v2056 = vsel %vm552, %v2052, 0
  %v2059 = vsel %vm552, %v2054, 0
  %2061 = vmatprep.subr.bf16.mxu0 0
  %2062 = vmatpush1.bf16.xpose.msra.mxu0 %v2059
  %2063 = vmatprep.subr.bf16.mxu0 0
  %2064 = vmatpush1.bf16.xpose.msra.mxu0 0
  %2065 = vmatprep.subr.bf16.mxu0 0
  %2066 = vmatpush1.bf16.xpose.msra.mxu0 0
  %2067 = vmatprep.subr.bf16.mxu0 0
  %2068 = vmatpush1.bf16.xpose.msra.mxu0 0
  %2069 = vmatprep.subr.bf16.mxu0 0
  %2070 = vmatpush1.bf16.xpose.msra.mxu0 0
  %2071 = vmatprep.subr.bf16.mxu0 0
  %2072 = vmatpush1.bf16.xpose.msra.mxu0 0
  %2073 = vmatprep.subr.bf16.mxu0 0
  %2074 = vmatpush1.bf16.xpose.msra.mxu0 0
  %2075 = vmatprep.subr.bf16.mxu0 0
  %2076 = vmatpush1.bf16.xpose.msra.mxu0 0
  %2077 = vmatprep.subr.bf16.mxu0 0
  %2078 = vmatpush1.bf16.xpose.msra.mxu0 0
  %2079 = vmatprep.subr.bf16.mxu0 0
  %2080 = vmatpush1.bf16.xpose.msra.mxu0 0
  %2081 = vmatprep.subr.bf16.mxu0 0
  %2082 = vmatpush1.bf16.xpose.msra.mxu0 0
  %2083 = vmatprep.subr.bf16.mxu0 0
  %2084 = vmatpush1.bf16.xpose.msra.mxu0 0
  %2085 = vmatprep.subr.bf16.mxu0 0
  %2086 = vmatpush1.bf16.xpose.msra.mxu0 0
  %2087 = vmatprep.subr.bf16.mxu0 0
  %2088 = vmatpush1.bf16.xpose.msra.mxu0 0
  %2089 = vmatprep.subr.bf16.mxu0 0
  %2090 = vmatpush1.bf16.xpose.msra.mxu0 0
  %2091 = vmatprep.subr.bf16.mxu0 0
  %2092 = vmatpush1.bf16.xpose.msra.mxu0 0
  %2093 = vmatprep.mubr.bf16.mxu0 0
  %2094 = vmatmul.mubr.bf16.gmra.mrb[0].mxu0 %v2056
  %v2095 = vpop.f32.mrb[0].mxu0
  %v2096 = vadd.f32 %v1314, %v2095
  %v2097 = vpop.f32.mrb[0].mxu0
  %v2098 = vpop.f32.mrb[0].mxu0
  %v2099 = vpop.f32.mrb[0].mxu0
  %2100 = vdwg.mxu0
  %v2101 = vsel %vm1616, %v2096, -inf
  %2102 = vmax.xlane.f32.xlu0 %v2101
  %v2103 = vpop.xlane.xlu0 %2102
  %v2104 = vsub.f32 %v2096, %v2103
  %v2105 = vmul.f32 %v2104, 1.442695
  %v2106 = vpow.pop %v2105
  %v2107 = vsel %vm1616, %v2106, 0.0
  %2108 = vadd.xlane.f32.xlu0 %v2107
  %v2109 = vpop.xlane.xlu0 %2108
  %v2110 = vrcp.pop %v2109
  %v2111 = vmul.f32 %v2106, %v2110
  %v2112 = vpack.c.bf16 %v2111, %v2111
  %2113 = vrot.lane.b32.xlu0 %v1629, 80
  %v2114 = vpop.permute.xlu0 %2113
  %v2116 = vsel %vm1616, %v2112, 0
  %v2119 = vsel %vm1633, %v2114, 0
  %2121 = vmatprep.subr.bf16.mxu0 0
  %2122 = vmatpush1.bf16.msra.mxu0 %v2119
  %2123 = vmatprep.subr.bf16.mxu0 0
  %2124 = vmatpush1.bf16.msra.mxu0 0
  %2125 = vmatprep.subr.bf16.mxu0 0
  %2126 = vmatpush1.bf16.msra.mxu0 0
  %2127 = vmatprep.subr.bf16.mxu0 0
  %2128 = vmatpush1.bf16.msra.mxu0 0
  %2129 = vmatprep.subr.bf16.mxu0 0
  %2130 = vmatpush1.bf16.msra.mxu0 0
  %2131 = vmatprep.subr.bf16.mxu0 0
  %2132 = vmatpush1.bf16.msra.mxu0 0
  %2133 = vmatprep.subr.bf16.mxu0 0
  %2134 = vmatpush1.bf16.msra.mxu0 0
  %2135 = vmatprep.subr.bf16.mxu0 0
  %2136 = vmatpush1.bf16.msra.mxu0 0
  %2137 = vmatprep.subr.bf16.mxu0 0
  %2138 = vmatpush1.bf16.msra.mxu0 0
  %2139 = vmatprep.subr.bf16.mxu0 0
  %2140 = vmatpush1.bf16.msra.mxu0 0
  %2141 = vmatprep.subr.bf16.mxu0 0
  %2142 = vmatpush1.bf16.msra.mxu0 0
  %2143 = vmatprep.subr.bf16.mxu0 0
  %2144 = vmatpush1.bf16.msra.mxu0 0
  %2145 = vmatprep.subr.bf16.mxu0 0
  %2146 = vmatpush1.bf16.msra.mxu0 0
  %2147 = vmatprep.subr.bf16.mxu0 0
  %2148 = vmatpush1.bf16.msra.mxu0 0
  %2149 = vmatprep.subr.bf16.mxu0 0
  %2150 = vmatpush1.bf16.msra.mxu0 0
  %2151 = vmatprep.subr.bf16.mxu0 0
  %2152 = vmatpush1.bf16.msra.mxu0 0
  %2153 = vmatprep.mubr.bf16.mxu0 0
  %2154 = vmatmul.mubr.bf16.gmra.mrb[0].mxu0 %v2116
  %v2155 = vpop.f32.mrb[0].mxu0
  %v2156 = vadd.f32 0.0, %v2155
  %v2157 = vpop.f32.mrb[0].mxu0
  %v2158 = vpop.f32.mrb[0].mxu0
  %v2159 = vpop.f32.mrb[0].mxu0
  %2160 = vdwg.mxu0
  %v2161 = vpack.c.bf16 %v2156, %v2156
  %v2164 = vunpack.c.l.b16 %v1348
  %v2165 = vunpack.c.l.b16 %v1349
  %v2166 = vpack.c.b16 %v2165, %v2164
  %v2169 = vsel %vm552, %v2161, 0
  %2171 = vmatprep.subr.bf16.mxu0 0
  %2172 = vmatpush1.bf16.msra.mxu0 %v2166
  %2173 = vmatprep.subr.bf16.mxu0 0
  %2174 = vmatpush1.bf16.msra.mxu0 0
  %2175 = vmatprep.subr.bf16.mxu0 0
  %2176 = vmatpush1.bf16.msra.mxu0 0
  %2177 = vmatprep.subr.bf16.mxu0 0
  %2178 = vmatpush1.bf16.msra.mxu0 0
  %2179 = vmatprep.subr.bf16.mxu0 0
  %2180 = vmatpush1.bf16.msra.mxu0 0
  %2181 = vmatprep.subr.bf16.mxu0 0
  %2182 = vmatpush1.bf16.msra.mxu0 0
  %2183 = vmatprep.subr.bf16.mxu0 0
  %2184 = vmatpush1.bf16.msra.mxu0 0
  %2185 = vmatprep.subr.bf16.mxu0 0
  %2186 = vmatpush1.bf16.msra.mxu0 0
  %2187 = vmatprep.subr.bf16.mxu0 0
  %2188 = vmatpush1.bf16.msra.mxu0 0
  %2189 = vmatprep.subr.bf16.mxu0 0
  %2190 = vmatpush1.bf16.msra.mxu0 0
  %2191 = vmatprep.subr.bf16.mxu0 0
  %2192 = vmatpush1.bf16.msra.mxu0 0
  %2193 = vmatprep.subr.bf16.mxu0 0
  %2194 = vmatpush1.bf16.msra.mxu0 0
  %2195 = vmatprep.subr.bf16.mxu0 0
  %2196 = vmatpush1.bf16.msra.mxu0 0
  %2197 = vmatprep.subr.bf16.mxu0 0
  %2198 = vmatpush1.bf16.msra.mxu0 0
  %2199 = vmatprep.subr.bf16.mxu0 0
  %2200 = vmatpush1.bf16.msra.mxu0 0
  %2201 = vmatprep.subr.bf16.mxu0 0
  %2202 = vmatpush1.bf16.msra.mxu0 0
  %2203 = vmatprep.mubr.bf16.mxu0 0
  %2204 = vmatmul.mubr.bf16.gmra.mrb[0].mxu0 %v2169
  %v2205 = vpop.f32.mrb[0].mxu0
  %v2206 = vadd.f32 0.0, %v2205
  %v2207 = vpop.f32.mrb[0].mxu0
  %v2208 = vpop.f32.mrb[0].mxu0
  %v2209 = vpop.f32.mrb[0].mxu0
  %2210 = vdwg.mxu0
  %v2211 = vadd.f32 %v2050, %v2206
  %v2212 = vmul.f32 %v1422, 0.25
  %v2213 = vpack.c.bf16 %v2212, %v2212
  %v2214 = vpack.c.bf16 %v1493, %v1493
  %v2216 = vsel %vm552, %v2213, 0
  %v2219 = vsel %vm552, %v2214, 0
  %2221 = vmatprep.subr.bf16.mxu0 0
  %2222 = vmatpush1.bf16.xpose.msra.mxu0 %v2219
  %2223 = vmatprep.subr.bf16.mxu0 0
  %2224 = vmatpush1.bf16.xpose.msra.mxu0 0
  %2225 = vmatprep.subr.bf16.mxu0 0
  %2226 = vmatpush1.bf16.xpose.msra.mxu0 0
  %2227 = vmatprep.subr.bf16.mxu0 0
  %2228 = vmatpush1.bf16.xpose.msra.mxu0 0
  %2229 = vmatprep.subr.bf16.mxu0 0
  %2230 = vmatpush1.bf16.xpose.msra.mxu0 0
  %2231 = vmatprep.subr.bf16.mxu0 0
  %2232 = vmatpush1.bf16.xpose.msra.mxu0 0
  %2233 = vmatprep.subr.bf16.mxu0 0
  %2234 = vmatpush1.bf16.xpose.msra.mxu0 0
  %2235 = vmatprep.subr.bf16.mxu0 0
  %2236 = vmatpush1.bf16.xpose.msra.mxu0 0
  %2237 = vmatprep.subr.bf16.mxu0 0
  %2238 = vmatpush1.bf16.xpose.msra.mxu0 0
  %2239 = vmatprep.subr.bf16.mxu0 0
  %2240 = vmatpush1.bf16.xpose.msra.mxu0 0
  %2241 = vmatprep.subr.bf16.mxu0 0
  %2242 = vmatpush1.bf16.xpose.msra.mxu0 0
  %2243 = vmatprep.subr.bf16.mxu0 0
  %2244 = vmatpush1.bf16.xpose.msra.mxu0 0
  %2245 = vmatprep.subr.bf16.mxu0 0
  %2246 = vmatpush1.bf16.xpose.msra.mxu0 0
  %2247 = vmatprep.subr.bf16.mxu0 0
  %2248 = vmatpush1.bf16.xpose.msra.mxu0 0
  %2249 = vmatprep.subr.bf16.mxu0 0
  %2250 = vmatpush1.bf16.xpose.msra.mxu0 0
  %2251 = vmatprep.subr.bf16.mxu0 0
  %2252 = vmatpush1.bf16.xpose.msra.mxu0 0
  %2253 = vmatprep.mubr.bf16.mxu0 0
  %2254 = vmatmul.mubr.bf16.gmra.mrb[0].mxu0 %v2216
  %v2255 = vpop.f32.mrb[0].mxu0
  %v2256 = vadd.f32 %v1314, %v2255
  %v2257 = vpop.f32.mrb[0].mxu0
  %v2258 = vpop.f32.mrb[0].mxu0
  %v2259 = vpop.f32.mrb[0].mxu0
  %2260 = vdwg.mxu0
  %v2261 = vsel %vm1616, %v2256, -inf
  %2262 = vmax.xlane.f32.xlu0 %v2261
  %v2263 = vpop.xlane.xlu0 %2262
  %v2264 = vsub.f32 %v2256, %v2263
  %v2265 = vmul.f32 %v2264, 1.442695
  %v2266 = vpow.pop %v2265
  %v2267 = vsel %vm1616, %v2266, 0.0
  %2268 = vadd.xlane.f32.xlu0 %v2267
  %v2269 = vpop.xlane.xlu0 %2268
  %v2270 = vrcp.pop %v2269
  %v2271 = vmul.f32 %v2266, %v2270
  %v2272 = vpack.c.bf16 %v2271, %v2271
  %v2273 = vpack.c.bf16 %v1564, %v1564
  %v2275 = vsel %vm1616, %v2272, 0
  %v2278 = vsel %vm1633, %v2273, 0
  %2280 = vmatprep.subr.bf16.mxu0 0
  %2281 = vmatpush1.bf16.msra.mxu0 %v2278
  %2282 = vmatprep.subr.bf16.mxu0 0
  %2283 = vmatpush1.bf16.msra.mxu0 0
  %2284 = vmatprep.subr.bf16.mxu0 0
  %2285 = vmatpush1.bf16.msra.mxu0 0
  %2286 = vmatprep.subr.bf16.mxu0 0
  %2287 = vmatpush1.bf16.msra.mxu0 0
  %2288 = vmatprep.subr.bf16.mxu0 0
  %2289 = vmatpush1.bf16.msra.mxu0 0
  %2290 = vmatprep.subr.bf16.mxu0 0
  %2291 = vmatpush1.bf16.msra.mxu0 0
  %2292 = vmatprep.subr.bf16.mxu0 0
  %2293 = vmatpush1.bf16.msra.mxu0 0
  %2294 = vmatprep.subr.bf16.mxu0 0
  %2295 = vmatpush1.bf16.msra.mxu0 0
  %2296 = vmatprep.subr.bf16.mxu0 0
  %2297 = vmatpush1.bf16.msra.mxu0 0
  %2298 = vmatprep.subr.bf16.mxu0 0
  %2299 = vmatpush1.bf16.msra.mxu0 0
  %2300 = vmatprep.subr.bf16.mxu0 0
  %2301 = vmatpush1.bf16.msra.mxu0 0
  %2302 = vmatprep.subr.bf16.mxu0 0
  %2303 = vmatpush1.bf16.msra.mxu0 0
  %2304 = vmatprep.subr.bf16.mxu0 0
  %2305 = vmatpush1.bf16.msra.mxu0 0
  %2306 = vmatprep.subr.bf16.mxu0 0
  %2307 = vmatpush1.bf16.msra.mxu0 0
  %2308 = vmatprep.subr.bf16.mxu0 0
  %2309 = vmatpush1.bf16.msra.mxu0 0
  %2310 = vmatprep.subr.bf16.mxu0 0
  %2311 = vmatpush1.bf16.msra.mxu0 0
  %2312 = vmatprep.mubr.bf16.mxu0 0
  %2313 = vmatmul.mubr.bf16.gmra.mrb[0].mxu0 %v2275
  %v2314 = vpop.f32.mrb[0].mxu0
  %v2315 = vadd.f32 0.0, %v2314
  %v2316 = vpop.f32.mrb[0].mxu0
  %v2317 = vpop.f32.mrb[0].mxu0
  %v2318 = vpop.f32.mrb[0].mxu0
  %2319 = vdwg.mxu0
  %v2320 = vpack.c.bf16 %v2315, %v2315
  %2322 = vrot.lane.b32.xlu0 %v2213, 112
  %v2323 = vpop.permute.xlu0 %2322
  %2325 = vrot.lane.b32.xlu0 %v2214, 112
  %v2326 = vpop.permute.xlu0 %2325
  %v2328 = vsel %vm552, %v2323, 0
  %v2331 = vsel %vm552, %v2326, 0
  %2333 = vmatprep.subr.bf16.mxu0 0
  %2334 = vmatpush1.bf16.xpose.msra.mxu0 %v2331
  %2335 = vmatprep.subr.bf16.mxu0 0
  %2336 = vmatpush1.bf16.xpose.msra.mxu0 0
  %2337 = vmatprep.subr.bf16.mxu0 0
  %2338 = vmatpush1.bf16.xpose.msra.mxu0 0
  %2339 = vmatprep.subr.bf16.mxu0 0
  %2340 = vmatpush1.bf16.xpose.msra.mxu0 0
  %2341 = vmatprep.subr.bf16.mxu0 0
  %2342 = vmatpush1.bf16.xpose.msra.mxu0 0
  %2343 = vmatprep.subr.bf16.mxu0 0
  %2344 = vmatpush1.bf16.xpose.msra.mxu0 0
  %2345 = vmatprep.subr.bf16.mxu0 0
  %2346 = vmatpush1.bf16.xpose.msra.mxu0 0
  %2347 = vmatprep.subr.bf16.mxu0 0
  %2348 = vmatpush1.bf16.xpose.msra.mxu0 0
  %2349 = vmatprep.subr.bf16.mxu0 0
  %2350 = vmatpush1.bf16.xpose.msra.mxu0 0
  %2351 = vmatprep.subr.bf16.mxu0 0
  %2352 = vmatpush1.bf16.xpose.msra.mxu0 0
  %2353 = vmatprep.subr.bf16.mxu0 0
  %2354 = vmatpush1.bf16.xpose.msra.mxu0 0
  %2355 = vmatprep.subr.bf16.mxu0 0
  %2356 = vmatpush1.bf16.xpose.msra.mxu0 0
  %2357 = vmatprep.subr.bf16.mxu0 0
  %2358 = vmatpush1.bf16.xpose.msra.mxu0 0
  %2359 = vmatprep.subr.bf16.mxu0 0
  %2360 = vmatpush1.bf16.xpose.msra.mxu0 0
  %2361 = vmatprep.subr.bf16.mxu0 0
  %2362 = vmatpush1.bf16.xpose.msra.mxu0 0
  %2363 = vmatprep.subr.bf16.mxu0 0
  %2364 = vmatpush1.bf16.xpose.msra.mxu0 0
  %2365 = vmatprep.mubr.bf16.mxu0 0
  %2366 = vmatmul.mubr.bf16.gmra.mrb[0].mxu0 %v2328
  %v2367 = vpop.f32.mrb[0].mxu0
  %v2368 = vadd.f32 %v1314, %v2367
  %v2369 = vpop.f32.mrb[0].mxu0
  %v2370 = vpop.f32.mrb[0].mxu0
  %v2371 = vpop.f32.mrb[0].mxu0
  %2372 = vdwg.mxu0
  %v2373 = vsel %vm1616, %v2368, -inf
  %2374 = vmax.xlane.f32.xlu0 %v2373
  %v2375 = vpop.xlane.xlu0 %2374
  %v2376 = vsub.f32 %v2368, %v2375
  %v2377 = vmul.f32 %v2376, 1.442695
  %v2378 = vpow.pop %v2377
  %v2379 = vsel %vm1616, %v2378, 0.0
  %2380 = vadd.xlane.f32.xlu0 %v2379
  %v2381 = vpop.xlane.xlu0 %2380
  %v2382 = vrcp.pop %v2381
  %v2383 = vmul.f32 %v2378, %v2382
  %v2384 = vpack.c.bf16 %v2383, %v2383
  %2386 = vrot.lane.b32.xlu0 %v2273, 112
  %v2387 = vpop.permute.xlu0 %2386
  %v2389 = vsel %vm1616, %v2384, 0
  %v2392 = vsel %vm1633, %v2387, 0
  %2394 = vmatprep.subr.bf16.mxu0 0
  %2395 = vmatpush1.bf16.msra.mxu0 %v2392
  %2396 = vmatprep.subr.bf16.mxu0 0
  %2397 = vmatpush1.bf16.msra.mxu0 0
  %2398 = vmatprep.subr.bf16.mxu0 0
  %2399 = vmatpush1.bf16.msra.mxu0 0
  %2400 = vmatprep.subr.bf16.mxu0 0
  %2401 = vmatpush1.bf16.msra.mxu0 0
  %2402 = vmatprep.subr.bf16.mxu0 0
  %2403 = vmatpush1.bf16.msra.mxu0 0
  %2404 = vmatprep.subr.bf16.mxu0 0
  %2405 = vmatpush1.bf16.msra.mxu0 0
  %2406 = vmatprep.subr.bf16.mxu0 0
  %2407 = vmatpush1.bf16.msra.mxu0 0
  %2408 = vmatprep.subr.bf16.mxu0 0
  %2409 = vmatpush1.bf16.msra.mxu0 0
  %2410 = vmatprep.subr.bf16.mxu0 0
  %2411 = vmatpush1.bf16.msra.mxu0 0
  %2412 = vmatprep.subr.bf16.mxu0 0
  %2413 = vmatpush1.bf16.msra.mxu0 0
  %2414 = vmatprep.subr.bf16.mxu0 0
  %2415 = vmatpush1.bf16.msra.mxu0 0
  %2416 = vmatprep.subr.bf16.mxu0 0
  %2417 = vmatpush1.bf16.msra.mxu0 0
  %2418 = vmatprep.subr.bf16.mxu0 0
  %2419 = vmatpush1.bf16.msra.mxu0 0
  %2420 = vmatprep.subr.bf16.mxu0 0
  %2421 = vmatpush1.bf16.msra.mxu0 0
  %2422 = vmatprep.subr.bf16.mxu0 0
  %2423 = vmatpush1.bf16.msra.mxu0 0
  %2424 = vmatprep.subr.bf16.mxu0 0
  %2425 = vmatpush1.bf16.msra.mxu0 0
  %2426 = vmatprep.mubr.bf16.mxu0 0
  %2427 = vmatmul.mubr.bf16.gmra.mrb[0].mxu0 %v2389
  %v2428 = vpop.f32.mrb[0].mxu0
  %v2429 = vadd.f32 0.0, %v2428
  %v2430 = vpop.f32.mrb[0].mxu0
  %v2431 = vpop.f32.mrb[0].mxu0
  %v2432 = vpop.f32.mrb[0].mxu0
  %2433 = vdwg.mxu0
  %v2434 = vpack.c.bf16 %v2429, %v2429
  %v2436 = vsel %vm552, %v2434, 0
  %2438 = vmatprep.subr.bf16.mxu0 0
  %2439 = vmatpush1.bf16.msra.mxu0 %v1796
  %2440 = vmatprep.subr.bf16.mxu0 0
  %2441 = vmatpush1.bf16.msra.mxu0 0
  %2442 = vmatprep.subr.bf16.mxu0 0
  %2443 = vmatpush1.bf16.msra.mxu0 0
  %2444 = vmatprep.subr.bf16.mxu0 0
  %2445 = vmatpush1.bf16.msra.mxu0 0
  %2446 = vmatprep.subr.bf16.mxu0 0
  %2447 = vmatpush1.bf16.msra.mxu0 0
  %2448 = vmatprep.subr.bf16.mxu0 0
  %2449 = vmatpush1.bf16.msra.mxu0 0
  %2450 = vmatprep.subr.bf16.mxu0 0
  %2451 = vmatpush1.bf16.msra.mxu0 0
  %2452 = vmatprep.subr.bf16.mxu0 0
  %2453 = vmatpush1.bf16.msra.mxu0 0
  %2454 = vmatprep.subr.bf16.mxu0 0
  %2455 = vmatpush1.bf16.msra.mxu0 0
  %2456 = vmatprep.subr.bf16.mxu0 0
  %2457 = vmatpush1.bf16.msra.mxu0 0
  %2458 = vmatprep.subr.bf16.mxu0 0
  %2459 = vmatpush1.bf16.msra.mxu0 0
  %2460 = vmatprep.subr.bf16.mxu0 0
  %2461 = vmatpush1.bf16.msra.mxu0 0
  %2462 = vmatprep.subr.bf16.mxu0 0
  %2463 = vmatpush1.bf16.msra.mxu0 0
  %2464 = vmatprep.subr.bf16.mxu0 0
  %2465 = vmatpush1.bf16.msra.mxu0 0
  %2466 = vmatprep.subr.bf16.mxu0 0
  %2467 = vmatpush1.bf16.msra.mxu0 0
  %2468 = vmatprep.subr.bf16.mxu0 0
  %2469 = vmatpush1.bf16.msra.mxu0 0
  %2470 = vmatprep.mubr.bf16.mxu0 0
  %2471 = vmatmul.mubr.bf16.gmra.mrb[0].mxu0 %v2436
  %v2472 = vpop.f32.mrb[0].mxu0
  %v2473 = vadd.f32 0.0, %v2472
  %v2474 = vpop.f32.mrb[0].mxu0
  %v2475 = vpop.f32.mrb[0].mxu0
  %v2476 = vpop.f32.mrb[0].mxu0
  %2477 = vdwg.mxu0
  %v2479 = vsel %vm552, %v2320, 0
  %2481 = vmatprep.subr.bf16.mxu0 0
  %2482 = vmatpush1.bf16.msra.mxu0 %v1845
  %2483 = vmatprep.subr.bf16.mxu0 0
  %2484 = vmatpush1.bf16.msra.mxu0 0
  %2485 = vmatprep.subr.bf16.mxu0 0
  %2486 = vmatpush1.bf16.msra.mxu0 0
  %2487 = vmatprep.subr.bf16.mxu0 0
  %2488 = vmatpush1.bf16.msra.mxu0 0
  %2489 = vmatprep.subr.bf16.mxu0 0
  %2490 = vmatpush1.bf16.msra.mxu0 0
  %2491 = vmatprep.subr.bf16.mxu0 0
  %2492 = vmatpush1.bf16.msra.mxu0 0
  %2493 = vmatprep.subr.bf16.mxu0 0
  %2494 = vmatpush1.bf16.msra.mxu0 0
  %2495 = vmatprep.subr.bf16.mxu0 0
  %2496 = vmatpush1.bf16.msra.mxu0 0
  %2497 = vmatprep.subr.bf16.mxu0 0
  %2498 = vmatpush1.bf16.msra.mxu0 0
  %2499 = vmatprep.subr.bf16.mxu0 0
  %2500 = vmatpush1.bf16.msra.mxu0 0
  %2501 = vmatprep.subr.bf16.mxu0 0
  %2502 = vmatpush1.bf16.msra.mxu0 0
  %2503 = vmatprep.subr.bf16.mxu0 0
  %2504 = vmatpush1.bf16.msra.mxu0 0
  %2505 = vmatprep.subr.bf16.mxu0 0
  %2506 = vmatpush1.bf16.msra.mxu0 0
  %2507 = vmatprep.subr.bf16.mxu0 0
  %2508 = vmatpush1.bf16.msra.mxu0 0
  %2509 = vmatprep.subr.bf16.mxu0 0
  %2510 = vmatpush1.bf16.msra.mxu0 0
  %2511 = vmatprep.subr.bf16.mxu0 0
  %2512 = vmatpush1.bf16.msra.mxu0 0
  %2513 = vmatprep.mubr.bf16.mxu0 0
  %2514 = vmatmul.mubr.bf16.gmra.mrb[0].mxu0 %v2479
  %v2515 = vpop.f32.mrb[0].mxu0
  %v2516 = vadd.f32 %v2473, %v2515
  %v2517 = vpop.f32.mrb[0].mxu0
  %v2518 = vpop.f32.mrb[0].mxu0
  %v2519 = vpop.f32.mrb[0].mxu0
  %2520 = vdwg.mxu0
  %2521 = vrot.lane.b32.xlu0 %v2213, 96
  %v2522 = vpop.permute.xlu0 %2521
  %2523 = vrot.lane.b32.xlu0 %v2214, 96
  %v2524 = vpop.permute.xlu0 %2523
  %v2526 = vsel %vm552, %v2522, 0
  %v2529 = vsel %vm552, %v2524, 0
  %2531 = vmatprep.subr.bf16.mxu0 0
  %2532 = vmatpush1.bf16.xpose.msra.mxu0 %v2529
  %2533 = vmatprep.subr.bf16.mxu0 0
  %2534 = vmatpush1.bf16.xpose.msra.mxu0 0
  %2535 = vmatprep.subr.bf16.mxu0 0
  %2536 = vmatpush1.bf16.xpose.msra.mxu0 0
  %2537 = vmatprep.subr.bf16.mxu0 0
  %2538 = vmatpush1.bf16.xpose.msra.mxu0 0
  %2539 = vmatprep.subr.bf16.mxu0 0
  %2540 = vmatpush1.bf16.xpose.msra.mxu0 0
  %2541 = vmatprep.subr.bf16.mxu0 0
  %2542 = vmatpush1.bf16.xpose.msra.mxu0 0
  %2543 = vmatprep.subr.bf16.mxu0 0
  %2544 = vmatpush1.bf16.xpose.msra.mxu0 0
  %2545 = vmatprep.subr.bf16.mxu0 0
  %2546 = vmatpush1.bf16.xpose.msra.mxu0 0
  %2547 = vmatprep.subr.bf16.mxu0 0
  %2548 = vmatpush1.bf16.xpose.msra.mxu0 0
  %2549 = vmatprep.subr.bf16.mxu0 0
  %2550 = vmatpush1.bf16.xpose.msra.mxu0 0
  %2551 = vmatprep.subr.bf16.mxu0 0
  %2552 = vmatpush1.bf16.xpose.msra.mxu0 0
  %2553 = vmatprep.subr.bf16.mxu0 0
  %2554 = vmatpush1.bf16.xpose.msra.mxu0 0
  %2555 = vmatprep.subr.bf16.mxu0 0
  %2556 = vmatpush1.bf16.xpose.msra.mxu0 0
  %2557 = vmatprep.subr.bf16.mxu0 0
  %2558 = vmatpush1.bf16.xpose.msra.mxu0 0
  %2559 = vmatprep.subr.bf16.mxu0 0
  %2560 = vmatpush1.bf16.xpose.msra.mxu0 0
  %2561 = vmatprep.subr.bf16.mxu0 0
  %2562 = vmatpush1.bf16.xpose.msra.mxu0 0
  %2563 = vmatprep.mubr.bf16.mxu0 0
  %2564 = vmatmul.mubr.bf16.gmra.mrb[0].mxu0 %v2526
  %v2565 = vpop.f32.mrb[0].mxu0
  %v2566 = vadd.f32 %v1314, %v2565
  %v2567 = vpop.f32.mrb[0].mxu0
  %v2568 = vpop.f32.mrb[0].mxu0
  %v2569 = vpop.f32.mrb[0].mxu0
  %2570 = vdwg.mxu0
  %v2571 = vsel %vm1616, %v2566, -inf
  %2572 = vmax.xlane.f32.xlu0 %v2571
  %v2573 = vpop.xlane.xlu0 %2572
  %v2574 = vsub.f32 %v2566, %v2573
  %v2575 = vmul.f32 %v2574, 1.442695
  %v2576 = vpow.pop %v2575
  %v2577 = vsel %vm1616, %v2576, 0.0
  %2578 = vadd.xlane.f32.xlu0 %v2577
  %v2579 = vpop.xlane.xlu0 %2578
  %v2580 = vrcp.pop %v2579
  %v2581 = vmul.f32 %v2576, %v2580
  %v2582 = vpack.c.bf16 %v2581, %v2581
  %2583 = vrot.lane.b32.xlu0 %v2273, 96
  %v2584 = vpop.permute.xlu0 %2583
  %v2586 = vsel %vm1616, %v2582, 0
  %v2589 = vsel %vm1633, %v2584, 0
  %2591 = vmatprep.subr.bf16.mxu0 0
  %2592 = vmatpush1.bf16.msra.mxu0 %v2589
  %2593 = vmatprep.subr.bf16.mxu0 0
  %2594 = vmatpush1.bf16.msra.mxu0 0
  %2595 = vmatprep.subr.bf16.mxu0 0
  %2596 = vmatpush1.bf16.msra.mxu0 0
  %2597 = vmatprep.subr.bf16.mxu0 0
  %2598 = vmatpush1.bf16.msra.mxu0 0
  %2599 = vmatprep.subr.bf16.mxu0 0
  %2600 = vmatpush1.bf16.msra.mxu0 0
  %2601 = vmatprep.subr.bf16.mxu0 0
  %2602 = vmatpush1.bf16.msra.mxu0 0
  %2603 = vmatprep.subr.bf16.mxu0 0
  %2604 = vmatpush1.bf16.msra.mxu0 0
  %2605 = vmatprep.subr.bf16.mxu0 0
  %2606 = vmatpush1.bf16.msra.mxu0 0
  %2607 = vmatprep.subr.bf16.mxu0 0
  %2608 = vmatpush1.bf16.msra.mxu0 0
  %2609 = vmatprep.subr.bf16.mxu0 0
  %2610 = vmatpush1.bf16.msra.mxu0 0
  %2611 = vmatprep.subr.bf16.mxu0 0
  %2612 = vmatpush1.bf16.msra.mxu0 0
  %2613 = vmatprep.subr.bf16.mxu0 0
  %2614 = vmatpush1.bf16.msra.mxu0 0
  %2615 = vmatprep.subr.bf16.mxu0 0
  %2616 = vmatpush1.bf16.msra.mxu0 0
  %2617 = vmatprep.subr.bf16.mxu0 0
  %2618 = vmatpush1.bf16.msra.mxu0 0
  %2619 = vmatprep.subr.bf16.mxu0 0
  %2620 = vmatpush1.bf16.msra.mxu0 0
  %2621 = vmatprep.subr.bf16.mxu0 0
  %2622 = vmatpush1.bf16.msra.mxu0 0
  %2623 = vmatprep.mubr.bf16.mxu0 0
  %2624 = vmatmul.mubr.bf16.gmra.mrb[0].mxu0 %v2586
  %v2625 = vpop.f32.mrb[0].mxu0
  %v2626 = vadd.f32 0.0, %v2625
  %v2627 = vpop.f32.mrb[0].mxu0
  %v2628 = vpop.f32.mrb[0].mxu0
  %v2629 = vpop.f32.mrb[0].mxu0
  %2630 = vdwg.mxu0
  %v2631 = vpack.c.bf16 %v2626, %v2626
  %v2633 = vsel %vm552, %v2631, 0
  %2635 = vmatprep.subr.bf16.mxu0 0
  %2636 = vmatpush1.bf16.msra.mxu0 %v2005
  %2637 = vmatprep.subr.bf16.mxu0 0
  %2638 = vmatpush1.bf16.msra.mxu0 0
  %2639 = vmatprep.subr.bf16.mxu0 0
  %2640 = vmatpush1.bf16.msra.mxu0 0
  %2641 = vmatprep.subr.bf16.mxu0 0
  %2642 = vmatpush1.bf16.msra.mxu0 0
  %2643 = vmatprep.subr.bf16.mxu0 0
  %2644 = vmatpush1.bf16.msra.mxu0 0
  %2645 = vmatprep.subr.bf16.mxu0 0
  %2646 = vmatpush1.bf16.msra.mxu0 0
  %2647 = vmatprep.subr.bf16.mxu0 0
  %2648 = vmatpush1.bf16.msra.mxu0 0
  %2649 = vmatprep.subr.bf16.mxu0 0
  %2650 = vmatpush1.bf16.msra.mxu0 0
  %2651 = vmatprep.subr.bf16.mxu0 0
  %2652 = vmatpush1.bf16.msra.mxu0 0
  %2653 = vmatprep.subr.bf16.mxu0 0
  %2654 = vmatpush1.bf16.msra.mxu0 0
  %2655 = vmatprep.subr.bf16.mxu0 0
  %2656 = vmatpush1.bf16.msra.mxu0 0
  %2657 = vmatprep.subr.bf16.mxu0 0
  %2658 = vmatpush1.bf16.msra.mxu0 0
  %2659 = vmatprep.subr.bf16.mxu0 0
  %2660 = vmatpush1.bf16.msra.mxu0 0
  %2661 = vmatprep.subr.bf16.mxu0 0
  %2662 = vmatpush1.bf16.msra.mxu0 0
  %2663 = vmatprep.subr.bf16.mxu0 0
  %2664 = vmatpush1.bf16.msra.mxu0 0
  %2665 = vmatprep.subr.bf16.mxu0 0
  %2666 = vmatpush1.bf16.msra.mxu0 0
  %2667 = vmatprep.mubr.bf16.mxu0 0
  %2668 = vmatmul.mubr.bf16.gmra.mrb[0].mxu0 %v2633
  %v2669 = vpop.f32.mrb[0].mxu0
  %v2670 = vadd.f32 0.0, %v2669
  %v2671 = vpop.f32.mrb[0].mxu0
  %v2672 = vpop.f32.mrb[0].mxu0
  %v2673 = vpop.f32.mrb[0].mxu0
  %2674 = vdwg.mxu0
  %v2675 = vadd.f32 %v2516, %v2670
  %2676 = vrot.lane.b32.xlu0 %v2213, 80
  %v2677 = vpop.permute.xlu0 %2676
  %2678 = vrot.lane.b32.xlu0 %v2214, 80
  %v2679 = vpop.permute.xlu0 %2678
  %v2681 = vsel %vm552, %v2677, 0
  %v2684 = vsel %vm552, %v2679, 0
  %2686 = vmatprep.subr.bf16.mxu0 0
  %2687 = vmatpush1.bf16.xpose.msra.mxu0 %v2684
  %2688 = vmatprep.subr.bf16.mxu0 0
  %2689 = vmatpush1.bf16.xpose.msra.mxu0 0
  %2690 = vmatprep.subr.bf16.mxu0 0
  %2691 = vmatpush1.bf16.xpose.msra.mxu0 0
  %2692 = vmatprep.subr.bf16.mxu0 0
  %2693 = vmatpush1.bf16.xpose.msra.mxu0 0
  %2694 = vmatprep.subr.bf16.mxu0 0
  %2695 = vmatpush1.bf16.xpose.msra.mxu0 0
  %2696 = vmatprep.subr.bf16.mxu0 0
  %2697 = vmatpush1.bf16.xpose.msra.mxu0 0
  %2698 = vmatprep.subr.bf16.mxu0 0
  %2699 = vmatpush1.bf16.xpose.msra.mxu0 0
  %2700 = vmatprep.subr.bf16.mxu0 0
  %2701 = vmatpush1.bf16.xpose.msra.mxu0 0
  %2702 = vmatprep.subr.bf16.mxu0 0
  %2703 = vmatpush1.bf16.xpose.msra.mxu0 0
  %2704 = vmatprep.subr.bf16.mxu0 0
  %2705 = vmatpush1.bf16.xpose.msra.mxu0 0
  %2706 = vmatprep.subr.bf16.mxu0 0
  %2707 = vmatpush1.bf16.xpose.msra.mxu0 0
  %2708 = vmatprep.subr.bf16.mxu0 0
  %2709 = vmatpush1.bf16.xpose.msra.mxu0 0
  %2710 = vmatprep.subr.bf16.mxu0 0
  %2711 = vmatpush1.bf16.xpose.msra.mxu0 0
  %2712 = vmatprep.subr.bf16.mxu0 0
  %2713 = vmatpush1.bf16.xpose.msra.mxu0 0
  %2714 = vmatprep.subr.bf16.mxu0 0
  %2715 = vmatpush1.bf16.xpose.msra.mxu0 0
  %2716 = vmatprep.subr.bf16.mxu0 0
  %2717 = vmatpush1.bf16.xpose.msra.mxu0 0
  %2718 = vmatprep.mubr.bf16.mxu0 0
  %2719 = vmatmul.mubr.bf16.gmra.mrb[0].mxu0 %v2681
  %v2720 = vpop.f32.mrb[0].mxu0
  %v2721 = vadd.f32 %v1314, %v2720
  %v2722 = vpop.f32.mrb[0].mxu0
  %v2723 = vpop.f32.mrb[0].mxu0
  %v2724 = vpop.f32.mrb[0].mxu0
  %2725 = vdwg.mxu0
  %v2726 = vsel %vm1616, %v2721, -inf
  %2727 = vmax.xlane.f32.xlu0 %v2726
  %v2728 = vpop.xlane.xlu0 %2727
  %v2729 = vsub.f32 %v2721, %v2728
  %v2730 = vmul.f32 %v2729, 1.442695
  %v2731 = vpow.pop %v2730
  %v2732 = vsel %vm1616, %v2731, 0.0
  %2733 = vadd.xlane.f32.xlu0 %v2732
  %v2734 = vpop.xlane.xlu0 %2733
  %v2735 = vrcp.pop %v2734
  %v2736 = vmul.f32 %v2731, %v2735
  %v2737 = vpack.c.bf16 %v2736, %v2736
  %2738 = vrot.lane.b32.xlu0 %v2273, 80
  %v2739 = vpop.permute.xlu0 %2738
  %v2741 = vsel %vm1616, %v2737, 0
  %v2744 = vsel %vm1633, %v2739, 0
  %2746 = vmatprep.subr.bf16.mxu0 0
  %2747 = vmatpush1.bf16.msra.mxu0 %v2744
  %2748 = vmatprep.subr.bf16.mxu0 0
  %2749 = vmatpush1.bf16.msra.mxu0 0
  %2750 = vmatprep.subr.bf16.mxu0 0
  %2751 = vmatpush1.bf16.msra.mxu0 0
  %2752 = vmatprep.subr.bf16.mxu0 0
  %2753 = vmatpush1.bf16.msra.mxu0 0
  %2754 = vmatprep.subr.bf16.mxu0 0
  %2755 = vmatpush1.bf16.msra.mxu0 0
  %2756 = vmatprep.subr.bf16.mxu0 0
  %2757 = vmatpush1.bf16.msra.mxu0 0
  %2758 = vmatprep.subr.bf16.mxu0 0
  %2759 = vmatpush1.bf16.msra.mxu0 0
  %2760 = vmatprep.subr.bf16.mxu0 0
  %2761 = vmatpush1.bf16.msra.mxu0 0
  %2762 = vmatprep.subr.bf16.mxu0 0
  %2763 = vmatpush1.bf16.msra.mxu0 0
  %2764 = vmatprep.subr.bf16.mxu0 0
  %2765 = vmatpush1.bf16.msra.mxu0 0
  %2766 = vmatprep.subr.bf16.mxu0 0
  %2767 = vmatpush1.bf16.msra.mxu0 0
  %2768 = vmatprep.subr.bf16.mxu0 0
  %2769 = vmatpush1.bf16.msra.mxu0 0
  %2770 = vmatprep.subr.bf16.mxu0 0
  %2771 = vmatpush1.bf16.msra.mxu0 0
  %2772 = vmatprep.subr.bf16.mxu0 0
  %2773 = vmatpush1.bf16.msra.mxu0 0
  %2774 = vmatprep.subr.bf16.mxu0 0
  %2775 = vmatpush1.bf16.msra.mxu0 0
  %2776 = vmatprep.subr.bf16.mxu0 0
  %2777 = vmatpush1.bf16.msra.mxu0 0
  %2778 = vmatprep.mubr.bf16.mxu0 0
  %2779 = vmatmul.mubr.bf16.gmra.mrb[0].mxu0 %v2741
  %v2780 = vpop.f32.mrb[0].mxu0
  %v2781 = vadd.f32 0.0, %v2780
  %v2782 = vpop.f32.mrb[0].mxu0
  %v2783 = vpop.f32.mrb[0].mxu0
  %v2784 = vpop.f32.mrb[0].mxu0
  %2785 = vdwg.mxu0
  %v2786 = vpack.c.bf16 %v2781, %v2781
  %v2788 = vsel %vm552, %v2786, 0
  %2790 = vmatprep.subr.bf16.mxu0 0
  %2791 = vmatpush1.bf16.msra.mxu0 %v2166
  %2792 = vmatprep.subr.bf16.mxu0 0
  %2793 = vmatpush1.bf16.msra.mxu0 0
  %2794 = vmatprep.subr.bf16.mxu0 0
  %2795 = vmatpush1.bf16.msra.mxu0 0
  %2796 = vmatprep.subr.bf16.mxu0 0
  %2797 = vmatpush1.bf16.msra.mxu0 0
  %2798 = vmatprep.subr.bf16.mxu0 0
  %2799 = vmatpush1.bf16.msra.mxu0 0
  %2800 = vmatprep.subr.bf16.mxu0 0
  %2801 = vmatpush1.bf16.msra.mxu0 0
  %2802 = vmatprep.subr.bf16.mxu0 0
  %2803 = vmatpush1.bf16.msra.mxu0 0
  %2804 = vmatprep.subr.bf16.mxu0 0
  %2805 = vmatpush1.bf16.msra.mxu0 0
  %2806 = vmatprep.subr.bf16.mxu0 0
  %2807 = vmatpush1.bf16.msra.mxu0 0
  %2808 = vmatprep.subr.bf16.mxu0 0
  %2809 = vmatpush1.bf16.msra.mxu0 0
  %2810 = vmatprep.subr.bf16.mxu0 0
  %2811 = vmatpush1.bf16.msra.mxu0 0
  %2812 = vmatprep.subr.bf16.mxu0 0
  %2813 = vmatpush1.bf16.msra.mxu0 0
  %2814 = vmatprep.subr.bf16.mxu0 0
  %2815 = vmatpush1.bf16.msra.mxu0 0
  %2816 = vmatprep.subr.bf16.mxu0 0
  %2817 = vmatpush1.bf16.msra.mxu0 0
  %2818 = vmatprep.subr.bf16.mxu0 0
  %2819 = vmatpush1.bf16.msra.mxu0 0
  %2820 = vmatprep.subr.bf16.mxu0 0
  %2821 = vmatpush1.bf16.msra.mxu0 0
  %2822 = vmatprep.mubr.bf16.mxu0 0
  %2823 = vmatmul.mubr.bf16.gmra.mrb[0].mxu0 %v2788
  %v2824 = vpop.f32.mrb[0].mxu0
  %v2825 = vadd.f32 0.0, %v2824
  %v2826 = vpop.f32.mrb[0].mxu0
  %v2827 = vpop.f32.mrb[0].mxu0
  %v2828 = vpop.f32.mrb[0].mxu0
  %2829 = vdwg.mxu0
  %v2830 = vadd.f32 %v2675, %v2825
  %v2831 = vld [vmem:[%s13] sm:$0x1]
  %v2833 = vlaneseq
  %v2834 = vshrl.u32 %v2833, 7
  %v2835 = vsub.s32 0, %v2834
  %v2836 = vrot.slane %v2831, %v2835
  %v2838 = vadd.f32 %v2211, %v2836
  %v2839 = vadd.f32 %v2830, %v2836
  %v2840 = vadd.f32 %v2838, %v1307
  %v2841 = vadd.f32 %v2839, %v1308
  %v2842 = vld [vmem:[%s14] sm:$0x1]
  %v2843 = vld [vmem:[%s15] sm:$0x1]
  %v2844 = vsel %vm351, %v2840, 0.0
  %2845 = vadd.xlane.f32.xlu0 %v2844
  %v2846 = vpop.xlane.xlu0 %2845
  %v2847 = vsel %vm351, %v2841, 0.0
  %2848 = vadd.xlane.f32.xlu0 %v2847
  %v2849 = vpop.xlane.xlu0 %2848
  %v2850 = vmul.f32 %v2846, %v1272
  %v2851 = vmul.f32 %v2849, %v1272
  %v2852 = vsub.f32 %v2840, %v2850
  %v2853 = vsub.f32 %v2841, %v2851
  %v2854 = vmul.f32 %v2852, %v2852
  %v2855 = vmul.f32 %v2853, %v2853
  %v2856 = vsel %vm351, %v2854, 0.0
  %2857 = vadd.xlane.f32.xlu0 %v2856
  %v2858 = vpop.xlane.xlu0 %2857
  %v2859 = vsel %vm351, %v2855, 0.0
  %2860 = vadd.xlane.f32.xlu0 %v2859
  %v2861 = vpop.xlane.xlu0 %2860
  %v2862 = vmul.f32 %v2858, %v1272
  %v2863 = vmul.f32 %v2861, %v1272
  %v2864 = vadd.f32 %v2862, 1e-05
  %v2865 = vadd.f32 %v2863, 1e-05
  %v2866 = vrsqrt.pop %v2864
  %v2867 = vrsqrt.pop %v2865
  %v2868 = vmul.f32 %v2852, %v2866
  %v2869 = vmul.f32 %v2853, %v2867
  %v2871 = vlaneseq
  %v2872 = vshrl.u32 %v2871, 7
  %v2873 = vsub.s32 0, %v2872
  %v2874 = vrot.slane %v2842, %v2873
  %v2876 = vmul.f32 %v2868, %v2874
  %v2877 = vmul.f32 %v2869, %v2874
  %v2879 = vlaneseq
  %v2880 = vshrl.u32 %v2879, 7
  %v2881 = vsub.s32 0, %v2880
  %v2882 = vrot.slane %v2843, %v2881
  %v2884 = vadd.f32 %v2876, %v2882
  %v2885 = vadd.f32 %v2877, %v2882
  %v2886 = vld [vmem:[%s16] sm:$0xf]
  %v2887 = vld [vmem:[%s16 + $0x4] sm:$0xf]
  %v2888 = vld [vmem:[%s16 + $0x8] sm:$0xf]
  %v2889 = vld [vmem:[%s16 + $0xc] sm:$0xf]
  %v2890 = vld [vmem:[%s16 + $0x10] sm:$0xf]
  %v2891 = vld [vmem:[%s16 + $0x14] sm:$0xf]
  %v2892 = vld [vmem:[%s16 + $0x18] sm:$0xf]
  %v2893 = vld [vmem:[%s16 + $0x1c] sm:$0xf]
  %v2894 = vpack.c.bf16 %v2885, %v2884
  %v2895 = vld [vmem:[%s17] sm:$0x1]
  %v2897 = vlaneseq
  %v2898 = vshrl.u32 %v2897, 7
  %v2899 = vsub.s32 0, %v2898
  %v2900 = vrot.slane %v2895, %v2899
  %v2910 = vunpack.c.l.b16 %v2886
  %v2911 = vunpack.c.l.b16 %v2887
  %v2912 = vunpack.c.l.b16 %v2888
  %v2913 = vunpack.c.l.b16 %v2889
  %v2914 = vunpack.c.l.b16 %v2890
  %v2915 = vunpack.c.l.b16 %v2891
  %v2916 = vunpack.c.l.b16 %v2892
  %v2917 = vunpack.c.l.b16 %v2893
  %v2918 = vpack.c.b16 %v2911, %v2910
  %v2919 = vpack.c.b16 %v2913, %v2912
  %v2920 = vpack.c.b16 %v2915, %v2914
  %v2921 = vpack.c.b16 %v2917, %v2916
  %v2927 = vsel %vm351, %v2894, 0
  %2929 = vmatprep.subr.bf16.mxu0 0
  %2930 = vmatpush1.bf16.msra.mxu0 %v2918
  %2931 = vmatprep.subr.bf16.mxu0 0
  %2932 = vmatpush1.bf16.msra.mxu0 %v2919
  %2933 = vmatprep.subr.bf16.mxu0 0
  %2934 = vmatpush1.bf16.msra.mxu0 %v2920
  %2935 = vmatprep.subr.bf16.mxu0 0
  %2936 = vmatpush1.bf16.msra.mxu0 %v2921
  %2937 = vmatprep.subr.bf16.mxu0 0
  %2938 = vmatpush1.bf16.msra.mxu0 0
  %2939 = vmatprep.subr.bf16.mxu0 0
  %2940 = vmatpush1.bf16.msra.mxu0 0
  %2941 = vmatprep.subr.bf16.mxu0 0
  %2942 = vmatpush1.bf16.msra.mxu0 0
  %2943 = vmatprep.subr.bf16.mxu0 0
  %2944 = vmatpush1.bf16.msra.mxu0 0
  %2945 = vmatprep.subr.bf16.mxu0 0
  %2946 = vmatpush1.bf16.msra.mxu0 0
  %2947 = vmatprep.subr.bf16.mxu0 0
  %2948 = vmatpush1.bf16.msra.mxu0 0
  %2949 = vmatprep.subr.bf16.mxu0 0
  %2950 = vmatpush1.bf16.msra.mxu0 0
  %2951 = vmatprep.subr.bf16.mxu0 0
  %2952 = vmatpush1.bf16.msra.mxu0 0
  %2953 = vmatprep.subr.bf16.mxu0 0
  %2954 = vmatpush1.bf16.msra.mxu0 0
  %2955 = vmatprep.subr.bf16.mxu0 0
  %2956 = vmatpush1.bf16.msra.mxu0 0
  %2957 = vmatprep.subr.bf16.mxu0 0
  %2958 = vmatpush1.bf16.msra.mxu0 0
  %2959 = vmatprep.subr.bf16.mxu0 0
  %2960 = vmatpush1.bf16.msra.mxu0 0
  %2961 = vmatprep.mubr.bf16.mxu0 0
  %2962 = vmatmul.mubr.bf16.gmra.mrb[0].mxu0 %v2927
  %v2963 = vpop.f32.mrb[0].mxu0
  %v2964 = vadd.f32 %v2900, %v2963
  %v2965 = vpop.f32.mrb[0].mxu0
  %v2966 = vpop.f32.mrb[0].mxu0
  %v2967 = vadd.f32 %v2900, %v2966
  %v2968 = vpop.f32.mrb[0].mxu0
  %2969 = vdwg.mxu0
  %v2970 = vmax.f32 %v2964, 0.0
  %v2971 = vmax.f32 %v2967, 0.0
  %v2972 = vld [vmem:[%s18] sm:$0xf]
  %v2973 = vld [vmem:[%s18 + $0x4] sm:$0xf]
  %v2974 = vld [vmem:[%s18 + $0x8] sm:$0xf]
  %v2975 = vld [vmem:[%s18 + $0xc] sm:$0xf]
  %v2976 = vld [vmem:[%s18 + $0x10] sm:$0xf]
  %v2977 = vld [vmem:[%s18 + $0x14] sm:$0xf]
  %v2978 = vld [vmem:[%s18 + $0x18] sm:$0xf]
  %v2979 = vld [vmem:[%s18 + $0x1c] sm:$0xf]
  %v2980 = vld [vmem:[%s18 + $0x20] sm:$0xf]
  %v2981 = vld [vmem:[%s18 + $0x24] sm:$0xf]
  %v2982 = vld [vmem:[%s18 + $0x28] sm:$0xf]
  %v2983 = vld [vmem:[%s18 + $0x2c] sm:$0xf]
  %v2984 = vld [vmem:[%s18 + $0x30] sm:$0xf]
  %v2985 = vld [vmem:[%s18 + $0x34] sm:$0xf]
  %v2986 = vld [vmem:[%s18 + $0x38] sm:$0xf]
  %v2987 = vld [vmem:[%s18 + $0x3c] sm:$0xf]
  %v2988 = vpack.c.bf16 %v2971, %v2970
  %v2989 = vld [vmem:[%s19] sm:$0x1]
  %v2991 = vlaneseq
  %v2992 = vshrl.u32 %v2991, 7
  %v2993 = vsub.s32 0, %v2992
  %v2994 = vrot.slane %v2989, %v2993
  %v3012 = vunpack.c.l.b16 %v2972
  %v3013 = vunpack.c.l.b16 %v2973
  %v3014 = vunpack.c.l.b16 %v2974
  %v3015 = vunpack.c.l.b16 %v2975
  %v3016 = vunpack.c.l.b16 %v2976
  %v3017 = vunpack.c.l.b16 %v2977
  %v3018 = vunpack.c.l.b16 %v2978
  %v3019 = vunpack.c.l.b16 %v2979
  %v3020 = vunpack.c.l.b16 %v2980
  %v3021 = vunpack.c.l.b16 %v2981
  %v3022 = vunpack.c.l.b16 %v2982
  %v3023 = vunpack.c.l.b16 %v2983
  %v3024 = vunpack.c.l.b16 %v2984
  %v3025 = vunpack.c.l.b16 %v2985
  %v3026 = vunpack.c.l.b16 %v2986
  %v3027 = vunpack.c.l.b16 %v2987
  %v3028 = vpack.c.b16 %v3013, %v3012
  %v3029 = vpack.c.b16 %v3015, %v3014
  %v3030 = vpack.c.b16 %v3017, %v3016
  %v3031 = vpack.c.b16 %v3019, %v3018
  %v3032 = vpack.c.b16 %v3021, %v3020
  %v3033 = vpack.c.b16 %v3023, %v3022
  %v3034 = vpack.c.b16 %v3025, %v3024
  %v3035 = vpack.c.b16 %v3027, %v3026
  %3044 = vmatprep.subr.bf16.mxu0 0
  %3045 = vmatpush1.bf16.msra.mxu0 %v3028
  %3046 = vmatprep.subr.bf16.mxu0 0
  %3047 = vmatpush1.bf16.msra.mxu0 %v3029
  %3048 = vmatprep.subr.bf16.mxu0 0
  %3049 = vmatpush1.bf16.msra.mxu0 %v3030
  %3050 = vmatprep.subr.bf16.mxu0 0
  %3051 = vmatpush1.bf16.msra.mxu0 %v3031
  %3052 = vmatprep.subr.bf16.mxu0 0
  %3053 = vmatpush1.bf16.msra.mxu0 %v3032
  %3054 = vmatprep.subr.bf16.mxu0 0
  %3055 = vmatpush1.bf16.msra.mxu0 %v3033
  %3056 = vmatprep.subr.bf16.mxu0 0
  %3057 = vmatpush1.bf16.msra.mxu0 %v3034
  %3058 = vmatprep.subr.bf16.mxu0 0
  %3059 = vmatpush1.bf16.msra.mxu0 %v3035
  %3060 = vmatprep.subr.bf16.mxu0 0
  %3061 = vmatpush1.bf16.msra.mxu0 0
  %3062 = vmatprep.subr.bf16.mxu0 0
  %3063 = vmatpush1.bf16.msra.mxu0 0
  %3064 = vmatprep.subr.bf16.mxu0 0
  %3065 = vmatpush1.bf16.msra.mxu0 0
  %3066 = vmatprep.subr.bf16.mxu0 0
  %3067 = vmatpush1.bf16.msra.mxu0 0
  %3068 = vmatprep.subr.bf16.mxu0 0
  %3069 = vmatpush1.bf16.msra.mxu0 0
  %3070 = vmatprep.subr.bf16.mxu0 0
  %3071 = vmatpush1.bf16.msra.mxu0 0
  %3072 = vmatprep.subr.bf16.mxu0 0
  %3073 = vmatpush1.bf16.msra.mxu0 0
  %3074 = vmatprep.subr.bf16.mxu0 0
  %3075 = vmatpush1.bf16.msra.mxu0 0
  %3076 = vmatprep.mubr.bf16.mxu0 0
  %3077 = vmatmul.mubr.bf16.gmra.mrb[0].mxu0 %v2988
  %v3078 = vpop.f32.mrb[0].mxu0
  %v3079 = vadd.f32 %v2994, %v3078
  %v3080 = vpop.f32.mrb[0].mxu0
  %v3081 = vpop.f32.mrb[0].mxu0
  %v3082 = vadd.f32 %v2994, %v3081
  %v3083 = vpop.f32.mrb[0].mxu0
  %3084 = vdwg.mxu0
  %v3085 = vadd.f32 %v3079, %v2884
  %v3086 = vadd.f32 %v3082, %v2885
  %v3087 = vld [vmem:[%s20] sm:$0x1]
  %v3088 = vld [vmem:[%s21] sm:$0x1]
  %v3089 = vsel %vm351, %v3085, 0.0
  %3090 = vadd.xlane.f32.xlu0 %v3089
  %v3091 = vpop.xlane.xlu0 %3090
  %v3092 = vsel %vm351, %v3086, 0.0
  %3093 = vadd.xlane.f32.xlu0 %v3092
  %v3094 = vpop.xlane.xlu0 %3093
  %v3095 = vmul.f32 %v3091, %v1272
  %v3096 = vmul.f32 %v3094, %v1272
  %v3097 = vsub.f32 %v3085, %v3095
  %v3098 = vsub.f32 %v3086, %v3096
  %v3099 = vmul.f32 %v3097, %v3097
  %v3100 = vmul.f32 %v3098, %v3098
  %v3101 = vsel %vm351, %v3099, 0.0
  %3102 = vadd.xlane.f32.xlu0 %v3101
  %v3103 = vpop.xlane.xlu0 %3102
  %v3104 = vsel %vm351, %v3100, 0.0
  %3105 = vadd.xlane.f32.xlu0 %v3104
  %v3106 = vpop.xlane.xlu0 %3105
  %v3107 = vmul.f32 %v3103, %v1272
  %v3108 = vmul.f32 %v3106, %v1272
  %v3109 = vadd.f32 %v3107, 1e-05
  %v3110 = vadd.f32 %v3108, 1e-05
  %v3111 = vrsqrt.pop %v3109
  %v3112 = vrsqrt.pop %v3110
  %v3113 = vmul.f32 %v3097, %v3111
  %v3114 = vmul.f32 %v3098, %v3112
  %v3116 = vlaneseq
  %v3117 = vshrl.u32 %v3116, 7
  %v3118 = vsub.s32 0, %v3117
  %v3119 = vrot.slane %v3087, %v3118
  %v3121 = vmul.f32 %v3113, %v3119
  %v3122 = vmul.f32 %v3114, %v3119
  %v3124 = vlaneseq
  %v3125 = vshrl.u32 %v3124, 7
  %v3126 = vsub.s32 0, %v3125
  %v3127 = vrot.slane %v3088, %v3126
  %v3129 = vadd.f32 %v3121, %v3127
  %v3130 = vadd.f32 %v3122, %v3127
  %s3131 = scalar_lea.vmem %s10, 96
  %v3132 = vld [vmem:[%s3131] sm:$0xf]
  %v3133 = vld [vmem:[%s3131 + $0x4] sm:$0xf]
  %v3134 = vld [vmem:[%s3131 + $0x8] sm:$0xf]
  %v3135 = vld [vmem:[%s3131 + $0xc] sm:$0xf]
  %v3136 = vld [vmem:[%s3131 + $0x10] sm:$0xf]
  %v3137 = vld [vmem:[%s3131 + $0x14] sm:$0xf]
  %v3138 = vld [vmem:[%s3131 + $0x18] sm:$0xf]
  %v3139 = vld [vmem:[%s3131 + $0x1c] sm:$0xf]
  %v3140 = vld [vmem:[%s3131 + $0x20] sm:$0xf]
  %v3141 = vld [vmem:[%s3131 + $0x24] sm:$0xf]
  %v3142 = vld [vmem:[%s3131 + $0x28] sm:$0xf]
  %v3143 = vld [vmem:[%s3131 + $0x2c] sm:$0xf]
  %v3144 = vld [vmem:[%s3131 + $0x30] sm:$0xf]
  %v3145 = vld [vmem:[%s3131 + $0x34] sm:$0xf]
  %v3146 = vld [vmem:[%s3131 + $0x38] sm:$0xf]
  %v3147 = vld [vmem:[%s3131 + $0x3c] sm:$0xf]
  %v3148 = vld [vmem:[%s3131 + $0x40] sm:$0xf]
  %v3149 = vld [vmem:[%s3131 + $0x44] sm:$0xf]
  %v3150 = vld [vmem:[%s3131 + $0x48] sm:$0xf]
  %v3151 = vld [vmem:[%s3131 + $0x4c] sm:$0xf]
  %v3152 = vld [vmem:[%s3131 + $0x50] sm:$0xf]
  %v3153 = vld [vmem:[%s3131 + $0x54] sm:$0xf]
  %v3154 = vld [vmem:[%s3131 + $0x58] sm:$0xf]
  %v3155 = vld [vmem:[%s3131 + $0x5c] sm:$0xf]
  %s3156 = scalar_lea.vmem %s11, 3
  %v3157 = vld [vmem:[%s3156] sm:$0x1]
  %v3158 = vld [vmem:[%s3156 + $0x1] sm:$0x1]
  %v3159 = vld [vmem:[%s3156 + $0x2] sm:$0x1]
  %s3160 = scalar_lea.vmem %s12, 32
  %v3161 = vld [vmem:[%s3160] sm:$0xf]
  %v3162 = vld [vmem:[%s3160 + $0x4] sm:$0xf]
  %v3163 = vld [vmem:[%s3160 + $0x8] sm:$0xf]
  %v3164 = vld [vmem:[%s3160 + $0xc] sm:$0xf]
  %v3165 = vld [vmem:[%s3160 + $0x10] sm:$0xf]
  %v3166 = vld [vmem:[%s3160 + $0x14] sm:$0xf]
  %v3167 = vld [vmem:[%s3160 + $0x18] sm:$0xf]
  %v3168 = vld [vmem:[%s3160 + $0x1c] sm:$0xf]
  %v3169 = vpack.c.bf16 %v3130, %v3129
  %v3171 = vlaneseq
  %v3172 = vshrl.u32 %v3171, 7
  %v3173 = vsub.s32 0, %v3172
  %v3174 = vrot.slane %v3157, %v3173
  %v3184 = vunpack.c.l.b16 %v3132
  %v3185 = vunpack.c.l.b16 %v3133
  %v3186 = vunpack.c.l.b16 %v3134
  %v3187 = vunpack.c.l.b16 %v3135
  %v3188 = vunpack.c.l.b16 %v3136
  %v3189 = vunpack.c.l.b16 %v3137
  %v3190 = vunpack.c.l.b16 %v3138
  %v3191 = vunpack.c.l.b16 %v3139
  %v3192 = vpack.c.b16 %v3185, %v3184
  %v3193 = vpack.c.b16 %v3187, %v3186
  %v3194 = vpack.c.b16 %v3189, %v3188
  %v3195 = vpack.c.b16 %v3191, %v3190
  %v3201 = vsel %vm351, %v3169, 0
  %3203 = vmatprep.subr.bf16.mxu0 0
  %3204 = vmatpush1.bf16.msra.mxu0 %v3192
  %3205 = vmatprep.subr.bf16.mxu0 0
  %3206 = vmatpush1.bf16.msra.mxu0 %v3193
  %3207 = vmatprep.subr.bf16.mxu0 0
  %3208 = vmatpush1.bf16.msra.mxu0 %v3194
  %3209 = vmatprep.subr.bf16.mxu0 0
  %3210 = vmatpush1.bf16.msra.mxu0 %v3195
  %3211 = vmatprep.subr.bf16.mxu0 0
  %3212 = vmatpush1.bf16.msra.mxu0 0
  %3213 = vmatprep.subr.bf16.mxu0 0
  %3214 = vmatpush1.bf16.msra.mxu0 0
  %3215 = vmatprep.subr.bf16.mxu0 0
  %3216 = vmatpush1.bf16.msra.mxu0 0
  %3217 = vmatprep.subr.bf16.mxu0 0
  %3218 = vmatpush1.bf16.msra.mxu0 0
  %3219 = vmatprep.subr.bf16.mxu0 0
  %3220 = vmatpush1.bf16.msra.mxu0 0
  %3221 = vmatprep.subr.bf16.mxu0 0
  %3222 = vmatpush1.bf16.msra.mxu0 0
  %3223 = vmatprep.subr.bf16.mxu0 0
  %3224 = vmatpush1.bf16.msra.mxu0 0
  %3225 = vmatprep.subr.bf16.mxu0 0
  %3226 = vmatpush1.bf16.msra.mxu0 0
  %3227 = vmatprep.subr.bf16.mxu0 0
  %3228 = vmatpush1.bf16.msra.mxu0 0
  %3229 = vmatprep.subr.bf16.mxu0 0
  %3230 = vmatpush1.bf16.msra.mxu0 0
  %3231 = vmatprep.subr.bf16.mxu0 0
  %3232 = vmatpush1.bf16.msra.mxu0 0
  %3233 = vmatprep.subr.bf16.mxu0 0
  %3234 = vmatpush1.bf16.msra.mxu0 0
  %3235 = vmatprep.mubr.bf16.mxu0 0
  %3236 = vmatmul.mubr.bf16.gmra.mrb[0].mxu0 %v3201
  %v3237 = vpop.f32.mrb[0].mxu0
  %v3238 = vadd.f32 %v3174, %v3237
  %v3239 = vpop.f32.mrb[0].mxu0
  %v3240 = vpop.f32.mrb[0].mxu0
  %v3241 = vadd.f32 %v3174, %v3240
  %v3242 = vpop.f32.mrb[0].mxu0
  %3243 = vdwg.mxu0
  %v3245 = vlaneseq
  %v3246 = vshrl.u32 %v3245, 7
  %v3247 = vsub.s32 0, %v3246
  %v3248 = vrot.slane %v3158, %v3247
  %v3258 = vunpack.c.l.b16 %v3140
  %v3259 = vunpack.c.l.b16 %v3141
  %v3260 = vunpack.c.l.b16 %v3142
  %v3261 = vunpack.c.l.b16 %v3143
  %v3262 = vunpack.c.l.b16 %v3144
  %v3263 = vunpack.c.l.b16 %v3145
  %v3264 = vunpack.c.l.b16 %v3146
  %v3265 = vunpack.c.l.b16 %v3147
  %v3266 = vpack.c.b16 %v3259, %v3258
  %v3267 = vpack.c.b16 %v3261, %v3260
  %v3268 = vpack.c.b16 %v3263, %v3262
  %v3269 = vpack.c.b16 %v3265, %v3264
  %3274 = vmatprep.subr.bf16.mxu0 0
  %3275 = vmatpush1.bf16.msra.mxu0 %v3266
  %3276 = vmatprep.subr.bf16.mxu0 0
  %3277 = vmatpush1.bf16.msra.mxu0 %v3267
  %3278 = vmatprep.subr.bf16.mxu0 0
  %3279 = vmatpush1.bf16.msra.mxu0 %v3268
  %3280 = vmatprep.subr.bf16.mxu0 0
  %3281 = vmatpush1.bf16.msra.mxu0 %v3269
  %3282 = vmatprep.subr.bf16.mxu0 0
  %3283 = vmatpush1.bf16.msra.mxu0 0
  %3284 = vmatprep.subr.bf16.mxu0 0
  %3285 = vmatpush1.bf16.msra.mxu0 0
  %3286 = vmatprep.subr.bf16.mxu0 0
  %3287 = vmatpush1.bf16.msra.mxu0 0
  %3288 = vmatprep.subr.bf16.mxu0 0
  %3289 = vmatpush1.bf16.msra.mxu0 0
  %3290 = vmatprep.subr.bf16.mxu0 0
  %3291 = vmatpush1.bf16.msra.mxu0 0
  %3292 = vmatprep.subr.bf16.mxu0 0
  %3293 = vmatpush1.bf16.msra.mxu0 0
  %3294 = vmatprep.subr.bf16.mxu0 0
  %3295 = vmatpush1.bf16.msra.mxu0 0
  %3296 = vmatprep.subr.bf16.mxu0 0
  %3297 = vmatpush1.bf16.msra.mxu0 0
  %3298 = vmatprep.subr.bf16.mxu0 0
  %3299 = vmatpush1.bf16.msra.mxu0 0
  %3300 = vmatprep.subr.bf16.mxu0 0
  %3301 = vmatpush1.bf16.msra.mxu0 0
  %3302 = vmatprep.subr.bf16.mxu0 0
  %3303 = vmatpush1.bf16.msra.mxu0 0
  %3304 = vmatprep.subr.bf16.mxu0 0
  %3305 = vmatpush1.bf16.msra.mxu0 0
  %3306 = vmatprep.mubr.bf16.mxu0 0
  %3307 = vmatmul.mubr.bf16.gmra.mrb[0].mxu0 %v3201
  %v3308 = vpop.f32.mrb[0].mxu0
  %v3309 = vadd.f32 %v3248, %v3308
  %v3310 = vpop.f32.mrb[0].mxu0
  %v3311 = vpop.f32.mrb[0].mxu0
  %v3312 = vadd.f32 %v3248, %v3311
  %v3313 = vpop.f32.mrb[0].mxu0
  %3314 = vdwg.mxu0
  %v3316 = vlaneseq
  %v3317 = vshrl.u32 %v3316, 7
  %v3318 = vsub.s32 0, %v3317
  %v3319 = vrot.slane %v3159, %v3318
  %v3329 = vunpack.c.l.b16 %v3148
  %v3330 = vunpack.c.l.b16 %v3149
  %v3331 = vunpack.c.l.b16 %v3150
  %v3332 = vunpack.c.l.b16 %v3151
  %v3333 = vunpack.c.l.b16 %v3152
  %v3334 = vunpack.c.l.b16 %v3153
  %v3335 = vunpack.c.l.b16 %v3154
  %v3336 = vunpack.c.l.b16 %v3155
  %v3337 = vpack.c.b16 %v3330, %v3329
  %v3338 = vpack.c.b16 %v3332, %v3331
  %v3339 = vpack.c.b16 %v3334, %v3333
  %v3340 = vpack.c.b16 %v3336, %v3335
  %3345 = vmatprep.subr.bf16.mxu0 0
  %3346 = vmatpush1.bf16.msra.mxu0 %v3337
  %3347 = vmatprep.subr.bf16.mxu0 0
  %3348 = vmatpush1.bf16.msra.mxu0 %v3338
  %3349 = vmatprep.subr.bf16.mxu0 0
  %3350 = vmatpush1.bf16.msra.mxu0 %v3339
  %3351 = vmatprep.subr.bf16.mxu0 0
  %3352 = vmatpush1.bf16.msra.mxu0 %v3340
  %3353 = vmatprep.subr.bf16.mxu0 0
  %3354 = vmatpush1.bf16.msra.mxu0 0
  %3355 = vmatprep.subr.bf16.mxu0 0
  %3356 = vmatpush1.bf16.msra.mxu0 0
  %3357 = vmatprep.subr.bf16.mxu0 0
  %3358 = vmatpush1.bf16.msra.mxu0 0
  %3359 = vmatprep.subr.bf16.mxu0 0
  %3360 = vmatpush1.bf16.msra.mxu0 0
  %3361 = vmatprep.subr.bf16.mxu0 0
  %3362 = vmatpush1.bf16.msra.mxu0 0
  %3363 = vmatprep.subr.bf16.mxu0 0
  %3364 = vmatpush1.bf16.msra.mxu0 0
  %3365 = vmatprep.subr.bf16.mxu0 0
  %3366 = vmatpush1.bf16.msra.mxu0 0
  %3367 = vmatprep.subr.bf16.mxu0 0
  %3368 = vmatpush1.bf16.msra.mxu0 0
  %3369 = vmatprep.subr.bf16.mxu0 0
  %3370 = vmatpush1.bf16.msra.mxu0 0
  %3371 = vmatprep.subr.bf16.mxu0 0
  %3372 = vmatpush1.bf16.msra.mxu0 0
  %3373 = vmatprep.subr.bf16.mxu0 0
  %3374 = vmatpush1.bf16.msra.mxu0 0
  %3375 = vmatprep.subr.bf16.mxu0 0
  %3376 = vmatpush1.bf16.msra.mxu0 0
  %3377 = vmatprep.mubr.bf16.mxu0 0
  %3378 = vmatmul.mubr.bf16.gmra.mrb[0].mxu0 %v3201
  %v3379 = vpop.f32.mrb[0].mxu0
  %v3380 = vadd.f32 %v3319, %v3379
  %v3381 = vpop.f32.mrb[0].mxu0
  %v3382 = vpop.f32.mrb[0].mxu0
  %v3383 = vadd.f32 %v3319, %v3382
  %v3384 = vpop.f32.mrb[0].mxu0
  %3385 = vdwg.mxu0
  %v3386 = vmul.f32 %v3238, 0.25
  %v3387 = vpack.c.bf16 %v3386, %v3386
  %v3388 = vpack.c.bf16 %v3309, %v3309
  %v3390 = vsel %vm552, %v3387, 0
  %v3393 = vsel %vm552, %v3388, 0
  %3395 = vmatprep.subr.bf16.mxu0 0
  %3396 = vmatpush1.bf16.xpose.msra.mxu0 %v3393
  %3397 = vmatprep.subr.bf16.mxu0 0
  %3398 = vmatpush1.bf16.xpose.msra.mxu0 0
  %3399 = vmatprep.subr.bf16.mxu0 0
  %3400 = vmatpush1.bf16.xpose.msra.mxu0 0
  %3401 = vmatprep.subr.bf16.mxu0 0
  %3402 = vmatpush1.bf16.xpose.msra.mxu0 0
  %3403 = vmatprep.subr.bf16.mxu0 0
  %3404 = vmatpush1.bf16.xpose.msra.mxu0 0
  %3405 = vmatprep.subr.bf16.mxu0 0
  %3406 = vmatpush1.bf16.xpose.msra.mxu0 0
  %3407 = vmatprep.subr.bf16.mxu0 0
  %3408 = vmatpush1.bf16.xpose.msra.mxu0 0
  %3409 = vmatprep.subr.bf16.mxu0 0
  %3410 = vmatpush1.bf16.xpose.msra.mxu0 0
  %3411 = vmatprep.subr.bf16.mxu0 0
  %3412 = vmatpush1.bf16.xpose.msra.mxu0 0
  %3413 = vmatprep.subr.bf16.mxu0 0
  %3414 = vmatpush1.bf16.xpose.msra.mxu0 0
  %3415 = vmatprep.subr.bf16.mxu0 0
  %3416 = vmatpush1.bf16.xpose.msra.mxu0 0
  %3417 = vmatprep.subr.bf16.mxu0 0
  %3418 = vmatpush1.bf16.xpose.msra.mxu0 0
  %3419 = vmatprep.subr.bf16.mxu0 0
  %3420 = vmatpush1.bf16.xpose.msra.mxu0 0
  %3421 = vmatprep.subr.bf16.mxu0 0
  %3422 = vmatpush1.bf16.xpose.msra.mxu0 0
  %3423 = vmatprep.subr.bf16.mxu0 0
  %3424 = vmatpush1.bf16.xpose.msra.mxu0 0
  %3425 = vmatprep.subr.bf16.mxu0 0
  %3426 = vmatpush1.bf16.xpose.msra.mxu0 0
  %3427 = vmatprep.mubr.bf16.mxu0 0
  %3428 = vmatmul.mubr.bf16.gmra.mrb[0].mxu0 %v3390
  %v3429 = vpop.f32.mrb[0].mxu0
  %v3430 = vadd.f32 %v1314, %v3429
  %v3431 = vpop.f32.mrb[0].mxu0
  %v3432 = vpop.f32.mrb[0].mxu0
  %v3433 = vpop.f32.mrb[0].mxu0
  %3434 = vdwg.mxu0
  %v3435 = vsel %vm1616, %v3430, -inf
  %3436 = vmax.xlane.f32.xlu0 %v3435
  %v3437 = vpop.xlane.xlu0 %3436
  %v3438 = vsub.f32 %v3430, %v3437
  %v3439 = vmul.f32 %v3438, 1.442695
  %v3440 = vpow.pop %v3439
  %v3441 = vsel %vm1616, %v3440, 0.0
  %3442 = vadd.xlane.f32.xlu0 %v3441
  %v3443 = vpop.xlane.xlu0 %3442
  %v3444 = vrcp.pop %v3443
  %v3445 = vmul.f32 %v3440, %v3444
  %v3446 = vpack.c.bf16 %v3445, %v3445
  %v3447 = vpack.c.bf16 %v3380, %v3380
  %v3449 = vsel %vm1616, %v3446, 0
  %v3452 = vsel %vm1633, %v3447, 0
  %3454 = vmatprep.subr.bf16.mxu0 0
  %3455 = vmatpush1.bf16.msra.mxu0 %v3452
  %3456 = vmatprep.subr.bf16.mxu0 0
  %3457 = vmatpush1.bf16.msra.mxu0 0
  %3458 = vmatprep.subr.bf16.mxu0 0
  %3459 = vmatpush1.bf16.msra.mxu0 0
  %3460 = vmatprep.subr.bf16.mxu0 0
  %3461 = vmatpush1.bf16.msra.mxu0 0
  %3462 = vmatprep.subr.bf16.mxu0 0
  %3463 = vmatpush1.bf16.msra.mxu0 0
  %3464 = vmatprep.subr.bf16.mxu0 0
  %3465 = vmatpush1.bf16.msra.mxu0 0
  %3466 = vmatprep.subr.bf16.mxu0 0
  %3467 = vmatpush1.bf16.msra.mxu0 0
  %3468 = vmatprep.subr.bf16.mxu0 0
  %3469 = vmatpush1.bf16.msra.mxu0 0
  %3470 = vmatprep.subr.bf16.mxu0 0
  %3471 = vmatpush1.bf16.msra.mxu0 0
  %3472 = vmatprep.subr.bf16.mxu0 0
  %3473 = vmatpush1.bf16.msra.mxu0 0
  %3474 = vmatprep.subr.bf16.mxu0 0
  %3475 = vmatpush1.bf16.msra.mxu0 0
  %3476 = vmatprep.subr.bf16.mxu0 0
  %3477 = vmatpush1.bf16.msra.mxu0 0
  %3478 = vmatprep.subr.bf16.mxu0 0
  %3479 = vmatpush1.bf16.msra.mxu0 0
  %3480 = vmatprep.subr.bf16.mxu0 0
  %3481 = vmatpush1.bf16.msra.mxu0 0
  %3482 = vmatprep.subr.bf16.mxu0 0
  %3483 = vmatpush1.bf16.msra.mxu0 0
  %3484 = vmatprep.subr.bf16.mxu0 0
  %3485 = vmatpush1.bf16.msra.mxu0 0
  %3486 = vmatprep.mubr.bf16.mxu0 0
  %3487 = vmatmul.mubr.bf16.gmra.mrb[0].mxu0 %v3449
  %v3488 = vpop.f32.mrb[0].mxu0
  %v3489 = vadd.f32 0.0, %v3488
  %v3490 = vpop.f32.mrb[0].mxu0
  %v3491 = vpop.f32.mrb[0].mxu0
  %v3492 = vpop.f32.mrb[0].mxu0
  %3493 = vdwg.mxu0
  %v3494 = vpack.c.bf16 %v3489, %v3489
  %3496 = vrot.lane.b32.xlu0 %v3387, 112
  %v3497 = vpop.permute.xlu0 %3496
  %3499 = vrot.lane.b32.xlu0 %v3388, 112
  %v3500 = vpop.permute.xlu0 %3499
  %v3502 = vsel %vm552, %v3497, 0
  %v3505 = vsel %vm552, %v3500, 0
  %3507 = vmatprep.subr.bf16.mxu0 0
  %3508 = vmatpush1.bf16.xpose.msra.mxu0 %v3505
  %3509 = vmatprep.subr.bf16.mxu0 0
  %3510 = vmatpush1.bf16.xpose.msra.mxu0 0
  %3511 = vmatprep.subr.bf16.mxu0 0
  %3512 = vmatpush1.bf16.xpose.msra.mxu0 0
  %3513 = vmatprep.subr.bf16.mxu0 0
  %3514 = vmatpush1.bf16.xpose.msra.mxu0 0
  %3515 = vmatprep.subr.bf16.mxu0 0
  %3516 = vmatpush1.bf16.xpose.msra.mxu0 0
  %3517 = vmatprep.subr.bf16.mxu0 0
  %3518 = vmatpush1.bf16.xpose.msra.mxu0 0
  %3519 = vmatprep.subr.bf16.mxu0 0
  %3520 = vmatpush1.bf16.xpose.msra.mxu0 0
  %3521 = vmatprep.subr.bf16.mxu0 0
  %3522 = vmatpush1.bf16.xpose.msra.mxu0 0
  %3523 = vmatprep.subr.bf16.mxu0 0
  %3524 = vmatpush1.bf16.xpose.msra.mxu0 0
  %3525 = vmatprep.subr.bf16.mxu0 0
  %3526 = vmatpush1.bf16.xpose.msra.mxu0 0
  %3527 = vmatprep.subr.bf16.mxu0 0
  %3528 = vmatpush1.bf16.xpose.msra.mxu0 0
  %3529 = vmatprep.subr.bf16.mxu0 0
  %3530 = vmatpush1.bf16.xpose.msra.mxu0 0
  %3531 = vmatprep.subr.bf16.mxu0 0
  %3532 = vmatpush1.bf16.xpose.msra.mxu0 0
  %3533 = vmatprep.subr.bf16.mxu0 0
  %3534 = vmatpush1.bf16.xpose.msra.mxu0 0
  %3535 = vmatprep.subr.bf16.mxu0 0
  %3536 = vmatpush1.bf16.xpose.msra.mxu0 0
  %3537 = vmatprep.subr.bf16.mxu0 0
  %3538 = vmatpush1.bf16.xpose.msra.mxu0 0
  %3539 = vmatprep.mubr.bf16.mxu0 0
  %3540 = vmatmul.mubr.bf16.gmra.mrb[0].mxu0 %v3502
  %v3541 = vpop.f32.mrb[0].mxu0
  %v3542 = vadd.f32 %v1314, %v3541
  %v3543 = vpop.f32.mrb[0].mxu0
  %v3544 = vpop.f32.mrb[0].mxu0
  %v3545 = vpop.f32.mrb[0].mxu0
  %3546 = vdwg.mxu0
  %v3547 = vsel %vm1616, %v3542, -inf
  %3548 = vmax.xlane.f32.xlu0 %v3547
  %v3549 = vpop.xlane.xlu0 %3548
  %v3550 = vsub.f32 %v3542, %v3549
  %v3551 = vmul.f32 %v3550, 1.442695
  %v3552 = vpow.pop %v3551
  %v3553 = vsel %vm1616, %v3552, 0.0
  %3554 = vadd.xlane.f32.xlu0 %v3553
  %v3555 = vpop.xlane.xlu0 %3554
  %v3556 = vrcp.pop %v3555
  %v3557 = vmul.f32 %v3552, %v3556
  %v3558 = vpack.c.bf16 %v3557, %v3557
  %3560 = vrot.lane.b32.xlu0 %v3447, 112
  %v3561 = vpop.permute.xlu0 %3560
  %v3563 = vsel %vm1616, %v3558, 0
  %v3566 = vsel %vm1633, %v3561, 0
  %3568 = vmatprep.subr.bf16.mxu0 0
  %3569 = vmatpush1.bf16.msra.mxu0 %v3566
  %3570 = vmatprep.subr.bf16.mxu0 0
  %3571 = vmatpush1.bf16.msra.mxu0 0
  %3572 = vmatprep.subr.bf16.mxu0 0
  %3573 = vmatpush1.bf16.msra.mxu0 0
  %3574 = vmatprep.subr.bf16.mxu0 0
  %3575 = vmatpush1.bf16.msra.mxu0 0
  %3576 = vmatprep.subr.bf16.mxu0 0
  %3577 = vmatpush1.bf16.msra.mxu0 0
  %3578 = vmatprep.subr.bf16.mxu0 0
  %3579 = vmatpush1.bf16.msra.mxu0 0
  %3580 = vmatprep.subr.bf16.mxu0 0
  %3581 = vmatpush1.bf16.msra.mxu0 0
  %3582 = vmatprep.subr.bf16.mxu0 0
  %3583 = vmatpush1.bf16.msra.mxu0 0
  %3584 = vmatprep.subr.bf16.mxu0 0
  %3585 = vmatpush1.bf16.msra.mxu0 0
  %3586 = vmatprep.subr.bf16.mxu0 0
  %3587 = vmatpush1.bf16.msra.mxu0 0
  %3588 = vmatprep.subr.bf16.mxu0 0
  %3589 = vmatpush1.bf16.msra.mxu0 0
  %3590 = vmatprep.subr.bf16.mxu0 0
  %3591 = vmatpush1.bf16.msra.mxu0 0
  %3592 = vmatprep.subr.bf16.mxu0 0
  %3593 = vmatpush1.bf16.msra.mxu0 0
  %3594 = vmatprep.subr.bf16.mxu0 0
  %3595 = vmatpush1.bf16.msra.mxu0 0
  %3596 = vmatprep.subr.bf16.mxu0 0
  %3597 = vmatpush1.bf16.msra.mxu0 0
  %3598 = vmatprep.subr.bf16.mxu0 0
  %3599 = vmatpush1.bf16.msra.mxu0 0
  %3600 = vmatprep.mubr.bf16.mxu0 0
  %3601 = vmatmul.mubr.bf16.gmra.mrb[0].mxu0 %v3563
  %v3602 = vpop.f32.mrb[0].mxu0
  %v3603 = vadd.f32 0.0, %v3602
  %v3604 = vpop.f32.mrb[0].mxu0
  %v3605 = vpop.f32.mrb[0].mxu0
  %v3606 = vpop.f32.mrb[0].mxu0
  %3607 = vdwg.mxu0
  %v3608 = vpack.c.bf16 %v3603, %v3603
  %v3611 = vunpack.c.l.b16 %v3163
  %v3612 = vunpack.c.l.b16 %v3164
  %v3613 = vpack.c.b16 %v3612, %v3611
  %v3616 = vsel %vm552, %v3608, 0
  %3618 = vmatprep.subr.bf16.mxu0 0
  %3619 = vmatpush1.bf16.msra.mxu0 %v3613
  %3620 = vmatprep.subr.bf16.mxu0 0
  %3621 = vmatpush1.bf16.msra.mxu0 0
  %3622 = vmatprep.subr.bf16.mxu0 0
  %3623 = vmatpush1.bf16.msra.mxu0 0
  %3624 = vmatprep.subr.bf16.mxu0 0
  %3625 = vmatpush1.bf16.msra.mxu0 0
  %3626 = vmatprep.subr.bf16.mxu0 0
  %3627 = vmatpush1.bf16.msra.mxu0 0
  %3628 = vmatprep.subr.bf16.mxu0 0
  %3629 = vmatpush1.bf16.msra.mxu0 0
  %3630 = vmatprep.subr.bf16.mxu0 0
  %3631 = vmatpush1.bf16.msra.mxu0 0
  %3632 = vmatprep.subr.bf16.mxu0 0
  %3633 = vmatpush1.bf16.msra.mxu0 0
  %3634 = vmatprep.subr.bf16.mxu0 0
  %3635 = vmatpush1.bf16.msra.mxu0 0
  %3636 = vmatprep.subr.bf16.mxu0 0
  %3637 = vmatpush1.bf16.msra.mxu0 0
  %3638 = vmatprep.subr.bf16.mxu0 0
  %3639 = vmatpush1.bf16.msra.mxu0 0
  %3640 = vmatprep.subr.bf16.mxu0 0
  %3641 = vmatpush1.bf16.msra.mxu0 0
  %3642 = vmatprep.subr.bf16.mxu0 0
  %3643 = vmatpush1.bf16.msra.mxu0 0
  %3644 = vmatprep.subr.bf16.mxu0 0
  %3645 = vmatpush1.bf16.msra.mxu0 0
  %3646 = vmatprep.subr.bf16.mxu0 0
  %3647 = vmatpush1.bf16.msra.mxu0 0
  %3648 = vmatprep.subr.bf16.mxu0 0
  %3649 = vmatpush1.bf16.msra.mxu0 0
  %3650 = vmatprep.mubr.bf16.mxu0 0
  %3651 = vmatmul.mubr.bf16.gmra.mrb[0].mxu0 %v3616
  %v3652 = vpop.f32.mrb[0].mxu0
  %v3653 = vadd.f32 0.0, %v3652
  %v3654 = vpop.f32.mrb[0].mxu0
  %v3655 = vpop.f32.mrb[0].mxu0
  %v3656 = vpop.f32.mrb[0].mxu0
  %3657 = vdwg.mxu0
  %v3660 = vunpack.c.l.b16 %v3161
  %v3661 = vunpack.c.l.b16 %v3162
  %v3662 = vpack.c.b16 %v3661, %v3660
  %v3665 = vsel %vm552, %v3494, 0
  %3667 = vmatprep.subr.bf16.mxu0 0
  %3668 = vmatpush1.bf16.msra.mxu0 %v3662
  %3669 = vmatprep.subr.bf16.mxu0 0
  %3670 = vmatpush1.bf16.msra.mxu0 0
  %3671 = vmatprep.subr.bf16.mxu0 0
  %3672 = vmatpush1.bf16.msra.mxu0 0
  %3673 = vmatprep.subr.bf16.mxu0 0
  %3674 = vmatpush1.bf16.msra.mxu0 0
  %3675 = vmatprep.subr.bf16.mxu0 0
  %3676 = vmatpush1.bf16.msra.mxu0 0
  %3677 = vmatprep.subr.bf16.mxu0 0
  %3678 = vmatpush1.bf16.msra.mxu0 0
  %3679 = vmatprep.subr.bf16.mxu0 0
  %3680 = vmatpush1.bf16.msra.mxu0 0
  %3681 = vmatprep.subr.bf16.mxu0 0
  %3682 = vmatpush1.bf16.msra.mxu0 0
  %3683 = vmatprep.subr.bf16.mxu0 0
  %3684 = vmatpush1.bf16.msra.mxu0 0
  %3685 = vmatprep.subr.bf16.mxu0 0
  %3686 = vmatpush1.bf16.msra.mxu0 0
  %3687 = vmatprep.subr.bf16.mxu0 0
  %3688 = vmatpush1.bf16.msra.mxu0 0
  %3689 = vmatprep.subr.bf16.mxu0 0
  %3690 = vmatpush1.bf16.msra.mxu0 0
  %3691 = vmatprep.subr.bf16.mxu0 0
  %3692 = vmatpush1.bf16.msra.mxu0 0
  %3693 = vmatprep.subr.bf16.mxu0 0
  %3694 = vmatpush1.bf16.msra.mxu0 0
  %3695 = vmatprep.subr.bf16.mxu0 0
  %3696 = vmatpush1.bf16.msra.mxu0 0
  %3697 = vmatprep.subr.bf16.mxu0 0
  %3698 = vmatpush1.bf16.msra.mxu0 0
  %3699 = vmatprep.mubr.bf16.mxu0 0
  %3700 = vmatmul.mubr.bf16.gmra.mrb[0].mxu0 %v3665
  %v3701 = vpop.f32.mrb[0].mxu0
  %v3702 = vadd.f32 %v3653, %v3701
  %v3703 = vpop.f32.mrb[0].mxu0
  %v3704 = vpop.f32.mrb[0].mxu0
  %v3705 = vpop.f32.mrb[0].mxu0
  %3706 = vdwg.mxu0
  %3707 = vrot.lane.b32.xlu0 %v3387, 96
  %v3708 = vpop.permute.xlu0 %3707
  %3709 = vrot.lane.b32.xlu0 %v3388, 96
  %v3710 = vpop.permute.xlu0 %3709
  %v3712 = vsel %vm552, %v3708, 0
  %v3715 = vsel %vm552, %v3710, 0
  %3717 = vmatprep.subr.bf16.mxu0 0
  %3718 = vmatpush1.bf16.xpose.msra.mxu0 %v3715
  %3719 = vmatprep.subr.bf16.mxu0 0
  %3720 = vmatpush1.bf16.xpose.msra.mxu0 0
  %3721 = vmatprep.subr.bf16.mxu0 0
  %3722 = vmatpush1.bf16.xpose.msra.mxu0 0
  %3723 = vmatprep.subr.bf16.mxu0 0
  %3724 = vmatpush1.bf16.xpose.msra.mxu0 0
  %3725 = vmatprep.subr.bf16.mxu0 0
  %3726 = vmatpush1.bf16.xpose.msra.mxu0 0
  %3727 = vmatprep.subr.bf16.mxu0 0
  %3728 = vmatpush1.bf16.xpose.msra.mxu0 0
  %3729 = vmatprep.subr.bf16.mxu0 0
  %3730 = vmatpush1.bf16.xpose.msra.mxu0 0
  %3731 = vmatprep.subr.bf16.mxu0 0
  %3732 = vmatpush1.bf16.xpose.msra.mxu0 0
  %3733 = vmatprep.subr.bf16.mxu0 0
  %3734 = vmatpush1.bf16.xpose.msra.mxu0 0
  %3735 = vmatprep.subr.bf16.mxu0 0
  %3736 = vmatpush1.bf16.xpose.msra.mxu0 0
  %3737 = vmatprep.subr.bf16.mxu0 0
  %3738 = vmatpush1.bf16.xpose.msra.mxu0 0
  %3739 = vmatprep.subr.bf16.mxu0 0
  %3740 = vmatpush1.bf16.xpose.msra.mxu0 0
  %3741 = vmatprep.subr.bf16.mxu0 0
  %3742 = vmatpush1.bf16.xpose.msra.mxu0 0
  %3743 = vmatprep.subr.bf16.mxu0 0
  %3744 = vmatpush1.bf16.xpose.msra.mxu0 0
  %3745 = vmatprep.subr.bf16.mxu0 0
  %3746 = vmatpush1.bf16.xpose.msra.mxu0 0
  %3747 = vmatprep.subr.bf16.mxu0 0
  %3748 = vmatpush1.bf16.xpose.msra.mxu0 0
  %3749 = vmatprep.mubr.bf16.mxu0 0
  %3750 = vmatmul.mubr.bf16.gmra.mrb[0].mxu0 %v3712
  %v3751 = vpop.f32.mrb[0].mxu0
  %v3752 = vadd.f32 %v1314, %v3751
  %v3753 = vpop.f32.mrb[0].mxu0
  %v3754 = vpop.f32.mrb[0].mxu0
  %v3755 = vpop.f32.mrb[0].mxu0
  %3756 = vdwg.mxu0
  %v3757 = vsel %vm1616, %v3752, -inf
  %3758 = vmax.xlane.f32.xlu0 %v3757
  %v3759 = vpop.xlane.xlu0 %3758
  %v3760 = vsub.f32 %v3752, %v3759
  %v3761 = vmul.f32 %v3760, 1.442695
  %v3762 = vpow.pop %v3761
  %v3763 = vsel %vm1616, %v3762, 0.0
  %3764 = vadd.xlane.f32.xlu0 %v3763
  %v3765 = vpop.xlane.xlu0 %3764
  %v3766 = vrcp.pop %v3765
  %v3767 = vmul.f32 %v3762, %v3766
  %v3768 = vpack.c.bf16 %v3767, %v3767
  %3769 = vrot.lane.b32.xlu0 %v3447, 96
  %v3770 = vpop.permute.xlu0 %3769
  %v3772 = vsel %vm1616, %v3768, 0
  %v3775 = vsel %vm1633, %v3770, 0
  %3777 = vmatprep.subr.bf16.mxu0 0
  %3778 = vmatpush1.bf16.msra.mxu0 %v3775
  %3779 = vmatprep.subr.bf16.mxu0 0
  %3780 = vmatpush1.bf16.msra.mxu0 0
  %3781 = vmatprep.subr.bf16.mxu0 0
  %3782 = vmatpush1.bf16.msra.mxu0 0
  %3783 = vmatprep.subr.bf16.mxu0 0
  %3784 = vmatpush1.bf16.msra.mxu0 0
  %3785 = vmatprep.subr.bf16.mxu0 0
  %3786 = vmatpush1.bf16.msra.mxu0 0
  %3787 = vmatprep.subr.bf16.mxu0 0
  %3788 = vmatpush1.bf16.msra.mxu0 0
  %3789 = vmatprep.subr.bf16.mxu0 0
  %3790 = vmatpush1.bf16.msra.mxu0 0
  %3791 = vmatprep.subr.bf16.mxu0 0
  %3792 = vmatpush1.bf16.msra.mxu0 0
  %3793 = vmatprep.subr.bf16.mxu0 0
  %3794 = vmatpush1.bf16.msra.mxu0 0
  %3795 = vmatprep.subr.bf16.mxu0 0
  %3796 = vmatpush1.bf16.msra.mxu0 0
  %3797 = vmatprep.subr.bf16.mxu0 0
  %3798 = vmatpush1.bf16.msra.mxu0 0
  %3799 = vmatprep.subr.bf16.mxu0 0
  %3800 = vmatpush1.bf16.msra.mxu0 0
  %3801 = vmatprep.subr.bf16.mxu0 0
  %3802 = vmatpush1.bf16.msra.mxu0 0
  %3803 = vmatprep.subr.bf16.mxu0 0
  %3804 = vmatpush1.bf16.msra.mxu0 0
  %3805 = vmatprep.subr.bf16.mxu0 0
  %3806 = vmatpush1.bf16.msra.mxu0 0
  %3807 = vmatprep.subr.bf16.mxu0 0
  %3808 = vmatpush1.bf16.msra.mxu0 0
  %3809 = vmatprep.mubr.bf16.mxu0 0
  %3810 = vmatmul.mubr.bf16.gmra.mrb[0].mxu0 %v3772
  %v3811 = vpop.f32.mrb[0].mxu0
  %v3812 = vadd.f32 0.0, %v3811
  %v3813 = vpop.f32.mrb[0].mxu0
  %v3814 = vpop.f32.mrb[0].mxu0
  %v3815 = vpop.f32.mrb[0].mxu0
  %3816 = vdwg.mxu0
  %v3817 = vpack.c.bf16 %v3812, %v3812
  %v3820 = vunpack.c.l.b16 %v3165
  %v3821 = vunpack.c.l.b16 %v3166
  %v3822 = vpack.c.b16 %v3821, %v3820
  %v3825 = vsel %vm552, %v3817, 0
  %3827 = vmatprep.subr.bf16.mxu0 0
  %3828 = vmatpush1.bf16.msra.mxu0 %v3822
  %3829 = vmatprep.subr.bf16.mxu0 0
  %3830 = vmatpush1.bf16.msra.mxu0 0
  %3831 = vmatprep.subr.bf16.mxu0 0
  %3832 = vmatpush1.bf16.msra.mxu0 0
  %3833 = vmatprep.subr.bf16.mxu0 0
  %3834 = vmatpush1.bf16.msra.mxu0 0
  %3835 = vmatprep.subr.bf16.mxu0 0
  %3836 = vmatpush1.bf16.msra.mxu0 0
  %3837 = vmatprep.subr.bf16.mxu0 0
  %3838 = vmatpush1.bf16.msra.mxu0 0
  %3839 = vmatprep.subr.bf16.mxu0 0
  %3840 = vmatpush1.bf16.msra.mxu0 0
  %3841 = vmatprep.subr.bf16.mxu0 0
  %3842 = vmatpush1.bf16.msra.mxu0 0
  %3843 = vmatprep.subr.bf16.mxu0 0
  %3844 = vmatpush1.bf16.msra.mxu0 0
  %3845 = vmatprep.subr.bf16.mxu0 0
  %3846 = vmatpush1.bf16.msra.mxu0 0
  %3847 = vmatprep.subr.bf16.mxu0 0
  %3848 = vmatpush1.bf16.msra.mxu0 0
  %3849 = vmatprep.subr.bf16.mxu0 0
  %3850 = vmatpush1.bf16.msra.mxu0 0
  %3851 = vmatprep.subr.bf16.mxu0 0
  %3852 = vmatpush1.bf16.msra.mxu0 0
  %3853 = vmatprep.subr.bf16.mxu0 0
  %3854 = vmatpush1.bf16.msra.mxu0 0
  %3855 = vmatprep.subr.bf16.mxu0 0
  %3856 = vmatpush1.bf16.msra.mxu0 0
  %3857 = vmatprep.subr.bf16.mxu0 0
  %3858 = vmatpush1.bf16.msra.mxu0 0
  %3859 = vmatprep.mubr.bf16.mxu0 0
  %3860 = vmatmul.mubr.bf16.gmra.mrb[0].mxu0 %v3825
  %v3861 = vpop.f32.mrb[0].mxu0
  %v3862 = vadd.f32 0.0, %v3861
  %v3863 = vpop.f32.mrb[0].mxu0
  %v3864 = vpop.f32.mrb[0].mxu0
  %v3865 = vpop.f32.mrb[0].mxu0
  %3866 = vdwg.mxu0
  %v3867 = vadd.f32 %v3702, %v3862
  %3868 = vrot.lane.b32.xlu0 %v3387, 80
  %v3869 = vpop.permute.xlu0 %3868
  %3870 = vrot.lane.b32.xlu0 %v3388, 80
  %v3871 = vpop.permute.xlu0 %3870
  %v3873 = vsel %vm552, %v3869, 0
  %v3876 = vsel %vm552, %v3871, 0
  %3878 = vmatprep.subr.bf16.mxu0 0
  %3879 = vmatpush1.bf16.xpose.msra.mxu0 %v3876
  %3880 = vmatprep.subr.bf16.mxu0 0
  %3881 = vmatpush1.bf16.xpose.msra.mxu0 0
  %3882 = vmatprep.subr.bf16.mxu0 0
  %3883 = vmatpush1.bf16.xpose.msra.mxu0 0
  %3884 = vmatprep.subr.bf16.mxu0 0
  %3885 = vmatpush1.bf16.xpose.msra.mxu0 0
  %3886 = vmatprep.subr.bf16.mxu0 0
  %3887 = vmatpush1.bf16.xpose.msra.mxu0 0
  %3888 = vmatprep.subr.bf16.mxu0 0
  %3889 = vmatpush1.bf16.xpose.msra.mxu0 0
  %3890 = vmatprep.subr.bf16.mxu0 0
  %3891 = vmatpush1.bf16.xpose.msra.mxu0 0
  %3892 = vmatprep.subr.bf16.mxu0 0
  %3893 = vmatpush1.bf16.xpose.msra.mxu0 0
  %3894 = vmatprep.subr.bf16.mxu0 0
  %3895 = vmatpush1.bf16.xpose.msra.mxu0 0
  %3896 = vmatprep.subr.bf16.mxu0 0
  %3897 = vmatpush1.bf16.xpose.msra.mxu0 0
  %3898 = vmatprep.subr.bf16.mxu0 0
  %3899 = vmatpush1.bf16.xpose.msra.mxu0 0
  %3900 = vmatprep.subr.bf16.mxu0 0
  %3901 = vmatpush1.bf16.xpose.msra.mxu0 0
  %3902 = vmatprep.subr.bf16.mxu0 0
  %3903 = vmatpush1.bf16.xpose.msra.mxu0 0
  %3904 = vmatprep.subr.bf16.mxu0 0
  %3905 = vmatpush1.bf16.xpose.msra.mxu0 0
  %3906 = vmatprep.subr.bf16.mxu0 0
  %3907 = vmatpush1.bf16.xpose.msra.mxu0 0
  %3908 = vmatprep.subr.bf16.mxu0 0
  %3909 = vmatpush1.bf16.xpose.msra.mxu0 0
  %3910 = vmatprep.mubr.bf16.mxu0 0
  %3911 = vmatmul.mubr.bf16.gmra.mrb[0].mxu0 %v3873
  %v3912 = vpop.f32.mrb[0].mxu0
  %v3913 = vadd.f32 %v1314, %v3912
  %v3914 = vpop.f32.mrb[0].mxu0
  %v3915 = vpop.f32.mrb[0].mxu0
  %v3916 = vpop.f32.mrb[0].mxu0
  %3917 = vdwg.mxu0
  %v3918 = vsel %vm1616, %v3913, -inf
  %3919 = vmax.xlane.f32.xlu0 %v3918
  %v3920 = vpop.xlane.xlu0 %3919
  %v3921 = vsub.f32 %v3913, %v3920
  %v3922 = vmul.f32 %v3921, 1.442695
  %v3923 = vpow.pop %v3922
  %v3924 = vsel %vm1616, %v3923, 0.0
  %3925 = vadd.xlane.f32.xlu0 %v3924
  %v3926 = vpop.xlane.xlu0 %3925
  %v3927 = vrcp.pop %v3926
  %v3928 = vmul.f32 %v3923, %v3927
  %v3929 = vpack.c.bf16 %v3928, %v3928
  %3930 = vrot.lane.b32.xlu0 %v3447, 80
  %v3931 = vpop.permute.xlu0 %3930
  %v3933 = vsel %vm1616, %v3929, 0
  %v3936 = vsel %vm1633, %v3931, 0
  %3938 = vmatprep.subr.bf16.mxu0 0
  %3939 = vmatpush1.bf16.msra.mxu0 %v3936
  %3940 = vmatprep.subr.bf16.mxu0 0
  %3941 = vmatpush1.bf16.msra.mxu0 0
  %3942 = vmatprep.subr.bf16.mxu0 0
  %3943 = vmatpush1.bf16.msra.mxu0 0
  %3944 = vmatprep.subr.bf16.mxu0 0
  %3945 = vmatpush1.bf16.msra.mxu0 0
  %3946 = vmatprep.subr.bf16.mxu0 0
  %3947 = vmatpush1.bf16.msra.mxu0 0
  %3948 = vmatprep.subr.bf16.mxu0 0
  %3949 = vmatpush1.bf16.msra.mxu0 0
  %3950 = vmatprep.subr.bf16.mxu0 0
  %3951 = vmatpush1.bf16.msra.mxu0 0
  %3952 = vmatprep.subr.bf16.mxu0 0
  %3953 = vmatpush1.bf16.msra.mxu0 0
  %3954 = vmatprep.subr.bf16.mxu0 0
  %3955 = vmatpush1.bf16.msra.mxu0 0
  %3956 = vmatprep.subr.bf16.mxu0 0
  %3957 = vmatpush1.bf16.msra.mxu0 0
  %3958 = vmatprep.subr.bf16.mxu0 0
  %3959 = vmatpush1.bf16.msra.mxu0 0
  %3960 = vmatprep.subr.bf16.mxu0 0
  %3961 = vmatpush1.bf16.msra.mxu0 0
  %3962 = vmatprep.subr.bf16.mxu0 0
  %3963 = vmatpush1.bf16.msra.mxu0 0
  %3964 = vmatprep.subr.bf16.mxu0 0
  %3965 = vmatpush1.bf16.msra.mxu0 0
  %3966 = vmatprep.subr.bf16.mxu0 0
  %3967 = vmatpush1.bf16.msra.mxu0 0
  %3968 = vmatprep.subr.bf16.mxu0 0
  %3969 = vmatpush1.bf16.msra.mxu0 0
  %3970 = vmatprep.mubr.bf16.mxu0 0
  %3971 = vmatmul.mubr.bf16.gmra.mrb[0].mxu0 %v3933
  %v3972 = vpop.f32.mrb[0].mxu0
  %v3973 = vadd.f32 0.0, %v3972
  %v3974 = vpop.f32.mrb[0].mxu0
  %v3975 = vpop.f32.mrb[0].mxu0
  %v3976 = vpop.f32.mrb[0].mxu0
  %3977 = vdwg.mxu0
  %v3978 = vpack.c.bf16 %v3973, %v3973
  %v3981 = vunpack.c.l.b16 %v3167
  %v3982 = vunpack.c.l.b16 %v3168
  %v3983 = vpack.c.b16 %v3982, %v3981
  %v3986 = vsel %vm552, %v3978, 0
  %3988 = vmatprep.subr.bf16.mxu0 0
  %3989 = vmatpush1.bf16.msra.mxu0 %v3983
  %3990 = vmatprep.subr.bf16.mxu0 0
  %3991 = vmatpush1.bf16.msra.mxu0 0
  %3992 = vmatprep.subr.bf16.mxu0 0
  %3993 = vmatpush1.bf16.msra.mxu0 0
  %3994 = vmatprep.subr.bf16.mxu0 0
  %3995 = vmatpush1.bf16.msra.mxu0 0
  %3996 = vmatprep.subr.bf16.mxu0 0
  %3997 = vmatpush1.bf16.msra.mxu0 0
  %3998 = vmatprep.subr.bf16.mxu0 0
  %3999 = vmatpush1.bf16.msra.mxu0 0
  %4000 = vmatprep.subr.bf16.mxu0 0
  %4001 = vmatpush1.bf16.msra.mxu0 0
  %4002 = vmatprep.subr.bf16.mxu0 0
  %4003 = vmatpush1.bf16.msra.mxu0 0
  %4004 = vmatprep.subr.bf16.mxu0 0
  %4005 = vmatpush1.bf16.msra.mxu0 0
  %4006 = vmatprep.subr.bf16.mxu0 0
  %4007 = vmatpush1.bf16.msra.mxu0 0
  %4008 = vmatprep.subr.bf16.mxu0 0
  %4009 = vmatpush1.bf16.msra.mxu0 0
  %4010 = vmatprep.subr.bf16.mxu0 0
  %4011 = vmatpush1.bf16.msra.mxu0 0
  %4012 = vmatprep.subr.bf16.mxu0 0
  %4013 = vmatpush1.bf16.msra.mxu0 0
  %4014 = vmatprep.subr.bf16.mxu0 0
  %4015 = vmatpush1.bf16.msra.mxu0 0
  %4016 = vmatprep.subr.bf16.mxu0 0
  %4017 = vmatpush1.bf16.msra.mxu0 0
  %4018 = vmatprep.subr.bf16.mxu0 0
  %4019 = vmatpush1.bf16.msra.mxu0 0
  %4020 = vmatprep.mubr.bf16.mxu0 0
  %4021 = vmatmul.mubr.bf16.gmra.mrb[0].mxu0 %v3986
  %v4022 = vpop.f32.mrb[0].mxu0
  %v4023 = vadd.f32 0.0, %v4022
  %v4024 = vpop.f32.mrb[0].mxu0
  %v4025 = vpop.f32.mrb[0].mxu0
  %v4026 = vpop.f32.mrb[0].mxu0
  %4027 = vdwg.mxu0
  %v4028 = vadd.f32 %v3867, %v4023
  %v4029 = vmul.f32 %v3241, 0.25
  %v4030 = vpack.c.bf16 %v4029, %v4029
  %v4031 = vpack.c.bf16 %v3312, %v3312
  %v4033 = vsel %vm552, %v4030, 0
  %v4036 = vsel %vm552, %v4031, 0
  %4038 = vmatprep.subr.bf16.mxu0 0
  %4039 = vmatpush1.bf16.xpose.msra.mxu0 %v4036
  %4040 = vmatprep.subr.bf16.mxu0 0
  %4041 = vmatpush1.bf16.xpose.msra.mxu0 0
  %4042 = vmatprep.subr.bf16.mxu0 0
  %4043 = vmatpush1.bf16.xpose.msra.mxu0 0
  %4044 = vmatprep.subr.bf16.mxu0 0
  %4045 = vmatpush1.bf16.xpose.msra.mxu0 0
  %4046 = vmatprep.subr.bf16.mxu0 0
  %4047 = vmatpush1.bf16.xpose.msra.mxu0 0
  %4048 = vmatprep.subr.bf16.mxu0 0
  %4049 = vmatpush1.bf16.xpose.msra.mxu0 0
  %4050 = vmatprep.subr.bf16.mxu0 0
  %4051 = vmatpush1.bf16.xpose.msra.mxu0 0
  %4052 = vmatprep.subr.bf16.mxu0 0
  %4053 = vmatpush1.bf16.xpose.msra.mxu0 0
  %4054 = vmatprep.subr.bf16.mxu0 0
  %4055 = vmatpush1.bf16.xpose.msra.mxu0 0
  %4056 = vmatprep.subr.bf16.mxu0 0
  %4057 = vmatpush1.bf16.xpose.msra.mxu0 0
  %4058 = vmatprep.subr.bf16.mxu0 0
  %4059 = vmatpush1.bf16.xpose.msra.mxu0 0
  %4060 = vmatprep.subr.bf16.mxu0 0
  %4061 = vmatpush1.bf16.xpose.msra.mxu0 0
  %4062 = vmatprep.subr.bf16.mxu0 0
  %4063 = vmatpush1.bf16.xpose.msra.mxu0 0
  %4064 = vmatprep.subr.bf16.mxu0 0
  %4065 = vmatpush1.bf16.xpose.msra.mxu0 0
  %4066 = vmatprep.subr.bf16.mxu0 0
  %4067 = vmatpush1.bf16.xpose.msra.mxu0 0
  %4068 = vmatprep.subr.bf16.mxu0 0
  %4069 = vmatpush1.bf16.xpose.msra.mxu0 0
  %4070 = vmatprep.mubr.bf16.mxu0 0
  %4071 = vmatmul.mubr.bf16.gmra.mrb[0].mxu0 %v4033
  %v4072 = vpop.f32.mrb[0].mxu0
  %v4073 = vadd.f32 %v1314, %v4072
  %v4074 = vpop.f32.mrb[0].mxu0
  %v4075 = vpop.f32.mrb[0].mxu0
  %v4076 = vpop.f32.mrb[0].mxu0
  %4077 = vdwg.mxu0
  %v4078 = vsel %vm1616, %v4073, -inf
  %4079 = vmax.xlane.f32.xlu0 %v4078
  %v4080 = vpop.xlane.xlu0 %4079
  %v4081 = vsub.f32 %v4073, %v4080
  %v4082 = vmul.f32 %v4081, 1.442695
  %v4083 = vpow.pop %v4082
  %v4084 = vsel %vm1616, %v4083, 0.0
  %4085 = vadd.xlane.f32.xlu0 %v4084
  %v4086 = vpop.xlane.xlu0 %4085
  %v4087 = vrcp.pop %v4086
  %v4088 = vmul.f32 %v4083, %v4087
  %v4089 = vpack.c.bf16 %v4088, %v4088
  %v4090 = vpack.c.bf16 %v3383, %v3383
  %v4092 = vsel %vm1616, %v4089, 0
  %v4095 = vsel %vm1633, %v4090, 0
  %4097 = vmatprep.subr.bf16.mxu0 0
  %4098 = vmatpush1.bf16.msra.mxu0 %v4095
  %4099 = vmatprep.subr.bf16.mxu0 0
  %4100 = vmatpush1.bf16.msra.mxu0 0
  %4101 = vmatprep.subr.bf16.mxu0 0
  %4102 = vmatpush1.bf16.msra.mxu0 0
  %4103 = vmatprep.subr.bf16.mxu0 0
  %4104 = vmatpush1.bf16.msra.mxu0 0
  %4105 = vmatprep.subr.bf16.mxu0 0
  %4106 = vmatpush1.bf16.msra.mxu0 0
  %4107 = vmatprep.subr.bf16.mxu0 0
  %4108 = vmatpush1.bf16.msra.mxu0 0
  %4109 = vmatprep.subr.bf16.mxu0 0
  %4110 = vmatpush1.bf16.msra.mxu0 0
  %4111 = vmatprep.subr.bf16.mxu0 0
  %4112 = vmatpush1.bf16.msra.mxu0 0
  %4113 = vmatprep.subr.bf16.mxu0 0
  %4114 = vmatpush1.bf16.msra.mxu0 0
  %4115 = vmatprep.subr.bf16.mxu0 0
  %4116 = vmatpush1.bf16.msra.mxu0 0
  %4117 = vmatprep.subr.bf16.mxu0 0
  %4118 = vmatpush1.bf16.msra.mxu0 0
  %4119 = vmatprep.subr.bf16.mxu0 0
  %4120 = vmatpush1.bf16.msra.mxu0 0
  %4121 = vmatprep.subr.bf16.mxu0 0
  %4122 = vmatpush1.bf16.msra.mxu0 0
  %4123 = vmatprep.subr.bf16.mxu0 0
  %4124 = vmatpush1.bf16.msra.mxu0 0
  %4125 = vmatprep.subr.bf16.mxu0 0
  %4126 = vmatpush1.bf16.msra.mxu0 0
  %4127 = vmatprep.subr.bf16.mxu0 0
  %4128 = vmatpush1.bf16.msra.mxu0 0
  %4129 = vmatprep.mubr.bf16.mxu0 0
  %4130 = vmatmul.mubr.bf16.gmra.mrb[0].mxu0 %v4092
  %v4131 = vpop.f32.mrb[0].mxu0
  %v4132 = vadd.f32 0.0, %v4131
  %v4133 = vpop.f32.mrb[0].mxu0
  %v4134 = vpop.f32.mrb[0].mxu0
  %v4135 = vpop.f32.mrb[0].mxu0
  %4136 = vdwg.mxu0
  %v4137 = vpack.c.bf16 %v4132, %v4132
  %4139 = vrot.lane.b32.xlu0 %v4030, 112
  %v4140 = vpop.permute.xlu0 %4139
  %4142 = vrot.lane.b32.xlu0 %v4031, 112
  %v4143 = vpop.permute.xlu0 %4142
  %v4145 = vsel %vm552, %v4140, 0
  %v4148 = vsel %vm552, %v4143, 0
  %4150 = vmatprep.subr.bf16.mxu0 0
  %4151 = vmatpush1.bf16.xpose.msra.mxu0 %v4148
  %4152 = vmatprep.subr.bf16.mxu0 0
  %4153 = vmatpush1.bf16.xpose.msra.mxu0 0
  %4154 = vmatprep.subr.bf16.mxu0 0
  %4155 = vmatpush1.bf16.xpose.msra.mxu0 0
  %4156 = vmatprep.subr.bf16.mxu0 0
  %4157 = vmatpush1.bf16.xpose.msra.mxu0 0
  %4158 = vmatprep.subr.bf16.mxu0 0
  %4159 = vmatpush1.bf16.xpose.msra.mxu0 0
  %4160 = vmatprep.subr.bf16.mxu0 0
  %4161 = vmatpush1.bf16.xpose.msra.mxu0 0
  %4162 = vmatprep.subr.bf16.mxu0 0
  %4163 = vmatpush1.bf16.xpose.msra.mxu0 0
  %4164 = vmatprep.subr.bf16.mxu0 0
  %4165 = vmatpush1.bf16.xpose.msra.mxu0 0
  %4166 = vmatprep.subr.bf16.mxu0 0
  %4167 = vmatpush1.bf16.xpose.msra.mxu0 0
  %4168 = vmatprep.subr.bf16.mxu0 0
  %4169 = vmatpush1.bf16.xpose.msra.mxu0 0
  %4170 = vmatprep.subr.bf16.mxu0 0
  %4171 = vmatpush1.bf16.xpose.msra.mxu0 0
  %4172 = vmatprep.subr.bf16.mxu0 0
  %4173 = vmatpush1.bf16.xpose.msra.mxu0 0
  %4174 = vmatprep.subr.bf16.mxu0 0
  %4175 = vmatpush1.bf16.xpose.msra.mxu0 0
  %4176 = vmatprep.subr.bf16.mxu0 0
  %4177 = vmatpush1.bf16.xpose.msra.mxu0 0
  %4178 = vmatprep.subr.bf16.mxu0 0
  %4179 = vmatpush1.bf16.xpose.msra.mxu0 0
  %4180 = vmatprep.subr.bf16.mxu0 0
  %4181 = vmatpush1.bf16.xpose.msra.mxu0 0
  %4182 = vmatprep.mubr.bf16.mxu0 0
  %4183 = vmatmul.mubr.bf16.gmra.mrb[0].mxu0 %v4145
  %v4184 = vpop.f32.mrb[0].mxu0
  %v4185 = vadd.f32 %v1314, %v4184
  %v4186 = vpop.f32.mrb[0].mxu0
  %v4187 = vpop.f32.mrb[0].mxu0
  %v4188 = vpop.f32.mrb[0].mxu0
  %4189 = vdwg.mxu0
  %v4190 = vsel %vm1616, %v4185, -inf
  %4191 = vmax.xlane.f32.xlu0 %v4190
  %v4192 = vpop.xlane.xlu0 %4191
  %v4193 = vsub.f32 %v4185, %v4192
  %v4194 = vmul.f32 %v4193, 1.442695
  %v4195 = vpow.pop %v4194
  %v4196 = vsel %vm1616, %v4195, 0.0
  %4197 = vadd.xlane.f32.xlu0 %v4196
  %v4198 = vpop.xlane.xlu0 %4197
  %v4199 = vrcp.pop %v4198
  %v4200 = vmul.f32 %v4195, %v4199
  %v4201 = vpack.c.bf16 %v4200, %v4200
  %4203 = vrot.lane.b32.xlu0 %v4090, 112
  %v4204 = vpop.permute.xlu0 %4203
  %v4206 = vsel %vm1616, %v4201, 0
  %v4209 = vsel %vm1633, %v4204, 0
  %4211 = vmatprep.subr.bf16.mxu0 0
  %4212 = vmatpush1.bf16.msra.mxu0 %v4209
  %4213 = vmatprep.subr.bf16.mxu0 0
  %4214 = vmatpush1.bf16.msra.mxu0 0
  %4215 = vmatprep.subr.bf16.mxu0 0
  %4216 = vmatpush1.bf16.msra.mxu0 0
  %4217 = vmatprep.subr.bf16.mxu0 0
  %4218 = vmatpush1.bf16.msra.mxu0 0
  %4219 = vmatprep.subr.bf16.mxu0 0
  %4220 = vmatpush1.bf16.msra.mxu0 0
  %4221 = vmatprep.subr.bf16.mxu0 0
  %4222 = vmatpush1.bf16.msra.mxu0 0
  %4223 = vmatprep.subr.bf16.mxu0 0
  %4224 = vmatpush1.bf16.msra.mxu0 0
  %4225 = vmatprep.subr.bf16.mxu0 0
  %4226 = vmatpush1.bf16.msra.mxu0 0
  %4227 = vmatprep.subr.bf16.mxu0 0
  %4228 = vmatpush1.bf16.msra.mxu0 0
  %4229 = vmatprep.subr.bf16.mxu0 0
  %4230 = vmatpush1.bf16.msra.mxu0 0
  %4231 = vmatprep.subr.bf16.mxu0 0
  %4232 = vmatpush1.bf16.msra.mxu0 0
  %4233 = vmatprep.subr.bf16.mxu0 0
  %4234 = vmatpush1.bf16.msra.mxu0 0
  %4235 = vmatprep.subr.bf16.mxu0 0
  %4236 = vmatpush1.bf16.msra.mxu0 0
  %4237 = vmatprep.subr.bf16.mxu0 0
  %4238 = vmatpush1.bf16.msra.mxu0 0
  %4239 = vmatprep.subr.bf16.mxu0 0
  %4240 = vmatpush1.bf16.msra.mxu0 0
  %4241 = vmatprep.subr.bf16.mxu0 0
  %4242 = vmatpush1.bf16.msra.mxu0 0
  %4243 = vmatprep.mubr.bf16.mxu0 0
  %4244 = vmatmul.mubr.bf16.gmra.mrb[0].mxu0 %v4206
  %v4245 = vpop.f32.mrb[0].mxu0
  %v4246 = vadd.f32 0.0, %v4245
  %v4247 = vpop.f32.mrb[0].mxu0
  %v4248 = vpop.f32.mrb[0].mxu0
  %v4249 = vpop.f32.mrb[0].mxu0
  %4250 = vdwg.mxu0
  %v4251 = vpack.c.bf16 %v4246, %v4246
  %v4253 = vsel %vm552, %v4251, 0
  %4255 = vmatprep.subr.bf16.mxu0 0
  %4256 = vmatpush1.bf16.msra.mxu0 %v3613
  %4257 = vmatprep.subr.bf16.mxu0 0
  %4258 = vmatpush1.bf16.msra.mxu0 0
  %4259 = vmatprep.subr.bf16.mxu0 0
  %4260 = vmatpush1.bf16.msra.mxu0 0
  %4261 = vmatprep.subr.bf16.mxu0 0
  %4262 = vmatpush1.bf16.msra.mxu0 0
  %4263 = vmatprep.subr.bf16.mxu0 0
  %4264 = vmatpush1.bf16.msra.mxu0 0
  %4265 = vmatprep.subr.bf16.mxu0 0
  %4266 = vmatpush1.bf16.msra.mxu0 0
  %4267 = vmatprep.subr.bf16.mxu0 0
  %4268 = vmatpush1.bf16.msra.mxu0 0
  %4269 = vmatprep.subr.bf16.mxu0 0
  %4270 = vmatpush1.bf16.msra.mxu0 0
  %4271 = vmatprep.subr.bf16.mxu0 0
  %4272 = vmatpush1.bf16.msra.mxu0 0
  %4273 = vmatprep.subr.bf16.mxu0 0
  %4274 = vmatpush1.bf16.msra.mxu0 0
  %4275 = vmatprep.subr.bf16.mxu0 0
  %4276 = vmatpush1.bf16.msra.mxu0 0
  %4277 = vmatprep.subr.bf16.mxu0 0
  %4278 = vmatpush1.bf16.msra.mxu0 0
  %4279 = vmatprep.subr.bf16.mxu0 0
  %4280 = vmatpush1.bf16.msra.mxu0 0
  %4281 = vmatprep.subr.bf16.mxu0 0
  %4282 = vmatpush1.bf16.msra.mxu0 0
  %4283 = vmatprep.subr.bf16.mxu0 0
  %4284 = vmatpush1.bf16.msra.mxu0 0
  %4285 = vmatprep.subr.bf16.mxu0 0
  %4286 = vmatpush1.bf16.msra.mxu0 0
  %4287 = vmatprep.mubr.bf16.mxu0 0
  %4288 = vmatmul.mubr.bf16.gmra.mrb[0].mxu0 %v4253
  %v4289 = vpop.f32.mrb[0].mxu0
  %v4290 = vadd.f32 0.0, %v4289
  %v4291 = vpop.f32.mrb[0].mxu0
  %v4292 = vpop.f32.mrb[0].mxu0
  %v4293 = vpop.f32.mrb[0].mxu0
  %4294 = vdwg.mxu0
  %v4296 = vsel %vm552, %v4137, 0
  %4298 = vmatprep.subr.bf16.mxu0 0
  %4299 = vmatpush1.bf16.msra.mxu0 %v3662
  %4300 = vmatprep.subr.bf16.mxu0 0
  %4301 = vmatpush1.bf16.msra.mxu0 0
  %4302 = vmatprep.subr.bf16.mxu0 0
  %4303 = vmatpush1.bf16.msra.mxu0 0
  %4304 = vmatprep.subr.bf16.mxu0 0
  %4305 = vmatpush1.bf16.msra.mxu0 0
  %4306 = vmatprep.subr.bf16.mxu0 0
  %4307 = vmatpush1.bf16.msra.mxu0 0
  %4308 = vmatprep.subr.bf16.mxu0 0
  %4309 = vmatpush1.bf16.msra.mxu0 0
  %4310 = vmatprep.subr.bf16.mxu0 0
  %4311 = vmatpush1.bf16.msra.mxu0 0
  %4312 = vmatprep.subr.bf16.mxu0 0
  %4313 = vmatpush1.bf16.msra.mxu0 0
  %4314 = vmatprep.subr.bf16.mxu0 0
  %4315 = vmatpush1.bf16.msra.mxu0 0
  %4316 = vmatprep.subr.bf16.mxu0 0
  %4317 = vmatpush1.bf16.msra.mxu0 0
  %4318 = vmatprep.subr.bf16.mxu0 0
  %4319 = vmatpush1.bf16.msra.mxu0 0
  %4320 = vmatprep.subr.bf16.mxu0 0
  %4321 = vmatpush1.bf16.msra.mxu0 0
  %4322 = vmatprep.subr.bf16.mxu0 0
  %4323 = vmatpush1.bf16.msra.mxu0 0
  %4324 = vmatprep.subr.bf16.mxu0 0
  %4325 = vmatpush1.bf16.msra.mxu0 0
  %4326 = vmatprep.subr.bf16.mxu0 0
  %4327 = vmatpush1.bf16.msra.mxu0 0
  %4328 = vmatprep.subr.bf16.mxu0 0
  %4329 = vmatpush1.bf16.msra.mxu0 0
  %4330 = vmatprep.mubr.bf16.mxu0 0
  %4331 = vmatmul.mubr.bf16.gmra.mrb[0].mxu0 %v4296
  %v4332 = vpop.f32.mrb[0].mxu0
  %v4333 = vadd.f32 %v4290, %v4332
  %v4334 = vpop.f32.mrb[0].mxu0
  %v4335 = vpop.f32.mrb[0].mxu0
  %v4336 = vpop.f32.mrb[0].mxu0
  %4337 = vdwg.mxu0
  %4338 = vrot.lane.b32.xlu0 %v4030, 96
  %v4339 = vpop.permute.xlu0 %4338
  %4340 = vrot.lane.b32.xlu0 %v4031, 96
  %v4341 = vpop.permute.xlu0 %4340
  %v4343 = vsel %vm552, %v4339, 0
  %v4346 = vsel %vm552, %v4341, 0
  %4348 = vmatprep.subr.bf16.mxu0 0
  %4349 = vmatpush1.bf16.xpose.msra.mxu0 %v4346
  %4350 = vmatprep.subr.bf16.mxu0 0
  %4351 = vmatpush1.bf16.xpose.msra.mxu0 0
  %4352 = vmatprep.subr.bf16.mxu0 0
  %4353 = vmatpush1.bf16.xpose.msra.mxu0 0
  %4354 = vmatprep.subr.bf16.mxu0 0
  %4355 = vmatpush1.bf16.xpose.msra.mxu0 0
  %4356 = vmatprep.subr.bf16.mxu0 0
  %4357 = vmatpush1.bf16.xpose.msra.mxu0 0
  %4358 = vmatprep.subr.bf16.mxu0 0
  %4359 = vmatpush1.bf16.xpose.msra.mxu0 0
  %4360 = vmatprep.subr.bf16.mxu0 0
  %4361 = vmatpush1.bf16.xpose.msra.mxu0 0
  %4362 = vmatprep.subr.bf16.mxu0 0
  %4363 = vmatpush1.bf16.xpose.msra.mxu0 0
  %4364 = vmatprep.subr.bf16.mxu0 0
  %4365 = vmatpush1.bf16.xpose.msra.mxu0 0
  %4366 = vmatprep.subr.bf16.mxu0 0
  %4367 = vmatpush1.bf16.xpose.msra.mxu0 0
  %4368 = vmatprep.subr.bf16.mxu0 0
  %4369 = vmatpush1.bf16.xpose.msra.mxu0 0
  %4370 = vmatprep.subr.bf16.mxu0 0
  %4371 = vmatpush1.bf16.xpose.msra.mxu0 0
  %4372 = vmatprep.subr.bf16.mxu0 0
  %4373 = vmatpush1.bf16.xpose.msra.mxu0 0
  %4374 = vmatprep.subr.bf16.mxu0 0
  %4375 = vmatpush1.bf16.xpose.msra.mxu0 0
  %4376 = vmatprep.subr.bf16.mxu0 0
  %4377 = vmatpush1.bf16.xpose.msra.mxu0 0
  %4378 = vmatprep.subr.bf16.mxu0 0
  %4379 = vmatpush1.bf16.xpose.msra.mxu0 0
  %4380 = vmatprep.mubr.bf16.mxu0 0
  %4381 = vmatmul.mubr.bf16.gmra.mrb[0].mxu0 %v4343
  %v4382 = vpop.f32.mrb[0].mxu0
  %v4383 = vadd.f32 %v1314, %v4382
  %v4384 = vpop.f32.mrb[0].mxu0
  %v4385 = vpop.f32.mrb[0].mxu0
  %v4386 = vpop.f32.mrb[0].mxu0
  %4387 = vdwg.mxu0
  %v4388 = vsel %vm1616, %v4383, -inf
  %4389 = vmax.xlane.f32.xlu0 %v4388
  %v4390 = vpop.xlane.xlu0 %4389
  %v4391 = vsub.f32 %v4383, %v4390
  %v4392 = vmul.f32 %v4391, 1.442695
  %v4393 = vpow.pop %v4392
  %v4394 = vsel %vm1616, %v4393, 0.0
  %4395 = vadd.xlane.f32.xlu0 %v4394
  %v4396 = vpop.xlane.xlu0 %4395
  %v4397 = vrcp.pop %v4396
  %v4398 = vmul.f32 %v4393, %v4397
  %v4399 = vpack.c.bf16 %v4398, %v4398
  %4400 = vrot.lane.b32.xlu0 %v4090, 96
  %v4401 = vpop.permute.xlu0 %4400
  %v4403 = vsel %vm1616, %v4399, 0
  %v4406 = vsel %vm1633, %v4401, 0
  %4408 = vmatprep.subr.bf16.mxu0 0
  %4409 = vmatpush1.bf16.msra.mxu0 %v4406
  %4410 = vmatprep.subr.bf16.mxu0 0
  %4411 = vmatpush1.bf16.msra.mxu0 0
  %4412 = vmatprep.subr.bf16.mxu0 0
  %4413 = vmatpush1.bf16.msra.mxu0 0
  %4414 = vmatprep.subr.bf16.mxu0 0
  %4415 = vmatpush1.bf16.msra.mxu0 0
  %4416 = vmatprep.subr.bf16.mxu0 0
  %4417 = vmatpush1.bf16.msra.mxu0 0
  %4418 = vmatprep.subr.bf16.mxu0 0
  %4419 = vmatpush1.bf16.msra.mxu0 0
  %4420 = vmatprep.subr.bf16.mxu0 0
  %4421 = vmatpush1.bf16.msra.mxu0 0
  %4422 = vmatprep.subr.bf16.mxu0 0
  %4423 = vmatpush1.bf16.msra.mxu0 0
  %4424 = vmatprep.subr.bf16.mxu0 0
  %4425 = vmatpush1.bf16.msra.mxu0 0
  %4426 = vmatprep.subr.bf16.mxu0 0
  %4427 = vmatpush1.bf16.msra.mxu0 0
  %4428 = vmatprep.subr.bf16.mxu0 0
  %4429 = vmatpush1.bf16.msra.mxu0 0
  %4430 = vmatprep.subr.bf16.mxu0 0
  %4431 = vmatpush1.bf16.msra.mxu0 0
  %4432 = vmatprep.subr.bf16.mxu0 0
  %4433 = vmatpush1.bf16.msra.mxu0 0
  %4434 = vmatprep.subr.bf16.mxu0 0
  %4435 = vmatpush1.bf16.msra.mxu0 0
  %4436 = vmatprep.subr.bf16.mxu0 0
  %4437 = vmatpush1.bf16.msra.mxu0 0
  %4438 = vmatprep.subr.bf16.mxu0 0
  %4439 = vmatpush1.bf16.msra.mxu0 0
  %4440 = vmatprep.mubr.bf16.mxu0 0
  %4441 = vmatmul.mubr.bf16.gmra.mrb[0].mxu0 %v4403
  %v4442 = vpop.f32.mrb[0].mxu0
  %v4443 = vadd.f32 0.0, %v4442
  %v4444 = vpop.f32.mrb[0].mxu0
  %v4445 = vpop.f32.mrb[0].mxu0
  %v4446 = vpop.f32.mrb[0].mxu0
  %4447 = vdwg.mxu0
  %v4448 = vpack.c.bf16 %v4443, %v4443
  %v4450 = vsel %vm552, %v4448, 0
  %4452 = vmatprep.subr.bf16.mxu0 0
  %4453 = vmatpush1.bf16.msra.mxu0 %v3822
  %4454 = vmatprep.subr.bf16.mxu0 0
  %4455 = vmatpush1.bf16.msra.mxu0 0
  %4456 = vmatprep.subr.bf16.mxu0 0
  %4457 = vmatpush1.bf16.msra.mxu0 0
  %4458 = vmatprep.subr.bf16.mxu0 0
  %4459 = vmatpush1.bf16.msra.mxu0 0
  %4460 = vmatprep.subr.bf16.mxu0 0
  %4461 = vmatpush1.bf16.msra.mxu0 0
  %4462 = vmatprep.subr.bf16.mxu0 0
  %4463 = vmatpush1.bf16.msra.mxu0 0
  %4464 = vmatprep.subr.bf16.mxu0 0
  %4465 = vmatpush1.bf16.msra.mxu0 0
  %4466 = vmatprep.subr.bf16.mxu0 0
  %4467 = vmatpush1.bf16.msra.mxu0 0
  %4468 = vmatprep.subr.bf16.mxu0 0
  %4469 = vmatpush1.bf16.msra.mxu0 0
  %4470 = vmatprep.subr.bf16.mxu0 0
  %4471 = vmatpush1.bf16.msra.mxu0 0
  %4472 = vmatprep.subr.bf16.mxu0 0
  %4473 = vmatpush1.bf16.msra.mxu0 0
  %4474 = vmatprep.subr.bf16.mxu0 0
  %4475 = vmatpush1.bf16.msra.mxu0 0
  %4476 = vmatprep.subr.bf16.mxu0 0
  %4477 = vmatpush1.bf16.msra.mxu0 0
  %4478 = vmatprep.subr.bf16.mxu0 0
  %4479 = vmatpush1.bf16.msra.mxu0 0
  %4480 = vmatprep.subr.bf16.mxu0 0
  %4481 = vmatpush1.bf16.msra.mxu0 0
  %4482 = vmatprep.subr.bf16.mxu0 0
  %4483 = vmatpush1.bf16.msra.mxu0 0
  %4484 = vmatprep.mubr.bf16.mxu0 0
  %4485 = vmatmul.mubr.bf16.gmra.mrb[0].mxu0 %v4450
  %v4486 = vpop.f32.mrb[0].mxu0
  %v4487 = vadd.f32 0.0, %v4486
  %v4488 = vpop.f32.mrb[0].mxu0
  %v4489 = vpop.f32.mrb[0].mxu0
  %v4490 = vpop.f32.mrb[0].mxu0
  %4491 = vdwg.mxu0
  %v4492 = vadd.f32 %v4333, %v4487
  %4493 = vrot.lane.b32.xlu0 %v4030, 80
  %v4494 = vpop.permute.xlu0 %4493
  %4495 = vrot.lane.b32.xlu0 %v4031, 80
  %v4496 = vpop.permute.xlu0 %4495
  %v4498 = vsel %vm552, %v4494, 0
  %v4501 = vsel %vm552, %v4496, 0
  %4503 = vmatprep.subr.bf16.mxu0 0
  %4504 = vmatpush1.bf16.xpose.msra.mxu0 %v4501
  %4505 = vmatprep.subr.bf16.mxu0 0
  %4506 = vmatpush1.bf16.xpose.msra.mxu0 0
  %4507 = vmatprep.subr.bf16.mxu0 0
  %4508 = vmatpush1.bf16.xpose.msra.mxu0 0
  %4509 = vmatprep.subr.bf16.mxu0 0
  %4510 = vmatpush1.bf16.xpose.msra.mxu0 0
  %4511 = vmatprep.subr.bf16.mxu0 0
  %4512 = vmatpush1.bf16.xpose.msra.mxu0 0
  %4513 = vmatprep.subr.bf16.mxu0 0
  %4514 = vmatpush1.bf16.xpose.msra.mxu0 0
  %4515 = vmatprep.subr.bf16.mxu0 0
  %4516 = vmatpush1.bf16.xpose.msra.mxu0 0
  %4517 = vmatprep.subr.bf16.mxu0 0
  %4518 = vmatpush1.bf16.xpose.msra.mxu0 0
  %4519 = vmatprep.subr.bf16.mxu0 0
  %4520 = vmatpush1.bf16.xpose.msra.mxu0 0
  %4521 = vmatprep.subr.bf16.mxu0 0
  %4522 = vmatpush1.bf16.xpose.msra.mxu0 0
  %4523 = vmatprep.subr.bf16.mxu0 0
  %4524 = vmatpush1.bf16.xpose.msra.mxu0 0
  %4525 = vmatprep.subr.bf16.mxu0 0
  %4526 = vmatpush1.bf16.xpose.msra.mxu0 0
  %4527 = vmatprep.subr.bf16.mxu0 0
  %4528 = vmatpush1.bf16.xpose.msra.mxu0 0
  %4529 = vmatprep.subr.bf16.mxu0 0
  %4530 = vmatpush1.bf16.xpose.msra.mxu0 0
  %4531 = vmatprep.subr.bf16.mxu0 0
  %4532 = vmatpush1.bf16.xpose.msra.mxu0 0
  %4533 = vmatprep.subr.bf16.mxu0 0
  %4534 = vmatpush1.bf16.xpose.msra.mxu0 0
  %4535 = vmatprep.mubr.bf16.mxu0 0
  %4536 = vmatmul.mubr.bf16.gmra.mrb[0].mxu0 %v4498
  %v4537 = vpop.f32.mrb[0].mxu0
  %v4538 = vadd.f32 %v1314, %v4537
  %v4539 = vpop.f32.mrb[0].mxu0
  %v4540 = vpop.f32.mrb[0].mxu0
  %v4541 = vpop.f32.mrb[0].mxu0
  %4542 = vdwg.mxu0
  %v4543 = vsel %vm1616, %v4538, -inf
  %4544 = vmax.xlane.f32.xlu0 %v4543
  %v4545 = vpop.xlane.xlu0 %4544
  %v4546 = vsub.f32 %v4538, %v4545
  %v4547 = vmul.f32 %v4546, 1.442695
  %v4548 = vpow.pop %v4547
  %v4549 = vsel %vm1616, %v4548, 0.0
  %4550 = vadd.xlane.f32.xlu0 %v4549
  %v4551 = vpop.xlane.xlu0 %4550
  %v4552 = vrcp.pop %v4551
  %v4553 = vmul.f32 %v4548, %v4552
  %v4554 = vpack.c.bf16 %v4553, %v4553
  %4555 = vrot.lane.b32.xlu0 %v4090, 80
  %v4556 = vpop.permute.xlu0 %4555
  %v4558 = vsel %vm1616, %v4554, 0
  %v4561 = vsel %vm1633, %v4556, 0
  %4563 = vmatprep.subr.bf16.mxu0 0
  %4564 = vmatpush1.bf16.msra.mxu0 %v4561
  %4565 = vmatprep.subr.bf16.mxu0 0
  %4566 = vmatpush1.bf16.msra.mxu0 0
  %4567 = vmatprep.subr.bf16.mxu0 0
  %4568 = vmatpush1.bf16.msra.mxu0 0
  %4569 = vmatprep.subr.bf16.mxu0 0
  %4570 = vmatpush1.bf16.msra.mxu0 0
  %4571 = vmatprep.subr.bf16.mxu0 0
  %4572 = vmatpush1.bf16.msra.mxu0 0
  %4573 = vmatprep.subr.bf16.mxu0 0
  %4574 = vmatpush1.bf16.msra.mxu0 0
  %4575 = vmatprep.subr.bf16.mxu0 0
  %4576 = vmatpush1.bf16.msra.mxu0 0
  %4577 = vmatprep.subr.bf16.mxu0 0
  %4578 = vmatpush1.bf16.msra.mxu0 0
  %4579 = vmatprep.subr.bf16.mxu0 0
  %4580 = vmatpush1.bf16.msra.mxu0 0
  %4581 = vmatprep.subr.bf16.mxu0 0
  %4582 = vmatpush1.bf16.msra.mxu0 0
  %4583 = vmatprep.subr.bf16.mxu0 0
  %4584 = vmatpush1.bf16.msra.mxu0 0
  %4585 = vmatprep.subr.bf16.mxu0 0
  %4586 = vmatpush1.bf16.msra.mxu0 0
  %4587 = vmatprep.subr.bf16.mxu0 0
  %4588 = vmatpush1.bf16.msra.mxu0 0
  %4589 = vmatprep.subr.bf16.mxu0 0
  %4590 = vmatpush1.bf16.msra.mxu0 0
  %4591 = vmatprep.subr.bf16.mxu0 0
  %4592 = vmatpush1.bf16.msra.mxu0 0
  %4593 = vmatprep.subr.bf16.mxu0 0
  %4594 = vmatpush1.bf16.msra.mxu0 0
  %4595 = vmatprep.mubr.bf16.mxu0 0
  %4596 = vmatmul.mubr.bf16.gmra.mrb[0].mxu0 %v4558
  %v4597 = vpop.f32.mrb[0].mxu0
  %v4598 = vadd.f32 0.0, %v4597
  %v4599 = vpop.f32.mrb[0].mxu0
  %v4600 = vpop.f32.mrb[0].mxu0
  %v4601 = vpop.f32.mrb[0].mxu0
  %4602 = vdwg.mxu0
  %v4603 = vpack.c.bf16 %v4598, %v4598
  %v4605 = vsel %vm552, %v4603, 0
  %4607 = vmatprep.subr.bf16.mxu0 0
  %4608 = vmatpush1.bf16.msra.mxu0 %v3983
  %4609 = vmatprep.subr.bf16.mxu0 0
  %4610 = vmatpush1.bf16.msra.mxu0 0
  %4611 = vmatprep.subr.bf16.mxu0 0
  %4612 = vmatpush1.bf16.msra.mxu0 0
  %4613 = vmatprep.subr.bf16.mxu0 0
  %4614 = vmatpush1.bf16.msra.mxu0 0
  %4615 = vmatprep.subr.bf16.mxu0 0
  %4616 = vmatpush1.bf16.msra.mxu0 0
  %4617 = vmatprep.subr.bf16.mxu0 0
  %4618 = vmatpush1.bf16.msra.mxu0 0
  %4619 = vmatprep.subr.bf16.mxu0 0
  %4620 = vmatpush1.bf16.msra.mxu0 0
  %4621 = vmatprep.subr.bf16.mxu0 0
  %4622 = vmatpush1.bf16.msra.mxu0 0
  %4623 = vmatprep.subr.bf16.mxu0 0
  %4624 = vmatpush1.bf16.msra.mxu0 0
  %4625 = vmatprep.subr.bf16.mxu0 0
  %4626 = vmatpush1.bf16.msra.mxu0 0
  %4627 = vmatprep.subr.bf16.mxu0 0
  %4628 = vmatpush1.bf16.msra.mxu0 0
  %4629 = vmatprep.subr.bf16.mxu0 0
  %4630 = vmatpush1.bf16.msra.mxu0 0
  %4631 = vmatprep.subr.bf16.mxu0 0
  %4632 = vmatpush1.bf16.msra.mxu0 0
  %4633 = vmatprep.subr.bf16.mxu0 0
  %4634 = vmatpush1.bf16.msra.mxu0 0
  %4635 = vmatprep.subr.bf16.mxu0 0
  %4636 = vmatpush1.bf16.msra.mxu0 0
  %4637 = vmatprep.subr.bf16.mxu0 0
  %4638 = vmatpush1.bf16.msra.mxu0 0
  %4639 = vmatprep.mubr.bf16.mxu0 0
  %4640 = vmatmul.mubr.bf16.gmra.mrb[0].mxu0 %v4605
  %v4641 = vpop.f32.mrb[0].mxu0
  %v4642 = vadd.f32 0.0, %v4641
  %v4643 = vpop.f32.mrb[0].mxu0
  %v4644 = vpop.f32.mrb[0].mxu0
  %v4645 = vpop.f32.mrb[0].mxu0
  %4646 = vdwg.mxu0
  %v4647 = vadd.f32 %v4492, %v4642
  %s4648 = scalar_lea.vmem %s13, 1
  %v4649 = vld [vmem:[%s4648] sm:$0x1]
  %v4651 = vlaneseq
  %v4652 = vshrl.u32 %v4651, 7
  %v4653 = vsub.s32 0, %v4652
  %v4654 = vrot.slane %v4649, %v4653
  %v4656 = vadd.f32 %v4028, %v4654
  %v4657 = vadd.f32 %v4647, %v4654
  %v4658 = vadd.f32 %v4656, %v3129
  %v4659 = vadd.f32 %v4657, %v3130
  %s4660 = scalar_lea.vmem %s14, 1
  %v4661 = vld [vmem:[%s4660] sm:$0x1]
  %s4662 = scalar_lea.vmem %s15, 1
  %v4663 = vld [vmem:[%s4662] sm:$0x1]
  %v4664 = vsel %vm351, %v4658, 0.0
  %4665 = vadd.xlane.f32.xlu0 %v4664
  %v4666 = vpop.xlane.xlu0 %4665
  %v4667 = vsel %vm351, %v4659, 0.0
  %4668 = vadd.xlane.f32.xlu0 %v4667
  %v4669 = vpop.xlane.xlu0 %4668
  %v4670 = vmul.f32 %v4666, %v1272
  %v4671 = vmul.f32 %v4669, %v1272
  %v4672 = vsub.f32 %v4658, %v4670
  %v4673 = vsub.f32 %v4659, %v4671
  %v4674 = vmul.f32 %v4672, %v4672
  %v4675 = vmul.f32 %v4673, %v4673
  %v4676 = vsel %vm351, %v4674, 0.0
  %4677 = vadd.xlane.f32.xlu0 %v4676
  %v4678 = vpop.xlane.xlu0 %4677
  %v4679 = vsel %vm351, %v4675, 0.0
  %4680 = vadd.xlane.f32.xlu0 %v4679
  %v4681 = vpop.xlane.xlu0 %4680
  %v4682 = vmul.f32 %v4678, %v1272
  %v4683 = vmul.f32 %v4681, %v1272
  %v4684 = vadd.f32 %v4682, 1e-05
  %v4685 = vadd.f32 %v4683, 1e-05
  %v4686 = vrsqrt.pop %v4684
  %v4687 = vrsqrt.pop %v4685
  %v4688 = vmul.f32 %v4672, %v4686
  %v4689 = vmul.f32 %v4673, %v4687
  %v4691 = vlaneseq
  %v4692 = vshrl.u32 %v4691, 7
  %v4693 = vsub.s32 0, %v4692
  %v4694 = vrot.slane %v4661, %v4693
  %v4696 = vmul.f32 %v4688, %v4694
  %v4697 = vmul.f32 %v4689, %v4694
  %v4699 = vlaneseq
  %v4700 = vshrl.u32 %v4699, 7
  %v4701 = vsub.s32 0, %v4700
  %v4702 = vrot.slane %v4663, %v4701
  %v4704 = vadd.f32 %v4696, %v4702
  %v4705 = vadd.f32 %v4697, %v4702
  %s4706 = scalar_lea.vmem %s16, 32
  %v4707 = vld [vmem:[%s4706] sm:$0xf]
  %v4708 = vld [vmem:[%s4706 + $0x4] sm:$0xf]
  %v4709 = vld [vmem:[%s4706 + $0x8] sm:$0xf]
  %v4710 = vld [vmem:[%s4706 + $0xc] sm:$0xf]
  %v4711 = vld [vmem:[%s4706 + $0x10] sm:$0xf]
  %v4712 = vld [vmem:[%s4706 + $0x14] sm:$0xf]
  %v4713 = vld [vmem:[%s4706 + $0x18] sm:$0xf]
  %v4714 = vld [vmem:[%s4706 + $0x1c] sm:$0xf]
  %v4715 = vpack.c.bf16 %v4705, %v4704
  %s4716 = scalar_lea.vmem %s17, 1
  %v4717 = vld [vmem:[%s4716] sm:$0x1]
  %v4719 = vlaneseq
  %v4720 = vshrl.u32 %v4719, 7
  %v4721 = vsub.s32 0, %v4720
  %v4722 = vrot.slane %v4717, %v4721
  %v4732 = vunpack.c.l.b16 %v4707
  %v4733 = vunpack.c.l.b16 %v4708
  %v4734 = vunpack.c.l.b16 %v4709
  %v4735 = vunpack.c.l.b16 %v4710
  %v4736 = vunpack.c.l.b16 %v4711
  %v4737 = vunpack.c.l.b16 %v4712
  %v4738 = vunpack.c.l.b16 %v4713
  %v4739 = vunpack.c.l.b16 %v4714
  %v4740 = vpack.c.b16 %v4733, %v4732
  %v4741 = vpack.c.b16 %v4735, %v4734
  %v4742 = vpack.c.b16 %v4737, %v4736
  %v4743 = vpack.c.b16 %v4739, %v4738
  %v4749 = vsel %vm351, %v4715, 0
  %4751 = vmatprep.subr.bf16.mxu0 0
  %4752 = vmatpush1.bf16.msra.mxu0 %v4740
  %4753 = vmatprep.subr.bf16.mxu0 0
  %4754 = vmatpush1.bf16.msra.mxu0 %v4741
  %4755 = vmatprep.subr.bf16.mxu0 0
  %4756 = vmatpush1.bf16.msra.mxu0 %v4742
  %4757 = vmatprep.subr.bf16.mxu0 0
  %4758 = vmatpush1.bf16.msra.mxu0 %v4743
  %4759 = vmatprep.subr.bf16.mxu0 0
  %4760 = vmatpush1.bf16.msra.mxu0 0
  %4761 = vmatprep.subr.bf16.mxu0 0
  %4762 = vmatpush1.bf16.msra.mxu0 0
  %4763 = vmatprep.subr.bf16.mxu0 0
  %4764 = vmatpush1.bf16.msra.mxu0 0
  %4765 = vmatprep.subr.bf16.mxu0 0
  %4766 = vmatpush1.bf16.msra.mxu0 0
  %4767 = vmatprep.subr.bf16.mxu0 0
  %4768 = vmatpush1.bf16.msra.mxu0 0
  %4769 = vmatprep.subr.bf16.mxu0 0
  %4770 = vmatpush1.bf16.msra.mxu0 0
  %4771 = vmatprep.subr.bf16.mxu0 0
  %4772 = vmatpush1.bf16.msra.mxu0 0
  %4773 = vmatprep.subr.bf16.mxu0 0
  %4774 = vmatpush1.bf16.msra.mxu0 0
  %4775 = vmatprep.subr.bf16.mxu0 0
  %4776 = vmatpush1.bf16.msra.mxu0 0
  %4777 = vmatprep.subr.bf16.mxu0 0
  %4778 = vmatpush1.bf16.msra.mxu0 0
  %4779 = vmatprep.subr.bf16.mxu0 0
  %4780 = vmatpush1.bf16.msra.mxu0 0
  %4781 = vmatprep.subr.bf16.mxu0 0
  %4782 = vmatpush1.bf16.msra.mxu0 0
  %4783 = vmatprep.mubr.bf16.mxu0 0
  %4784 = vmatmul.mubr.bf16.gmra.mrb[0].mxu0 %v4749
  %v4785 = vpop.f32.mrb[0].mxu0
  %v4786 = vadd.f32 %v4722, %v4785
  %v4787 = vpop.f32.mrb[0].mxu0
  %v4788 = vpop.f32.mrb[0].mxu0
  %v4789 = vadd.f32 %v4722, %v4788
  %v4790 = vpop.f32.mrb[0].mxu0
  %4791 = vdwg.mxu0
  %v4792 = vmax.f32 %v4786, 0.0
  %v4793 = vmax.f32 %v4789, 0.0
  %s4794 = scalar_lea.vmem %s18, 64
  %v4795 = vld [vmem:[%s4794] sm:$0xf]
  %v4796 = vld [vmem:[%s4794 + $0x4] sm:$0xf]
  %v4797 = vld [vmem:[%s4794 + $0x8] sm:$0xf]
  %v4798 = vld [vmem:[%s4794 + $0xc] sm:$0xf]
  %v4799 = vld [vmem:[%s4794 + $0x10] sm:$0xf]
  %v4800 = vld [vmem:[%s4794 + $0x14] sm:$0xf]
  %v4801 = vld [vmem:[%s4794 + $0x18] sm:$0xf]
  %v4802 = vld [vmem:[%s4794 + $0x1c] sm:$0xf]
  %v4803 = vld [vmem:[%s4794 + $0x20] sm:$0xf]
  %v4804 = vld [vmem:[%s4794 + $0x24] sm:$0xf]
  %v4805 = vld [vmem:[%s4794 + $0x28] sm:$0xf]
  %v4806 = vld [vmem:[%s4794 + $0x2c] sm:$0xf]
  %v4807 = vld [vmem:[%s4794 + $0x30] sm:$0xf]
  %v4808 = vld [vmem:[%s4794 + $0x34] sm:$0xf]
  %v4809 = vld [vmem:[%s4794 + $0x38] sm:$0xf]
  %v4810 = vld [vmem:[%s4794 + $0x3c] sm:$0xf]
  %v4811 = vpack.c.bf16 %v4793, %v4792
  %s4812 = scalar_lea.vmem %s19, 1
  %v4813 = vld [vmem:[%s4812] sm:$0x1]
  %v4815 = vlaneseq
  %v4816 = vshrl.u32 %v4815, 7
  %v4817 = vsub.s32 0, %v4816
  %v4818 = vrot.slane %v4813, %v4817
  %v4836 = vunpack.c.l.b16 %v4795
  %v4837 = vunpack.c.l.b16 %v4796
  %v4838 = vunpack.c.l.b16 %v4797
  %v4839 = vunpack.c.l.b16 %v4798
  %v4840 = vunpack.c.l.b16 %v4799
  %v4841 = vunpack.c.l.b16 %v4800
  %v4842 = vunpack.c.l.b16 %v4801
  %v4843 = vunpack.c.l.b16 %v4802
  %v4844 = vunpack.c.l.b16 %v4803
  %v4845 = vunpack.c.l.b16 %v4804
  %v4846 = vunpack.c.l.b16 %v4805
  %v4847 = vunpack.c.l.b16 %v4806
  %v4848 = vunpack.c.l.b16 %v4807
  %v4849 = vunpack.c.l.b16 %v4808
  %v4850 = vunpack.c.l.b16 %v4809
  %v4851 = vunpack.c.l.b16 %v4810
  %v4852 = vpack.c.b16 %v4837, %v4836
  %v4853 = vpack.c.b16 %v4839, %v4838
  %v4854 = vpack.c.b16 %v4841, %v4840
  %v4855 = vpack.c.b16 %v4843, %v4842
  %v4856 = vpack.c.b16 %v4845, %v4844
  %v4857 = vpack.c.b16 %v4847, %v4846
  %v4858 = vpack.c.b16 %v4849, %v4848
  %v4859 = vpack.c.b16 %v4851, %v4850
  %4868 = vmatprep.subr.bf16.mxu0 0
  %4869 = vmatpush1.bf16.msra.mxu0 %v4852
  %4870 = vmatprep.subr.bf16.mxu0 0
  %4871 = vmatpush1.bf16.msra.mxu0 %v4853
  %4872 = vmatprep.subr.bf16.mxu0 0
  %4873 = vmatpush1.bf16.msra.mxu0 %v4854
  %4874 = vmatprep.subr.bf16.mxu0 0
  %4875 = vmatpush1.bf16.msra.mxu0 %v4855
  %4876 = vmatprep.subr.bf16.mxu0 0
  %4877 = vmatpush1.bf16.msra.mxu0 %v4856
  %4878 = vmatprep.subr.bf16.mxu0 0
  %4879 = vmatpush1.bf16.msra.mxu0 %v4857
  %4880 = vmatprep.subr.bf16.mxu0 0
  %4881 = vmatpush1.bf16.msra.mxu0 %v4858
  %4882 = vmatprep.subr.bf16.mxu0 0
  %4883 = vmatpush1.bf16.msra.mxu0 %v4859
  %4884 = vmatprep.subr.bf16.mxu0 0
  %4885 = vmatpush1.bf16.msra.mxu0 0
  %4886 = vmatprep.subr.bf16.mxu0 0
  %4887 = vmatpush1.bf16.msra.mxu0 0
  %4888 = vmatprep.subr.bf16.mxu0 0
  %4889 = vmatpush1.bf16.msra.mxu0 0
  %4890 = vmatprep.subr.bf16.mxu0 0
  %4891 = vmatpush1.bf16.msra.mxu0 0
  %4892 = vmatprep.subr.bf16.mxu0 0
  %4893 = vmatpush1.bf16.msra.mxu0 0
  %4894 = vmatprep.subr.bf16.mxu0 0
  %4895 = vmatpush1.bf16.msra.mxu0 0
  %4896 = vmatprep.subr.bf16.mxu0 0
  %4897 = vmatpush1.bf16.msra.mxu0 0
  %4898 = vmatprep.subr.bf16.mxu0 0
  %4899 = vmatpush1.bf16.msra.mxu0 0
  %4900 = vmatprep.mubr.bf16.mxu0 0
  %4901 = vmatmul.mubr.bf16.gmra.mrb[0].mxu0 %v4811
  %v4902 = vpop.f32.mrb[0].mxu0
  %v4903 = vadd.f32 %v4818, %v4902
  %v4904 = vpop.f32.mrb[0].mxu0
  %v4905 = vpop.f32.mrb[0].mxu0
  %v4906 = vadd.f32 %v4818, %v4905
  %v4907 = vpop.f32.mrb[0].mxu0
  %4908 = vdwg.mxu0
  %v4909 = vadd.f32 %v4903, %v4704
  %v4910 = vadd.f32 %v4906, %v4705
  %s4911 = scalar_lea.vmem %s20, 1
  %v4912 = vld [vmem:[%s4911] sm:$0x1]
  %s4913 = scalar_lea.vmem %s21, 1
  %v4914 = vld [vmem:[%s4913] sm:$0x1]
  %v4915 = vsel %vm351, %v4909, 0.0
  %4916 = vadd.xlane.f32.xlu0 %v4915
  %v4917 = vpop.xlane.xlu0 %4916
  %v4918 = vsel %vm351, %v4910, 0.0
  %4919 = vadd.xlane.f32.xlu0 %v4918
  %v4920 = vpop.xlane.xlu0 %4919
  %v4921 = vmul.f32 %v4917, %v1272
  %v4922 = vmul.f32 %v4920, %v1272
  %v4923 = vsub.f32 %v4909, %v4921
  %v4924 = vsub.f32 %v4910, %v4922
  %v4925 = vmul.f32 %v4923, %v4923
  %v4926 = vmul.f32 %v4924, %v4924
  %v4927 = vsel %vm351, %v4925, 0.0
  %4928 = vadd.xlane.f32.xlu0 %v4927
  %v4929 = vpop.xlane.xlu0 %4928
  %v4930 = vsel %vm351, %v4926, 0.0
  %4931 = vadd.xlane.f32.xlu0 %v4930
  %v4932 = vpop.xlane.xlu0 %4931
  %v4933 = vmul.f32 %v4929, %v1272
  %v4934 = vmul.f32 %v4932, %v1272
  %v4935 = vadd.f32 %v4933, 1e-05
  %v4936 = vadd.f32 %v4934, 1e-05
  %v4937 = vrsqrt.pop %v4935
  %v4938 = vrsqrt.pop %v4936
  %v4939 = vmul.f32 %v4923, %v4937
  %v4940 = vmul.f32 %v4924, %v4938
  %v4942 = vlaneseq
  %v4943 = vshrl.u32 %v4942, 7
  %v4944 = vsub.s32 0, %v4943
  %v4945 = vrot.slane %v4912, %v4944
  %v4947 = vmul.f32 %v4939, %v4945
  %v4948 = vmul.f32 %v4940, %v4945
  %v4950 = vlaneseq
  %v4951 = vshrl.u32 %v4950, 7
  %v4952 = vsub.s32 0, %v4951
  %v4953 = vrot.slane %v4914, %v4952
  %v4955 = vadd.f32 %v4947, %v4953
  %v4956 = vadd.f32 %v4948, %v4953
  %v4957 = vld [vmem:[%s22] sm:$0x1]
  %v4958 = vld [vmem:[%s23] sm:$0x1]
  %v4959 = vsel %vm351, %v4955, 0.0
  %4960 = vadd.xlane.f32.xlu0 %v4959
  %v4961 = vpop.xlane.xlu0 %4960
  %v4962 = vsel %vm351, %v4956, 0.0
  %4963 = vadd.xlane.f32.xlu0 %v4962
  %v4964 = vpop.xlane.xlu0 %4963
  %v4965 = vmul.f32 %v4961, %v1272
  %v4966 = vmul.f32 %v4964, %v1272
  %v4967 = vsub.f32 %v4955, %v4965
  %v4968 = vsub.f32 %v4956, %v4966
  %v4969 = vmul.f32 %v4967, %v4967
  %v4970 = vmul.f32 %v4968, %v4968
  %v4971 = vsel %vm351, %v4969, 0.0
  %4972 = vadd.xlane.f32.xlu0 %v4971
  %v4973 = vpop.xlane.xlu0 %4972
  %v4974 = vsel %vm351, %v4970, 0.0
  %4975 = vadd.xlane.f32.xlu0 %v4974
  %v4976 = vpop.xlane.xlu0 %4975
  %v4977 = vmul.f32 %v4973, %v1272
  %v4978 = vmul.f32 %v4976, %v1272
  %v4979 = vadd.f32 %v4977, 1e-05
  %v4980 = vadd.f32 %v4978, 1e-05
  %v4981 = vrsqrt.pop %v4979
  %v4982 = vrsqrt.pop %v4980
  %v4983 = vmul.f32 %v4967, %v4981
  %v4984 = vmul.f32 %v4968, %v4982
  %v4986 = vlaneseq
  %v4987 = vshrl.u32 %v4986, 7
  %v4988 = vsub.s32 0, %v4987
  %v4989 = vrot.slane %v4957, %v4988
  %v4991 = vmul.f32 %v4983, %v4989
  %v4992 = vmul.f32 %v4984, %v4989
  %v4994 = vlaneseq
  %v4995 = vshrl.u32 %v4994, 7
  %v4996 = vsub.s32 0, %v4995
  %v4997 = vrot.slane %v4958, %v4996
  %v4999 = vadd.f32 %v4991, %v4997
  %v5000 = vadd.f32 %v4992, %v4997
  %v5001 = vld [vmem:[%s24] sm:$0xf]
  %v5002 = vld [vmem:[%s24 + $0x4] sm:$0xf]
  %v5003 = vld [vmem:[%s24 + $0x8] sm:$0xf]
  %v5004 = vld [vmem:[%s24 + $0xc] sm:$0xf]
  %v5005 = vld [vmem:[%s24 + $0x10] sm:$0xf]
  %v5006 = vld [vmem:[%s24 + $0x14] sm:$0xf]
  %v5007 = vld [vmem:[%s24 + $0x18] sm:$0xf]
  %v5008 = vld [vmem:[%s24 + $0x1c] sm:$0xf]
  %v5009 = vpack.c.bf16 %v5000, %v4999
  %v5010 = vld [vmem:[%s25] sm:$0x1]
  %v5012 = vlaneseq
  %v5013 = vshrl.u32 %v5012, 7
  %v5014 = vsub.s32 0, %v5013
  %v5015 = vrot.slane %v5010, %v5014
  %v5025 = vunpack.c.l.b16 %v5001
  %v5026 = vunpack.c.l.b16 %v5002
  %v5027 = vunpack.c.l.b16 %v5003
  %v5028 = vunpack.c.l.b16 %v5004
  %v5029 = vunpack.c.l.b16 %v5005
  %v5030 = vunpack.c.l.b16 %v5006
  %v5031 = vunpack.c.l.b16 %v5007
  %v5032 = vunpack.c.l.b16 %v5008
  %v5033 = vpack.c.b16 %v5026, %v5025
  %v5034 = vpack.c.b16 %v5028, %v5027
  %v5035 = vpack.c.b16 %v5030, %v5029
  %v5036 = vpack.c.b16 %v5032, %v5031
  %v5042 = vsel %vm351, %v5009, 0
  %5044 = vmatprep.subr.bf16.mxu0 0
  %5045 = vmatpush1.bf16.msra.mxu0 %v5033
  %5046 = vmatprep.subr.bf16.mxu0 0
  %5047 = vmatpush1.bf16.msra.mxu0 %v5034
  %5048 = vmatprep.subr.bf16.mxu0 0
  %5049 = vmatpush1.bf16.msra.mxu0 %v5035
  %5050 = vmatprep.subr.bf16.mxu0 0
  %5051 = vmatpush1.bf16.msra.mxu0 %v5036
  %5052 = vmatprep.subr.bf16.mxu0 0
  %5053 = vmatpush1.bf16.msra.mxu0 0
  %5054 = vmatprep.subr.bf16.mxu0 0
  %5055 = vmatpush1.bf16.msra.mxu0 0
  %5056 = vmatprep.subr.bf16.mxu0 0
  %5057 = vmatpush1.bf16.msra.mxu0 0
  %5058 = vmatprep.subr.bf16.mxu0 0
  %5059 = vmatpush1.bf16.msra.mxu0 0
  %5060 = vmatprep.subr.bf16.mxu0 0
  %5061 = vmatpush1.bf16.msra.mxu0 0
  %5062 = vmatprep.subr.bf16.mxu0 0
  %5063 = vmatpush1.bf16.msra.mxu0 0
  %5064 = vmatprep.subr.bf16.mxu0 0
  %5065 = vmatpush1.bf16.msra.mxu0 0
  %5066 = vmatprep.subr.bf16.mxu0 0
  %5067 = vmatpush1.bf16.msra.mxu0 0
  %5068 = vmatprep.subr.bf16.mxu0 0
  %5069 = vmatpush1.bf16.msra.mxu0 0
  %5070 = vmatprep.subr.bf16.mxu0 0
  %5071 = vmatpush1.bf16.msra.mxu0 0
  %5072 = vmatprep.subr.bf16.mxu0 0
  %5073 = vmatpush1.bf16.msra.mxu0 0
  %5074 = vmatprep.subr.bf16.mxu0 0
  %5075 = vmatpush1.bf16.msra.mxu0 0
  %5076 = vmatprep.mubr.bf16.mxu0 0
  %5077 = vmatmul.mubr.bf16.gmra.mrb[0].mxu0 %v5042
  %v5078 = vpop.f32.mrb[0].mxu0
  %v5079 = vadd.f32 %v5015, %v5078
  %v5080 = vpop.f32.mrb[0].mxu0
  %v5081 = vpop.f32.mrb[0].mxu0
  %v5082 = vadd.f32 %v5015, %v5081
  %v5083 = vpop.f32.mrb[0].mxu0
  %5084 = vdwg.mxu0
  %5085 = vst [vmem:[%s26] sm:$0xff] %v5079
  %5086 = vst [vmem:[%s26 + $0x8] sm:$0xff] %v5082
  // Predicated region
  $region106: #{reconstructor_forward.1} parent=0 // pred_check
    _
  $region107: #{reconstructor_forward.1} parent=0 // pred_check_branch
    %5088 = sbr.rel (0) target = $region109
  $region108: #{reconstructor_forward.1} parent=0 // pred_region
    _
  $region109: #{reconstructor_forward.1} parent=0 // pred_fallthru
    _
  // Predicated region
  $region110: #{reconstructor_forward.1} parent=0 // pred_check
    _
  $region111: #{reconstructor_forward.1} parent=0 // pred_check_branch
    %5090 = sbr.rel (0) target = $region113
  $region112: #{reconstructor_forward.1} parent=0 // pred_region
    _
  $region113: #{reconstructor_forward.1} parent=0 // pred_fallthru
    _

</llo_original>
